<compile_context>
chip_gen: v5e
topology: v5e:2x2
jax: 0.10.0
libtpu: 0.0.40
codegen_flags: <defaults>
</compile_context>

<pallas_src>
import jax
import jax.numpy as jnp
from jax.experimental import pallas as pl
from jax.experimental.pallas import tpu as pltpu


# ---------------------------------------------------------------------------
# In-kernel building blocks.
# Activations are stored channel-fastest: an (H, W, C) tensor lives as a 2-D
# (H, W*C) VMEM buffer, so spatial shifts / crops are static index offsets.
# ---------------------------------------------------------------------------
def _conv3x3_bd(parts, b_ref, ho, wo, relu=True):
    """Valid 3x3 conv (+bias, +ReLU) as 9 accumulated block-diagonal matmuls.

    parts: list of (src_ref, row_off, col_off, cin, w_ref) where src_ref holds
    a (H, W*cin) channel-fastest activation (row_off/col_off implement the
    skip-connection crop / concat for free) and w_ref is a (9, wo*cin,
    wo*cout) bf16 block-diagonal weight stack (one slab per 3x3 tap).
    Returns the f32 (ho, wo*cout) result.
    """
    acc = None
    for t in range(9):
        dy, dx = t // 3, t % 3
        for (src, r0, c0, cin, w_ref) in parts:
            s = src[r0 + dy:r0 + dy + ho,
                    c0 + dx * cin:c0 + (dx + wo) * cin].astype(jnp.bfloat16)
            p = jnp.dot(s, w_ref[t], preferred_element_type=jnp.float32)
            acc = p if acc is None else acc + p
    acc = acc + b_ref[...]                      # (1, wo*cout) broadcast, f32
    if relu:
        acc = jnp.maximum(acc, 0.0)
    return acc


def _maxpool2x2(src_ref, h, w, c, rowmax_ref, out_ref):
    """2x2 max pool, stride 2, ceil_mode=True, fully in VMEM.

    src_ref: (h, w*c); rowmax_ref: (ceil(h/2), w*c) scratch; out_ref:
    (ceil(h/2), ceil(w/2)*c).  The odd-tail branches implement ceil_mode
    (they are not taken for this config, where h and w are always even).
    """
    hp, wp = (h + 1) // 2, (w + 1) // 2
    for i in range(hp):                          # max over row pairs
        r = src_ref[2 * i:2 * i + 1, :]
        if 2 * i + 1 < h:
            r = jnp.maximum(r, src_ref[2 * i + 1:2 * i + 2, :])
        rowmax_ref[i:i + 1, :] = r
    for j in range(wp):                          # max over pixel (column) pairs
        v = rowmax_ref[:, 2 * j * c:(2 * j + 1) * c]
        if 2 * j + 1 < w:
            v = jnp.maximum(v, rowmax_ref[:, (2 * j + 1) * c:(2 * j + 2) * c])
        out_ref[:, j * c:(j + 1) * c] = v


def _convT2x2_bd(x, wt_ref, bt_ref, h, out_ref):
    """ConvTranspose2d(kernel=2, stride=2) -> (2h, 2w*cout) written to out_ref.

    x: (h, w*cin) f32 value.  wt_ref: (2, w*cin, 2*w*cout) bf16 block-diagonal
    weights (one slab per output-row parity di); the column interleave over dj
    is already baked into the weight layout, so only the row interleave is
    done here (in-VMEM single-row stores).
    """
    xb = x.astype(jnp.bfloat16)
    for di in range(2):
        y = jnp.dot(xb, wt_ref[di], preferred_element_type=jnp.float32) + bt_ref[...]
        for r in range(h):
            out_ref[2 * r + di:2 * r + di + 1, :] = y[r:r + 1, :]


# ---------------------------------------------------------------------------
# The fused UNet forward kernel (one batch sample per grid step).
# ---------------------------------------------------------------------------
def _unet_fused_kernel(x_ref,
                       wd1, bd1, wd2, bd2, wc, bc, wct, bct,
                       wu1a, wu1b, bu1, wu1t, bu1t,
                       wu2a, wu2b, bu2, wfc, bfc,
                       out_ref,
                       d1_s, rm1_s, p1_s, d2_s, rm2_s, p2_s, upc_s, upu_s):
    # ---------------- encoder ----------------
    # down1: 26x26x1 -> 24x24x8
    d1_s[...] = _conv3x3_bd([(x_ref, 0, 0, 1, wd1)], bd1, 24, 24)
    # pool: 24x24x8 -> 12x12x8
    _maxpool2x2(d1_s, 24, 24, 8, rm1_s, p1_s)
    # down2: 12x12x8 -> 10x10x16
    d2_s[...] = _conv3x3_bd([(p1_s, 0, 0, 8, wd2)], bd2, 10, 10)
    # pool: 10x10x16 -> 5x5x16
    _maxpool2x2(d2_s, 10, 10, 16, rm2_s, p2_s)

    # ---------------- center -----------------
    # conv: 5x5x16 -> 3x3x32 ; convT: 3x3x32 -> 6x6x16 (into upc_s)
    cen = _conv3x3_bd([(p2_s, 0, 0, 16, wc)], bc, 3, 3)
    _convT2x2_bd(cen, wct, bct, 3, upc_s)

    # ---------------- decoder ----------------
    # up1: cat([up(6x6x16), d2 cropped [2:8, 2:8]]) -> conv -> 4x4x16
    #      (the crop/concat is just (row_off=2, col_off=2*16) on d2_s)
    u1 = _conv3x3_bd([(upc_s, 0, 0, 16, wu1a), (d2_s, 2, 2 * 16, 16, wu1b)],
                     bu1, 4, 4)
    # convT: 4x4x16 -> 8x8x8 (into upu_s)
    _convT2x2_bd(u1, wu1t, bu1t, 4, upu_s)
    # up2: cat([up(8x8x8), d1 cropped [8:16, 8:16]]) -> conv -> 6x6x8
    u2 = _conv3x3_bd([(upu_s, 0, 0, 8, wu2a), (d1_s, 8, 8 * 8, 8, wu2b)],
                     bu2, 6, 6)

    # ---------------- final 1x1 conv, /10 fused as *0.1, NCHW output ---------
    u2b = u2.astype(jnp.bfloat16)
    for co in range(2):                          # per-class (48, 6) matmul
        yc = jnp.dot(u2b, wfc[co], preferred_element_type=jnp.float32)
        out_ref[co, :, :] = ((yc + bfc[co]) * 0.1).astype(out_ref.dtype)


# ---------------------------------------------------------------------------
# Host-side weight packing (done once at init, never in the forward path).
# ---------------------------------------------------------------------------
def _xavier_normal(key, shape, fan_in, fan_out):
    std = (2.0 / (fan_in + fan_out)) ** 0.5
    return std * jax.random.normal(key, shape, dtype=jnp.float32)


def _bd_conv3x3(w, wo):
    """torch-layout (Cout, Cin, 3, 3) -> (9, wo*Cin, wo*Cout) bf16 block-diag."""
    eye = jnp.eye(wo, dtype=w.dtype)
    mats = []
    for dy in range(3):
        for dx in range(3):
            mats.append(jnp.kron(eye, w[:, :, dy, dx].T))
    return jnp.stack(mats).astype(jnp.bfloat16)


def _bd_convT2x2(w, wi):
    """torch-layout (Cin, Cout, 2, 2) -> (2, wi*Cin, 2*wi*Cout) bf16 block-diag."""
    eye = jnp.eye(wi, dtype=w.dtype)
    mats = []
    for di in range(2):
        blk = jnp.concatenate([w[:, :, di, 0], w[:, :, di, 1]], axis=1)
        mats.append(jnp.kron(eye, blk))
    return jnp.stack(mats).astype(jnp.bfloat16)


def _final_1x1(w2d, wo):
    """(Cout, Cin) 1x1-conv weight -> (Cout, wo*Cin, wo) per-class matrices."""
    cout, cin = w2d.shape
    m = jnp.einsum('oc,wv->owcv', w2d, jnp.eye(wo, dtype=w2d.dtype))
    return m.reshape(cout, wo * cin, wo).astype(jnp.bfloat16)


def _tile_bias(b, reps):
    return jnp.tile(b, reps)[None, :].astype(jnp.float32)


def init_unet_params(key, in_ch=1, flc=8, num_classes=2):
    """Returns (kernel-ready packed params, raw torch-layout weights)."""
    f1, f2, f4 = flc, 2 * flc, 4 * flc
    ks = jax.random.split(key, 8)

    raw = dict(
        w_d1=_xavier_normal(ks[0], (f1, in_ch, 3, 3), in_ch * 9, f1 * 9),
        w_d2=_xavier_normal(ks[1], (f2, f1, 3, 3), f1 * 9, f2 * 9),
        w_c=_xavier_normal(ks[2], (f4, f2, 3, 3), f2 * 9, f4 * 9),
        w_ct=_xavier_normal(ks[3], (f4, f2, 2, 2), f2 * 4, f4 * 4),
        w_u1=_xavier_normal(ks[4], (f2, f4, 3, 3), f4 * 9, f2 * 9),
        w_u1t=_xavier_normal(ks[5], (f2, f1, 2, 2), f1 * 4, f2 * 4),
        w_u2=_xavier_normal(ks[6], (f1, f2, 3, 3), f2 * 9, f1 * 9),
        w_f=_xavier_normal(ks[7], (num_classes, f1, 1, 1), f1, num_classes),
    )
    # Round once to bf16 so the kernel and the f32 reference share weights.
    raw = {k: v.astype(jnp.bfloat16).astype(jnp.float32) for k, v in raw.items()}
    zb = lambda c: jnp.zeros((c,), jnp.float32)   # biases are zero per init

    params = dict(
        wd1=_bd_conv3x3(raw['w_d1'], 24), bd1=_tile_bias(zb(f1), 24),
        wd2=_bd_conv3x3(raw['w_d2'], 10), bd2=_tile_bias(zb(f2), 10),
        wc=_bd_conv3x3(raw['w_c'], 3),    bc=_tile_bias(zb(f4), 3),
        wct=_bd_convT2x2(raw['w_ct'], 3), bct=_tile_bias(zb(f2), 6),
        wu1a=_bd_conv3x3(raw['w_u1'][:, :f2], 4),
        wu1b=_bd_conv3x3(raw['w_u1'][:, f2:], 4),
        bu1=_tile_bias(zb(f2), 4),
        wu1t=_bd_convT2x2(raw['w_u1t'], 4), bu1t=_tile_bias(zb(f1), 8),
        wu2a=_bd_conv3x3(raw['w_u2'][:, :f1], 6),
        wu2b=_bd_conv3x3(raw['w_u2'][:, f1:], 6),
        bu2=_tile_bias(zb(f1), 6),
        wfc=_final_1x1(raw['w_f'][:, :, 0, 0], 6),
        bfc=jnp.zeros((num_classes, 1, 6), jnp.float32),
    )
    return params, raw


# ---------------------------------------------------------------------------
# Forward wrapper: one pallas_call for the whole network.
# ---------------------------------------------------------------------------
_WEIGHT_KEYS = ('wd1', 'bd1', 'wd2', 'bd2', 'wc', 'bc', 'wct', 'bct',
                'wu1a', 'wu1b', 'bu1', 'wu1t', 'bu1t',
                'wu2a', 'wu2b', 'bu2', 'wfc', 'bfc')


def _const_index_map(ndim):
    return lambda i: (0,) * ndim


def unet_apply(params, x_nchw):
    n, cin, h, w = x_nchw.shape
    # NCHW -> (N, H, W*Cin) channel-fastest rows (trivial relayout for Cin=1).
    x2 = jnp.transpose(x_nchw, (0, 2, 3, 1)).reshape(n, h, w * cin)
    args = [params[k] for k in _WEIGHT_KEYS]

    in_specs = [pl.BlockSpec((None, h, w * cin), lambda i: (i, 0, 0))]
    for a in args:   # full-array VMEM-resident weights, fetched once
        in_specs.append(pl.BlockSpec(a.shape, _const_index_map(a.ndim)))

    return pl.pallas_call(
        _unet_fused_kernel,
        out_shape=jax.ShapeDtypeStruct((n, 2, 6, 6), jnp.float32),
        grid=(n,),
        in_specs=in_specs,
        out_specs=pl.BlockSpec((None, 2, 6, 6), lambda i: (i, 0, 0, 0)),
        scratch_shapes=[
            pltpu.VMEM((24, 24 * 8), jnp.float32),   # down1 output
            pltpu.VMEM((12, 24 * 8), jnp.float32),   # pool1 row-max
            pltpu.VMEM((12, 12 * 8), jnp.float32),   # pool1 output
            pltpu.VMEM((10, 10 * 16), jnp.float32),  # down2 output
            pltpu.VMEM((5, 10 * 16), jnp.float32),   # pool2 row-max
            pltpu.VMEM((5, 5 * 16), jnp.float32),    # pool2 output
            pltpu.VMEM((6, 6 * 16), jnp.float32),    # center up-sample
            pltpu.VMEM((8, 8 * 8), jnp.float32),     # up1 up-sample
        ],
        compiler_params=pltpu.CompilerParams(
            dimension_semantics=("parallel",),       # megacore batch split (v7x)
            vmem_limit_bytes=32 * 1024 * 1024),      # explicit budget, safe on all gens
    )(x2, *args)


# ---------------------------------------------------------------------------
# Pure-JAX reference (same math, torch-layout weights) for a sanity check.
# ---------------------------------------------------------------------------
def unet_reference(raw, x_nchw):
    conv = lambda x, w: jax.lax.conv_general_dilated(
        x, w, (1, 1), 'VALID', dimension_numbers=('NCHW', 'OIHW', 'NCHW'))
    relu = lambda x: jnp.maximum(x, 0.0)

    def pool(x):                    # 2x2/stride-2 max pool (even dims here)
        n, c, hh, ww = x.shape
        return jnp.max(x.reshape(n, c, hh // 2, 2, ww // 2, 2), axis=(3, 5))

    def convT(x, w):                # kernel 2, stride 2, torch weight layout
        t = jnp.einsum('nchw,coij->nohiwj', x, w)
        n, o, hh, _, ww, _ = t.shape
        return t.reshape(n, o, hh * 2, ww * 2)

    d1 = relu(conv(x_nchw, raw['w_d1']))
    d2 = relu(conv(pool(d1), raw['w_d2']))
    c = relu(conv(pool(d2), raw['w_c']))
    x = convT(c, raw['w_ct'])
    x = relu(conv(jnp.concatenate([x, d2[:, :, 2:8, 2:8]], axis=1), raw['w_u1']))
    x = convT(x, raw['w_u1t'])
    x = relu(conv(jnp.concatenate([x, d1[:, :, 8:16, 8:16]], axis=1), raw['w_u2']))
    return conv(x, raw['w_f']) / 10.0


# ---------------------------------------------------------------------------
if __name__ == "__main__":
    batch, in_ch, flc, num_classes = 2, 1, 8, 2
    h_in = w_in = 26     # UNet.get_optimal_shape([6,6], steps=2, num_convs=1)

    key = jax.random.PRNGKey(0)
    k_p, k_x = jax.random.split(key)
    params, raw = init_unet_params(k_p, in_ch, flc, num_classes)
    x = jax.random.normal(k_x, (batch, in_ch, h_in, w_in), dtype=jnp.float32)

    fwd = jax.jit(unet_apply)
    out = jax.block_until_ready(fwd(params, x))

    assert out.shape == (batch, num_classes, 6, 6), out.shape
    assert bool(jnp.all(jnp.isfinite(out)))

    ref = jax.block_until_ready(unet_reference(raw, x))
    assert bool(jnp.allclose(out, ref, atol=5e-3, rtol=5e-2)), (
        "max abs err = %r" % float(jnp.max(jnp.abs(out - ref))))

    print("KERNEL_OK")
</pallas_src>

<mosaic_0001>
module attributes {stable_mosaic.version = 11 : i64} {
  func.func @_unet_fused_kernel(%arg0: i32, %arg1: memref<1x26x26xf32, #tpu.memory_space<vmem>>, %arg2: memref<9x24x192xbf16, #tpu.memory_space<vmem>>, %arg3: memref<1x192xf32, #tpu.memory_space<vmem>>, %arg4: memref<9x80x160xbf16, #tpu.memory_space<vmem>>, %arg5: memref<1x160xf32, #tpu.memory_space<vmem>>, %arg6: memref<9x48x96xbf16, #tpu.memory_space<vmem>>, %arg7: memref<1x96xf32, #tpu.memory_space<vmem>>, %arg8: memref<2x96x96xbf16, #tpu.memory_space<vmem>>, %arg9: memref<1x96xf32, #tpu.memory_space<vmem>>, %arg10: memref<9x64x64xbf16, #tpu.memory_space<vmem>>, %arg11: memref<9x64x64xbf16, #tpu.memory_space<vmem>>, %arg12: memref<1x64xf32, #tpu.memory_space<vmem>>, %arg13: memref<2x64x64xbf16, #tpu.memory_space<vmem>>, %arg14: memref<1x64xf32, #tpu.memory_space<vmem>>, %arg15: memref<9x48x48xbf16, #tpu.memory_space<vmem>>, %arg16: memref<9x48x48xbf16, #tpu.memory_space<vmem>>, %arg17: memref<1x48xf32, #tpu.memory_space<vmem>>, %arg18: memref<2x48x6xbf16, #tpu.memory_space<vmem>>, %arg19: memref<2x1x6xf32, #tpu.memory_space<vmem>>, %arg20: memref<1x2x6x6xf32, #tpu.memory_space<vmem>>, %arg21: memref<24x192xf32, #tpu.memory_space<vmem>>, %arg22: memref<12x192xf32, #tpu.memory_space<vmem>>, %arg23: memref<12x96xf32, #tpu.memory_space<vmem>>, %arg24: memref<10x160xf32, #tpu.memory_space<vmem>>, %arg25: memref<5x160xf32, #tpu.memory_space<vmem>>, %arg26: memref<5x80xf32, #tpu.memory_space<vmem>>, %arg27: memref<6x96xf32, #tpu.memory_space<vmem>>, %arg28: memref<8x64xf32, #tpu.memory_space<vmem>>) attributes {dimension_semantics = [#tpu.dimension_semantics<parallel>], iteration_bounds = array<i64: 2>, scalar_prefetch = 0 : i64, scratch_operands = 8 : i64, tpu.core_type = #tpu.core_type<tc>, window_params = [{transform_indices = @transform_0, window_bounds = array<i64: 1, 26, 26>}, {pipeline_mode = #tpu.pipeline_mode<synchronous>, transform_indices = @transform_1, window_bounds = array<i64: 9, 24, 192>}, {pipeline_mode = #tpu.pipeline_mode<synchronous>, transform_indices = @transform_2, window_bounds = array<i64: 1, 192>}, {pipeline_mode = #tpu.pipeline_mode<synchronous>, transform_indices = @transform_3, window_bounds = array<i64: 9, 80, 160>}, {pipeline_mode = #tpu.pipeline_mode<synchronous>, transform_indices = @transform_4, window_bounds = array<i64: 1, 160>}, {pipeline_mode = #tpu.pipeline_mode<synchronous>, transform_indices = @transform_5, window_bounds = array<i64: 9, 48, 96>}, {pipeline_mode = #tpu.pipeline_mode<synchronous>, transform_indices = @transform_6, window_bounds = array<i64: 1, 96>}, {pipeline_mode = #tpu.pipeline_mode<synchronous>, transform_indices = @transform_7, window_bounds = array<i64: 2, 96, 96>}, {pipeline_mode = #tpu.pipeline_mode<synchronous>, transform_indices = @transform_8, window_bounds = array<i64: 1, 96>}, {pipeline_mode = #tpu.pipeline_mode<synchronous>, transform_indices = @transform_9, window_bounds = array<i64: 9, 64, 64>}, {pipeline_mode = #tpu.pipeline_mode<synchronous>, transform_indices = @transform_10, window_bounds = array<i64: 9, 64, 64>}, {pipeline_mode = #tpu.pipeline_mode<synchronous>, transform_indices = @transform_11, window_bounds = array<i64: 1, 64>}, {pipeline_mode = #tpu.pipeline_mode<synchronous>, transform_indices = @transform_12, window_bounds = array<i64: 2, 64, 64>}, {pipeline_mode = #tpu.pipeline_mode<synchronous>, transform_indices = @transform_13, window_bounds = array<i64: 1, 64>}, {pipeline_mode = #tpu.pipeline_mode<synchronous>, transform_indices = @transform_14, window_bounds = array<i64: 9, 48, 48>}, {pipeline_mode = #tpu.pipeline_mode<synchronous>, transform_indices = @transform_15, window_bounds = array<i64: 9, 48, 48>}, {pipeline_mode = #tpu.pipeline_mode<synchronous>, transform_indices = @transform_16, window_bounds = array<i64: 1, 48>}, {pipeline_mode = #tpu.pipeline_mode<synchronous>, transform_indices = @transform_17, window_bounds = array<i64: 2, 48, 6>}, {pipeline_mode = #tpu.pipeline_mode<synchronous>, transform_indices = @transform_18, window_bounds = array<i64: 2, 1, 6>}, {transform_indices = @transform_19, window_bounds = array<i64: 1, 2, 6, 6>}]} {
    %c0 = arith.constant 0 : index
    %c0_0 = arith.constant 0 : index
    %c0_1 = arith.constant 0 : index
    %0 = vector.load %arg1[%c0, %c0_0, %c0_1] : memref<1x26x26xf32, #tpu.memory_space<vmem>>, vector<1x24x24xf32>
    %1 = vector.shape_cast %0 : vector<1x24x24xf32> to vector<24x24xf32>
    %2 = arith.truncf %1 : vector<24x24xf32> to vector<24x24xbf16>
    %c0_2 = arith.constant 0 : index
    %c0_3 = arith.constant 0 : index
    %c0_4 = arith.constant 0 : index
    %3 = vector.load %arg2[%c0_2, %c0_3, %c0_4] : memref<9x24x192xbf16, #tpu.memory_space<vmem>>, vector<1x24x192xbf16>
    %4 = vector.shape_cast %3 : vector<1x24x192xbf16> to vector<24x192xbf16>
    %cst = arith.constant dense<0.000000e+00> : vector<24x192xf32>
    %5 = tpu.matmul %2, %4, %cst {dimension_numbers = #tpu.dot_dimension_numbers<[1], [0], [0], [1], [0, 0, 1, 1], [], []>} : vector<24x24xbf16>, vector<24x192xbf16>, vector<24x192xf32> -> vector<24x192xf32>
    %c0_5 = arith.constant 0 : index
    %c0_6 = arith.constant 0 : index
    %c1 = arith.constant 1 : index
    %6 = vector.load %arg1[%c0_5, %c0_6, %c1] : memref<1x26x26xf32, #tpu.memory_space<vmem>>, vector<1x24x24xf32>
    %7 = vector.shape_cast %6 : vector<1x24x24xf32> to vector<24x24xf32>
    %8 = arith.truncf %7 : vector<24x24xf32> to vector<24x24xbf16>
    %c1_7 = arith.constant 1 : index
    %c0_8 = arith.constant 0 : index
    %c0_9 = arith.constant 0 : index
    %9 = vector.load %arg2[%c1_7, %c0_8, %c0_9] : memref<9x24x192xbf16, #tpu.memory_space<vmem>>, vector<1x24x192xbf16>
    %10 = vector.shape_cast %9 : vector<1x24x192xbf16> to vector<24x192xbf16>
    %cst_10 = arith.constant dense<0.000000e+00> : vector<24x192xf32>
    %11 = tpu.matmul %8, %10, %cst_10 {dimension_numbers = #tpu.dot_dimension_numbers<[1], [0], [0], [1], [0, 0, 1, 1], [], []>} : vector<24x24xbf16>, vector<24x192xbf16>, vector<24x192xf32> -> vector<24x192xf32>
    %12 = arith.addf %5, %11 : vector<24x192xf32>
    %c0_11 = arith.constant 0 : index
    %c0_12 = arith.constant 0 : index
    %c2 = arith.constant 2 : index
    %13 = vector.load %arg1[%c0_11, %c0_12, %c2] : memref<1x26x26xf32, #tpu.memory_space<vmem>>, vector<1x24x24xf32>
    %14 = vector.shape_cast %13 : vector<1x24x24xf32> to vector<24x24xf32>
    %15 = arith.truncf %14 : vector<24x24xf32> to vector<24x24xbf16>
    %c2_13 = arith.constant 2 : index
    %c0_14 = arith.constant 0 : index
    %c0_15 = arith.constant 0 : index
    %16 = vector.load %arg2[%c2_13, %c0_14, %c0_15] : memref<9x24x192xbf16, #tpu.memory_space<vmem>>, vector<1x24x192xbf16>
    %17 = vector.shape_cast %16 : vector<1x24x192xbf16> to vector<24x192xbf16>
    %cst_16 = arith.constant dense<0.000000e+00> : vector<24x192xf32>
    %18 = tpu.matmul %15, %17, %cst_16 {dimension_numbers = #tpu.dot_dimension_numbers<[1], [0], [0], [1], [0, 0, 1, 1], [], []>} : vector<24x24xbf16>, vector<24x192xbf16>, vector<24x192xf32> -> vector<24x192xf32>
    %19 = arith.addf %12, %18 : vector<24x192xf32>
    %c0_17 = arith.constant 0 : index
    %c1_18 = arith.constant 1 : index
    %c0_19 = arith.constant 0 : index
    %20 = vector.load %arg1[%c0_17, %c1_18, %c0_19] : memref<1x26x26xf32, #tpu.memory_space<vmem>>, vector<1x24x24xf32>
    %21 = vector.shape_cast %20 : vector<1x24x24xf32> to vector<24x24xf32>
    %22 = arith.truncf %21 : vector<24x24xf32> to vector<24x24xbf16>
    %c3 = arith.constant 3 : index
    %c0_20 = arith.constant 0 : index
    %c0_21 = arith.constant 0 : index
    %23 = vector.load %arg2[%c3, %c0_20, %c0_21] : memref<9x24x192xbf16, #tpu.memory_space<vmem>>, vector<1x24x192xbf16>
    %24 = vector.shape_cast %23 : vector<1x24x192xbf16> to vector<24x192xbf16>
    %cst_22 = arith.constant dense<0.000000e+00> : vector<24x192xf32>
    %25 = tpu.matmul %22, %24, %cst_22 {dimension_numbers = #tpu.dot_dimension_numbers<[1], [0], [0], [1], [0, 0, 1, 1], [], []>} : vector<24x24xbf16>, vector<24x192xbf16>, vector<24x192xf32> -> vector<24x192xf32>
    %26 = arith.addf %19, %25 : vector<24x192xf32>
    %c0_23 = arith.constant 0 : index
    %c1_24 = arith.constant 1 : index
    %c1_25 = arith.constant 1 : index
    %27 = vector.load %arg1[%c0_23, %c1_24, %c1_25] : memref<1x26x26xf32, #tpu.memory_space<vmem>>, vector<1x24x24xf32>
    %28 = vector.shape_cast %27 : vector<1x24x24xf32> to vector<24x24xf32>
    %29 = arith.truncf %28 : vector<24x24xf32> to vector<24x24xbf16>
    %c4 = arith.constant 4 : index
    %c0_26 = arith.constant 0 : index
    %c0_27 = arith.constant 0 : index
    %30 = vector.load %arg2[%c4, %c0_26, %c0_27] : memref<9x24x192xbf16, #tpu.memory_space<vmem>>, vector<1x24x192xbf16>
    %31 = vector.shape_cast %30 : vector<1x24x192xbf16> to vector<24x192xbf16>
    %cst_28 = arith.constant dense<0.000000e+00> : vector<24x192xf32>
    %32 = tpu.matmul %29, %31, %cst_28 {dimension_numbers = #tpu.dot_dimension_numbers<[1], [0], [0], [1], [0, 0, 1, 1], [], []>} : vector<24x24xbf16>, vector<24x192xbf16>, vector<24x192xf32> -> vector<24x192xf32>
    %33 = arith.addf %26, %32 : vector<24x192xf32>
    %c0_29 = arith.constant 0 : index
    %c1_30 = arith.constant 1 : index
    %c2_31 = arith.constant 2 : index
    %34 = vector.load %arg1[%c0_29, %c1_30, %c2_31] : memref<1x26x26xf32, #tpu.memory_space<vmem>>, vector<1x24x24xf32>
    %35 = vector.shape_cast %34 : vector<1x24x24xf32> to vector<24x24xf32>
    %36 = arith.truncf %35 : vector<24x24xf32> to vector<24x24xbf16>
    %c5 = arith.constant 5 : index
    %c0_32 = arith.constant 0 : index
    %c0_33 = arith.constant 0 : index
    %37 = vector.load %arg2[%c5, %c0_32, %c0_33] : memref<9x24x192xbf16, #tpu.memory_space<vmem>>, vector<1x24x192xbf16>
    %38 = vector.shape_cast %37 : vector<1x24x192xbf16> to vector<24x192xbf16>
    %cst_34 = arith.constant dense<0.000000e+00> : vector<24x192xf32>
    %39 = tpu.matmul %36, %38, %cst_34 {dimension_numbers = #tpu.dot_dimension_numbers<[1], [0], [0], [1], [0, 0, 1, 1], [], []>} : vector<24x24xbf16>, vector<24x192xbf16>, vector<24x192xf32> -> vector<24x192xf32>
    %40 = arith.addf %33, %39 : vector<24x192xf32>
    %c0_35 = arith.constant 0 : index
    %c2_36 = arith.constant 2 : index
    %c0_37 = arith.constant 0 : index
    %41 = vector.load %arg1[%c0_35, %c2_36, %c0_37] : memref<1x26x26xf32, #tpu.memory_space<vmem>>, vector<1x24x24xf32>
    %42 = vector.shape_cast %41 : vector<1x24x24xf32> to vector<24x24xf32>
    %43 = arith.truncf %42 : vector<24x24xf32> to vector<24x24xbf16>
    %c6 = arith.constant 6 : index
    %c0_38 = arith.constant 0 : index
    %c0_39 = arith.constant 0 : index
    %44 = vector.load %arg2[%c6, %c0_38, %c0_39] : memref<9x24x192xbf16, #tpu.memory_space<vmem>>, vector<1x24x192xbf16>
    %45 = vector.shape_cast %44 : vector<1x24x192xbf16> to vector<24x192xbf16>
    %cst_40 = arith.constant dense<0.000000e+00> : vector<24x192xf32>
    %46 = tpu.matmul %43, %45, %cst_40 {dimension_numbers = #tpu.dot_dimension_numbers<[1], [0], [0], [1], [0, 0, 1, 1], [], []>} : vector<24x24xbf16>, vector<24x192xbf16>, vector<24x192xf32> -> vector<24x192xf32>
    %47 = arith.addf %40, %46 : vector<24x192xf32>
    %c0_41 = arith.constant 0 : index
    %c2_42 = arith.constant 2 : index
    %c1_43 = arith.constant 1 : index
    %48 = vector.load %arg1[%c0_41, %c2_42, %c1_43] : memref<1x26x26xf32, #tpu.memory_space<vmem>>, vector<1x24x24xf32>
    %49 = vector.shape_cast %48 : vector<1x24x24xf32> to vector<24x24xf32>
    %50 = arith.truncf %49 : vector<24x24xf32> to vector<24x24xbf16>
    %c7 = arith.constant 7 : index
    %c0_44 = arith.constant 0 : index
    %c0_45 = arith.constant 0 : index
    %51 = vector.load %arg2[%c7, %c0_44, %c0_45] : memref<9x24x192xbf16, #tpu.memory_space<vmem>>, vector<1x24x192xbf16>
    %52 = vector.shape_cast %51 : vector<1x24x192xbf16> to vector<24x192xbf16>
    %cst_46 = arith.constant dense<0.000000e+00> : vector<24x192xf32>
    %53 = tpu.matmul %50, %52, %cst_46 {dimension_numbers = #tpu.dot_dimension_numbers<[1], [0], [0], [1], [0, 0, 1, 1], [], []>} : vector<24x24xbf16>, vector<24x192xbf16>, vector<24x192xf32> -> vector<24x192xf32>
    %54 = arith.addf %47, %53 : vector<24x192xf32>
    %c0_47 = arith.constant 0 : index
    %c2_48 = arith.constant 2 : index
    %c2_49 = arith.constant 2 : index
    %55 = vector.load %arg1[%c0_47, %c2_48, %c2_49] : memref<1x26x26xf32, #tpu.memory_space<vmem>>, vector<1x24x24xf32>
    %56 = vector.shape_cast %55 : vector<1x24x24xf32> to vector<24x24xf32>
    %57 = arith.truncf %56 : vector<24x24xf32> to vector<24x24xbf16>
    %c8 = arith.constant 8 : index
    %c0_50 = arith.constant 0 : index
    %c0_51 = arith.constant 0 : index
    %58 = vector.load %arg2[%c8, %c0_50, %c0_51] : memref<9x24x192xbf16, #tpu.memory_space<vmem>>, vector<1x24x192xbf16>
    %59 = vector.shape_cast %58 : vector<1x24x192xbf16> to vector<24x192xbf16>
    %cst_52 = arith.constant dense<0.000000e+00> : vector<24x192xf32>
    %60 = tpu.matmul %57, %59, %cst_52 {dimension_numbers = #tpu.dot_dimension_numbers<[1], [0], [0], [1], [0, 0, 1, 1], [], []>} : vector<24x24xbf16>, vector<24x192xbf16>, vector<24x192xf32> -> vector<24x192xf32>
    %61 = arith.addf %54, %60 : vector<24x192xf32>
    %c0_53 = arith.constant 0 : index
    %c0_54 = arith.constant 0 : index
    %62 = vector.load %arg3[%c0_53, %c0_54] : memref<1x192xf32, #tpu.memory_space<vmem>>, vector<1x192xf32>
    %63 = vector.broadcast %62 : vector<1x192xf32> to vector<24x192xf32>
    %64 = arith.addf %61, %63 : vector<24x192xf32>
    %cst_55 = arith.constant 0.000000e+00 : f32
    %65 = vector.broadcast %cst_55 : f32 to vector<24x192xf32>
    %66 = arith.maximumf %64, %65 : vector<24x192xf32>
    %c0_56 = arith.constant 0 : index
    %c0_57 = arith.constant 0 : index
    %67 = vector.load %arg21[%c0_56, %c0_57] : memref<24x192xf32, #tpu.memory_space<vmem>>, vector<24x192xf32>
    tpu.vector_store %arg21[%c0_56, %c0_57], %66 {strides = array<i32>} : memref<24x192xf32, #tpu.memory_space<vmem>>, vector<24x192xf32>,
    %c0_58 = arith.constant 0 : index
    %c0_59 = arith.constant 0 : index
    %68 = vector.load %arg21[%c0_58, %c0_59] : memref<24x192xf32, #tpu.memory_space<vmem>>, vector<1x192xf32>
    %c1_60 = arith.constant 1 : index
    %c0_61 = arith.constant 0 : index
    %69 = vector.load %arg21[%c1_60, %c0_61] : memref<24x192xf32, #tpu.memory_space<vmem>>, vector<1x192xf32>
    %70 = arith.maximumf %68, %69 : vector<1x192xf32>
    %c0_62 = arith.constant 0 : index
    %c0_63 = arith.constant 0 : index
    %71 = vector.load %arg22[%c0_62, %c0_63] : memref<12x192xf32, #tpu.memory_space<vmem>>, vector<1x192xf32>
    tpu.vector_store %arg22[%c0_62, %c0_63], %70 {strides = array<i32>} : memref<12x192xf32, #tpu.memory_space<vmem>>, vector<1x192xf32>,
    %c2_64 = arith.constant 2 : index
    %c0_65 = arith.constant 0 : index
    %72 = vector.load %arg21[%c2_64, %c0_65] : memref<24x192xf32, #tpu.memory_space<vmem>>, vector<1x192xf32>
    %c3_66 = arith.constant 3 : index
    %c0_67 = arith.constant 0 : index
    %73 = vector.load %arg21[%c3_66, %c0_67] : memref<24x192xf32, #tpu.memory_space<vmem>>, vector<1x192xf32>
    %74 = arith.maximumf %72, %73 : vector<1x192xf32>
    %c1_68 = arith.constant 1 : index
    %c0_69 = arith.constant 0 : index
    %75 = vector.load %arg22[%c1_68, %c0_69] : memref<12x192xf32, #tpu.memory_space<vmem>>, vector<1x192xf32>
    tpu.vector_store %arg22[%c1_68, %c0_69], %74 {strides = array<i32>} : memref<12x192xf32, #tpu.memory_space<vmem>>, vector<1x192xf32>,
    %c4_70 = arith.constant 4 : index
    %c0_71 = arith.constant 0 : index
    %76 = vector.load %arg21[%c4_70, %c0_71] : memref<24x192xf32, #tpu.memory_space<vmem>>, vector<1x192xf32>
    %c5_72 = arith.constant 5 : index
    %c0_73 = arith.constant 0 : index
    %77 = vector.load %arg21[%c5_72, %c0_73] : memref<24x192xf32, #tpu.memory_space<vmem>>, vector<1x192xf32>
    %78 = arith.maximumf %76, %77 : vector<1x192xf32>
    %c2_74 = arith.constant 2 : index
    %c0_75 = arith.constant 0 : index
    %79 = vector.load %arg22[%c2_74, %c0_75] : memref<12x192xf32, #tpu.memory_space<vmem>>, vector<1x192xf32>
    tpu.vector_store %arg22[%c2_74, %c0_75], %78 {strides = array<i32>} : memref<12x192xf32, #tpu.memory_space<vmem>>, vector<1x192xf32>,
    %c6_76 = arith.constant 6 : index
    %c0_77 = arith.constant 0 : index
    %80 = vector.load %arg21[%c6_76, %c0_77] : memref<24x192xf32, #tpu.memory_space<vmem>>, vector<1x192xf32>
    %c7_78 = arith.constant 7 : index
    %c0_79 = arith.constant 0 : index
    %81 = vector.load %arg21[%c7_78, %c0_79] : memref<24x192xf32, #tpu.memory_space<vmem>>, vector<1x192xf32>
    %82 = arith.maximumf %80, %81 : vector<1x192xf32>
    %c3_80 = arith.constant 3 : index
    %c0_81 = arith.constant 0 : index
    %83 = vector.load %arg22[%c3_80, %c0_81] : memref<12x192xf32, #tpu.memory_space<vmem>>, vector<1x192xf32>
    tpu.vector_store %arg22[%c3_80, %c0_81], %82 {strides = array<i32>} : memref<12x192xf32, #tpu.memory_space<vmem>>, vector<1x192xf32>,
    %c8_82 = arith.constant 8 : index
    %c0_83 = arith.constant 0 : index
    %84 = vector.load %arg21[%c8_82, %c0_83] : memref<24x192xf32, #tpu.memory_space<vmem>>, vector<1x192xf32>
    %c9 = arith.constant 9 : index
    %c0_84 = arith.constant 0 : index
    %85 = vector.load %arg21[%c9, %c0_84] : memref<24x192xf32, #tpu.memory_space<vmem>>, vector<1x192xf32>
    %86 = arith.maximumf %84, %85 : vector<1x192xf32>
    %c4_85 = arith.constant 4 : index
    %c0_86 = arith.constant 0 : index
    %87 = vector.load %arg22[%c4_85, %c0_86] : memref<12x192xf32, #tpu.memory_space<vmem>>, vector<1x192xf32>
    tpu.vector_store %arg22[%c4_85, %c0_86], %86 {strides = array<i32>} : memref<12x192xf32, #tpu.memory_space<vmem>>, vector<1x192xf32>,
    %c10 = arith.constant 10 : index
    %c0_87 = arith.constant 0 : index
    %88 = vector.load %arg21[%c10, %c0_87] : memref<24x192xf32, #tpu.memory_space<vmem>>, vector<1x192xf32>
    %c11 = arith.constant 11 : index
    %c0_88 = arith.constant 0 : index
    %89 = vector.load %arg21[%c11, %c0_88] : memref<24x192xf32, #tpu.memory_space<vmem>>, vector<1x192xf32>
    %90 = arith.maximumf %88, %89 : vector<1x192xf32>
    %c5_89 = arith.constant 5 : index
    %c0_90 = arith.constant 0 : index
    %91 = vector.load %arg22[%c5_89, %c0_90] : memref<12x192xf32, #tpu.memory_space<vmem>>, vector<1x192xf32>
    tpu.vector_store %arg22[%c5_89, %c0_90], %90 {strides = array<i32>} : memref<12x192xf32, #tpu.memory_space<vmem>>, vector<1x192xf32>,
    %c12 = arith.constant 12 : index
    %c0_91 = arith.constant 0 : index
    %92 = vector.load %arg21[%c12, %c0_91] : memref<24x192xf32, #tpu.memory_space<vmem>>, vector<1x192xf32>
    %c13 = arith.constant 13 : index
    %c0_92 = arith.constant 0 : index
    %93 = vector.load %arg21[%c13, %c0_92] : memref<24x192xf32, #tpu.memory_space<vmem>>, vector<1x192xf32>
    %94 = arith.maximumf %92, %93 : vector<1x192xf32>
    %c6_93 = arith.constant 6 : index
    %c0_94 = arith.constant 0 : index
    %95 = vector.load %arg22[%c6_93, %c0_94] : memref<12x192xf32, #tpu.memory_space<vmem>>, vector<1x192xf32>
    tpu.vector_store %arg22[%c6_93, %c0_94], %94 {strides = array<i32>} : memref<12x192xf32, #tpu.memory_space<vmem>>, vector<1x192xf32>,
    %c14 = arith.constant 14 : index
    %c0_95 = arith.constant 0 : index
    %96 = vector.load %arg21[%c14, %c0_95] : memref<24x192xf32, #tpu.memory_space<vmem>>, vector<1x192xf32>
    %c15 = arith.constant 15 : index
    %c0_96 = arith.constant 0 : index
    %97 = vector.load %arg21[%c15, %c0_96] : memref<24x192xf32, #tpu.memory_space<vmem>>, vector<1x192xf32>
    %98 = arith.maximumf %96, %97 : vector<1x192xf32>
    %c7_97 = arith.constant 7 : index
    %c0_98 = arith.constant 0 : index
    %99 = vector.load %arg22[%c7_97, %c0_98] : memref<12x192xf32, #tpu.memory_space<vmem>>, vector<1x192xf32>
    tpu.vector_store %arg22[%c7_97, %c0_98], %98 {strides = array<i32>} : memref<12x192xf32, #tpu.memory_space<vmem>>, vector<1x192xf32>,
    %c16 = arith.constant 16 : index
    %c0_99 = arith.constant 0 : index
    %100 = vector.load %arg21[%c16, %c0_99] : memref<24x192xf32, #tpu.memory_space<vmem>>, vector<1x192xf32>
    %c17 = arith.constant 17 : index
    %c0_100 = arith.constant 0 : index
    %101 = vector.load %arg21[%c17, %c0_100] : memref<24x192xf32, #tpu.memory_space<vmem>>, vector<1x192xf32>
    %102 = arith.maximumf %100, %101 : vector<1x192xf32>
    %c8_101 = arith.constant 8 : index
    %c0_102 = arith.constant 0 : index
    %103 = vector.load %arg22[%c8_101, %c0_102] : memref<12x192xf32, #tpu.memory_space<vmem>>, vector<1x192xf32>
    tpu.vector_store %arg22[%c8_101, %c0_102], %102 {strides = array<i32>} : memref<12x192xf32, #tpu.memory_space<vmem>>, vector<1x192xf32>,
    %c18 = arith.constant 18 : index
    %c0_103 = arith.constant 0 : index
    %104 = vector.load %arg21[%c18, %c0_103] : memref<24x192xf32, #tpu.memory_space<vmem>>, vector<1x192xf32>
    %c19 = arith.constant 19 : index
    %c0_104 = arith.constant 0 : index
    %105 = vector.load %arg21[%c19, %c0_104] : memref<24x192xf32, #tpu.memory_space<vmem>>, vector<1x192xf32>
    %106 = arith.maximumf %104, %105 : vector<1x192xf32>
    %c9_105 = arith.constant 9 : index
    %c0_106 = arith.constant 0 : index
    %107 = vector.load %arg22[%c9_105, %c0_106] : memref<12x192xf32, #tpu.memory_space<vmem>>, vector<1x192xf32>
    tpu.vector_store %arg22[%c9_105, %c0_106], %106 {strides = array<i32>} : memref<12x192xf32, #tpu.memory_space<vmem>>, vector<1x192xf32>,
    %c20 = arith.constant 20 : index
    %c0_107 = arith.constant 0 : index
    %108 = vector.load %arg21[%c20, %c0_107] : memref<24x192xf32, #tpu.memory_space<vmem>>, vector<1x192xf32>
    %c21 = arith.constant 21 : index
    %c0_108 = arith.constant 0 : index
    %109 = vector.load %arg21[%c21, %c0_108] : memref<24x192xf32, #tpu.memory_space<vmem>>, vector<1x192xf32>
    %110 = arith.maximumf %108, %109 : vector<1x192xf32>
    %c10_109 = arith.constant 10 : index
    %c0_110 = arith.constant 0 : index
    %111 = vector.load %arg22[%c10_109, %c0_110] : memref<12x192xf32, #tpu.memory_space<vmem>>, vector<1x192xf32>
    tpu.vector_store %arg22[%c10_109, %c0_110], %110 {strides = array<i32>} : memref<12x192xf32, #tpu.memory_space<vmem>>, vector<1x192xf32>,
    %c22 = arith.constant 22 : index
    %c0_111 = arith.constant 0 : index
    %112 = vector.load %arg21[%c22, %c0_111] : memref<24x192xf32, #tpu.memory_space<vmem>>, vector<1x192xf32>
    %c23 = arith.constant 23 : index
    %c0_112 = arith.constant 0 : index
    %113 = vector.load %arg21[%c23, %c0_112] : memref<24x192xf32, #tpu.memory_space<vmem>>, vector<1x192xf32>
    %114 = arith.maximumf %112, %113 : vector<1x192xf32>
    %c11_113 = arith.constant 11 : index
    %c0_114 = arith.constant 0 : index
    %115 = vector.load %arg22[%c11_113, %c0_114] : memref<12x192xf32, #tpu.memory_space<vmem>>, vector<1x192xf32>
    tpu.vector_store %arg22[%c11_113, %c0_114], %114 {strides = array<i32>} : memref<12x192xf32, #tpu.memory_space<vmem>>, vector<1x192xf32>,
    %c0_115 = arith.constant 0 : index
    %c0_116 = arith.constant 0 : index
    %116 = vector.load %arg22[%c0_115, %c0_116] : memref<12x192xf32, #tpu.memory_space<vmem>>, vector<12x8xf32>
    %c0_117 = arith.constant 0 : index
    %c8_118 = arith.constant 8 : index
    %117 = vector.load %arg22[%c0_117, %c8_118] : memref<12x192xf32, #tpu.memory_space<vmem>>, vector<12x8xf32>
    %118 = arith.maximumf %116, %117 : vector<12x8xf32>
    %c0_119 = arith.constant 0 : index
    %c0_120 = arith.constant 0 : index
    %119 = vector.load %arg23[%c0_119, %c0_120] : memref<12x96xf32, #tpu.memory_space<vmem>>, vector<12x8xf32>
    tpu.vector_store %arg23[%c0_119, %c0_120], %118 {strides = array<i32>} : memref<12x96xf32, #tpu.memory_space<vmem>>, vector<12x8xf32>,
    %c0_121 = arith.constant 0 : index
    %c16_122 = arith.constant 16 : index
    %120 = vector.load %arg22[%c0_121, %c16_122] : memref<12x192xf32, #tpu.memory_space<vmem>>, vector<12x8xf32>
    %c0_123 = arith.constant 0 : index
    %c24 = arith.constant 24 : index
    %121 = vector.load %arg22[%c0_123, %c24] : memref<12x192xf32, #tpu.memory_space<vmem>>, vector<12x8xf32>
    %122 = arith.maximumf %120, %121 : vector<12x8xf32>
    %c0_124 = arith.constant 0 : index
    %c8_125 = arith.constant 8 : index
    %123 = vector.load %arg23[%c0_124, %c8_125] : memref<12x96xf32, #tpu.memory_space<vmem>>, vector<12x8xf32>
    tpu.vector_store %arg23[%c0_124, %c8_125], %122 {strides = array<i32>} : memref<12x96xf32, #tpu.memory_space<vmem>>, vector<12x8xf32>,
    %c0_126 = arith.constant 0 : index
    %c32 = arith.constant 32 : index
    %124 = vector.load %arg22[%c0_126, %c32] : memref<12x192xf32, #tpu.memory_space<vmem>>, vector<12x8xf32>
    %c0_127 = arith.constant 0 : index
    %c40 = arith.constant 40 : index
    %125 = vector.load %arg22[%c0_127, %c40] : memref<12x192xf32, #tpu.memory_space<vmem>>, vector<12x8xf32>
    %126 = arith.maximumf %124, %125 : vector<12x8xf32>
    %c0_128 = arith.constant 0 : index
    %c16_129 = arith.constant 16 : index
    %127 = vector.load %arg23[%c0_128, %c16_129] : memref<12x96xf32, #tpu.memory_space<vmem>>, vector<12x8xf32>
    tpu.vector_store %arg23[%c0_128, %c16_129], %126 {strides = array<i32>} : memref<12x96xf32, #tpu.memory_space<vmem>>, vector<12x8xf32>,
    %c0_130 = arith.constant 0 : index
    %c48 = arith.constant 48 : index
    %128 = vector.load %arg22[%c0_130, %c48] : memref<12x192xf32, #tpu.memory_space<vmem>>, vector<12x8xf32>
    %c0_131 = arith.constant 0 : index
    %c56 = arith.constant 56 : index
    %129 = vector.load %arg22[%c0_131, %c56] : memref<12x192xf32, #tpu.memory_space<vmem>>, vector<12x8xf32>
    %130 = arith.maximumf %128, %129 : vector<12x8xf32>
    %c0_132 = arith.constant 0 : index
    %c24_133 = arith.constant 24 : index
    %131 = vector.load %arg23[%c0_132, %c24_133] : memref<12x96xf32, #tpu.memory_space<vmem>>, vector<12x8xf32>
    tpu.vector_store %arg23[%c0_132, %c24_133], %130 {strides = array<i32>} : memref<12x96xf32, #tpu.memory_space<vmem>>, vector<12x8xf32>,
    %c0_134 = arith.constant 0 : index
    %c64 = arith.constant 64 : index
    %132 = vector.load %arg22[%c0_134, %c64] : memref<12x192xf32, #tpu.memory_space<vmem>>, vector<12x8xf32>
    %c0_135 = arith.constant 0 : index
    %c72 = arith.constant 72 : index
    %133 = vector.load %arg22[%c0_135, %c72] : memref<12x192xf32, #tpu.memory_space<vmem>>, vector<12x8xf32>
    %134 = arith.maximumf %132, %133 : vector<12x8xf32>
    %c0_136 = arith.constant 0 : index
    %c32_137 = arith.constant 32 : index
    %135 = vector.load %arg23[%c0_136, %c32_137] : memref<12x96xf32, #tpu.memory_space<vmem>>, vector<12x8xf32>
    tpu.vector_store %arg23[%c0_136, %c32_137], %134 {strides = array<i32>} : memref<12x96xf32, #tpu.memory_space<vmem>>, vector<12x8xf32>,
    %c0_138 = arith.constant 0 : index
    %c80 = arith.constant 80 : index
    %136 = vector.load %arg22[%c0_138, %c80] : memref<12x192xf32, #tpu.memory_space<vmem>>, vector<12x8xf32>
    %c0_139 = arith.constant 0 : index
    %c88 = arith.constant 88 : index
    %137 = vector.load %arg22[%c0_139, %c88] : memref<12x192xf32, #tpu.memory_space<vmem>>, vector<12x8xf32>
    %138 = arith.maximumf %136, %137 : vector<12x8xf32>
    %c0_140 = arith.constant 0 : index
    %c40_141 = arith.constant 40 : index
    %139 = vector.load %arg23[%c0_140, %c40_141] : memref<12x96xf32, #tpu.memory_space<vmem>>, vector<12x8xf32>
    tpu.vector_store %arg23[%c0_140, %c40_141], %138 {strides = array<i32>} : memref<12x96xf32, #tpu.memory_space<vmem>>, vector<12x8xf32>,
    %c0_142 = arith.constant 0 : index
    %c96 = arith.constant 96 : index
    %140 = vector.load %arg22[%c0_142, %c96] : memref<12x192xf32, #tpu.memory_space<vmem>>, vector<12x8xf32>
    %c0_143 = arith.constant 0 : index
    %c104 = arith.constant 104 : index
    %141 = vector.load %arg22[%c0_143, %c104] : memref<12x192xf32, #tpu.memory_space<vmem>>, vector<12x8xf32>
    %142 = arith.maximumf %140, %141 : vector<12x8xf32>
    %c0_144 = arith.constant 0 : index
    %c48_145 = arith.constant 48 : index
    %143 = vector.load %arg23[%c0_144, %c48_145] : memref<12x96xf32, #tpu.memory_space<vmem>>, vector<12x8xf32>
    tpu.vector_store %arg23[%c0_144, %c48_145], %142 {strides = array<i32>} : memref<12x96xf32, #tpu.memory_space<vmem>>, vector<12x8xf32>,
    %c0_146 = arith.constant 0 : index
    %c112 = arith.constant 112 : index
    %144 = vector.load %arg22[%c0_146, %c112] : memref<12x192xf32, #tpu.memory_space<vmem>>, vector<12x8xf32>
    %c0_147 = arith.constant 0 : index
    %c120 = arith.constant 120 : index
    %145 = vector.load %arg22[%c0_147, %c120] : memref<12x192xf32, #tpu.memory_space<vmem>>, vector<12x8xf32>
    %146 = arith.maximumf %144, %145 : vector<12x8xf32>
    %c0_148 = arith.constant 0 : index
    %c56_149 = arith.constant 56 : index
    %147 = vector.load %arg23[%c0_148, %c56_149] : memref<12x96xf32, #tpu.memory_space<vmem>>, vector<12x8xf32>
    tpu.vector_store %arg23[%c0_148, %c56_149], %146 {strides = array<i32>} : memref<12x96xf32, #tpu.memory_space<vmem>>, vector<12x8xf32>,
    %c0_150 = arith.constant 0 : index
    %c128 = arith.constant 128 : index
    %148 = vector.load %arg22[%c0_150, %c128] : memref<12x192xf32, #tpu.memory_space<vmem>>, vector<12x8xf32>
    %c0_151 = arith.constant 0 : index
    %c136 = arith.constant 136 : index
    %149 = vector.load %arg22[%c0_151, %c136] : memref<12x192xf32, #tpu.memory_space<vmem>>, vector<12x8xf32>
    %150 = arith.maximumf %148, %149 : vector<12x8xf32>
    %c0_152 = arith.constant 0 : index
    %c64_153 = arith.constant 64 : index
    %151 = vector.load %arg23[%c0_152, %c64_153] : memref<12x96xf32, #tpu.memory_space<vmem>>, vector<12x8xf32>
    tpu.vector_store %arg23[%c0_152, %c64_153], %150 {strides = array<i32>} : memref<12x96xf32, #tpu.memory_space<vmem>>, vector<12x8xf32>,
    %c0_154 = arith.constant 0 : index
    %c144 = arith.constant 144 : index
    %152 = vector.load %arg22[%c0_154, %c144] : memref<12x192xf32, #tpu.memory_space<vmem>>, vector<12x8xf32>
    %c0_155 = arith.constant 0 : index
    %c152 = arith.constant 152 : index
    %153 = vector.load %arg22[%c0_155, %c152] : memref<12x192xf32, #tpu.memory_space<vmem>>, vector<12x8xf32>
    %154 = arith.maximumf %152, %153 : vector<12x8xf32>
    %c0_156 = arith.constant 0 : index
    %c72_157 = arith.constant 72 : index
    %155 = vector.load %arg23[%c0_156, %c72_157] : memref<12x96xf32, #tpu.memory_space<vmem>>, vector<12x8xf32>
    tpu.vector_store %arg23[%c0_156, %c72_157], %154 {strides = array<i32>} : memref<12x96xf32, #tpu.memory_space<vmem>>, vector<12x8xf32>,
    %c0_158 = arith.constant 0 : index
    %c160 = arith.constant 160 : index
    %156 = vector.load %arg22[%c0_158, %c160] : memref<12x192xf32, #tpu.memory_space<vmem>>, vector<12x8xf32>
    %c0_159 = arith.constant 0 : index
    %c168 = arith.constant 168 : index
    %157 = vector.load %arg22[%c0_159, %c168] : memref<12x192xf32, #tpu.memory_space<vmem>>, vector<12x8xf32>
    %158 = arith.maximumf %156, %157 : vector<12x8xf32>
    %c0_160 = arith.constant 0 : index
    %c80_161 = arith.constant 80 : index
    %159 = vector.load %arg23[%c0_160, %c80_161] : memref<12x96xf32, #tpu.memory_space<vmem>>, vector<12x8xf32>
    tpu.vector_store %arg23[%c0_160, %c80_161], %158 {strides = array<i32>} : memref<12x96xf32, #tpu.memory_space<vmem>>, vector<12x8xf32>,
    %c0_162 = arith.constant 0 : index
    %c176 = arith.constant 176 : index
    %160 = vector.load %arg22[%c0_162, %c176] : memref<12x192xf32, #tpu.memory_space<vmem>>, vector<12x8xf32>
    %c0_163 = arith.constant 0 : index
    %c184 = arith.constant 184 : index
    %161 = vector.load %arg22[%c0_163, %c184] : memref<12x192xf32, #tpu.memory_space<vmem>>, vector<12x8xf32>
    %162 = arith.maximumf %160, %161 : vector<12x8xf32>
    %c0_164 = arith.constant 0 : index
    %c88_165 = arith.constant 88 : index
    %163 = vector.load %arg23[%c0_164, %c88_165] : memref<12x96xf32, #tpu.memory_space<vmem>>, vector<12x8xf32>
    tpu.vector_store %arg23[%c0_164, %c88_165], %162 {strides = array<i32>} : memref<12x96xf32, #tpu.memory_space<vmem>>, vector<12x8xf32>,
    %c0_166 = arith.constant 0 : index
    %c0_167 = arith.constant 0 : index
    %164 = vector.load %arg23[%c0_166, %c0_167] : memref<12x96xf32, #tpu.memory_space<vmem>>, vector<10x80xf32>
    %165 = arith.truncf %164 : vector<10x80xf32> to vector<10x80xbf16>
    %c0_168 = arith.constant 0 : index
    %c0_169 = arith.constant 0 : index
    %c0_170 = arith.constant 0 : index
    %166 = vector.load %arg4[%c0_168, %c0_169, %c0_170] : memref<9x80x160xbf16, #tpu.memory_space<vmem>>, vector<1x80x160xbf16>
    %167 = vector.shape_cast %166 : vector<1x80x160xbf16> to vector<80x160xbf16>
    %cst_171 = arith.constant dense<0.000000e+00> : vector<10x160xf32>
    %168 = tpu.matmul %165, %167, %cst_171 {dimension_numbers = #tpu.dot_dimension_numbers<[1], [0], [0], [1], [0, 0, 1, 1], [], []>} : vector<10x80xbf16>, vector<80x160xbf16>, vector<10x160xf32> -> vector<10x160xf32>
    %c0_172 = arith.constant 0 : index
    %c8_173 = arith.constant 8 : index
    %169 = vector.load %arg23[%c0_172, %c8_173] : memref<12x96xf32, #tpu.memory_space<vmem>>, vector<10x80xf32>
    %170 = arith.truncf %169 : vector<10x80xf32> to vector<10x80xbf16>
    %c1_174 = arith.constant 1 : index
    %c0_175 = arith.constant 0 : index
    %c0_176 = arith.constant 0 : index
    %171 = vector.load %arg4[%c1_174, %c0_175, %c0_176] : memref<9x80x160xbf16, #tpu.memory_space<vmem>>, vector<1x80x160xbf16>
    %172 = vector.shape_cast %171 : vector<1x80x160xbf16> to vector<80x160xbf16>
    %cst_177 = arith.constant dense<0.000000e+00> : vector<10x160xf32>
    %173 = tpu.matmul %170, %172, %cst_177 {dimension_numbers = #tpu.dot_dimension_numbers<[1], [0], [0], [1], [0, 0, 1, 1], [], []>} : vector<10x80xbf16>, vector<80x160xbf16>, vector<10x160xf32> -> vector<10x160xf32>
    %174 = arith.addf %168, %173 : vector<10x160xf32>
    %c0_178 = arith.constant 0 : index
    %c16_179 = arith.constant 16 : index
    %175 = vector.load %arg23[%c0_178, %c16_179] : memref<12x96xf32, #tpu.memory_space<vmem>>, vector<10x80xf32>
    %176 = arith.truncf %175 : vector<10x80xf32> to vector<10x80xbf16>
    %c2_180 = arith.constant 2 : index
    %c0_181 = arith.constant 0 : index
    %c0_182 = arith.constant 0 : index
    %177 = vector.load %arg4[%c2_180, %c0_181, %c0_182] : memref<9x80x160xbf16, #tpu.memory_space<vmem>>, vector<1x80x160xbf16>
    %178 = vector.shape_cast %177 : vector<1x80x160xbf16> to vector<80x160xbf16>
    %cst_183 = arith.constant dense<0.000000e+00> : vector<10x160xf32>
    %179 = tpu.matmul %176, %178, %cst_183 {dimension_numbers = #tpu.dot_dimension_numbers<[1], [0], [0], [1], [0, 0, 1, 1], [], []>} : vector<10x80xbf16>, vector<80x160xbf16>, vector<10x160xf32> -> vector<10x160xf32>
    %180 = arith.addf %174, %179 : vector<10x160xf32>
    %c1_184 = arith.constant 1 : index
    %c0_185 = arith.constant 0 : index
    %181 = vector.load %arg23[%c1_184, %c0_185] : memref<12x96xf32, #tpu.memory_space<vmem>>, vector<10x80xf32>
    %182 = arith.truncf %181 : vector<10x80xf32> to vector<10x80xbf16>
    %c3_186 = arith.constant 3 : index
    %c0_187 = arith.constant 0 : index
    %c0_188 = arith.constant 0 : index
    %183 = vector.load %arg4[%c3_186, %c0_187, %c0_188] : memref<9x80x160xbf16, #tpu.memory_space<vmem>>, vector<1x80x160xbf16>
    %184 = vector.shape_cast %183 : vector<1x80x160xbf16> to vector<80x160xbf16>
    %cst_189 = arith.constant dense<0.000000e+00> : vector<10x160xf32>
    %185 = tpu.matmul %182, %184, %cst_189 {dimension_numbers = #tpu.dot_dimension_numbers<[1], [0], [0], [1], [0, 0, 1, 1], [], []>} : vector<10x80xbf16>, vector<80x160xbf16>, vector<10x160xf32> -> vector<10x160xf32>
    %186 = arith.addf %180, %185 : vector<10x160xf32>
    %c1_190 = arith.constant 1 : index
    %c8_191 = arith.constant 8 : index
    %187 = vector.load %arg23[%c1_190, %c8_191] : memref<12x96xf32, #tpu.memory_space<vmem>>, vector<10x80xf32>
    %188 = arith.truncf %187 : vector<10x80xf32> to vector<10x80xbf16>
    %c4_192 = arith.constant 4 : index
    %c0_193 = arith.constant 0 : index
    %c0_194 = arith.constant 0 : index
    %189 = vector.load %arg4[%c4_192, %c0_193, %c0_194] : memref<9x80x160xbf16, #tpu.memory_space<vmem>>, vector<1x80x160xbf16>
    %190 = vector.shape_cast %189 : vector<1x80x160xbf16> to vector<80x160xbf16>
    %cst_195 = arith.constant dense<0.000000e+00> : vector<10x160xf32>
    %191 = tpu.matmul %188, %190, %cst_195 {dimension_numbers = #tpu.dot_dimension_numbers<[1], [0], [0], [1], [0, 0, 1, 1], [], []>} : vector<10x80xbf16>, vector<80x160xbf16>, vector<10x160xf32> -> vector<10x160xf32>
    %192 = arith.addf %186, %191 : vector<10x160xf32>
    %c1_196 = arith.constant 1 : index
    %c16_197 = arith.constant 16 : index
    %193 = vector.load %arg23[%c1_196, %c16_197] : memref<12x96xf32, #tpu.memory_space<vmem>>, vector<10x80xf32>
    %194 = arith.truncf %193 : vector<10x80xf32> to vector<10x80xbf16>
    %c5_198 = arith.constant 5 : index
    %c0_199 = arith.constant 0 : index
    %c0_200 = arith.constant 0 : index
    %195 = vector.load %arg4[%c5_198, %c0_199, %c0_200] : memref<9x80x160xbf16, #tpu.memory_space<vmem>>, vector<1x80x160xbf16>
    %196 = vector.shape_cast %195 : vector<1x80x160xbf16> to vector<80x160xbf16>
    %cst_201 = arith.constant dense<0.000000e+00> : vector<10x160xf32>
    %197 = tpu.matmul %194, %196, %cst_201 {dimension_numbers = #tpu.dot_dimension_numbers<[1], [0], [0], [1], [0, 0, 1, 1], [], []>} : vector<10x80xbf16>, vector<80x160xbf16>, vector<10x160xf32> -> vector<10x160xf32>
    %198 = arith.addf %192, %197 : vector<10x160xf32>
    %c2_202 = arith.constant 2 : index
    %c0_203 = arith.constant 0 : index
    %199 = vector.load %arg23[%c2_202, %c0_203] : memref<12x96xf32, #tpu.memory_space<vmem>>, vector<10x80xf32>
    %200 = arith.truncf %199 : vector<10x80xf32> to vector<10x80xbf16>
    %c6_204 = arith.constant 6 : index
    %c0_205 = arith.constant 0 : index
    %c0_206 = arith.constant 0 : index
    %201 = vector.load %arg4[%c6_204, %c0_205, %c0_206] : memref<9x80x160xbf16, #tpu.memory_space<vmem>>, vector<1x80x160xbf16>
    %202 = vector.shape_cast %201 : vector<1x80x160xbf16> to vector<80x160xbf16>
    %cst_207 = arith.constant dense<0.000000e+00> : vector<10x160xf32>
    %203 = tpu.matmul %200, %202, %cst_207 {dimension_numbers = #tpu.dot_dimension_numbers<[1], [0], [0], [1], [0, 0, 1, 1], [], []>} : vector<10x80xbf16>, vector<80x160xbf16>, vector<10x160xf32> -> vector<10x160xf32>
    %204 = arith.addf %198, %203 : vector<10x160xf32>
    %c2_208 = arith.constant 2 : index
    %c8_209 = arith.constant 8 : index
    %205 = vector.load %arg23[%c2_208, %c8_209] : memref<12x96xf32, #tpu.memory_space<vmem>>, vector<10x80xf32>
    %206 = arith.truncf %205 : vector<10x80xf32> to vector<10x80xbf16>
    %c7_210 = arith.constant 7 : index
    %c0_211 = arith.constant 0 : index
    %c0_212 = arith.constant 0 : index
    %207 = vector.load %arg4[%c7_210, %c0_211, %c0_212] : memref<9x80x160xbf16, #tpu.memory_space<vmem>>, vector<1x80x160xbf16>
    %208 = vector.shape_cast %207 : vector<1x80x160xbf16> to vector<80x160xbf16>
    %cst_213 = arith.constant dense<0.000000e+00> : vector<10x160xf32>
    %209 = tpu.matmul %206, %208, %cst_213 {dimension_numbers = #tpu.dot_dimension_numbers<[1], [0], [0], [1], [0, 0, 1, 1], [], []>} : vector<10x80xbf16>, vector<80x160xbf16>, vector<10x160xf32> -> vector<10x160xf32>
    %210 = arith.addf %204, %209 : vector<10x160xf32>
    %c2_214 = arith.constant 2 : index
    %c16_215 = arith.constant 16 : index
    %211 = vector.load %arg23[%c2_214, %c16_215] : memref<12x96xf32, #tpu.memory_space<vmem>>, vector<10x80xf32>
    %212 = arith.truncf %211 : vector<10x80xf32> to vector<10x80xbf16>
    %c8_216 = arith.constant 8 : index
    %c0_217 = arith.constant 0 : index
    %c0_218 = arith.constant 0 : index
    %213 = vector.load %arg4[%c8_216, %c0_217, %c0_218] : memref<9x80x160xbf16, #tpu.memory_space<vmem>>, vector<1x80x160xbf16>
    %214 = vector.shape_cast %213 : vector<1x80x160xbf16> to vector<80x160xbf16>
    %cst_219 = arith.constant dense<0.000000e+00> : vector<10x160xf32>
    %215 = tpu.matmul %212, %214, %cst_219 {dimension_numbers = #tpu.dot_dimension_numbers<[1], [0], [0], [1], [0, 0, 1, 1], [], []>} : vector<10x80xbf16>, vector<80x160xbf16>, vector<10x160xf32> -> vector<10x160xf32>
    %216 = arith.addf %210, %215 : vector<10x160xf32>
    %c0_220 = arith.constant 0 : index
    %c0_221 = arith.constant 0 : index
    %217 = vector.load %arg5[%c0_220, %c0_221] : memref<1x160xf32, #tpu.memory_space<vmem>>, vector<1x160xf32>
    %218 = vector.broadcast %217 : vector<1x160xf32> to vector<10x160xf32>
    %219 = arith.addf %216, %218 : vector<10x160xf32>
    %cst_222 = arith.constant 0.000000e+00 : f32
    %220 = vector.broadcast %cst_222 : f32 to vector<10x160xf32>
    %221 = arith.maximumf %219, %220 : vector<10x160xf32>
    %c0_223 = arith.constant 0 : index
    %c0_224 = arith.constant 0 : index
    %222 = vector.load %arg24[%c0_223, %c0_224] : memref<10x160xf32, #tpu.memory_space<vmem>>, vector<10x160xf32>
    tpu.vector_store %arg24[%c0_223, %c0_224], %221 {strides = array<i32>} : memref<10x160xf32, #tpu.memory_space<vmem>>, vector<10x160xf32>,
    %c0_225 = arith.constant 0 : index
    %c0_226 = arith.constant 0 : index
    %223 = vector.load %arg24[%c0_225, %c0_226] : memref<10x160xf32, #tpu.memory_space<vmem>>, vector<1x160xf32>
    %c1_227 = arith.constant 1 : index
    %c0_228 = arith.constant 0 : index
    %224 = vector.load %arg24[%c1_227, %c0_228] : memref<10x160xf32, #tpu.memory_space<vmem>>, vector<1x160xf32>
    %225 = arith.maximumf %223, %224 : vector<1x160xf32>
    %c0_229 = arith.constant 0 : index
    %c0_230 = arith.constant 0 : index
    %226 = vector.load %arg25[%c0_229, %c0_230] : memref<5x160xf32, #tpu.memory_space<vmem>>, vector<1x160xf32>
    tpu.vector_store %arg25[%c0_229, %c0_230], %225 {strides = array<i32>} : memref<5x160xf32, #tpu.memory_space<vmem>>, vector<1x160xf32>,
    %c2_231 = arith.constant 2 : index
    %c0_232 = arith.constant 0 : index
    %227 = vector.load %arg24[%c2_231, %c0_232] : memref<10x160xf32, #tpu.memory_space<vmem>>, vector<1x160xf32>
    %c3_233 = arith.constant 3 : index
    %c0_234 = arith.constant 0 : index
    %228 = vector.load %arg24[%c3_233, %c0_234] : memref<10x160xf32, #tpu.memory_space<vmem>>, vector<1x160xf32>
    %229 = arith.maximumf %227, %228 : vector<1x160xf32>
    %c1_235 = arith.constant 1 : index
    %c0_236 = arith.constant 0 : index
    %230 = vector.load %arg25[%c1_235, %c0_236] : memref<5x160xf32, #tpu.memory_space<vmem>>, vector<1x160xf32>
    tpu.vector_store %arg25[%c1_235, %c0_236], %229 {strides = array<i32>} : memref<5x160xf32, #tpu.memory_space<vmem>>, vector<1x160xf32>,
    %c4_237 = arith.constant 4 : index
    %c0_238 = arith.constant 0 : index
    %231 = vector.load %arg24[%c4_237, %c0_238] : memref<10x160xf32, #tpu.memory_space<vmem>>, vector<1x160xf32>
    %c5_239 = arith.constant 5 : index
    %c0_240 = arith.constant 0 : index
    %232 = vector.load %arg24[%c5_239, %c0_240] : memref<10x160xf32, #tpu.memory_space<vmem>>, vector<1x160xf32>
    %233 = arith.maximumf %231, %232 : vector<1x160xf32>
    %c2_241 = arith.constant 2 : index
    %c0_242 = arith.constant 0 : index
    %234 = vector.load %arg25[%c2_241, %c0_242] : memref<5x160xf32, #tpu.memory_space<vmem>>, vector<1x160xf32>
    tpu.vector_store %arg25[%c2_241, %c0_242], %233 {strides = array<i32>} : memref<5x160xf32, #tpu.memory_space<vmem>>, vector<1x160xf32>,
    %c6_243 = arith.constant 6 : index
    %c0_244 = arith.constant 0 : index
    %235 = vector.load %arg24[%c6_243, %c0_244] : memref<10x160xf32, #tpu.memory_space<vmem>>, vector<1x160xf32>
    %c7_245 = arith.constant 7 : index
    %c0_246 = arith.constant 0 : index
    %236 = vector.load %arg24[%c7_245, %c0_246] : memref<10x160xf32, #tpu.memory_space<vmem>>, vector<1x160xf32>
    %237 = arith.maximumf %235, %236 : vector<1x160xf32>
    %c3_247 = arith.constant 3 : index
    %c0_248 = arith.constant 0 : index
    %238 = vector.load %arg25[%c3_247, %c0_248] : memref<5x160xf32, #tpu.memory_space<vmem>>, vector<1x160xf32>
    tpu.vector_store %arg25[%c3_247, %c0_248], %237 {strides = array<i32>} : memref<5x160xf32, #tpu.memory_space<vmem>>, vector<1x160xf32>,
    %c8_249 = arith.constant 8 : index
    %c0_250 = arith.constant 0 : index
    %239 = vector.load %arg24[%c8_249, %c0_250] : memref<10x160xf32, #tpu.memory_space<vmem>>, vector<1x160xf32>
    %c9_251 = arith.constant 9 : index
    %c0_252 = arith.constant 0 : index
    %240 = vector.load %arg24[%c9_251, %c0_252] : memref<10x160xf32, #tpu.memory_space<vmem>>, vector<1x160xf32>
    %241 = arith.maximumf %239, %240 : vector<1x160xf32>
    %c4_253 = arith.constant 4 : index
    %c0_254 = arith.constant 0 : index
    %242 = vector.load %arg25[%c4_253, %c0_254] : memref<5x160xf32, #tpu.memory_space<vmem>>, vector<1x160xf32>
    tpu.vector_store %arg25[%c4_253, %c0_254], %241 {strides = array<i32>} : memref<5x160xf32, #tpu.memory_space<vmem>>, vector<1x160xf32>,
    %c0_255 = arith.constant 0 : index
    %c0_256 = arith.constant 0 : index
    %243 = vector.load %arg25[%c0_255, %c0_256] : memref<5x160xf32, #tpu.memory_space<vmem>>, vector<5x16xf32>
    %c0_257 = arith.constant 0 : index
    %c16_258 = arith.constant 16 : index
    %244 = vector.load %arg25[%c0_257, %c16_258] : memref<5x160xf32, #tpu.memory_space<vmem>>, vector<5x16xf32>
    %245 = arith.maximumf %243, %244 : vector<5x16xf32>
    %c0_259 = arith.constant 0 : index
    %c0_260 = arith.constant 0 : index
    %246 = vector.load %arg26[%c0_259, %c0_260] : memref<5x80xf32, #tpu.memory_space<vmem>>, vector<5x16xf32>
    tpu.vector_store %arg26[%c0_259, %c0_260], %245 {strides = array<i32>} : memref<5x80xf32, #tpu.memory_space<vmem>>, vector<5x16xf32>,
    %c0_261 = arith.constant 0 : index
    %c32_262 = arith.constant 32 : index
    %247 = vector.load %arg25[%c0_261, %c32_262] : memref<5x160xf32, #tpu.memory_space<vmem>>, vector<5x16xf32>
    %c0_263 = arith.constant 0 : index
    %c48_264 = arith.constant 48 : index
    %248 = vector.load %arg25[%c0_263, %c48_264] : memref<5x160xf32, #tpu.memory_space<vmem>>, vector<5x16xf32>
    %249 = arith.maximumf %247, %248 : vector<5x16xf32>
    %c0_265 = arith.constant 0 : index
    %c16_266 = arith.constant 16 : index
    %250 = vector.load %arg26[%c0_265, %c16_266] : memref<5x80xf32, #tpu.memory_space<vmem>>, vector<5x16xf32>
    tpu.vector_store %arg26[%c0_265, %c16_266], %249 {strides = array<i32>} : memref<5x80xf32, #tpu.memory_space<vmem>>, vector<5x16xf32>,
    %c0_267 = arith.constant 0 : index
    %c64_268 = arith.constant 64 : index
    %251 = vector.load %arg25[%c0_267, %c64_268] : memref<5x160xf32, #tpu.memory_space<vmem>>, vector<5x16xf32>
    %c0_269 = arith.constant 0 : index
    %c80_270 = arith.constant 80 : index
    %252 = vector.load %arg25[%c0_269, %c80_270] : memref<5x160xf32, #tpu.memory_space<vmem>>, vector<5x16xf32>
    %253 = arith.maximumf %251, %252 : vector<5x16xf32>
    %c0_271 = arith.constant 0 : index
    %c32_272 = arith.constant 32 : index
    %254 = vector.load %arg26[%c0_271, %c32_272] : memref<5x80xf32, #tpu.memory_space<vmem>>, vector<5x16xf32>
    tpu.vector_store %arg26[%c0_271, %c32_272], %253 {strides = array<i32>} : memref<5x80xf32, #tpu.memory_space<vmem>>, vector<5x16xf32>,
    %c0_273 = arith.constant 0 : index
    %c96_274 = arith.constant 96 : index
    %255 = vector.load %arg25[%c0_273, %c96_274] : memref<5x160xf32, #tpu.memory_space<vmem>>, vector<5x16xf32>
    %c0_275 = arith.constant 0 : index
    %c112_276 = arith.constant 112 : index
    %256 = vector.load %arg25[%c0_275, %c112_276] : memref<5x160xf32, #tpu.memory_space<vmem>>, vector<5x16xf32>
    %257 = arith.maximumf %255, %256 : vector<5x16xf32>
    %c0_277 = arith.constant 0 : index
    %c48_278 = arith.constant 48 : index
    %258 = vector.load %arg26[%c0_277, %c48_278] : memref<5x80xf32, #tpu.memory_space<vmem>>, vector<5x16xf32>
    tpu.vector_store %arg26[%c0_277, %c48_278], %257 {strides = array<i32>} : memref<5x80xf32, #tpu.memory_space<vmem>>, vector<5x16xf32>,
    %c0_279 = arith.constant 0 : index
    %c128_280 = arith.constant 128 : index
    %259 = vector.load %arg25[%c0_279, %c128_280] : memref<5x160xf32, #tpu.memory_space<vmem>>, vector<5x16xf32>
    %c0_281 = arith.constant 0 : index
    %c144_282 = arith.constant 144 : index
    %260 = vector.load %arg25[%c0_281, %c144_282] : memref<5x160xf32, #tpu.memory_space<vmem>>, vector<5x16xf32>
    %261 = arith.maximumf %259, %260 : vector<5x16xf32>
    %c0_283 = arith.constant 0 : index
    %c64_284 = arith.constant 64 : index
    %262 = vector.load %arg26[%c0_283, %c64_284] : memref<5x80xf32, #tpu.memory_space<vmem>>, vector<5x16xf32>
    tpu.vector_store %arg26[%c0_283, %c64_284], %261 {strides = array<i32>} : memref<5x80xf32, #tpu.memory_space<vmem>>, vector<5x16xf32>,
    %c0_285 = arith.constant 0 : index
    %c0_286 = arith.constant 0 : index
    %263 = vector.load %arg26[%c0_285, %c0_286] : memref<5x80xf32, #tpu.memory_space<vmem>>, vector<3x48xf32>
    %264 = arith.truncf %263 : vector<3x48xf32> to vector<3x48xbf16>
    %c0_287 = arith.constant 0 : index
    %c0_288 = arith.constant 0 : index
    %c0_289 = arith.constant 0 : index
    %265 = vector.load %arg6[%c0_287, %c0_288, %c0_289] : memref<9x48x96xbf16, #tpu.memory_space<vmem>>, vector<1x48x96xbf16>
    %266 = vector.shape_cast %265 : vector<1x48x96xbf16> to vector<48x96xbf16>
    %cst_290 = arith.constant dense<0.000000e+00> : vector<3x96xf32>
    %267 = tpu.matmul %264, %266, %cst_290 {dimension_numbers = #tpu.dot_dimension_numbers<[1], [0], [0], [1], [0, 0, 1, 1], [], []>} : vector<3x48xbf16>, vector<48x96xbf16>, vector<3x96xf32> -> vector<3x96xf32>
    %c0_291 = arith.constant 0 : index
    %c16_292 = arith.constant 16 : index
    %268 = vector.load %arg26[%c0_291, %c16_292] : memref<5x80xf32, #tpu.memory_space<vmem>>, vector<3x48xf32>
    %269 = arith.truncf %268 : vector<3x48xf32> to vector<3x48xbf16>
    %c1_293 = arith.constant 1 : index
    %c0_294 = arith.constant 0 : index
    %c0_295 = arith.constant 0 : index
    %270 = vector.load %arg6[%c1_293, %c0_294, %c0_295] : memref<9x48x96xbf16, #tpu.memory_space<vmem>>, vector<1x48x96xbf16>
    %271 = vector.shape_cast %270 : vector<1x48x96xbf16> to vector<48x96xbf16>
    %cst_296 = arith.constant dense<0.000000e+00> : vector<3x96xf32>
    %272 = tpu.matmul %269, %271, %cst_296 {dimension_numbers = #tpu.dot_dimension_numbers<[1], [0], [0], [1], [0, 0, 1, 1], [], []>} : vector<3x48xbf16>, vector<48x96xbf16>, vector<3x96xf32> -> vector<3x96xf32>
    %273 = arith.addf %267, %272 : vector<3x96xf32>
    %c0_297 = arith.constant 0 : index
    %c32_298 = arith.constant 32 : index
    %274 = vector.load %arg26[%c0_297, %c32_298] : memref<5x80xf32, #tpu.memory_space<vmem>>, vector<3x48xf32>
    %275 = arith.truncf %274 : vector<3x48xf32> to vector<3x48xbf16>
    %c2_299 = arith.constant 2 : index
    %c0_300 = arith.constant 0 : index
    %c0_301 = arith.constant 0 : index
    %276 = vector.load %arg6[%c2_299, %c0_300, %c0_301] : memref<9x48x96xbf16, #tpu.memory_space<vmem>>, vector<1x48x96xbf16>
    %277 = vector.shape_cast %276 : vector<1x48x96xbf16> to vector<48x96xbf16>
    %cst_302 = arith.constant dense<0.000000e+00> : vector<3x96xf32>
    %278 = tpu.matmul %275, %277, %cst_302 {dimension_numbers = #tpu.dot_dimension_numbers<[1], [0], [0], [1], [0, 0, 1, 1], [], []>} : vector<3x48xbf16>, vector<48x96xbf16>, vector<3x96xf32> -> vector<3x96xf32>
    %279 = arith.addf %273, %278 : vector<3x96xf32>
    %c1_303 = arith.constant 1 : index
    %c0_304 = arith.constant 0 : index
    %280 = vector.load %arg26[%c1_303, %c0_304] : memref<5x80xf32, #tpu.memory_space<vmem>>, vector<3x48xf32>
    %281 = arith.truncf %280 : vector<3x48xf32> to vector<3x48xbf16>
    %c3_305 = arith.constant 3 : index
    %c0_306 = arith.constant 0 : index
    %c0_307 = arith.constant 0 : index
    %282 = vector.load %arg6[%c3_305, %c0_306, %c0_307] : memref<9x48x96xbf16, #tpu.memory_space<vmem>>, vector<1x48x96xbf16>
    %283 = vector.shape_cast %282 : vector<1x48x96xbf16> to vector<48x96xbf16>
    %cst_308 = arith.constant dense<0.000000e+00> : vector<3x96xf32>
    %284 = tpu.matmul %281, %283, %cst_308 {dimension_numbers = #tpu.dot_dimension_numbers<[1], [0], [0], [1], [0, 0, 1, 1], [], []>} : vector<3x48xbf16>, vector<48x96xbf16>, vector<3x96xf32> -> vector<3x96xf32>
    %285 = arith.addf %279, %284 : vector<3x96xf32>
    %c1_309 = arith.constant 1 : index
    %c16_310 = arith.constant 16 : index
    %286 = vector.load %arg26[%c1_309, %c16_310] : memref<5x80xf32, #tpu.memory_space<vmem>>, vector<3x48xf32>
    %287 = arith.truncf %286 : vector<3x48xf32> to vector<3x48xbf16>
    %c4_311 = arith.constant 4 : index
    %c0_312 = arith.constant 0 : index
    %c0_313 = arith.constant 0 : index
    %288 = vector.load %arg6[%c4_311, %c0_312, %c0_313] : memref<9x48x96xbf16, #tpu.memory_space<vmem>>, vector<1x48x96xbf16>
    %289 = vector.shape_cast %288 : vector<1x48x96xbf16> to vector<48x96xbf16>
    %cst_314 = arith.constant dense<0.000000e+00> : vector<3x96xf32>
    %290 = tpu.matmul %287, %289, %cst_314 {dimension_numbers = #tpu.dot_dimension_numbers<[1], [0], [0], [1], [0, 0, 1, 1], [], []>} : vector<3x48xbf16>, vector<48x96xbf16>, vector<3x96xf32> -> vector<3x96xf32>
    %291 = arith.addf %285, %290 : vector<3x96xf32>
    %c1_315 = arith.constant 1 : index
    %c32_316 = arith.constant 32 : index
    %292 = vector.load %arg26[%c1_315, %c32_316] : memref<5x80xf32, #tpu.memory_space<vmem>>, vector<3x48xf32>
    %293 = arith.truncf %292 : vector<3x48xf32> to vector<3x48xbf16>
    %c5_317 = arith.constant 5 : index
    %c0_318 = arith.constant 0 : index
    %c0_319 = arith.constant 0 : index
    %294 = vector.load %arg6[%c5_317, %c0_318, %c0_319] : memref<9x48x96xbf16, #tpu.memory_space<vmem>>, vector<1x48x96xbf16>
    %295 = vector.shape_cast %294 : vector<1x48x96xbf16> to vector<48x96xbf16>
    %cst_320 = arith.constant dense<0.000000e+00> : vector<3x96xf32>
    %296 = tpu.matmul %293, %295, %cst_320 {dimension_numbers = #tpu.dot_dimension_numbers<[1], [0], [0], [1], [0, 0, 1, 1], [], []>} : vector<3x48xbf16>, vector<48x96xbf16>, vector<3x96xf32> -> vector<3x96xf32>
    %297 = arith.addf %291, %296 : vector<3x96xf32>
    %c2_321 = arith.constant 2 : index
    %c0_322 = arith.constant 0 : index
    %298 = vector.load %arg26[%c2_321, %c0_322] : memref<5x80xf32, #tpu.memory_space<vmem>>, vector<3x48xf32>
    %299 = arith.truncf %298 : vector<3x48xf32> to vector<3x48xbf16>
    %c6_323 = arith.constant 6 : index
    %c0_324 = arith.constant 0 : index
    %c0_325 = arith.constant 0 : index
    %300 = vector.load %arg6[%c6_323, %c0_324, %c0_325] : memref<9x48x96xbf16, #tpu.memory_space<vmem>>, vector<1x48x96xbf16>
    %301 = vector.shape_cast %300 : vector<1x48x96xbf16> to vector<48x96xbf16>
    %cst_326 = arith.constant dense<0.000000e+00> : vector<3x96xf32>
    %302 = tpu.matmul %299, %301, %cst_326 {dimension_numbers = #tpu.dot_dimension_numbers<[1], [0], [0], [1], [0, 0, 1, 1], [], []>} : vector<3x48xbf16>, vector<48x96xbf16>, vector<3x96xf32> -> vector<3x96xf32>
    %303 = arith.addf %297, %302 : vector<3x96xf32>
    %c2_327 = arith.constant 2 : index
    %c16_328 = arith.constant 16 : index
    %304 = vector.load %arg26[%c2_327, %c16_328] : memref<5x80xf32, #tpu.memory_space<vmem>>, vector<3x48xf32>
    %305 = arith.truncf %304 : vector<3x48xf32> to vector<3x48xbf16>
    %c7_329 = arith.constant 7 : index
    %c0_330 = arith.constant 0 : index
    %c0_331 = arith.constant 0 : index
    %306 = vector.load %arg6[%c7_329, %c0_330, %c0_331] : memref<9x48x96xbf16, #tpu.memory_space<vmem>>, vector<1x48x96xbf16>
    %307 = vector.shape_cast %306 : vector<1x48x96xbf16> to vector<48x96xbf16>
    %cst_332 = arith.constant dense<0.000000e+00> : vector<3x96xf32>
    %308 = tpu.matmul %305, %307, %cst_332 {dimension_numbers = #tpu.dot_dimension_numbers<[1], [0], [0], [1], [0, 0, 1, 1], [], []>} : vector<3x48xbf16>, vector<48x96xbf16>, vector<3x96xf32> -> vector<3x96xf32>
    %309 = arith.addf %303, %308 : vector<3x96xf32>
    %c2_333 = arith.constant 2 : index
    %c32_334 = arith.constant 32 : index
    %310 = vector.load %arg26[%c2_333, %c32_334] : memref<5x80xf32, #tpu.memory_space<vmem>>, vector<3x48xf32>
    %311 = arith.truncf %310 : vector<3x48xf32> to vector<3x48xbf16>
    %c8_335 = arith.constant 8 : index
    %c0_336 = arith.constant 0 : index
    %c0_337 = arith.constant 0 : index
    %312 = vector.load %arg6[%c8_335, %c0_336, %c0_337] : memref<9x48x96xbf16, #tpu.memory_space<vmem>>, vector<1x48x96xbf16>
    %313 = vector.shape_cast %312 : vector<1x48x96xbf16> to vector<48x96xbf16>
    %cst_338 = arith.constant dense<0.000000e+00> : vector<3x96xf32>
    %314 = tpu.matmul %311, %313, %cst_338 {dimension_numbers = #tpu.dot_dimension_numbers<[1], [0], [0], [1], [0, 0, 1, 1], [], []>} : vector<3x48xbf16>, vector<48x96xbf16>, vector<3x96xf32> -> vector<3x96xf32>
    %315 = arith.addf %309, %314 : vector<3x96xf32>
    %c0_339 = arith.constant 0 : index
    %c0_340 = arith.constant 0 : index
    %316 = vector.load %arg7[%c0_339, %c0_340] : memref<1x96xf32, #tpu.memory_space<vmem>>, vector<1x96xf32>
    %317 = vector.broadcast %316 : vector<1x96xf32> to vector<3x96xf32>
    %318 = arith.addf %315, %317 : vector<3x96xf32>
    %cst_341 = arith.constant 0.000000e+00 : f32
    %319 = vector.broadcast %cst_341 : f32 to vector<3x96xf32>
    %320 = arith.maximumf %318, %319 : vector<3x96xf32>
    %321 = arith.truncf %320 : vector<3x96xf32> to vector<3x96xbf16>
    %c0_342 = arith.constant 0 : index
    %c0_343 = arith.constant 0 : index
    %c0_344 = arith.constant 0 : index
    %322 = vector.load %arg8[%c0_342, %c0_343, %c0_344] : memref<2x96x96xbf16, #tpu.memory_space<vmem>>, vector<1x96x96xbf16>
    %323 = vector.shape_cast %322 : vector<1x96x96xbf16> to vector<96x96xbf16>
    %cst_345 = arith.constant dense<0.000000e+00> : vector<3x96xf32>
    %324 = tpu.matmul %321, %323, %cst_345 {dimension_numbers = #tpu.dot_dimension_numbers<[1], [0], [0], [1], [0, 0, 1, 1], [], []>} : vector<3x96xbf16>, vector<96x96xbf16>, vector<3x96xf32> -> vector<3x96xf32>
    %c0_346 = arith.constant 0 : index
    %c0_347 = arith.constant 0 : index
    %325 = vector.load %arg9[%c0_346, %c0_347] : memref<1x96xf32, #tpu.memory_space<vmem>>, vector<1x96xf32>
    %326 = vector.broadcast %325 : vector<1x96xf32> to vector<3x96xf32>
    %327 = arith.addf %324, %326 : vector<3x96xf32>
    %328 = vector.extract_strided_slice %327 {offsets = [0, 0], sizes = [1, 96], strides = [1, 1]} : vector<3x96xf32> to vector<1x96xf32>
    %c0_348 = arith.constant 0 : index
    %c0_349 = arith.constant 0 : index
    %329 = vector.load %arg27[%c0_348, %c0_349] : memref<6x96xf32, #tpu.memory_space<vmem>>, vector<1x96xf32>
    tpu.vector_store %arg27[%c0_348, %c0_349], %328 {strides = array<i32>} : memref<6x96xf32, #tpu.memory_space<vmem>>, vector<1x96xf32>,
    %330 = vector.extract_strided_slice %327 {offsets = [1, 0], sizes = [1, 96], strides = [1, 1]} : vector<3x96xf32> to vector<1x96xf32>
    %c2_350 = arith.constant 2 : index
    %c0_351 = arith.constant 0 : index
    %331 = vector.load %arg27[%c2_350, %c0_351] : memref<6x96xf32, #tpu.memory_space<vmem>>, vector<1x96xf32>
    tpu.vector_store %arg27[%c2_350, %c0_351], %330 {strides = array<i32>} : memref<6x96xf32, #tpu.memory_space<vmem>>, vector<1x96xf32>,
    %332 = vector.extract_strided_slice %327 {offsets = [2, 0], sizes = [1, 96], strides = [1, 1]} : vector<3x96xf32> to vector<1x96xf32>
    %c4_352 = arith.constant 4 : index
    %c0_353 = arith.constant 0 : index
    %333 = vector.load %arg27[%c4_352, %c0_353] : memref<6x96xf32, #tpu.memory_space<vmem>>, vector<1x96xf32>
    tpu.vector_store %arg27[%c4_352, %c0_353], %332 {strides = array<i32>} : memref<6x96xf32, #tpu.memory_space<vmem>>, vector<1x96xf32>,
    %c1_354 = arith.constant 1 : index
    %c0_355 = arith.constant 0 : index
    %c0_356 = arith.constant 0 : index
    %334 = vector.load %arg8[%c1_354, %c0_355, %c0_356] : memref<2x96x96xbf16, #tpu.memory_space<vmem>>, vector<1x96x96xbf16>
    %335 = vector.shape_cast %334 : vector<1x96x96xbf16> to vector<96x96xbf16>
    %cst_357 = arith.constant dense<0.000000e+00> : vector<3x96xf32>
    %336 = tpu.matmul %321, %335, %cst_357 {dimension_numbers = #tpu.dot_dimension_numbers<[1], [0], [0], [1], [0, 0, 1, 1], [], []>} : vector<3x96xbf16>, vector<96x96xbf16>, vector<3x96xf32> -> vector<3x96xf32>
    %c0_358 = arith.constant 0 : index
    %c0_359 = arith.constant 0 : index
    %337 = vector.load %arg9[%c0_358, %c0_359] : memref<1x96xf32, #tpu.memory_space<vmem>>, vector<1x96xf32>
    %338 = vector.broadcast %337 : vector<1x96xf32> to vector<3x96xf32>
    %339 = arith.addf %336, %338 : vector<3x96xf32>
    %340 = vector.extract_strided_slice %339 {offsets = [0, 0], sizes = [1, 96], strides = [1, 1]} : vector<3x96xf32> to vector<1x96xf32>
    %c1_360 = arith.constant 1 : index
    %c0_361 = arith.constant 0 : index
    %341 = vector.load %arg27[%c1_360, %c0_361] : memref<6x96xf32, #tpu.memory_space<vmem>>, vector<1x96xf32>
    tpu.vector_store %arg27[%c1_360, %c0_361], %340 {strides = array<i32>} : memref<6x96xf32, #tpu.memory_space<vmem>>, vector<1x96xf32>,
    %342 = vector.extract_strided_slice %339 {offsets = [1, 0], sizes = [1, 96], strides = [1, 1]} : vector<3x96xf32> to vector<1x96xf32>
    %c3_362 = arith.constant 3 : index
    %c0_363 = arith.constant 0 : index
    %343 = vector.load %arg27[%c3_362, %c0_363] : memref<6x96xf32, #tpu.memory_space<vmem>>, vector<1x96xf32>
    tpu.vector_store %arg27[%c3_362, %c0_363], %342 {strides = array<i32>} : memref<6x96xf32, #tpu.memory_space<vmem>>, vector<1x96xf32>,
    %344 = vector.extract_strided_slice %339 {offsets = [2, 0], sizes = [1, 96], strides = [1, 1]} : vector<3x96xf32> to vector<1x96xf32>
    %c5_364 = arith.constant 5 : index
    %c0_365 = arith.constant 0 : index
    %345 = vector.load %arg27[%c5_364, %c0_365] : memref<6x96xf32, #tpu.memory_space<vmem>>, vector<1x96xf32>
    tpu.vector_store %arg27[%c5_364, %c0_365], %344 {strides = array<i32>} : memref<6x96xf32, #tpu.memory_space<vmem>>, vector<1x96xf32>,
    %c0_366 = arith.constant 0 : index
    %c0_367 = arith.constant 0 : index
    %346 = vector.load %arg27[%c0_366, %c0_367] : memref<6x96xf32, #tpu.memory_space<vmem>>, vector<4x64xf32>
    %347 = arith.truncf %346 : vector<4x64xf32> to vector<4x64xbf16>
    %c0_368 = arith.constant 0 : index
    %c0_369 = arith.constant 0 : index
    %c0_370 = arith.constant 0 : index
    %348 = vector.load %arg10[%c0_368, %c0_369, %c0_370] : memref<9x64x64xbf16, #tpu.memory_space<vmem>>, vector<1x64x64xbf16>
    %349 = vector.shape_cast %348 : vector<1x64x64xbf16> to vector<64x64xbf16>
    %cst_371 = arith.constant dense<0.000000e+00> : vector<4x64xf32>
    %350 = tpu.matmul %347, %349, %cst_371 {dimension_numbers = #tpu.dot_dimension_numbers<[1], [0], [0], [1], [0, 0, 1, 1], [], []>} : vector<4x64xbf16>, vector<64x64xbf16>, vector<4x64xf32> -> vector<4x64xf32>
    %c2_372 = arith.constant 2 : index
    %c32_373 = arith.constant 32 : index
    %351 = vector.load %arg24[%c2_372, %c32_373] : memref<10x160xf32, #tpu.memory_space<vmem>>, vector<4x64xf32>
    %352 = arith.truncf %351 : vector<4x64xf32> to vector<4x64xbf16>
    %c0_374 = arith.constant 0 : index
    %c0_375 = arith.constant 0 : index
    %c0_376 = arith.constant 0 : index
    %353 = vector.load %arg11[%c0_374, %c0_375, %c0_376] : memref<9x64x64xbf16, #tpu.memory_space<vmem>>, vector<1x64x64xbf16>
    %354 = vector.shape_cast %353 : vector<1x64x64xbf16> to vector<64x64xbf16>
    %cst_377 = arith.constant dense<0.000000e+00> : vector<4x64xf32>
    %355 = tpu.matmul %352, %354, %cst_377 {dimension_numbers = #tpu.dot_dimension_numbers<[1], [0], [0], [1], [0, 0, 1, 1], [], []>} : vector<4x64xbf16>, vector<64x64xbf16>, vector<4x64xf32> -> vector<4x64xf32>
    %356 = arith.addf %350, %355 : vector<4x64xf32>
    %c0_378 = arith.constant 0 : index
    %c16_379 = arith.constant 16 : index
    %357 = vector.load %arg27[%c0_378, %c16_379] : memref<6x96xf32, #tpu.memory_space<vmem>>, vector<4x64xf32>
    %358 = arith.truncf %357 : vector<4x64xf32> to vector<4x64xbf16>
    %c1_380 = arith.constant 1 : index
    %c0_381 = arith.constant 0 : index
    %c0_382 = arith.constant 0 : index
    %359 = vector.load %arg10[%c1_380, %c0_381, %c0_382] : memref<9x64x64xbf16, #tpu.memory_space<vmem>>, vector<1x64x64xbf16>
    %360 = vector.shape_cast %359 : vector<1x64x64xbf16> to vector<64x64xbf16>
    %cst_383 = arith.constant dense<0.000000e+00> : vector<4x64xf32>
    %361 = tpu.matmul %358, %360, %cst_383 {dimension_numbers = #tpu.dot_dimension_numbers<[1], [0], [0], [1], [0, 0, 1, 1], [], []>} : vector<4x64xbf16>, vector<64x64xbf16>, vector<4x64xf32> -> vector<4x64xf32>
    %362 = arith.addf %356, %361 : vector<4x64xf32>
    %c2_384 = arith.constant 2 : index
    %c48_385 = arith.constant 48 : index
    %363 = vector.load %arg24[%c2_384, %c48_385] : memref<10x160xf32, #tpu.memory_space<vmem>>, vector<4x64xf32>
    %364 = arith.truncf %363 : vector<4x64xf32> to vector<4x64xbf16>
    %c1_386 = arith.constant 1 : index
    %c0_387 = arith.constant 0 : index
    %c0_388 = arith.constant 0 : index
    %365 = vector.load %arg11[%c1_386, %c0_387, %c0_388] : memref<9x64x64xbf16, #tpu.memory_space<vmem>>, vector<1x64x64xbf16>
    %366 = vector.shape_cast %365 : vector<1x64x64xbf16> to vector<64x64xbf16>
    %cst_389 = arith.constant dense<0.000000e+00> : vector<4x64xf32>
    %367 = tpu.matmul %364, %366, %cst_389 {dimension_numbers = #tpu.dot_dimension_numbers<[1], [0], [0], [1], [0, 0, 1, 1], [], []>} : vector<4x64xbf16>, vector<64x64xbf16>, vector<4x64xf32> -> vector<4x64xf32>
    %368 = arith.addf %362, %367 : vector<4x64xf32>
    %c0_390 = arith.constant 0 : index
    %c32_391 = arith.constant 32 : index
    %369 = vector.load %arg27[%c0_390, %c32_391] : memref<6x96xf32, #tpu.memory_space<vmem>>, vector<4x64xf32>
    %370 = arith.truncf %369 : vector<4x64xf32> to vector<4x64xbf16>
    %c2_392 = arith.constant 2 : index
    %c0_393 = arith.constant 0 : index
    %c0_394 = arith.constant 0 : index
    %371 = vector.load %arg10[%c2_392, %c0_393, %c0_394] : memref<9x64x64xbf16, #tpu.memory_space<vmem>>, vector<1x64x64xbf16>
    %372 = vector.shape_cast %371 : vector<1x64x64xbf16> to vector<64x64xbf16>
    %cst_395 = arith.constant dense<0.000000e+00> : vector<4x64xf32>
    %373 = tpu.matmul %370, %372, %cst_395 {dimension_numbers = #tpu.dot_dimension_numbers<[1], [0], [0], [1], [0, 0, 1, 1], [], []>} : vector<4x64xbf16>, vector<64x64xbf16>, vector<4x64xf32> -> vector<4x64xf32>
    %374 = arith.addf %368, %373 : vector<4x64xf32>
    %c2_396 = arith.constant 2 : index
    %c64_397 = arith.constant 64 : index
    %375 = vector.load %arg24[%c2_396, %c64_397] : memref<10x160xf32, #tpu.memory_space<vmem>>, vector<4x64xf32>
    %376 = arith.truncf %375 : vector<4x64xf32> to vector<4x64xbf16>
    %c2_398 = arith.constant 2 : index
    %c0_399 = arith.constant 0 : index
    %c0_400 = arith.constant 0 : index
    %377 = vector.load %arg11[%c2_398, %c0_399, %c0_400] : memref<9x64x64xbf16, #tpu.memory_space<vmem>>, vector<1x64x64xbf16>
    %378 = vector.shape_cast %377 : vector<1x64x64xbf16> to vector<64x64xbf16>
    %cst_401 = arith.constant dense<0.000000e+00> : vector<4x64xf32>
    %379 = tpu.matmul %376, %378, %cst_401 {dimension_numbers = #tpu.dot_dimension_numbers<[1], [0], [0], [1], [0, 0, 1, 1], [], []>} : vector<4x64xbf16>, vector<64x64xbf16>, vector<4x64xf32> -> vector<4x64xf32>
    %380 = arith.addf %374, %379 : vector<4x64xf32>
    %c1_402 = arith.constant 1 : index
    %c0_403 = arith.constant 0 : index
    %381 = vector.load %arg27[%c1_402, %c0_403] : memref<6x96xf32, #tpu.memory_space<vmem>>, vector<4x64xf32>
    %382 = arith.truncf %381 : vector<4x64xf32> to vector<4x64xbf16>
    %c3_404 = arith.constant 3 : index
    %c0_405 = arith.constant 0 : index
    %c0_406 = arith.constant 0 : index
    %383 = vector.load %arg10[%c3_404, %c0_405, %c0_406] : memref<9x64x64xbf16, #tpu.memory_space<vmem>>, vector<1x64x64xbf16>
    %384 = vector.shape_cast %383 : vector<1x64x64xbf16> to vector<64x64xbf16>
    %cst_407 = arith.constant dense<0.000000e+00> : vector<4x64xf32>
    %385 = tpu.matmul %382, %384, %cst_407 {dimension_numbers = #tpu.dot_dimension_numbers<[1], [0], [0], [1], [0, 0, 1, 1], [], []>} : vector<4x64xbf16>, vector<64x64xbf16>, vector<4x64xf32> -> vector<4x64xf32>
    %386 = arith.addf %380, %385 : vector<4x64xf32>
    %c3_408 = arith.constant 3 : index
    %c32_409 = arith.constant 32 : index
    %387 = vector.load %arg24[%c3_408, %c32_409] : memref<10x160xf32, #tpu.memory_space<vmem>>, vector<4x64xf32>
    %388 = arith.truncf %387 : vector<4x64xf32> to vector<4x64xbf16>
    %c3_410 = arith.constant 3 : index
    %c0_411 = arith.constant 0 : index
    %c0_412 = arith.constant 0 : index
    %389 = vector.load %arg11[%c3_410, %c0_411, %c0_412] : memref<9x64x64xbf16, #tpu.memory_space<vmem>>, vector<1x64x64xbf16>
    %390 = vector.shape_cast %389 : vector<1x64x64xbf16> to vector<64x64xbf16>
    %cst_413 = arith.constant dense<0.000000e+00> : vector<4x64xf32>
    %391 = tpu.matmul %388, %390, %cst_413 {dimension_numbers = #tpu.dot_dimension_numbers<[1], [0], [0], [1], [0, 0, 1, 1], [], []>} : vector<4x64xbf16>, vector<64x64xbf16>, vector<4x64xf32> -> vector<4x64xf32>
    %392 = arith.addf %386, %391 : vector<4x64xf32>
    %c1_414 = arith.constant 1 : index
    %c16_415 = arith.constant 16 : index
    %393 = vector.load %arg27[%c1_414, %c16_415] : memref<6x96xf32, #tpu.memory_space<vmem>>, vector<4x64xf32>
    %394 = arith.truncf %393 : vector<4x64xf32> to vector<4x64xbf16>
    %c4_416 = arith.constant 4 : index
    %c0_417 = arith.constant 0 : index
    %c0_418 = arith.constant 0 : index
    %395 = vector.load %arg10[%c4_416, %c0_417, %c0_418] : memref<9x64x64xbf16, #tpu.memory_space<vmem>>, vector<1x64x64xbf16>
    %396 = vector.shape_cast %395 : vector<1x64x64xbf16> to vector<64x64xbf16>
    %cst_419 = arith.constant dense<0.000000e+00> : vector<4x64xf32>
    %397 = tpu.matmul %394, %396, %cst_419 {dimension_numbers = #tpu.dot_dimension_numbers<[1], [0], [0], [1], [0, 0, 1, 1], [], []>} : vector<4x64xbf16>, vector<64x64xbf16>, vector<4x64xf32> -> vector<4x64xf32>
    %398 = arith.addf %392, %397 : vector<4x64xf32>
    %c3_420 = arith.constant 3 : index
    %c48_421 = arith.constant 48 : index
    %399 = vector.load %arg24[%c3_420, %c48_421] : memref<10x160xf32, #tpu.memory_space<vmem>>, vector<4x64xf32>
    %400 = arith.truncf %399 : vector<4x64xf32> to vector<4x64xbf16>
    %c4_422 = arith.constant 4 : index
    %c0_423 = arith.constant 0 : index
    %c0_424 = arith.constant 0 : index
    %401 = vector.load %arg11[%c4_422, %c0_423, %c0_424] : memref<9x64x64xbf16, #tpu.memory_space<vmem>>, vector<1x64x64xbf16>
    %402 = vector.shape_cast %401 : vector<1x64x64xbf16> to vector<64x64xbf16>
    %cst_425 = arith.constant dense<0.000000e+00> : vector<4x64xf32>
    %403 = tpu.matmul %400, %402, %cst_425 {dimension_numbers = #tpu.dot_dimension_numbers<[1], [0], [0], [1], [0, 0, 1, 1], [], []>} : vector<4x64xbf16>, vector<64x64xbf16>, vector<4x64xf32> -> vector<4x64xf32>
    %404 = arith.addf %398, %403 : vector<4x64xf32>
    %c1_426 = arith.constant 1 : index
    %c32_427 = arith.constant 32 : index
    %405 = vector.load %arg27[%c1_426, %c32_427] : memref<6x96xf32, #tpu.memory_space<vmem>>, vector<4x64xf32>
    %406 = arith.truncf %405 : vector<4x64xf32> to vector<4x64xbf16>
    %c5_428 = arith.constant 5 : index
    %c0_429 = arith.constant 0 : index
    %c0_430 = arith.constant 0 : index
    %407 = vector.load %arg10[%c5_428, %c0_429, %c0_430] : memref<9x64x64xbf16, #tpu.memory_space<vmem>>, vector<1x64x64xbf16>
    %408 = vector.shape_cast %407 : vector<1x64x64xbf16> to vector<64x64xbf16>
    %cst_431 = arith.constant dense<0.000000e+00> : vector<4x64xf32>
    %409 = tpu.matmul %406, %408, %cst_431 {dimension_numbers = #tpu.dot_dimension_numbers<[1], [0], [0], [1], [0, 0, 1, 1], [], []>} : vector<4x64xbf16>, vector<64x64xbf16>, vector<4x64xf32> -> vector<4x64xf32>
    %410 = arith.addf %404, %409 : vector<4x64xf32>
    %c3_432 = arith.constant 3 : index
    %c64_433 = arith.constant 64 : index
    %411 = vector.load %arg24[%c3_432, %c64_433] : memref<10x160xf32, #tpu.memory_space<vmem>>, vector<4x64xf32>
    %412 = arith.truncf %411 : vector<4x64xf32> to vector<4x64xbf16>
    %c5_434 = arith.constant 5 : index
    %c0_435 = arith.constant 0 : index
    %c0_436 = arith.constant 0 : index
    %413 = vector.load %arg11[%c5_434, %c0_435, %c0_436] : memref<9x64x64xbf16, #tpu.memory_space<vmem>>, vector<1x64x64xbf16>
    %414 = vector.shape_cast %413 : vector<1x64x64xbf16> to vector<64x64xbf16>
    %cst_437 = arith.constant dense<0.000000e+00> : vector<4x64xf32>
    %415 = tpu.matmul %412, %414, %cst_437 {dimension_numbers = #tpu.dot_dimension_numbers<[1], [0], [0], [1], [0, 0, 1, 1], [], []>} : vector<4x64xbf16>, vector<64x64xbf16>, vector<4x64xf32> -> vector<4x64xf32>
    %416 = arith.addf %410, %415 : vector<4x64xf32>
    %c2_438 = arith.constant 2 : index
    %c0_439 = arith.constant 0 : index
    %417 = vector.load %arg27[%c2_438, %c0_439] : memref<6x96xf32, #tpu.memory_space<vmem>>, vector<4x64xf32>
    %418 = arith.truncf %417 : vector<4x64xf32> to vector<4x64xbf16>
    %c6_440 = arith.constant 6 : index
    %c0_441 = arith.constant 0 : index
    %c0_442 = arith.constant 0 : index
    %419 = vector.load %arg10[%c6_440, %c0_441, %c0_442] : memref<9x64x64xbf16, #tpu.memory_space<vmem>>, vector<1x64x64xbf16>
    %420 = vector.shape_cast %419 : vector<1x64x64xbf16> to vector<64x64xbf16>
    %cst_443 = arith.constant dense<0.000000e+00> : vector<4x64xf32>
    %421 = tpu.matmul %418, %420, %cst_443 {dimension_numbers = #tpu.dot_dimension_numbers<[1], [0], [0], [1], [0, 0, 1, 1], [], []>} : vector<4x64xbf16>, vector<64x64xbf16>, vector<4x64xf32> -> vector<4x64xf32>
    %422 = arith.addf %416, %421 : vector<4x64xf32>
    %c4_444 = arith.constant 4 : index
    %c32_445 = arith.constant 32 : index
    %423 = vector.load %arg24[%c4_444, %c32_445] : memref<10x160xf32, #tpu.memory_space<vmem>>, vector<4x64xf32>
    %424 = arith.truncf %423 : vector<4x64xf32> to vector<4x64xbf16>
    %c6_446 = arith.constant 6 : index
    %c0_447 = arith.constant 0 : index
    %c0_448 = arith.constant 0 : index
    %425 = vector.load %arg11[%c6_446, %c0_447, %c0_448] : memref<9x64x64xbf16, #tpu.memory_space<vmem>>, vector<1x64x64xbf16>
    %426 = vector.shape_cast %425 : vector<1x64x64xbf16> to vector<64x64xbf16>
    %cst_449 = arith.constant dense<0.000000e+00> : vector<4x64xf32>
    %427 = tpu.matmul %424, %426, %cst_449 {dimension_numbers = #tpu.dot_dimension_numbers<[1], [0], [0], [1], [0, 0, 1, 1], [], []>} : vector<4x64xbf16>, vector<64x64xbf16>, vector<4x64xf32> -> vector<4x64xf32>
    %428 = arith.addf %422, %427 : vector<4x64xf32>
    %c2_450 = arith.constant 2 : index
    %c16_451 = arith.constant 16 : index
    %429 = vector.load %arg27[%c2_450, %c16_451] : memref<6x96xf32, #tpu.memory_space<vmem>>, vector<4x64xf32>
    %430 = arith.truncf %429 : vector<4x64xf32> to vector<4x64xbf16>
    %c7_452 = arith.constant 7 : index
    %c0_453 = arith.constant 0 : index
    %c0_454 = arith.constant 0 : index
    %431 = vector.load %arg10[%c7_452, %c0_453, %c0_454] : memref<9x64x64xbf16, #tpu.memory_space<vmem>>, vector<1x64x64xbf16>
    %432 = vector.shape_cast %431 : vector<1x64x64xbf16> to vector<64x64xbf16>
    %cst_455 = arith.constant dense<0.000000e+00> : vector<4x64xf32>
    %433 = tpu.matmul %430, %432, %cst_455 {dimension_numbers = #tpu.dot_dimension_numbers<[1], [0], [0], [1], [0, 0, 1, 1], [], []>} : vector<4x64xbf16>, vector<64x64xbf16>, vector<4x64xf32> -> vector<4x64xf32>
    %434 = arith.addf %428, %433 : vector<4x64xf32>
    %c4_456 = arith.constant 4 : index
    %c48_457 = arith.constant 48 : index
    %435 = vector.load %arg24[%c4_456, %c48_457] : memref<10x160xf32, #tpu.memory_space<vmem>>, vector<4x64xf32>
    %436 = arith.truncf %435 : vector<4x64xf32> to vector<4x64xbf16>
    %c7_458 = arith.constant 7 : index
    %c0_459 = arith.constant 0 : index
    %c0_460 = arith.constant 0 : index
    %437 = vector.load %arg11[%c7_458, %c0_459, %c0_460] : memref<9x64x64xbf16, #tpu.memory_space<vmem>>, vector<1x64x64xbf16>
    %438 = vector.shape_cast %437 : vector<1x64x64xbf16> to vector<64x64xbf16>
    %cst_461 = arith.constant dense<0.000000e+00> : vector<4x64xf32>
    %439 = tpu.matmul %436, %438, %cst_461 {dimension_numbers = #tpu.dot_dimension_numbers<[1], [0], [0], [1], [0, 0, 1, 1], [], []>} : vector<4x64xbf16>, vector<64x64xbf16>, vector<4x64xf32> -> vector<4x64xf32>
    %440 = arith.addf %434, %439 : vector<4x64xf32>
    %c2_462 = arith.constant 2 : index
    %c32_463 = arith.constant 32 : index
    %441 = vector.load %arg27[%c2_462, %c32_463] : memref<6x96xf32, #tpu.memory_space<vmem>>, vector<4x64xf32>
    %442 = arith.truncf %441 : vector<4x64xf32> to vector<4x64xbf16>
    %c8_464 = arith.constant 8 : index
    %c0_465 = arith.constant 0 : index
    %c0_466 = arith.constant 0 : index
    %443 = vector.load %arg10[%c8_464, %c0_465, %c0_466] : memref<9x64x64xbf16, #tpu.memory_space<vmem>>, vector<1x64x64xbf16>
    %444 = vector.shape_cast %443 : vector<1x64x64xbf16> to vector<64x64xbf16>
    %cst_467 = arith.constant dense<0.000000e+00> : vector<4x64xf32>
    %445 = tpu.matmul %442, %444, %cst_467 {dimension_numbers = #tpu.dot_dimension_numbers<[1], [0], [0], [1], [0, 0, 1, 1], [], []>} : vector<4x64xbf16>, vector<64x64xbf16>, vector<4x64xf32> -> vector<4x64xf32>
    %446 = arith.addf %440, %445 : vector<4x64xf32>
    %c4_468 = arith.constant 4 : index
    %c64_469 = arith.constant 64 : index
    %447 = vector.load %arg24[%c4_468, %c64_469] : memref<10x160xf32, #tpu.memory_space<vmem>>, vector<4x64xf32>
    %448 = arith.truncf %447 : vector<4x64xf32> to vector<4x64xbf16>
    %c8_470 = arith.constant 8 : index
    %c0_471 = arith.constant 0 : index
    %c0_472 = arith.constant 0 : index
    %449 = vector.load %arg11[%c8_470, %c0_471, %c0_472] : memref<9x64x64xbf16, #tpu.memory_space<vmem>>, vector<1x64x64xbf16>
    %450 = vector.shape_cast %449 : vector<1x64x64xbf16> to vector<64x64xbf16>
    %cst_473 = arith.constant dense<0.000000e+00> : vector<4x64xf32>
    %451 = tpu.matmul %448, %450, %cst_473 {dimension_numbers = #tpu.dot_dimension_numbers<[1], [0], [0], [1], [0, 0, 1, 1], [], []>} : vector<4x64xbf16>, vector<64x64xbf16>, vector<4x64xf32> -> vector<4x64xf32>
    %452 = arith.addf %446, %451 : vector<4x64xf32>
    %c0_474 = arith.constant 0 : index
    %c0_475 = arith.constant 0 : index
    %453 = vector.load %arg12[%c0_474, %c0_475] : memref<1x64xf32, #tpu.memory_space<vmem>>, vector<1x64xf32>
    %454 = vector.broadcast %453 : vector<1x64xf32> to vector<4x64xf32>
    %455 = arith.addf %452, %454 : vector<4x64xf32>
    %cst_476 = arith.constant 0.000000e+00 : f32
    %456 = vector.broadcast %cst_476 : f32 to vector<4x64xf32>
    %457 = arith.maximumf %455, %456 : vector<4x64xf32>
    %458 = arith.truncf %457 : vector<4x64xf32> to vector<4x64xbf16>
    %c0_477 = arith.constant 0 : index
    %c0_478 = arith.constant 0 : index
    %c0_479 = arith.constant 0 : index
    %459 = vector.load %arg13[%c0_477, %c0_478, %c0_479] : memref<2x64x64xbf16, #tpu.memory_space<vmem>>, vector<1x64x64xbf16>
    %460 = vector.shape_cast %459 : vector<1x64x64xbf16> to vector<64x64xbf16>
    %cst_480 = arith.constant dense<0.000000e+00> : vector<4x64xf32>
    %461 = tpu.matmul %458, %460, %cst_480 {dimension_numbers = #tpu.dot_dimension_numbers<[1], [0], [0], [1], [0, 0, 1, 1], [], []>} : vector<4x64xbf16>, vector<64x64xbf16>, vector<4x64xf32> -> vector<4x64xf32>
    %c0_481 = arith.constant 0 : index
    %c0_482 = arith.constant 0 : index
    %462 = vector.load %arg14[%c0_481, %c0_482] : memref<1x64xf32, #tpu.memory_space<vmem>>, vector<1x64xf32>
    %463 = vector.broadcast %462 : vector<1x64xf32> to vector<4x64xf32>
    %464 = arith.addf %461, %463 : vector<4x64xf32>
    %465 = vector.extract_strided_slice %464 {offsets = [0, 0], sizes = [1, 64], strides = [1, 1]} : vector<4x64xf32> to vector<1x64xf32>
    %c0_483 = arith.constant 0 : index
    %c0_484 = arith.constant 0 : index
    %466 = vector.load %arg28[%c0_483, %c0_484] : memref<8x64xf32, #tpu.memory_space<vmem>>, vector<1x64xf32>
    tpu.vector_store %arg28[%c0_483, %c0_484], %465 {strides = array<i32>} : memref<8x64xf32, #tpu.memory_space<vmem>>, vector<1x64xf32>,
    %467 = vector.extract_strided_slice %464 {offsets = [1, 0], sizes = [1, 64], strides = [1, 1]} : vector<4x64xf32> to vector<1x64xf32>
    %c2_485 = arith.constant 2 : index
    %c0_486 = arith.constant 0 : index
    %468 = vector.load %arg28[%c2_485, %c0_486] : memref<8x64xf32, #tpu.memory_space<vmem>>, vector<1x64xf32>
    tpu.vector_store %arg28[%c2_485, %c0_486], %467 {strides = array<i32>} : memref<8x64xf32, #tpu.memory_space<vmem>>, vector<1x64xf32>,
    %469 = vector.extract_strided_slice %464 {offsets = [2, 0], sizes = [1, 64], strides = [1, 1]} : vector<4x64xf32> to vector<1x64xf32>
    %c4_487 = arith.constant 4 : index
    %c0_488 = arith.constant 0 : index
    %470 = vector.load %arg28[%c4_487, %c0_488] : memref<8x64xf32, #tpu.memory_space<vmem>>, vector<1x64xf32>
    tpu.vector_store %arg28[%c4_487, %c0_488], %469 {strides = array<i32>} : memref<8x64xf32, #tpu.memory_space<vmem>>, vector<1x64xf32>,
    %471 = vector.extract_strided_slice %464 {offsets = [3, 0], sizes = [1, 64], strides = [1, 1]} : vector<4x64xf32> to vector<1x64xf32>
    %c6_489 = arith.constant 6 : index
    %c0_490 = arith.constant 0 : index
    %472 = vector.load %arg28[%c6_489, %c0_490] : memref<8x64xf32, #tpu.memory_space<vmem>>, vector<1x64xf32>
    tpu.vector_store %arg28[%c6_489, %c0_490], %471 {strides = array<i32>} : memref<8x64xf32, #tpu.memory_space<vmem>>, vector<1x64xf32>,
    %c1_491 = arith.constant 1 : index
    %c0_492 = arith.constant 0 : index
    %c0_493 = arith.constant 0 : index
    %473 = vector.load %arg13[%c1_491, %c0_492, %c0_493] : memref<2x64x64xbf16, #tpu.memory_space<vmem>>, vector<1x64x64xbf16>
    %474 = vector.shape_cast %473 : vector<1x64x64xbf16> to vector<64x64xbf16>
    %cst_494 = arith.constant dense<0.000000e+00> : vector<4x64xf32>
    %475 = tpu.matmul %458, %474, %cst_494 {dimension_numbers = #tpu.dot_dimension_numbers<[1], [0], [0], [1], [0, 0, 1, 1], [], []>} : vector<4x64xbf16>, vector<64x64xbf16>, vector<4x64xf32> -> vector<4x64xf32>
    %c0_495 = arith.constant 0 : index
    %c0_496 = arith.constant 0 : index
    %476 = vector.load %arg14[%c0_495, %c0_496] : memref<1x64xf32, #tpu.memory_space<vmem>>, vector<1x64xf32>
    %477 = vector.broadcast %476 : vector<1x64xf32> to vector<4x64xf32>
    %478 = arith.addf %475, %477 : vector<4x64xf32>
    %479 = vector.extract_strided_slice %478 {offsets = [0, 0], sizes = [1, 64], strides = [1, 1]} : vector<4x64xf32> to vector<1x64xf32>
    %c1_497 = arith.constant 1 : index
    %c0_498 = arith.constant 0 : index
    %480 = vector.load %arg28[%c1_497, %c0_498] : memref<8x64xf32, #tpu.memory_space<vmem>>, vector<1x64xf32>
    tpu.vector_store %arg28[%c1_497, %c0_498], %479 {strides = array<i32>} : memref<8x64xf32, #tpu.memory_space<vmem>>, vector<1x64xf32>,
    %481 = vector.extract_strided_slice %478 {offsets = [1, 0], sizes = [1, 64], strides = [1, 1]} : vector<4x64xf32> to vector<1x64xf32>
    %c3_499 = arith.constant 3 : index
    %c0_500 = arith.constant 0 : index
    %482 = vector.load %arg28[%c3_499, %c0_500] : memref<8x64xf32, #tpu.memory_space<vmem>>, vector<1x64xf32>
    tpu.vector_store %arg28[%c3_499, %c0_500], %481 {strides = array<i32>} : memref<8x64xf32, #tpu.memory_space<vmem>>, vector<1x64xf32>,
    %483 = vector.extract_strided_slice %478 {offsets = [2, 0], sizes = [1, 64], strides = [1, 1]} : vector<4x64xf32> to vector<1x64xf32>
    %c5_501 = arith.constant 5 : index
    %c0_502 = arith.constant 0 : index
    %484 = vector.load %arg28[%c5_501, %c0_502] : memref<8x64xf32, #tpu.memory_space<vmem>>, vector<1x64xf32>
    tpu.vector_store %arg28[%c5_501, %c0_502], %483 {strides = array<i32>} : memref<8x64xf32, #tpu.memory_space<vmem>>, vector<1x64xf32>,
    %485 = vector.extract_strided_slice %478 {offsets = [3, 0], sizes = [1, 64], strides = [1, 1]} : vector<4x64xf32> to vector<1x64xf32>
    %c7_503 = arith.constant 7 : index
    %c0_504 = arith.constant 0 : index
    %486 = vector.load %arg28[%c7_503, %c0_504] : memref<8x64xf32, #tpu.memory_space<vmem>>, vector<1x64xf32>
    tpu.vector_store %arg28[%c7_503, %c0_504], %485 {strides = array<i32>} : memref<8x64xf32, #tpu.memory_space<vmem>>, vector<1x64xf32>,
    %c0_505 = arith.constant 0 : index
    %c0_506 = arith.constant 0 : index
    %487 = vector.load %arg28[%c0_505, %c0_506] : memref<8x64xf32, #tpu.memory_space<vmem>>, vector<6x48xf32>
    %488 = arith.truncf %487 : vector<6x48xf32> to vector<6x48xbf16>
    %c0_507 = arith.constant 0 : index
    %c0_508 = arith.constant 0 : index
    %c0_509 = arith.constant 0 : index
    %489 = vector.load %arg15[%c0_507, %c0_508, %c0_509] : memref<9x48x48xbf16, #tpu.memory_space<vmem>>, vector<1x48x48xbf16>
    %490 = vector.shape_cast %489 : vector<1x48x48xbf16> to vector<48x48xbf16>
    %cst_510 = arith.constant dense<0.000000e+00> : vector<6x48xf32>
    %491 = tpu.matmul %488, %490, %cst_510 {dimension_numbers = #tpu.dot_dimension_numbers<[1], [0], [0], [1], [0, 0, 1, 1], [], []>} : vector<6x48xbf16>, vector<48x48xbf16>, vector<6x48xf32> -> vector<6x48xf32>
    %c8_511 = arith.constant 8 : index
    %c64_512 = arith.constant 64 : index
    %492 = vector.load %arg21[%c8_511, %c64_512] : memref<24x192xf32, #tpu.memory_space<vmem>>, vector<6x48xf32>
    %493 = arith.truncf %492 : vector<6x48xf32> to vector<6x48xbf16>
    %c0_513 = arith.constant 0 : index
    %c0_514 = arith.constant 0 : index
    %c0_515 = arith.constant 0 : index
    %494 = vector.load %arg16[%c0_513, %c0_514, %c0_515] : memref<9x48x48xbf16, #tpu.memory_space<vmem>>, vector<1x48x48xbf16>
    %495 = vector.shape_cast %494 : vector<1x48x48xbf16> to vector<48x48xbf16>
    %cst_516 = arith.constant dense<0.000000e+00> : vector<6x48xf32>
    %496 = tpu.matmul %493, %495, %cst_516 {dimension_numbers = #tpu.dot_dimension_numbers<[1], [0], [0], [1], [0, 0, 1, 1], [], []>} : vector<6x48xbf16>, vector<48x48xbf16>, vector<6x48xf32> -> vector<6x48xf32>
    %497 = arith.addf %491, %496 : vector<6x48xf32>
    %c0_517 = arith.constant 0 : index
    %c8_518 = arith.constant 8 : index
    %498 = vector.load %arg28[%c0_517, %c8_518] : memref<8x64xf32, #tpu.memory_space<vmem>>, vector<6x48xf32>
    %499 = arith.truncf %498 : vector<6x48xf32> to vector<6x48xbf16>
    %c1_519 = arith.constant 1 : index
    %c0_520 = arith.constant 0 : index
    %c0_521 = arith.constant 0 : index
    %500 = vector.load %arg15[%c1_519, %c0_520, %c0_521] : memref<9x48x48xbf16, #tpu.memory_space<vmem>>, vector<1x48x48xbf16>
    %501 = vector.shape_cast %500 : vector<1x48x48xbf16> to vector<48x48xbf16>
    %cst_522 = arith.constant dense<0.000000e+00> : vector<6x48xf32>
    %502 = tpu.matmul %499, %501, %cst_522 {dimension_numbers = #tpu.dot_dimension_numbers<[1], [0], [0], [1], [0, 0, 1, 1], [], []>} : vector<6x48xbf16>, vector<48x48xbf16>, vector<6x48xf32> -> vector<6x48xf32>
    %503 = arith.addf %497, %502 : vector<6x48xf32>
    %c8_523 = arith.constant 8 : index
    %c72_524 = arith.constant 72 : index
    %504 = vector.load %arg21[%c8_523, %c72_524] : memref<24x192xf32, #tpu.memory_space<vmem>>, vector<6x48xf32>
    %505 = arith.truncf %504 : vector<6x48xf32> to vector<6x48xbf16>
    %c1_525 = arith.constant 1 : index
    %c0_526 = arith.constant 0 : index
    %c0_527 = arith.constant 0 : index
    %506 = vector.load %arg16[%c1_525, %c0_526, %c0_527] : memref<9x48x48xbf16, #tpu.memory_space<vmem>>, vector<1x48x48xbf16>
    %507 = vector.shape_cast %506 : vector<1x48x48xbf16> to vector<48x48xbf16>
    %cst_528 = arith.constant dense<0.000000e+00> : vector<6x48xf32>
    %508 = tpu.matmul %505, %507, %cst_528 {dimension_numbers = #tpu.dot_dimension_numbers<[1], [0], [0], [1], [0, 0, 1, 1], [], []>} : vector<6x48xbf16>, vector<48x48xbf16>, vector<6x48xf32> -> vector<6x48xf32>
    %509 = arith.addf %503, %508 : vector<6x48xf32>
    %c0_529 = arith.constant 0 : index
    %c16_530 = arith.constant 16 : index
    %510 = vector.load %arg28[%c0_529, %c16_530] : memref<8x64xf32, #tpu.memory_space<vmem>>, vector<6x48xf32>
    %511 = arith.truncf %510 : vector<6x48xf32> to vector<6x48xbf16>
    %c2_531 = arith.constant 2 : index
    %c0_532 = arith.constant 0 : index
    %c0_533 = arith.constant 0 : index
    %512 = vector.load %arg15[%c2_531, %c0_532, %c0_533] : memref<9x48x48xbf16, #tpu.memory_space<vmem>>, vector<1x48x48xbf16>
    %513 = vector.shape_cast %512 : vector<1x48x48xbf16> to vector<48x48xbf16>
    %cst_534 = arith.constant dense<0.000000e+00> : vector<6x48xf32>
    %514 = tpu.matmul %511, %513, %cst_534 {dimension_numbers = #tpu.dot_dimension_numbers<[1], [0], [0], [1], [0, 0, 1, 1], [], []>} : vector<6x48xbf16>, vector<48x48xbf16>, vector<6x48xf32> -> vector<6x48xf32>
    %515 = arith.addf %509, %514 : vector<6x48xf32>
    %c8_535 = arith.constant 8 : index
    %c80_536 = arith.constant 80 : index
    %516 = vector.load %arg21[%c8_535, %c80_536] : memref<24x192xf32, #tpu.memory_space<vmem>>, vector<6x48xf32>
    %517 = arith.truncf %516 : vector<6x48xf32> to vector<6x48xbf16>
    %c2_537 = arith.constant 2 : index
    %c0_538 = arith.constant 0 : index
    %c0_539 = arith.constant 0 : index
    %518 = vector.load %arg16[%c2_537, %c0_538, %c0_539] : memref<9x48x48xbf16, #tpu.memory_space<vmem>>, vector<1x48x48xbf16>
    %519 = vector.shape_cast %518 : vector<1x48x48xbf16> to vector<48x48xbf16>
    %cst_540 = arith.constant dense<0.000000e+00> : vector<6x48xf32>
    %520 = tpu.matmul %517, %519, %cst_540 {dimension_numbers = #tpu.dot_dimension_numbers<[1], [0], [0], [1], [0, 0, 1, 1], [], []>} : vector<6x48xbf16>, vector<48x48xbf16>, vector<6x48xf32> -> vector<6x48xf32>
    %521 = arith.addf %515, %520 : vector<6x48xf32>
    %c1_541 = arith.constant 1 : index
    %c0_542 = arith.constant 0 : index
    %522 = vector.load %arg28[%c1_541, %c0_542] : memref<8x64xf32, #tpu.memory_space<vmem>>, vector<6x48xf32>
    %523 = arith.truncf %522 : vector<6x48xf32> to vector<6x48xbf16>
    %c3_543 = arith.constant 3 : index
    %c0_544 = arith.constant 0 : index
    %c0_545 = arith.constant 0 : index
    %524 = vector.load %arg15[%c3_543, %c0_544, %c0_545] : memref<9x48x48xbf16, #tpu.memory_space<vmem>>, vector<1x48x48xbf16>
    %525 = vector.shape_cast %524 : vector<1x48x48xbf16> to vector<48x48xbf16>
    %cst_546 = arith.constant dense<0.000000e+00> : vector<6x48xf32>
    %526 = tpu.matmul %523, %525, %cst_546 {dimension_numbers = #tpu.dot_dimension_numbers<[1], [0], [0], [1], [0, 0, 1, 1], [], []>} : vector<6x48xbf16>, vector<48x48xbf16>, vector<6x48xf32> -> vector<6x48xf32>
    %527 = arith.addf %521, %526 : vector<6x48xf32>
    %c9_547 = arith.constant 9 : index
    %c64_548 = arith.constant 64 : index
    %528 = vector.load %arg21[%c9_547, %c64_548] : memref<24x192xf32, #tpu.memory_space<vmem>>, vector<6x48xf32>
    %529 = arith.truncf %528 : vector<6x48xf32> to vector<6x48xbf16>
    %c3_549 = arith.constant 3 : index
    %c0_550 = arith.constant 0 : index
    %c0_551 = arith.constant 0 : index
    %530 = vector.load %arg16[%c3_549, %c0_550, %c0_551] : memref<9x48x48xbf16, #tpu.memory_space<vmem>>, vector<1x48x48xbf16>
    %531 = vector.shape_cast %530 : vector<1x48x48xbf16> to vector<48x48xbf16>
    %cst_552 = arith.constant dense<0.000000e+00> : vector<6x48xf32>
    %532 = tpu.matmul %529, %531, %cst_552 {dimension_numbers = #tpu.dot_dimension_numbers<[1], [0], [0], [1], [0, 0, 1, 1], [], []>} : vector<6x48xbf16>, vector<48x48xbf16>, vector<6x48xf32> -> vector<6x48xf32>
    %533 = arith.addf %527, %532 : vector<6x48xf32>
    %c1_553 = arith.constant 1 : index
    %c8_554 = arith.constant 8 : index
    %534 = vector.load %arg28[%c1_553, %c8_554] : memref<8x64xf32, #tpu.memory_space<vmem>>, vector<6x48xf32>
    %535 = arith.truncf %534 : vector<6x48xf32> to vector<6x48xbf16>
    %c4_555 = arith.constant 4 : index
    %c0_556 = arith.constant 0 : index
    %c0_557 = arith.constant 0 : index
    %536 = vector.load %arg15[%c4_555, %c0_556, %c0_557] : memref<9x48x48xbf16, #tpu.memory_space<vmem>>, vector<1x48x48xbf16>
    %537 = vector.shape_cast %536 : vector<1x48x48xbf16> to vector<48x48xbf16>
    %cst_558 = arith.constant dense<0.000000e+00> : vector<6x48xf32>
    %538 = tpu.matmul %535, %537, %cst_558 {dimension_numbers = #tpu.dot_dimension_numbers<[1], [0], [0], [1], [0, 0, 1, 1], [], []>} : vector<6x48xbf16>, vector<48x48xbf16>, vector<6x48xf32> -> vector<6x48xf32>
    %539 = arith.addf %533, %538 : vector<6x48xf32>
    %c9_559 = arith.constant 9 : index
    %c72_560 = arith.constant 72 : index
    %540 = vector.load %arg21[%c9_559, %c72_560] : memref<24x192xf32, #tpu.memory_space<vmem>>, vector<6x48xf32>
    %541 = arith.truncf %540 : vector<6x48xf32> to vector<6x48xbf16>
    %c4_561 = arith.constant 4 : index
    %c0_562 = arith.constant 0 : index
    %c0_563 = arith.constant 0 : index
    %542 = vector.load %arg16[%c4_561, %c0_562, %c0_563] : memref<9x48x48xbf16, #tpu.memory_space<vmem>>, vector<1x48x48xbf16>
    %543 = vector.shape_cast %542 : vector<1x48x48xbf16> to vector<48x48xbf16>
    %cst_564 = arith.constant dense<0.000000e+00> : vector<6x48xf32>
    %544 = tpu.matmul %541, %543, %cst_564 {dimension_numbers = #tpu.dot_dimension_numbers<[1], [0], [0], [1], [0, 0, 1, 1], [], []>} : vector<6x48xbf16>, vector<48x48xbf16>, vector<6x48xf32> -> vector<6x48xf32>
    %545 = arith.addf %539, %544 : vector<6x48xf32>
    %c1_565 = arith.constant 1 : index
    %c16_566 = arith.constant 16 : index
    %546 = vector.load %arg28[%c1_565, %c16_566] : memref<8x64xf32, #tpu.memory_space<vmem>>, vector<6x48xf32>
    %547 = arith.truncf %546 : vector<6x48xf32> to vector<6x48xbf16>
    %c5_567 = arith.constant 5 : index
    %c0_568 = arith.constant 0 : index
    %c0_569 = arith.constant 0 : index
    %548 = vector.load %arg15[%c5_567, %c0_568, %c0_569] : memref<9x48x48xbf16, #tpu.memory_space<vmem>>, vector<1x48x48xbf16>
    %549 = vector.shape_cast %548 : vector<1x48x48xbf16> to vector<48x48xbf16>
    %cst_570 = arith.constant dense<0.000000e+00> : vector<6x48xf32>
    %550 = tpu.matmul %547, %549, %cst_570 {dimension_numbers = #tpu.dot_dimension_numbers<[1], [0], [0], [1], [0, 0, 1, 1], [], []>} : vector<6x48xbf16>, vector<48x48xbf16>, vector<6x48xf32> -> vector<6x48xf32>
    %551 = arith.addf %545, %550 : vector<6x48xf32>
    %c9_571 = arith.constant 9 : index
    %c80_572 = arith.constant 80 : index
    %552 = vector.load %arg21[%c9_571, %c80_572] : memref<24x192xf32, #tpu.memory_space<vmem>>, vector<6x48xf32>
    %553 = arith.truncf %552 : vector<6x48xf32> to vector<6x48xbf16>
    %c5_573 = arith.constant 5 : index
    %c0_574 = arith.constant 0 : index
    %c0_575 = arith.constant 0 : index
    %554 = vector.load %arg16[%c5_573, %c0_574, %c0_575] : memref<9x48x48xbf16, #tpu.memory_space<vmem>>, vector<1x48x48xbf16>
    %555 = vector.shape_cast %554 : vector<1x48x48xbf16> to vector<48x48xbf16>
    %cst_576 = arith.constant dense<0.000000e+00> : vector<6x48xf32>
    %556 = tpu.matmul %553, %555, %cst_576 {dimension_numbers = #tpu.dot_dimension_numbers<[1], [0], [0], [1], [0, 0, 1, 1], [], []>} : vector<6x48xbf16>, vector<48x48xbf16>, vector<6x48xf32> -> vector<6x48xf32>
    %557 = arith.addf %551, %556 : vector<6x48xf32>
    %c2_577 = arith.constant 2 : index
    %c0_578 = arith.constant 0 : index
    %558 = vector.load %arg28[%c2_577, %c0_578] : memref<8x64xf32, #tpu.memory_space<vmem>>, vector<6x48xf32>
    %559 = arith.truncf %558 : vector<6x48xf32> to vector<6x48xbf16>
    %c6_579 = arith.constant 6 : index
    %c0_580 = arith.constant 0 : index
    %c0_581 = arith.constant 0 : index
    %560 = vector.load %arg15[%c6_579, %c0_580, %c0_581] : memref<9x48x48xbf16, #tpu.memory_space<vmem>>, vector<1x48x48xbf16>
    %561 = vector.shape_cast %560 : vector<1x48x48xbf16> to vector<48x48xbf16>
    %cst_582 = arith.constant dense<0.000000e+00> : vector<6x48xf32>
    %562 = tpu.matmul %559, %561, %cst_582 {dimension_numbers = #tpu.dot_dimension_numbers<[1], [0], [0], [1], [0, 0, 1, 1], [], []>} : vector<6x48xbf16>, vector<48x48xbf16>, vector<6x48xf32> -> vector<6x48xf32>
    %563 = arith.addf %557, %562 : vector<6x48xf32>
    %c10_583 = arith.constant 10 : index
    %c64_584 = arith.constant 64 : index
    %564 = vector.load %arg21[%c10_583, %c64_584] : memref<24x192xf32, #tpu.memory_space<vmem>>, vector<6x48xf32>
    %565 = arith.truncf %564 : vector<6x48xf32> to vector<6x48xbf16>
    %c6_585 = arith.constant 6 : index
    %c0_586 = arith.constant 0 : index
    %c0_587 = arith.constant 0 : index
    %566 = vector.load %arg16[%c6_585, %c0_586, %c0_587] : memref<9x48x48xbf16, #tpu.memory_space<vmem>>, vector<1x48x48xbf16>
    %567 = vector.shape_cast %566 : vector<1x48x48xbf16> to vector<48x48xbf16>
    %cst_588 = arith.constant dense<0.000000e+00> : vector<6x48xf32>
    %568 = tpu.matmul %565, %567, %cst_588 {dimension_numbers = #tpu.dot_dimension_numbers<[1], [0], [0], [1], [0, 0, 1, 1], [], []>} : vector<6x48xbf16>, vector<48x48xbf16>, vector<6x48xf32> -> vector<6x48xf32>
    %569 = arith.addf %563, %568 : vector<6x48xf32>
    %c2_589 = arith.constant 2 : index
    %c8_590 = arith.constant 8 : index
    %570 = vector.load %arg28[%c2_589, %c8_590] : memref<8x64xf32, #tpu.memory_space<vmem>>, vector<6x48xf32>
    %571 = arith.truncf %570 : vector<6x48xf32> to vector<6x48xbf16>
    %c7_591 = arith.constant 7 : index
    %c0_592 = arith.constant 0 : index
    %c0_593 = arith.constant 0 : index
    %572 = vector.load %arg15[%c7_591, %c0_592, %c0_593] : memref<9x48x48xbf16, #tpu.memory_space<vmem>>, vector<1x48x48xbf16>
    %573 = vector.shape_cast %572 : vector<1x48x48xbf16> to vector<48x48xbf16>
    %cst_594 = arith.constant dense<0.000000e+00> : vector<6x48xf32>
    %574 = tpu.matmul %571, %573, %cst_594 {dimension_numbers = #tpu.dot_dimension_numbers<[1], [0], [0], [1], [0, 0, 1, 1], [], []>} : vector<6x48xbf16>, vector<48x48xbf16>, vector<6x48xf32> -> vector<6x48xf32>
    %575 = arith.addf %569, %574 : vector<6x48xf32>
    %c10_595 = arith.constant 10 : index
    %c72_596 = arith.constant 72 : index
    %576 = vector.load %arg21[%c10_595, %c72_596] : memref<24x192xf32, #tpu.memory_space<vmem>>, vector<6x48xf32>
    %577 = arith.truncf %576 : vector<6x48xf32> to vector<6x48xbf16>
    %c7_597 = arith.constant 7 : index
    %c0_598 = arith.constant 0 : index
    %c0_599 = arith.constant 0 : index
    %578 = vector.load %arg16[%c7_597, %c0_598, %c0_599] : memref<9x48x48xbf16, #tpu.memory_space<vmem>>, vector<1x48x48xbf16>
    %579 = vector.shape_cast %578 : vector<1x48x48xbf16> to vector<48x48xbf16>
    %cst_600 = arith.constant dense<0.000000e+00> : vector<6x48xf32>
    %580 = tpu.matmul %577, %579, %cst_600 {dimension_numbers = #tpu.dot_dimension_numbers<[1], [0], [0], [1], [0, 0, 1, 1], [], []>} : vector<6x48xbf16>, vector<48x48xbf16>, vector<6x48xf32> -> vector<6x48xf32>
    %581 = arith.addf %575, %580 : vector<6x48xf32>
    %c2_601 = arith.constant 2 : index
    %c16_602 = arith.constant 16 : index
    %582 = vector.load %arg28[%c2_601, %c16_602] : memref<8x64xf32, #tpu.memory_space<vmem>>, vector<6x48xf32>
    %583 = arith.truncf %582 : vector<6x48xf32> to vector<6x48xbf16>
    %c8_603 = arith.constant 8 : index
    %c0_604 = arith.constant 0 : index
    %c0_605 = arith.constant 0 : index
    %584 = vector.load %arg15[%c8_603, %c0_604, %c0_605] : memref<9x48x48xbf16, #tpu.memory_space<vmem>>, vector<1x48x48xbf16>
    %585 = vector.shape_cast %584 : vector<1x48x48xbf16> to vector<48x48xbf16>
    %cst_606 = arith.constant dense<0.000000e+00> : vector<6x48xf32>
    %586 = tpu.matmul %583, %585, %cst_606 {dimension_numbers = #tpu.dot_dimension_numbers<[1], [0], [0], [1], [0, 0, 1, 1], [], []>} : vector<6x48xbf16>, vector<48x48xbf16>, vector<6x48xf32> -> vector<6x48xf32>
    %587 = arith.addf %581, %586 : vector<6x48xf32>
    %c10_607 = arith.constant 10 : index
    %c80_608 = arith.constant 80 : index
    %588 = vector.load %arg21[%c10_607, %c80_608] : memref<24x192xf32, #tpu.memory_space<vmem>>, vector<6x48xf32>
    %589 = arith.truncf %588 : vector<6x48xf32> to vector<6x48xbf16>
    %c8_609 = arith.constant 8 : index
    %c0_610 = arith.constant 0 : index
    %c0_611 = arith.constant 0 : index
    %590 = vector.load %arg16[%c8_609, %c0_610, %c0_611] : memref<9x48x48xbf16, #tpu.memory_space<vmem>>, vector<1x48x48xbf16>
    %591 = vector.shape_cast %590 : vector<1x48x48xbf16> to vector<48x48xbf16>
    %cst_612 = arith.constant dense<0.000000e+00> : vector<6x48xf32>
    %592 = tpu.matmul %589, %591, %cst_612 {dimension_numbers = #tpu.dot_dimension_numbers<[1], [0], [0], [1], [0, 0, 1, 1], [], []>} : vector<6x48xbf16>, vector<48x48xbf16>, vector<6x48xf32> -> vector<6x48xf32>
    %593 = arith.addf %587, %592 : vector<6x48xf32>
    %c0_613 = arith.constant 0 : index
    %c0_614 = arith.constant 0 : index
    %594 = vector.load %arg17[%c0_613, %c0_614] : memref<1x48xf32, #tpu.memory_space<vmem>>, vector<1x48xf32>
    %595 = vector.broadcast %594 : vector<1x48xf32> to vector<6x48xf32>
    %596 = arith.addf %593, %595 : vector<6x48xf32>
    %cst_615 = arith.constant 0.000000e+00 : f32
    %597 = vector.broadcast %cst_615 : f32 to vector<6x48xf32>
    %598 = arith.maximumf %596, %597 : vector<6x48xf32>
    %599 = arith.truncf %598 : vector<6x48xf32> to vector<6x48xbf16>
    %c0_616 = arith.constant 0 : index
    %c0_617 = arith.constant 0 : index
    %c0_618 = arith.constant 0 : index
    %600 = vector.load %arg18[%c0_616, %c0_617, %c0_618] : memref<2x48x6xbf16, #tpu.memory_space<vmem>>, vector<1x48x6xbf16>
    %601 = vector.shape_cast %600 : vector<1x48x6xbf16> to vector<48x6xbf16>
    %cst_619 = arith.constant dense<0.000000e+00> : vector<6x6xf32>
    %602 = tpu.matmul %599, %601, %cst_619 {dimension_numbers = #tpu.dot_dimension_numbers<[1], [0], [0], [1], [0, 0, 1, 1], [], []>} : vector<6x48xbf16>, vector<48x6xbf16>, vector<6x6xf32> -> vector<6x6xf32>
    %c0_620 = arith.constant 0 : index
    %c0_621 = arith.constant 0 : index
    %c0_622 = arith.constant 0 : index
    %603 = vector.load %arg19[%c0_620, %c0_621, %c0_622] : memref<2x1x6xf32, #tpu.memory_space<vmem>>, vector<1x1x6xf32>
    %604 = vector.shape_cast %603 : vector<1x1x6xf32> to vector<1x6xf32>
    %605 = vector.broadcast %604 : vector<1x6xf32> to vector<6x6xf32>
    %606 = arith.addf %602, %605 : vector<6x6xf32>
    %cst_623 = arith.constant 1.000000e-01 : f32
    %607 = vector.broadcast %cst_623 : f32 to vector<6x6xf32>
    %608 = arith.mulf %606, %607 : vector<6x6xf32>
    %c0_624 = arith.constant 0 : index
    %c0_625 = arith.constant 0 : index
    %c0_626 = arith.constant 0 : index
    %c0_627 = arith.constant 0 : index
    %609 = vector.load %arg20[%c0_624, %c0_625, %c0_626, %c0_627] : memref<1x2x6x6xf32, #tpu.memory_space<vmem>>, vector<1x1x6x6xf32>
    %610 = vector.shape_cast %609 : vector<1x1x6x6xf32> to vector<6x6xf32>
    %611 = vector.shape_cast %608 : vector<6x6xf32> to vector<1x1x6x6xf32>
    tpu.vector_store %arg20[%c0_624, %c0_625, %c0_626, %c0_627], %611 {strides = array<i32>} : memref<1x2x6x6xf32, #tpu.memory_space<vmem>>, vector<1x1x6x6xf32>,
    %c1_628 = arith.constant 1 : index
    %c0_629 = arith.constant 0 : index
    %c0_630 = arith.constant 0 : index
    %612 = vector.load %arg18[%c1_628, %c0_629, %c0_630] : memref<2x48x6xbf16, #tpu.memory_space<vmem>>, vector<1x48x6xbf16>
    %613 = vector.shape_cast %612 : vector<1x48x6xbf16> to vector<48x6xbf16>
    %cst_631 = arith.constant dense<0.000000e+00> : vector<6x6xf32>
    %614 = tpu.matmul %599, %613, %cst_631 {dimension_numbers = #tpu.dot_dimension_numbers<[1], [0], [0], [1], [0, 0, 1, 1], [], []>} : vector<6x48xbf16>, vector<48x6xbf16>, vector<6x6xf32> -> vector<6x6xf32>
    %c1_632 = arith.constant 1 : index
    %c0_633 = arith.constant 0 : index
    %c0_634 = arith.constant 0 : index
    %615 = vector.load %arg19[%c1_632, %c0_633, %c0_634] : memref<2x1x6xf32, #tpu.memory_space<vmem>>, vector<1x1x6xf32>
    %616 = vector.shape_cast %615 : vector<1x1x6xf32> to vector<1x6xf32>
    %617 = vector.broadcast %616 : vector<1x6xf32> to vector<6x6xf32>
    %618 = arith.addf %614, %617 : vector<6x6xf32>
    %cst_635 = arith.constant 1.000000e-01 : f32
    %619 = vector.broadcast %cst_635 : f32 to vector<6x6xf32>
    %620 = arith.mulf %618, %619 : vector<6x6xf32>
    %c0_636 = arith.constant 0 : index
    %c1_637 = arith.constant 1 : index
    %c0_638 = arith.constant 0 : index
    %c0_639 = arith.constant 0 : index
    %621 = vector.load %arg20[%c0_636, %c1_637, %c0_638, %c0_639] : memref<1x2x6x6xf32, #tpu.memory_space<vmem>>, vector<1x1x6x6xf32>
    %622 = vector.shape_cast %621 : vector<1x1x6x6xf32> to vector<6x6xf32>
    %623 = vector.shape_cast %620 : vector<6x6xf32> to vector<1x1x6x6xf32>
    tpu.vector_store %arg20[%c0_636, %c1_637, %c0_638, %c0_639], %623 {strides = array<i32>} : memref<1x2x6x6xf32, #tpu.memory_space<vmem>>, vector<1x1x6x6xf32>,
    return
  }
  func.func @transform_0(%arg0: i32) -> (i32, i32, i32) {
    %c0_i32 = arith.constant 0 : i32
    %c0_i32_0 = arith.constant 0 : i32
    %c0_i32_1 = arith.constant 0 : i32
    return %arg0, %c0_i32, %c0_i32_0 : i32, i32, i32
  }
  func.func @transform_1(%arg0: i32) -> (i32, i32, i32) {
    %c0_i32 = arith.constant 0 : i32
    %c0_i32_0 = arith.constant 0 : i32
    %c0_i32_1 = arith.constant 0 : i32
    %c0_i32_2 = arith.constant 0 : i32
    return %c0_i32, %c0_i32_0, %c0_i32_1 : i32, i32, i32
  }
  func.func @transform_2(%arg0: i32) -> (i32, i32) {
    %c0_i32 = arith.constant 0 : i32
    %c0_i32_0 = arith.constant 0 : i32
    %c0_i32_1 = arith.constant 0 : i32
    return %c0_i32, %c0_i32_0 : i32, i32
  }
  func.func @transform_3(%arg0: i32) -> (i32, i32, i32) {
    %c0_i32 = arith.constant 0 : i32
    %c0_i32_0 = arith.constant 0 : i32
    %c0_i32_1 = arith.constant 0 : i32
    %c0_i32_2 = arith.constant 0 : i32
    return %c0_i32, %c0_i32_0, %c0_i32_1 : i32, i32, i32
  }
  func.func @transform_4(%arg0: i32) -> (i32, i32) {
    %c0_i32 = arith.constant 0 : i32
    %c0_i32_0 = arith.constant 0 : i32
    %c0_i32_1 = arith.constant 0 : i32
    return %c0_i32, %c0_i32_0 : i32, i32
  }
  func.func @transform_5(%arg0: i32) -> (i32, i32, i32) {
    %c0_i32 = arith.constant 0 : i32
    %c0_i32_0 = arith.constant 0 : i32
    %c0_i32_1 = arith.constant 0 : i32
    %c0_i32_2 = arith.constant 0 : i32
    return %c0_i32, %c0_i32_0, %c0_i32_1 : i32, i32, i32
  }
  func.func @transform_6(%arg0: i32) -> (i32, i32) {
    %c0_i32 = arith.constant 0 : i32
    %c0_i32_0 = arith.constant 0 : i32
    %c0_i32_1 = arith.constant 0 : i32
    return %c0_i32, %c0_i32_0 : i32, i32
  }
  func.func @transform_7(%arg0: i32) -> (i32, i32, i32) {
    %c0_i32 = arith.constant 0 : i32
    %c0_i32_0 = arith.constant 0 : i32
    %c0_i32_1 = arith.constant 0 : i32
    %c0_i32_2 = arith.constant 0 : i32
    return %c0_i32, %c0_i32_0, %c0_i32_1 : i32, i32, i32
  }
  func.func @transform_8(%arg0: i32) -> (i32, i32) {
    %c0_i32 = arith.constant 0 : i32
    %c0_i32_0 = arith.constant 0 : i32
    %c0_i32_1 = arith.constant 0 : i32
    return %c0_i32, %c0_i32_0 : i32, i32
  }
  func.func @transform_9(%arg0: i32) -> (i32, i32, i32) {
    %c0_i32 = arith.constant 0 : i32
    %c0_i32_0 = arith.constant 0 : i32
    %c0_i32_1 = arith.constant 0 : i32
    %c0_i32_2 = arith.constant 0 : i32
    return %c0_i32, %c0_i32_0, %c0_i32_1 : i32, i32, i32
  }
  func.func @transform_10(%arg0: i32) -> (i32, i32, i32) {
    %c0_i32 = arith.constant 0 : i32
    %c0_i32_0 = arith.constant 0 : i32
    %c0_i32_1 = arith.constant 0 : i32
    %c0_i32_2 = arith.constant 0 : i32
    return %c0_i32, %c0_i32_0, %c0_i32_1 : i32, i32, i32
  }
  func.func @transform_11(%arg0: i32) -> (i32, i32) {
    %c0_i32 = arith.constant 0 : i32
    %c0_i32_0 = arith.constant 0 : i32
    %c0_i32_1 = arith.constant 0 : i32
    return %c0_i32, %c0_i32_0 : i32, i32
  }
  func.func @transform_12(%arg0: i32) -> (i32, i32, i32) {
    %c0_i32 = arith.constant 0 : i32
    %c0_i32_0 = arith.constant 0 : i32
    %c0_i32_1 = arith.constant 0 : i32
    %c0_i32_2 = arith.constant 0 : i32
    return %c0_i32, %c0_i32_0, %c0_i32_1 : i32, i32, i32
  }
  func.func @transform_13(%arg0: i32) -> (i32, i32) {
    %c0_i32 = arith.constant 0 : i32
    %c0_i32_0 = arith.constant 0 : i32
    %c0_i32_1 = arith.constant 0 : i32
    return %c0_i32, %c0_i32_0 : i32, i32
  }
  func.func @transform_14(%arg0: i32) -> (i32, i32, i32) {
    %c0_i32 = arith.constant 0 : i32
    %c0_i32_0 = arith.constant 0 : i32
    %c0_i32_1 = arith.constant 0 : i32
    %c0_i32_2 = arith.constant 0 : i32
    return %c0_i32, %c0_i32_0, %c0_i32_1 : i32, i32, i32
  }
  func.func @transform_15(%arg0: i32) -> (i32, i32, i32) {
    %c0_i32 = arith.constant 0 : i32
    %c0_i32_0 = arith.constant 0 : i32
    %c0_i32_1 = arith.constant 0 : i32
    %c0_i32_2 = arith.constant 0 : i32
    return %c0_i32, %c0_i32_0, %c0_i32_1 : i32, i32, i32
  }
  func.func @transform_16(%arg0: i32) -> (i32, i32) {
    %c0_i32 = arith.constant 0 : i32
    %c0_i32_0 = arith.constant 0 : i32
    %c0_i32_1 = arith.constant 0 : i32
    return %c0_i32, %c0_i32_0 : i32, i32
  }
  func.func @transform_17(%arg0: i32) -> (i32, i32, i32) {
    %c0_i32 = arith.constant 0 : i32
    %c0_i32_0 = arith.constant 0 : i32
    %c0_i32_1 = arith.constant 0 : i32
    %c0_i32_2 = arith.constant 0 : i32
    return %c0_i32, %c0_i32_0, %c0_i32_1 : i32, i32, i32
  }
  func.func @transform_18(%arg0: i32) -> (i32, i32, i32) {
    %c0_i32 = arith.constant 0 : i32
    %c0_i32_0 = arith.constant 0 : i32
    %c0_i32_1 = arith.constant 0 : i32
    %c0_i32_2 = arith.constant 0 : i32
    return %c0_i32, %c0_i32_0, %c0_i32_1 : i32, i32, i32
  }
  func.func @transform_19(%arg0: i32) -> (i32, i32, i32, i32) {
    %c0_i32 = arith.constant 0 : i32
    %c0_i32_0 = arith.constant 0 : i32
    %c0_i32_1 = arith.constant 0 : i32
    %c0_i32_2 = arith.constant 0 : i32
    return %arg0, %c0_i32, %c0_i32_0, %c0_i32_1 : i32, i32, i32, i32
  }
}

</mosaic_0001>

<llo_original>
// kernel: unet_apply.1
$region0: #{unet_apply.1}
  #allocation0 [shape = 'u32[]', space=smem, size = 0x4, offset = 0x4, fixed_abs, tag = 'smem constant byte address 0x4 - core index']
  #allocation1 [shape = 'u32[72,128]{1,0:T(1,128)}', space=vmem, size = 0x9000, scoped, tag = 'internal scratch']
  #allocation2 [shape = 'f32[24,192]{1,0:T(8,128)}', space=vmem, size = 0x6000, scoped, tag = 'scratch operand']
  #allocation3 [shape = 'f32[12,192]{1,0:T(8,128)}', space=vmem, size = 0x4000, scoped, tag = 'scratch operand']
  #allocation4 [shape = 'f32[12,96]{1,0:T(8,128)}', space=vmem, size = 0x2000, scoped, tag = 'scratch operand']
  #allocation5 [shape = 'f32[10,160]{1,0:T(8,128)}', space=vmem, size = 0x4000, scoped, tag = 'scratch operand']
  #allocation6 [shape = 'f32[5,160]{1,0:T(8,128)}', space=vmem, size = 0x2000, scoped, tag = 'scratch operand']
  #allocation7 [shape = 'f32[5,80]{1,0:T(8,128)}', space=vmem, size = 0x1000, scoped, tag = 'scratch operand']
  #allocation8 [shape = 'f32[6,96]{1,0:T(8,128)}', space=vmem, size = 0x1000, scoped, tag = 'scratch operand']
  #allocation9 [shape = 'f32[8,64]{1,0:T(8,128)}', space=vmem, size = 0x1000, scoped, tag = 'scratch operand']
  %s0 = inlined_call_operand.vmem [shape: f32[2,26,26], index: 0, kind: input, shape index: {}]
  %s1 = inlined_call_operand.vmem [shape: bf16[9,24,192], index: 1, kind: input, shape index: {}]
  %s2 = inlined_call_operand.vmem [shape: f32[1,192], index: 2, kind: input, shape index: {}]
  %s3 = inlined_call_operand.hbm [shape: bf16[9,80,160], index: 3, kind: input, shape index: {}]
  %s4 = inlined_call_operand.vmem [shape: f32[1,160], index: 4, kind: input, shape index: {}]
  %s5 = inlined_call_operand.hbm [shape: bf16[9,48,96], index: 5, kind: input, shape index: {}]
  %s6 = inlined_call_operand.vmem [shape: f32[1,96], index: 6, kind: input, shape index: {}]
  %s7 = inlined_call_operand.hbm [shape: bf16[2,96,96], index: 7, kind: input, shape index: {}]
  %s8 = inlined_call_operand.vmem [shape: f32[1,96], index: 8, kind: input, shape index: {}]
  %s9 = inlined_call_operand.hbm [shape: bf16[9,64,64], index: 9, kind: input, shape index: {}]
  %s10 = inlined_call_operand.hbm [shape: bf16[9,64,64], index: 10, kind: input, shape index: {}]
  %s11 = inlined_call_operand.vmem [shape: f32[1,64], index: 11, kind: input, shape index: {}]
  %s12 = inlined_call_operand.hbm [shape: bf16[2,64,64], index: 12, kind: input, shape index: {}]
  %s13 = inlined_call_operand.vmem [shape: f32[1,64], index: 13, kind: input, shape index: {}]
  %s14 = inlined_call_operand.hbm [shape: bf16[9,48,48], index: 14, kind: input, shape index: {}]
  %s15 = inlined_call_operand.hbm [shape: bf16[9,48,48], index: 15, kind: input, shape index: {}]
  %s16 = inlined_call_operand.vmem [shape: f32[1,48], index: 16, kind: input, shape index: {}]
  %s17 = inlined_call_operand.vmem [shape: bf16[2,48,6], index: 17, kind: input, shape index: {}]
  %s18 = inlined_call_operand.vmem [shape: f32[2,1,6], index: 18, kind: input, shape index: {}]
  %s19 = inlined_call_operand.vmem [shape: f32[2,2,6,6], index: 19, kind: output, shape index: {}]
  %s20 = sld [smem:[#allocation0]]
  $region141: #{unet_apply.1} parent=0
    _
  %s22 = ssub.s32 1, %s20
  %s23 = scalar_select 0, %s22, %s20
  $region1: #{unet_apply.1} parent=0
    #allocation10 [shape = 'u8[368640]{0}', space=vmem, size = 0x5a000, scoped, tag = 'input window, operand 3, single buffered']
    #allocation11 [shape = 's32[2]{0}', space=sflag, size = 0x8, scoped, tag = 'scoped memory for unet_apply.1']
    #allocation12 [shape = 'u8[110592]{0}', space=vmem, size = 0x1b000, scoped, tag = 'input window, operand 5, single buffered']
    #allocation13 [shape = 's32[1]{0}', space=sflag, size = 0x4, scoped, tag = 'scoped memory for unet_apply.1']
    #allocation14 [shape = 'u8[49152]{0}', space=vmem, size = 0xc000, scoped, tag = 'input window, operand 7, single buffered']
    #allocation15 [shape = 'u8[147456]{0}', space=vmem, size = 0x24000, scoped, tag = 'input window, operand 9, single buffered']
    #allocation16 [shape = 's32[1]{0}', space=sflag, size = 0x4, scoped, tag = 'scoped memory for unet_apply.1']
    #allocation17 [shape = 'u8[147456]{0}', space=vmem, size = 0x24000, scoped, tag = 'input window, operand 10, single buffered']
    #allocation18 [shape = 'u8[32768]{0}', space=vmem, size = 0x8000, scoped, tag = 'input window, operand 12, single buffered']
    #allocation19 [shape = 's32[1]{0}', space=sflag, size = 0x4, scoped, tag = 'scoped memory for unet_apply.1']
    #allocation20 [shape = 'u8[110592]{0}', space=vmem, size = 0x1b000, scoped, tag = 'input window, operand 14, single buffered']
    #allocation21 [shape = 'u8[110592]{0}', space=vmem, size = 0x1b000, scoped, tag = 'input window, operand 15, single buffered']
    #allocation22 [shape = 's32[1]{0}', space=sflag, size = 0x4, scoped, tag = 'scoped memory for unet_apply.1']
    %24 = vsyncpa [#allocation11], 0
    %25 = vsyncpa [#allocation13], 0
    %26 = vsyncpa [#allocation16], 0
    %27 = vsyncpa [#allocation19], 0
    %28 = vsyncpa [#allocation22], 0
    loop: start=0, step=1, limit=4
    $region2: #{unet_apply.1} parent=1 // loop_pre_header
      _
    $region3: #{unet_apply.1} parent=1 // loop_header
      %s30 = sphi 0, %s34
      %p31 = scmp.ge.s32.totalorder %s30, 4
      %s40 = sphi 0, %s42
      %s43 = sphi 0, %s40
      %s44 = sphi 0, %s43
      %s60 = sphi 0, %s44
      %s64 = sphi 0, %s64
      %s66 = sphi 0, %s64
      %s67 = sphi 0, %s66
      %s81 = sphi 0, %s67
      %s85 = sphi 0, %s85
      %s87 = sphi 0, %s85
      %s88 = sphi 0, %s87
      %s102 = sphi 0, %s88
      %s106 = sphi 0, %s106
      %s108 = sphi 0, %s106
      %s109 = sphi 0, %s108
      %s123 = sphi 0, %s109
      %s127 = sphi 0, %s127
      %s129 = sphi 0, %s127
      %s130 = sphi 0, %s129
      %s144 = sphi 0, %s130
      %s148 = sphi 0, %s148
      %s150 = sphi 0, %s148
      %s151 = sphi 0, %s150
      %s165 = sphi 0, %s151
      %s169 = sphi 0, %s169
      %s171 = sphi 0, %s169
      %s172 = sphi 0, %s171
      %s186 = sphi 0, %s172
      %s190 = sphi 0, %s190
      %s192 = sphi 0, %s190
      %s193 = sphi 0, %s192
      %s207 = sphi 0, %s193
      %s211 = sphi 0, %s211
      %s213 = sphi 0, %s211
      %s214 = sphi 0, %s213
      %s228 = sphi 0, %s214
      %s232 = sphi 0, %s232
      %s234 = sphi 0, %s232
      %s235 = sphi 0, %s234
      %s249 = sphi 0, %s235
      %s253 = sphi 0, %s253
      %s255 = sphi 0, %s253
      %s256 = sphi 0, %s255
      %s270 = sphi 0, %s256
      %s274 = sphi 0, %s274
      %s276 = sphi 0, %s274
      %s277 = sphi 0, %s276
      %s291 = sphi 0, %s277
      %s295 = sphi 0, %s295
      %s297 = sphi 0, %s295
      %s298 = sphi 0, %s297
      %s312 = sphi 0, %s298
      %s316 = sphi 0, %s316
      %s318 = sphi 0, %s316
      %s319 = sphi 0, %s318
      %s333 = sphi 0, %s319
      %s337 = sphi 0, %s337
      %s339 = sphi 0, %s337
      %s340 = sphi 0, %s339
      %s354 = sphi 0, %s340
      %s358 = sphi 0, %s358
      %s360 = sphi 0, %s358
      %s361 = sphi 0, %s360
      %s375 = sphi 0, %s361
      %s379 = sphi 0, %s379
      %s381 = sphi 0, %s379
      %s382 = sphi 0, %s381
      %s396 = sphi 0, %s382
      %s400 = sphi 0, %s400
      %s402 = sphi 0, %s400
      %s403 = sphi 0, %s402
      %s417 = sphi 0, %s403
      %s421 = sphi 0, %s421
      %s423 = sphi 0, %s421
      %s424 = sphi 0, %s423
      %s438 = sphi 0, %s424
      %s444 = sphi 0, %s446
      %s447 = sphi 0, %s444
      %s448 = sphi 0, %s447
      %s464 = sphi 0, %s448
    $region4: #{unet_apply.1} parent=1 // loop_header_branch
      %33 = sbr.rel (%p31) target = $region8
    $region5: #{unet_apply.1} parent=1 // loop_body
      %s35 = ssub.s32 %s30, 1
      %s36 = ssub.s32 %s30, 2
      %s37 = sadd.s32 %s30, 1
      %s38 = ssub.s32 %s30, %s37
      %p39 = scmp.eq.s32.totalorder %s38, 0
      %s41 = sadd.s32 %s40, 1
      %s42 = scalar_select %p39, %s40, %s41
      %p45 = pneg %p39
      %p46 = scmp.eq.s32.totalorder %s30, 1
      %p47 = por %p45, %p46
      %p48 = scmp.ne.s32.totalorder %s40, %s43
      %p49 = scmp.eq.s32.totalorder %s30, 0
      %p50 = por %p48, %p49
      %p51 = scmp.ne.s32.totalorder %s40, %s43
      %p52 = scmp.eq.s32.totalorder %s35, 1
      %p53 = por %p51, %p52
      %p54 = scmp.ne.s32.totalorder %s43, %s44
      %p55 = scmp.eq.s32.totalorder %s35, 0
      %p56 = por %p54, %p55
      %p57 = scmp.ne.s32.totalorder %s43, %s44
      %p58 = scmp.eq.s32.totalorder %s36, 1
      %p59 = por %p57, %p58
      %p61 = scmp.ne.s32.totalorder %s44, %s60
      %p62 = scmp.eq.s32.totalorder %s36, 0
      %p63 = por %p61, %p62
      %s65 = sadd.s32 %s64, 1
      %p68 = scmp.eq.s32.totalorder %s30, 1
      %p69 = scmp.ne.s32.totalorder %s64, %s66
      %p70 = scmp.eq.s32.totalorder %s30, 0
      %p71 = por %p69, %p70
      %p72 = scmp.ne.s32.totalorder %s64, %s66
      %p73 = scmp.eq.s32.totalorder %s35, 1
      %p74 = por %p72, %p73
      %p75 = scmp.ne.s32.totalorder %s66, %s67
      %p76 = scmp.eq.s32.totalorder %s35, 0
      %p77 = por %p75, %p76
      %p78 = scmp.ne.s32.totalorder %s66, %s67
      %p79 = scmp.eq.s32.totalorder %s36, 1
      %p80 = por %p78, %p79
      %p82 = scmp.ne.s32.totalorder %s67, %s81
      %p83 = scmp.eq.s32.totalorder %s36, 0
      %p84 = por %p82, %p83
      %s86 = sadd.s32 %s85, 1
      %p89 = scmp.eq.s32.totalorder %s30, 1
      %p90 = scmp.ne.s32.totalorder %s85, %s87
      %p91 = scmp.eq.s32.totalorder %s30, 0
      %p92 = por %p90, %p91
      %p93 = scmp.ne.s32.totalorder %s85, %s87
      %p94 = scmp.eq.s32.totalorder %s35, 1
      %p95 = por %p93, %p94
      %p96 = scmp.ne.s32.totalorder %s87, %s88
      %p97 = scmp.eq.s32.totalorder %s35, 0
      %p98 = por %p96, %p97
      %p99 = scmp.ne.s32.totalorder %s87, %s88
      %p100 = scmp.eq.s32.totalorder %s36, 1
      %p101 = por %p99, %p100
      %p103 = scmp.ne.s32.totalorder %s88, %s102
      %p104 = scmp.eq.s32.totalorder %s36, 0
      %p105 = por %p103, %p104
      %s107 = sadd.s32 %s106, 1
      %p110 = scmp.eq.s32.totalorder %s30, 1
      %p111 = scmp.ne.s32.totalorder %s106, %s108
      %p112 = scmp.eq.s32.totalorder %s30, 0
      %p113 = por %p111, %p112
      %p114 = scmp.ne.s32.totalorder %s106, %s108
      %p115 = scmp.eq.s32.totalorder %s35, 1
      %p116 = por %p114, %p115
      %p117 = scmp.ne.s32.totalorder %s108, %s109
      %p118 = scmp.eq.s32.totalorder %s35, 0
      %p119 = por %p117, %p118
      %p120 = scmp.ne.s32.totalorder %s108, %s109
      %p121 = scmp.eq.s32.totalorder %s36, 1
      %p122 = por %p120, %p121
      %p124 = scmp.ne.s32.totalorder %s109, %s123
      %p125 = scmp.eq.s32.totalorder %s36, 0
      %p126 = por %p124, %p125
      %s128 = sadd.s32 %s127, 1
      %p131 = scmp.eq.s32.totalorder %s30, 1
      %p132 = scmp.ne.s32.totalorder %s127, %s129
      %p133 = scmp.eq.s32.totalorder %s30, 0
      %p134 = por %p132, %p133
      %p135 = scmp.ne.s32.totalorder %s127, %s129
      %p136 = scmp.eq.s32.totalorder %s35, 1
      %p137 = por %p135, %p136
      %p138 = scmp.ne.s32.totalorder %s129, %s130
      %p139 = scmp.eq.s32.totalorder %s35, 0
      %p140 = por %p138, %p139
      %p141 = scmp.ne.s32.totalorder %s129, %s130
      %p142 = scmp.eq.s32.totalorder %s36, 1
      %p143 = por %p141, %p142
      %p145 = scmp.ne.s32.totalorder %s130, %s144
      %p146 = scmp.eq.s32.totalorder %s36, 0
      %p147 = por %p145, %p146
      %s149 = sadd.s32 %s148, 1
      %p152 = scmp.eq.s32.totalorder %s30, 1
      %p153 = scmp.ne.s32.totalorder %s148, %s150
      %p154 = scmp.eq.s32.totalorder %s30, 0
      %p155 = por %p153, %p154
      %p156 = scmp.ne.s32.totalorder %s148, %s150
      %p157 = scmp.eq.s32.totalorder %s35, 1
      %p158 = por %p156, %p157
      %p159 = scmp.ne.s32.totalorder %s150, %s151
      %p160 = scmp.eq.s32.totalorder %s35, 0
      %p161 = por %p159, %p160
      %p162 = scmp.ne.s32.totalorder %s150, %s151
      %p163 = scmp.eq.s32.totalorder %s36, 1
      %p164 = por %p162, %p163
      %p166 = scmp.ne.s32.totalorder %s151, %s165
      %p167 = scmp.eq.s32.totalorder %s36, 0
      %p168 = por %p166, %p167
      %s170 = sadd.s32 %s169, 1
      %p173 = scmp.eq.s32.totalorder %s30, 1
      %p174 = scmp.ne.s32.totalorder %s169, %s171
      %p175 = scmp.eq.s32.totalorder %s30, 0
      %p176 = por %p174, %p175
      %p177 = scmp.ne.s32.totalorder %s169, %s171
      %p178 = scmp.eq.s32.totalorder %s35, 1
      %p179 = por %p177, %p178
      %p180 = scmp.ne.s32.totalorder %s171, %s172
      %p181 = scmp.eq.s32.totalorder %s35, 0
      %p182 = por %p180, %p181
      %p183 = scmp.ne.s32.totalorder %s171, %s172
      %p184 = scmp.eq.s32.totalorder %s36, 1
      %p185 = por %p183, %p184
      %p187 = scmp.ne.s32.totalorder %s172, %s186
      %p188 = scmp.eq.s32.totalorder %s36, 0
      %p189 = por %p187, %p188
      %s191 = sadd.s32 %s190, 1
      %p194 = scmp.eq.s32.totalorder %s30, 1
      %p195 = scmp.ne.s32.totalorder %s190, %s192
      %p196 = scmp.eq.s32.totalorder %s30, 0
      %p197 = por %p195, %p196
      %p198 = scmp.ne.s32.totalorder %s190, %s192
      %p199 = scmp.eq.s32.totalorder %s35, 1
      %p200 = por %p198, %p199
      %p201 = scmp.ne.s32.totalorder %s192, %s193
      %p202 = scmp.eq.s32.totalorder %s35, 0
      %p203 = por %p201, %p202
      %p204 = scmp.ne.s32.totalorder %s192, %s193
      %p205 = scmp.eq.s32.totalorder %s36, 1
      %p206 = por %p204, %p205
      %p208 = scmp.ne.s32.totalorder %s193, %s207
      %p209 = scmp.eq.s32.totalorder %s36, 0
      %p210 = por %p208, %p209
      %s212 = sadd.s32 %s211, 1
      %p215 = scmp.eq.s32.totalorder %s30, 1
      %p216 = scmp.ne.s32.totalorder %s211, %s213
      %p217 = scmp.eq.s32.totalorder %s30, 0
      %p218 = por %p216, %p217
      %p219 = scmp.ne.s32.totalorder %s211, %s213
      %p220 = scmp.eq.s32.totalorder %s35, 1
      %p221 = por %p219, %p220
      %p222 = scmp.ne.s32.totalorder %s213, %s214
      %p223 = scmp.eq.s32.totalorder %s35, 0
      %p224 = por %p222, %p223
      %p225 = scmp.ne.s32.totalorder %s213, %s214
      %p226 = scmp.eq.s32.totalorder %s36, 1
      %p227 = por %p225, %p226
      %p229 = scmp.ne.s32.totalorder %s214, %s228
      %p230 = scmp.eq.s32.totalorder %s36, 0
      %p231 = por %p229, %p230
      %s233 = sadd.s32 %s232, 1
      %p236 = scmp.eq.s32.totalorder %s30, 1
      %p237 = scmp.ne.s32.totalorder %s232, %s234
      %p238 = scmp.eq.s32.totalorder %s30, 0
      %p239 = por %p237, %p238
      %p240 = scmp.ne.s32.totalorder %s232, %s234
      %p241 = scmp.eq.s32.totalorder %s35, 1
      %p242 = por %p240, %p241
      %p243 = scmp.ne.s32.totalorder %s234, %s235
      %p244 = scmp.eq.s32.totalorder %s35, 0
      %p245 = por %p243, %p244
      %p246 = scmp.ne.s32.totalorder %s234, %s235
      %p247 = scmp.eq.s32.totalorder %s36, 1
      %p248 = por %p246, %p247
      %p250 = scmp.ne.s32.totalorder %s235, %s249
      %p251 = scmp.eq.s32.totalorder %s36, 0
      %p252 = por %p250, %p251
      %s254 = sadd.s32 %s253, 1
      %p257 = scmp.eq.s32.totalorder %s30, 1
      %p258 = scmp.ne.s32.totalorder %s253, %s255
      %p259 = scmp.eq.s32.totalorder %s30, 0
      %p260 = por %p258, %p259
      %p261 = scmp.ne.s32.totalorder %s253, %s255
      %p262 = scmp.eq.s32.totalorder %s35, 1
      %p263 = por %p261, %p262
      %p264 = scmp.ne.s32.totalorder %s255, %s256
      %p265 = scmp.eq.s32.totalorder %s35, 0
      %p266 = por %p264, %p265
      %p267 = scmp.ne.s32.totalorder %s255, %s256
      %p268 = scmp.eq.s32.totalorder %s36, 1
      %p269 = por %p267, %p268
      %p271 = scmp.ne.s32.totalorder %s256, %s270
      %p272 = scmp.eq.s32.totalorder %s36, 0
      %p273 = por %p271, %p272
      %s275 = sadd.s32 %s274, 1
      %p278 = scmp.eq.s32.totalorder %s30, 1
      %p279 = scmp.ne.s32.totalorder %s274, %s276
      %p280 = scmp.eq.s32.totalorder %s30, 0
      %p281 = por %p279, %p280
      %p282 = scmp.ne.s32.totalorder %s274, %s276
      %p283 = scmp.eq.s32.totalorder %s35, 1
      %p284 = por %p282, %p283
      %p285 = scmp.ne.s32.totalorder %s276, %s277
      %p286 = scmp.eq.s32.totalorder %s35, 0
      %p287 = por %p285, %p286
      %p288 = scmp.ne.s32.totalorder %s276, %s277
      %p289 = scmp.eq.s32.totalorder %s36, 1
      %p290 = por %p288, %p289
      %p292 = scmp.ne.s32.totalorder %s277, %s291
      %p293 = scmp.eq.s32.totalorder %s36, 0
      %p294 = por %p292, %p293
      %s296 = sadd.s32 %s295, 1
      %p299 = scmp.eq.s32.totalorder %s30, 1
      %p300 = scmp.ne.s32.totalorder %s295, %s297
      %p301 = scmp.eq.s32.totalorder %s30, 0
      %p302 = por %p300, %p301
      %p303 = scmp.ne.s32.totalorder %s295, %s297
      %p304 = scmp.eq.s32.totalorder %s35, 1
      %p305 = por %p303, %p304
      %p306 = scmp.ne.s32.totalorder %s297, %s298
      %p307 = scmp.eq.s32.totalorder %s35, 0
      %p308 = por %p306, %p307
      %p309 = scmp.ne.s32.totalorder %s297, %s298
      %p310 = scmp.eq.s32.totalorder %s36, 1
      %p311 = por %p309, %p310
      %p313 = scmp.ne.s32.totalorder %s298, %s312
      %p314 = scmp.eq.s32.totalorder %s36, 0
      %p315 = por %p313, %p314
      %s317 = sadd.s32 %s316, 1
      %p320 = scmp.eq.s32.totalorder %s30, 1
      %p321 = scmp.ne.s32.totalorder %s316, %s318
      %p322 = scmp.eq.s32.totalorder %s30, 0
      %p323 = por %p321, %p322
      %p324 = scmp.ne.s32.totalorder %s316, %s318
      %p325 = scmp.eq.s32.totalorder %s35, 1
      %p326 = por %p324, %p325
      %p327 = scmp.ne.s32.totalorder %s318, %s319
      %p328 = scmp.eq.s32.totalorder %s35, 0
      %p329 = por %p327, %p328
      %p330 = scmp.ne.s32.totalorder %s318, %s319
      %p331 = scmp.eq.s32.totalorder %s36, 1
      %p332 = por %p330, %p331
      %p334 = scmp.ne.s32.totalorder %s319, %s333
      %p335 = scmp.eq.s32.totalorder %s36, 0
      %p336 = por %p334, %p335
      %s338 = sadd.s32 %s337, 1
      %p341 = scmp.eq.s32.totalorder %s30, 1
      %p342 = scmp.ne.s32.totalorder %s337, %s339
      %p343 = scmp.eq.s32.totalorder %s30, 0
      %p344 = por %p342, %p343
      %p345 = scmp.ne.s32.totalorder %s337, %s339
      %p346 = scmp.eq.s32.totalorder %s35, 1
      %p347 = por %p345, %p346
      %p348 = scmp.ne.s32.totalorder %s339, %s340
      %p349 = scmp.eq.s32.totalorder %s35, 0
      %p350 = por %p348, %p349
      %p351 = scmp.ne.s32.totalorder %s339, %s340
      %p352 = scmp.eq.s32.totalorder %s36, 1
      %p353 = por %p351, %p352
      %p355 = scmp.ne.s32.totalorder %s340, %s354
      %p356 = scmp.eq.s32.totalorder %s36, 0
      %p357 = por %p355, %p356
      %s359 = sadd.s32 %s358, 1
      %p362 = scmp.eq.s32.totalorder %s30, 1
      %p363 = scmp.ne.s32.totalorder %s358, %s360
      %p364 = scmp.eq.s32.totalorder %s30, 0
      %p365 = por %p363, %p364
      %p366 = scmp.ne.s32.totalorder %s358, %s360
      %p367 = scmp.eq.s32.totalorder %s35, 1
      %p368 = por %p366, %p367
      %p369 = scmp.ne.s32.totalorder %s360, %s361
      %p370 = scmp.eq.s32.totalorder %s35, 0
      %p371 = por %p369, %p370
      %p372 = scmp.ne.s32.totalorder %s360, %s361
      %p373 = scmp.eq.s32.totalorder %s36, 1
      %p374 = por %p372, %p373
      %p376 = scmp.ne.s32.totalorder %s361, %s375
      %p377 = scmp.eq.s32.totalorder %s36, 0
      %p378 = por %p376, %p377
      %s380 = sadd.s32 %s379, 1
      %p383 = scmp.eq.s32.totalorder %s30, 1
      %p384 = scmp.ne.s32.totalorder %s379, %s381
      %p385 = scmp.eq.s32.totalorder %s30, 0
      %p386 = por %p384, %p385
      %p387 = scmp.ne.s32.totalorder %s379, %s381
      %p388 = scmp.eq.s32.totalorder %s35, 1
      %p389 = por %p387, %p388
      %p390 = scmp.ne.s32.totalorder %s381, %s382
      %p391 = scmp.eq.s32.totalorder %s35, 0
      %p392 = por %p390, %p391
      %p393 = scmp.ne.s32.totalorder %s381, %s382
      %p394 = scmp.eq.s32.totalorder %s36, 1
      %p395 = por %p393, %p394
      %p397 = scmp.ne.s32.totalorder %s382, %s396
      %p398 = scmp.eq.s32.totalorder %s36, 0
      %p399 = por %p397, %p398
      %s401 = sadd.s32 %s400, 1
      %p404 = scmp.eq.s32.totalorder %s30, 1
      %p405 = scmp.ne.s32.totalorder %s400, %s402
      %p406 = scmp.eq.s32.totalorder %s30, 0
      %p407 = por %p405, %p406
      %p408 = scmp.ne.s32.totalorder %s400, %s402
      %p409 = scmp.eq.s32.totalorder %s35, 1
      %p410 = por %p408, %p409
      %p411 = scmp.ne.s32.totalorder %s402, %s403
      %p412 = scmp.eq.s32.totalorder %s35, 0
      %p413 = por %p411, %p412
      %p414 = scmp.ne.s32.totalorder %s402, %s403
      %p415 = scmp.eq.s32.totalorder %s36, 1
      %p416 = por %p414, %p415
      %p418 = scmp.ne.s32.totalorder %s403, %s417
      %p419 = scmp.eq.s32.totalorder %s36, 0
      %p420 = por %p418, %p419
      %s422 = sadd.s32 %s421, 1
      %p425 = scmp.eq.s32.totalorder %s30, 1
      %p426 = scmp.ne.s32.totalorder %s421, %s423
      %p427 = scmp.eq.s32.totalorder %s30, 0
      %p428 = por %p426, %p427
      %p429 = scmp.ne.s32.totalorder %s421, %s423
      %p430 = scmp.eq.s32.totalorder %s35, 1
      %p431 = por %p429, %p430
      %p432 = scmp.ne.s32.totalorder %s423, %s424
      %p433 = scmp.eq.s32.totalorder %s35, 0
      %p434 = por %p432, %p433
      %p435 = scmp.ne.s32.totalorder %s423, %s424
      %p436 = scmp.eq.s32.totalorder %s36, 1
      %p437 = por %p435, %p436
      %p439 = scmp.ne.s32.totalorder %s424, %s438
      %p440 = scmp.eq.s32.totalorder %s36, 0
      %p441 = por %p439, %p440
      %s442 = ssub.s32 %s30, %s37
      %p443 = scmp.eq.s32.totalorder %s442, 0
      %s445 = sadd.s32 %s444, 1
      %s446 = scalar_select %p443, %s444, %s445
      %p449 = pneg %p443
      %p450 = scmp.eq.s32.totalorder %s30, 1
      %p451 = por %p449, %p450
      %p452 = scmp.ne.s32.totalorder %s444, %s447
      %p453 = scmp.eq.s32.totalorder %s30, 0
      %p454 = por %p452, %p453
      %p455 = scmp.ne.s32.totalorder %s444, %s447
      %p456 = scmp.eq.s32.totalorder %s35, 1
      %p457 = por %p455, %p456
      %p458 = scmp.ne.s32.totalorder %s447, %s448
      %p459 = scmp.eq.s32.totalorder %s35, 0
      %p460 = por %p458, %p459
      %p461 = scmp.ne.s32.totalorder %s447, %s448
      %p462 = scmp.eq.s32.totalorder %s36, 1
      %p463 = por %p461, %p462
      %p465 = scmp.ne.s32.totalorder %s448, %s464
      %p466 = scmp.eq.s32.totalorder %s36, 0
      %p467 = por %p465, %p466
      %p468 = scmp.le.s32.totalorder 1, %s30
      %p469 = scmp.lt.s32.totalorder %s30, 3
      %p470 = pnand %p468, %p469
      %p471 = pneg %p470
      // Predicated region
      $region9: #{unet_apply.1} parent=5 // pred_check
        _
      $region10: #{unet_apply.1} parent=5 // pred_check_branch
        %473 = sbr.rel (%p470) target = $region12
      $region11: #{unet_apply.1} parent=5 // pred_region
        %s474 = ssub.s32 %s30, 1
        // Predicated region
        $region13: #{unet_apply.1} parent=11 // pred_check
          %p475 = pneg %p77
        $region14: #{unet_apply.1} parent=11 // pred_check_branch
          %477 = sbr.rel (%p475) target = $region16
        $region15: #{unet_apply.1} parent=11 // pred_region
          _
        $region16: #{unet_apply.1} parent=11 // pred_fallthru
          _
        // Predicated region
        $region17: #{unet_apply.1} parent=11 // pred_check
          %p478 = pneg %p98
        $region18: #{unet_apply.1} parent=11 // pred_check_branch
          %480 = sbr.rel (%p478) target = $region20
        $region19: #{unet_apply.1} parent=11 // pred_region
          _
        $region20: #{unet_apply.1} parent=11 // pred_fallthru
          _
        // Predicated region
        $region21: #{unet_apply.1} parent=11 // pred_check
          %p481 = pneg %p119
        $region22: #{unet_apply.1} parent=11 // pred_check_branch
          %483 = sbr.rel (%p481) target = $region24
        $region23: #{unet_apply.1} parent=11 // pred_region
          %485 = vsyncadd [#allocation11], 0
          %s486 = sshll.u32 %s3, 4
          %s487 = int_to_ptr.hbm [resolvable:$true] %s486
          %s488 = sshll.u32 [#allocation10], 4
          %s489 = int_to_ptr.vmem [resolvable:$true] %s488
          %494 = dma.hbm_to_vmem [thread:$0]  %s487, 11520, %s489, [#allocation11], 128, 128, 8
        $region24: #{unet_apply.1} parent=11 // pred_fallthru
          _
        // Predicated region
        $region25: #{unet_apply.1} parent=11 // pred_check
          %p495 = pneg %p140
        $region26: #{unet_apply.1} parent=11 // pred_check_branch
          %497 = sbr.rel (%p495) target = $region28
        $region27: #{unet_apply.1} parent=11 // pred_region
          _
        $region28: #{unet_apply.1} parent=11 // pred_fallthru
          _
        // Predicated region
        $region29: #{unet_apply.1} parent=11 // pred_check
          %p498 = pneg %p161
        $region30: #{unet_apply.1} parent=11 // pred_check_branch
          %500 = sbr.rel (%p498) target = $region32
        $region31: #{unet_apply.1} parent=11 // pred_region
          %502 = vsyncadd [#allocation13], 0
          %s503 = sshll.u32 %s5, 4
          %s504 = int_to_ptr.hbm [resolvable:$true] %s503
          %s505 = sshll.u32 [#allocation12], 4
          %s506 = int_to_ptr.vmem [resolvable:$true] %s505
          %511 = dma.hbm_to_vmem [thread:$0]  %s504, 3456, %s506, [#allocation13], 64, 64, 4
        $region32: #{unet_apply.1} parent=11 // pred_fallthru
          _
        // Predicated region
        $region33: #{unet_apply.1} parent=11 // pred_check
          %p512 = pneg %p182
        $region34: #{unet_apply.1} parent=11 // pred_check_branch
          %514 = sbr.rel (%p512) target = $region36
        $region35: #{unet_apply.1} parent=11 // pred_region
          _
        $region36: #{unet_apply.1} parent=11 // pred_fallthru
          _
        // Predicated region
        $region37: #{unet_apply.1} parent=11 // pred_check
          %p515 = pneg %p203
        $region38: #{unet_apply.1} parent=11 // pred_check_branch
          %517 = sbr.rel (%p515) target = $region40
        $region39: #{unet_apply.1} parent=11 // pred_region
          %519 = vsyncadd [#allocation13], 0
          %s520 = sshll.u32 %s7, 4
          %s521 = int_to_ptr.hbm [resolvable:$true] %s520
          %s522 = sshll.u32 [#allocation14], 4
          %s523 = int_to_ptr.vmem [resolvable:$true] %s522
          %528 = dma.hbm_to_vmem [thread:$0]  %s521, 1536, %s523, [#allocation13], 64, 64, 4
        $region40: #{unet_apply.1} parent=11 // pred_fallthru
          _
        // Predicated region
        $region41: #{unet_apply.1} parent=11 // pred_check
          %p529 = pneg %p224
        $region42: #{unet_apply.1} parent=11 // pred_check_branch
          %531 = sbr.rel (%p529) target = $region44
        $region43: #{unet_apply.1} parent=11 // pred_region
          _
        $region44: #{unet_apply.1} parent=11 // pred_fallthru
          _
        // Predicated region
        $region45: #{unet_apply.1} parent=11 // pred_check
          %p532 = pneg %p245
        $region46: #{unet_apply.1} parent=11 // pred_check_branch
          %534 = sbr.rel (%p532) target = $region48
        $region47: #{unet_apply.1} parent=11 // pred_region
          %536 = vsyncadd [#allocation16], 0
          %s537 = sshll.u32 %s9, 4
          %s538 = int_to_ptr.hbm [resolvable:$true] %s537
          %s539 = sshll.u32 [#allocation15], 4
          %s540 = int_to_ptr.vmem [resolvable:$true] %s539
          %545 = dma.hbm_to_vmem [thread:$0]  %s538, 4608, %s540, [#allocation16], 64, 64, 4
        $region48: #{unet_apply.1} parent=11 // pred_fallthru
          _
        // Predicated region
        $region49: #{unet_apply.1} parent=11 // pred_check
          %p546 = pneg %p266
        $region50: #{unet_apply.1} parent=11 // pred_check_branch
          %548 = sbr.rel (%p546) target = $region52
        $region51: #{unet_apply.1} parent=11 // pred_region
          %550 = vsyncadd [#allocation16], 0
          %s551 = sshll.u32 %s10, 4
          %s552 = int_to_ptr.hbm [resolvable:$true] %s551
          %s553 = sshll.u32 [#allocation17], 4
          %s554 = int_to_ptr.vmem [resolvable:$true] %s553
          %559 = dma.hbm_to_vmem [thread:$0]  %s552, 4608, %s554, [#allocation16], 64, 64, 4
        $region52: #{unet_apply.1} parent=11 // pred_fallthru
          _
        // Predicated region
        $region53: #{unet_apply.1} parent=11 // pred_check
          %p560 = pneg %p287
        $region54: #{unet_apply.1} parent=11 // pred_check_branch
          %562 = sbr.rel (%p560) target = $region56
        $region55: #{unet_apply.1} parent=11 // pred_region
          _
        $region56: #{unet_apply.1} parent=11 // pred_fallthru
          _
        // Predicated region
        $region57: #{unet_apply.1} parent=11 // pred_check
          %p563 = pneg %p308
        $region58: #{unet_apply.1} parent=11 // pred_check_branch
          %565 = sbr.rel (%p563) target = $region60
        $region59: #{unet_apply.1} parent=11 // pred_region
          %567 = vsyncadd [#allocation19], 0
          %s568 = sshll.u32 %s12, 4
          %s569 = int_to_ptr.hbm [resolvable:$true] %s568
          %s570 = sshll.u32 [#allocation18], 4
          %s571 = int_to_ptr.vmem [resolvable:$true] %s570
          %576 = dma.hbm_to_vmem [thread:$0]  %s569, 1024, %s571, [#allocation19], 64, 64, 4
        $region60: #{unet_apply.1} parent=11 // pred_fallthru
          _
        // Predicated region
        $region61: #{unet_apply.1} parent=11 // pred_check
          %p577 = pneg %p329
        $region62: #{unet_apply.1} parent=11 // pred_check_branch
          %579 = sbr.rel (%p577) target = $region64
        $region63: #{unet_apply.1} parent=11 // pred_region
          _
        $region64: #{unet_apply.1} parent=11 // pred_fallthru
          _
        // Predicated region
        $region65: #{unet_apply.1} parent=11 // pred_check
          %p580 = pneg %p350
        $region66: #{unet_apply.1} parent=11 // pred_check_branch
          %582 = sbr.rel (%p580) target = $region68
        $region67: #{unet_apply.1} parent=11 // pred_region
          %584 = vsyncadd [#allocation19], 0
          %s585 = sshll.u32 %s14, 4
          %s586 = int_to_ptr.hbm [resolvable:$true] %s585
          %s587 = sshll.u32 [#allocation20], 4
          %s588 = int_to_ptr.vmem [resolvable:$true] %s587
          %593 = dma.hbm_to_vmem [thread:$0]  %s586, 3456, %s588, [#allocation19], 64, 64, 4
        $region68: #{unet_apply.1} parent=11 // pred_fallthru
          _
        // Predicated region
        $region69: #{unet_apply.1} parent=11 // pred_check
          %p594 = pneg %p371
        $region70: #{unet_apply.1} parent=11 // pred_check_branch
          %596 = sbr.rel (%p594) target = $region72
        $region71: #{unet_apply.1} parent=11 // pred_region
          %598 = vsyncadd [#allocation22], 0
          %s599 = sshll.u32 %s15, 4
          %s600 = int_to_ptr.hbm [resolvable:$true] %s599
          %s601 = sshll.u32 [#allocation21], 4
          %s602 = int_to_ptr.vmem [resolvable:$true] %s601
          %607 = dma.hbm_to_vmem [thread:$0]  %s600, 3456, %s602, [#allocation22], 64, 64, 4
        $region72: #{unet_apply.1} parent=11 // pred_fallthru
          _
        // Predicated region
        $region73: #{unet_apply.1} parent=11 // pred_check
          %p608 = pneg %p392
        $region74: #{unet_apply.1} parent=11 // pred_check_branch
          %610 = sbr.rel (%p608) target = $region76
        $region75: #{unet_apply.1} parent=11 // pred_region
          _
        $region76: #{unet_apply.1} parent=11 // pred_fallthru
          _
        // Predicated region
        $region77: #{unet_apply.1} parent=11 // pred_check
          %p611 = pneg %p413
        $region78: #{unet_apply.1} parent=11 // pred_check_branch
          %613 = sbr.rel (%p611) target = $region80
        $region79: #{unet_apply.1} parent=11 // pred_region
          _
        $region80: #{unet_apply.1} parent=11 // pred_fallthru
          _
        // Predicated region
        $region81: #{unet_apply.1} parent=11 // pred_check
          %p614 = pneg %p434
        $region82: #{unet_apply.1} parent=11 // pred_check_branch
          %616 = sbr.rel (%p614) target = $region84
        $region83: #{unet_apply.1} parent=11 // pred_region
          _
        $region84: #{unet_apply.1} parent=11 // pred_fallthru
          _
      $region12: #{unet_apply.1} parent=5 // pred_fallthru
        _
      %p617 = scmp.lt.s32.totalorder %s30, 2
      // Predicated region
      $region85: #{unet_apply.1} parent=5 // pred_check
        %p618 = pneg %p617
      $region86: #{unet_apply.1} parent=5 // pred_check_branch
        %620 = sbr.rel (%p618) target = $region88
      $region87: #{unet_apply.1} parent=5 // pred_region
        // Predicated region
        $region89: #{unet_apply.1} parent=87 // pred_check
          %p621 = pneg %p50
        $region90: #{unet_apply.1} parent=87 // pred_check_branch
          %623 = sbr.rel (%p621) target = $region92
        $region91: #{unet_apply.1} parent=87 // pred_region
          %p624 = scmp.lt.s32.totalorder %s30, 1
          %s625 = scalar_select %p624, %s30, 1
          %s626 = smul.addr %s625, 4
          %s627 = smul.addr %s626, 8
          %s628 = scalar_lea.vmem %s0, %s627
        $region92: #{unet_apply.1} parent=87 // pred_fallthru
          _
      $region88: #{unet_apply.1} parent=5 // pred_fallthru
        _
      %p629 = scmp.le.s32.totalorder 1, %s30
      %p630 = scmp.lt.s32.totalorder %s30, 3
      %p631 = pnand %p629, %p630
      %p632 = pneg %p631
      // Predicated region
      $region93: #{unet_apply.1} parent=5 // pred_check
        _
      $region94: #{unet_apply.1} parent=5 // pred_check_branch
        %634 = sbr.rel (%p631) target = $region96
      $region95: #{unet_apply.1} parent=5 // pred_region
        %s635 = ssub.s32 %s30, 1
        // Predicated region
        $region97: #{unet_apply.1} parent=95 // pred_check
          %p636 = pneg %p119
        $region98: #{unet_apply.1} parent=95 // pred_check_branch
          %638 = sbr.rel (%p636) target = $region100
        $region99: #{unet_apply.1} parent=95 // pred_region
          %640 = dma.done [#allocation11], 11520
        $region100: #{unet_apply.1} parent=95 // pred_fallthru
          _
        // Predicated region
        $region101: #{unet_apply.1} parent=95 // pred_check
          %p641 = pneg %p161
        $region102: #{unet_apply.1} parent=95 // pred_check_branch
          %643 = sbr.rel (%p641) target = $region104
        $region103: #{unet_apply.1} parent=95 // pred_region
          %645 = dma.done [#allocation13], 3456
        $region104: #{unet_apply.1} parent=95 // pred_fallthru
          _
        // Predicated region
        $region105: #{unet_apply.1} parent=95 // pred_check
          %p646 = pneg %p203
        $region106: #{unet_apply.1} parent=95 // pred_check_branch
          %648 = sbr.rel (%p646) target = $region108
        $region107: #{unet_apply.1} parent=95 // pred_region
          %650 = dma.done [#allocation13], 1536
        $region108: #{unet_apply.1} parent=95 // pred_fallthru
          _
        // Predicated region
        $region109: #{unet_apply.1} parent=95 // pred_check
          %p651 = pneg %p245
        $region110: #{unet_apply.1} parent=95 // pred_check_branch
          %653 = sbr.rel (%p651) target = $region112
        $region111: #{unet_apply.1} parent=95 // pred_region
          %655 = dma.done [#allocation16], 4608
        $region112: #{unet_apply.1} parent=95 // pred_fallthru
          _
        // Predicated region
        $region113: #{unet_apply.1} parent=95 // pred_check
          %p656 = pneg %p266
        $region114: #{unet_apply.1} parent=95 // pred_check_branch
          %658 = sbr.rel (%p656) target = $region116
        $region115: #{unet_apply.1} parent=95 // pred_region
          %660 = dma.done [#allocation16], 4608
        $region116: #{unet_apply.1} parent=95 // pred_fallthru
          _
        // Predicated region
        $region117: #{unet_apply.1} parent=95 // pred_check
          %p661 = pneg %p308
        $region118: #{unet_apply.1} parent=95 // pred_check_branch
          %663 = sbr.rel (%p661) target = $region120
        $region119: #{unet_apply.1} parent=95 // pred_region
          %665 = dma.done [#allocation19], 1024
        $region120: #{unet_apply.1} parent=95 // pred_fallthru
          _
        // Predicated region
        $region121: #{unet_apply.1} parent=95 // pred_check
          %p666 = pneg %p350
        $region122: #{unet_apply.1} parent=95 // pred_check_branch
          %668 = sbr.rel (%p666) target = $region124
        $region123: #{unet_apply.1} parent=95 // pred_region
          %670 = dma.done [#allocation19], 3456
        $region124: #{unet_apply.1} parent=95 // pred_fallthru
          _
        // Predicated region
        $region125: #{unet_apply.1} parent=95 // pred_check
          %p671 = pneg %p371
        $region126: #{unet_apply.1} parent=95 // pred_check_branch
          %673 = sbr.rel (%p671) target = $region128
        $region127: #{unet_apply.1} parent=95 // pred_region
          %675 = dma.done [#allocation22], 3456
        $region128: #{unet_apply.1} parent=95 // pred_fallthru
          _
        %p676 = scmp.lt.s32.totalorder %s35, 1
        %s677 = scalar_select %p676, %s35, 1
        %s678 = smul.addr %s677, 4
        %s679 = smul.addr %s678, 8
        %s680 = scalar_lea.vmem %s0, %s679
        %p681 = pneg %p56
        %p682 = pneg %p53
        %p683 = pneg %p77
        %p684 = pneg %p74
        %p685 = pneg %p98
        %p686 = pneg %p95
        %p687 = pneg %p119
        %p688 = pneg %p116
        %p689 = pneg %p140
        %p690 = pneg %p137
        %p691 = pneg %p161
        %p692 = pneg %p158
        %p693 = pneg %p182
        %p694 = pneg %p179
        %p695 = pneg %p203
        %p696 = pneg %p200
        %p697 = pneg %p224
        %p698 = pneg %p221
        %p699 = pneg %p245
        %p700 = pneg %p242
        %p701 = pneg %p266
        %p702 = pneg %p263
        %p703 = pneg %p287
        %p704 = pneg %p284
        %p705 = pneg %p308
        %p706 = pneg %p305
        %p707 = pneg %p329
        %p708 = pneg %p326
        %p709 = pneg %p350
        %p710 = pneg %p347
        %p711 = pneg %p371
        %p712 = pneg %p368
        %p713 = pneg %p392
        %p714 = pneg %p389
        %p715 = pneg %p413
        %p716 = pneg %p410
        %p717 = pneg %p434
        %p718 = pneg %p431
        %p719 = pneg %p460
        %p720 = pneg %p457
        %p721 = scmp.lt.s32.totalorder %s35, 1
        %s722 = scalar_select %p721, %s35, 1
        %s723 = smul.addr %s722, 2
        %s724 = smul.addr %s723, 8
        %s725 = scalar_lea.vmem %s19, %s724
        %p726 = scmp.lt.s32.totalorder %s35, 1
        %s727 = scalar_select %p726, %s35, 1
        %s728 = smul.addr %s727, 4
        %s729 = smul.addr %s728, 8
        %s730 = scalar_lea.vmem %s0, %s729
        %p731 = scmp.lt.s32.totalorder %s35, 1
        %s732 = scalar_select %p731, %s35, 1
        %s733 = smul.addr %s732, 2
        %s734 = smul.addr %s733, 8
        %s735 = scalar_lea.vmem %s19, %s734
        %v737 = vld [vmem:[%s730] sm:$0xff]
        %v738 = vld [vmem:[%s730 + $0x8] sm:$0xff]
        %v739 = vld [vmem:[%s730 + $0x10] sm:$0xff]
        %v740 = vpack.c.bf16 %v738, %v737
        %v741 = vpack.c.bf16 %v739, %v739
        %v742 = vld [vmem:[%s1] sm:$0xff]
        %v743 = vld [vmem:[%s1 + $0x8] sm:$0xff]
        %v744 = vld [vmem:[%s1 + $0x10] sm:$0xff]
        %s745 = scalar_lea.vmem %s1, 24
        %v746 = vld [vmem:[%s745] sm:$0xff]
        %v747 = vld [vmem:[%s745 + $0x8] sm:$0xff]
        %v748 = vld [vmem:[%s745 + $0x10] sm:$0xff]
        %751 = vrot.lane.b32.xlu0 %v740, 127
        %v752 = vpop.permute.xlu0 %751
        %753 = vrot.lane.b32.xlu0 %v741, 127
        %v754 = vpop.permute.xlu0 %753
        %v758 = vunpack.c.l.b16 %v746
        %v759 = vunpack.c.h.b16 %v746
        %v760 = vunpack.c.l.b16 %v747
        %v761 = vunpack.c.h.b16 %v747
        %v762 = vunpack.c.l.b16 %v748
        %v763 = vunpack.c.h.b16 %v748
        %v764 = vpack.c.b16 %v760, %v758
        %v765 = vpack.c.b16 %v761, %v759
        %v766 = vpack.c.b16 %v762, %v762
        %v767 = vpack.c.b16 %v763, %v763
        %vm770 = vcmask 195584
        %v772 = vsel %vm770, %v752, 0
        %v775 = vsel %vm770, %v754, 0
        %vm777 = vcmask 1043456
        %v779 = vsel %vm777, %v766, 0
        %v782 = vsel %vm777, %v767, 0
        %784 = vmatpush.bf16.msra.mxu0 0
        %785 = vmatpush.bf16.msra.mxu0 0
        %786 = vmatpush.bf16.msra.mxu0 0
        %787 = vmatpush.bf16.msra.mxu0 0
        %788 = vmatpush.bf16.msra.mxu0 0
        %789 = vmatpush.bf16.msra.mxu0 0
        %790 = vmatpush.bf16.msra.mxu0 %v779
        %791 = vmatpush.bf16.msra.mxu0 %v764
        %792 = vmatmul.bf16.gmra.mxu0 %v772
        %v793 = vpop.f32.mrf.mxu0
        %v794 = vadd.f32 0.0, %v793
        %v795 = vpop.f32.mrf.mxu0
        %v796 = vadd.f32 0.0, %v795
        %797 = vmatmul.bf16.gmra.mxu0 %v775
        %v798 = vpop.f32.mrf.mxu0
        %v799 = vadd.f32 0.0, %v798
        %v800 = vpop.f32.mrf.mxu0
        %801 = vdwg.mxu0
        %802 = vmatpush.bf16.msra.mxu0 0
        %803 = vmatpush.bf16.msra.mxu0 0
        %804 = vmatpush.bf16.msra.mxu0 0
        %805 = vmatpush.bf16.msra.mxu0 0
        %806 = vmatpush.bf16.msra.mxu0 0
        %807 = vmatpush.bf16.msra.mxu0 0
        %808 = vmatpush.bf16.msra.mxu0 %v782
        %809 = vmatpush.bf16.msra.mxu0 %v765
        %810 = vmatmul.bf16.gmra.mxu0 %v772
        %v811 = vpop.f32.mrf.mxu0
        %v812 = vadd.f32 0.0, %v811
        %v813 = vpop.f32.mrf.mxu0
        %v814 = vadd.f32 0.0, %v813
        %815 = vmatmul.bf16.gmra.mxu0 %v775
        %v816 = vpop.f32.mrf.mxu0
        %v817 = vadd.f32 0.0, %v816
        %v818 = vpop.f32.mrf.mxu0
        %819 = vdwg.mxu0
        %v823 = vunpack.c.l.b16 %v742
        %v824 = vunpack.c.h.b16 %v742
        %v825 = vunpack.c.l.b16 %v743
        %v826 = vunpack.c.h.b16 %v743
        %v827 = vunpack.c.l.b16 %v744
        %v828 = vunpack.c.h.b16 %v744
        %v829 = vpack.c.b16 %v825, %v823
        %v830 = vpack.c.b16 %v826, %v824
        %v831 = vpack.c.b16 %v827, %v827
        %v832 = vpack.c.b16 %v828, %v828
        %v836 = vsel %vm770, %v740, 0
        %v839 = vsel %vm770, %v741, 0
        %v842 = vsel %vm777, %v831, 0
        %v845 = vsel %vm777, %v832, 0
        %847 = vmatpush.bf16.msra.mxu0 0
        %848 = vmatpush.bf16.msra.mxu0 0
        %849 = vmatpush.bf16.msra.mxu0 0
        %850 = vmatpush.bf16.msra.mxu0 0
        %851 = vmatpush.bf16.msra.mxu0 0
        %852 = vmatpush.bf16.msra.mxu0 0
        %853 = vmatpush.bf16.msra.mxu0 %v842
        %854 = vmatpush.bf16.msra.mxu0 %v829
        %855 = vmatmul.bf16.gmra.mxu0 %v836
        %v856 = vpop.f32.mrf.mxu0
        %v857 = vadd.f32 %v794, %v856
        %v858 = vpop.f32.mrf.mxu0
        %v859 = vadd.f32 %v796, %v858
        %860 = vmatmul.bf16.gmra.mxu0 %v839
        %v861 = vpop.f32.mrf.mxu0
        %v862 = vadd.f32 %v799, %v861
        %v863 = vpop.f32.mrf.mxu0
        %864 = vdwg.mxu0
        %865 = vmatpush.bf16.msra.mxu0 0
        %866 = vmatpush.bf16.msra.mxu0 0
        %867 = vmatpush.bf16.msra.mxu0 0
        %868 = vmatpush.bf16.msra.mxu0 0
        %869 = vmatpush.bf16.msra.mxu0 0
        %870 = vmatpush.bf16.msra.mxu0 0
        %871 = vmatpush.bf16.msra.mxu0 %v845
        %872 = vmatpush.bf16.msra.mxu0 %v830
        %873 = vmatmul.bf16.gmra.mxu0 %v836
        %v874 = vpop.f32.mrf.mxu0
        %v875 = vadd.f32 %v812, %v874
        %v876 = vpop.f32.mrf.mxu0
        %v877 = vadd.f32 %v814, %v876
        %878 = vmatmul.bf16.gmra.mxu0 %v839
        %v879 = vpop.f32.mrf.mxu0
        %v880 = vadd.f32 %v817, %v879
        %v881 = vpop.f32.mrf.mxu0
        %882 = vdwg.mxu0
        %s883 = scalar_lea.vmem %s1, 48
        %v884 = vld [vmem:[%s883] sm:$0xff]
        %v885 = vld [vmem:[%s883 + $0x8] sm:$0xff]
        %v886 = vld [vmem:[%s883 + $0x10] sm:$0xff]
        %887 = vrot.lane.b32.xlu0 %v740, 126
        %v888 = vpop.permute.xlu0 %887
        %889 = vrot.lane.b32.xlu0 %v741, 126
        %v890 = vpop.permute.xlu0 %889
        %v894 = vunpack.c.l.b16 %v884
        %v895 = vunpack.c.h.b16 %v884
        %v896 = vunpack.c.l.b16 %v885
        %v897 = vunpack.c.h.b16 %v885
        %v898 = vunpack.c.l.b16 %v886
        %v899 = vunpack.c.h.b16 %v886
        %v900 = vpack.c.b16 %v896, %v894
        %v901 = vpack.c.b16 %v897, %v895
        %v902 = vpack.c.b16 %v898, %v898
        %v903 = vpack.c.b16 %v899, %v899
        %v907 = vsel %vm770, %v888, 0
        %v910 = vsel %vm770, %v890, 0
        %v913 = vsel %vm777, %v902, 0
        %v916 = vsel %vm777, %v903, 0
        %918 = vmatpush.bf16.msra.mxu0 0
        %919 = vmatpush.bf16.msra.mxu0 0
        %920 = vmatpush.bf16.msra.mxu0 0
        %921 = vmatpush.bf16.msra.mxu0 0
        %922 = vmatpush.bf16.msra.mxu0 0
        %923 = vmatpush.bf16.msra.mxu0 0
        %924 = vmatpush.bf16.msra.mxu0 %v913
        %925 = vmatpush.bf16.msra.mxu0 %v900
        %926 = vmatmul.bf16.gmra.mxu0 %v907
        %v927 = vpop.f32.mrf.mxu0
        %v928 = vadd.f32 0.0, %v927
        %v929 = vpop.f32.mrf.mxu0
        %v930 = vadd.f32 0.0, %v929
        %931 = vmatmul.bf16.gmra.mxu0 %v910
        %v932 = vpop.f32.mrf.mxu0
        %v933 = vadd.f32 0.0, %v932
        %v934 = vpop.f32.mrf.mxu0
        %935 = vdwg.mxu0
        %936 = vmatpush.bf16.msra.mxu0 0
        %937 = vmatpush.bf16.msra.mxu0 0
        %938 = vmatpush.bf16.msra.mxu0 0
        %939 = vmatpush.bf16.msra.mxu0 0
        %940 = vmatpush.bf16.msra.mxu0 0
        %941 = vmatpush.bf16.msra.mxu0 0
        %942 = vmatpush.bf16.msra.mxu0 %v916
        %943 = vmatpush.bf16.msra.mxu0 %v901
        %944 = vmatmul.bf16.gmra.mxu0 %v907
        %v945 = vpop.f32.mrf.mxu0
        %v946 = vadd.f32 0.0, %v945
        %v947 = vpop.f32.mrf.mxu0
        %v948 = vadd.f32 0.0, %v947
        %949 = vmatmul.bf16.gmra.mxu0 %v910
        %v950 = vpop.f32.mrf.mxu0
        %v951 = vadd.f32 0.0, %v950
        %v952 = vpop.f32.mrf.mxu0
        %953 = vdwg.mxu0
        %v954 = vadd.f32 %v857, %v928
        %v955 = vadd.f32 %v875, %v946
        %v956 = vadd.f32 %v859, %v930
        %v957 = vadd.f32 %v877, %v948
        %v958 = vadd.f32 %v862, %v933
        %v959 = vadd.f32 %v880, %v951
        %v960 = vld [vmem:[%s730 + $0x1] sm:$0xff]
        %v961 = vld [vmem:[%s730 + $0x9] sm:$0xff]
        %v962 = vld [vmem:[%s730 + $0x11] sm:$0xff]
        %v963 = vpack.c.bf16 %v961, %v960
        %v964 = vpack.c.bf16 %v962, %v962
        %s965 = scalar_lea.vmem %s1, 72
        %v966 = vld [vmem:[%s965] sm:$0xff]
        %v967 = vld [vmem:[%s965 + $0x8] sm:$0xff]
        %v968 = vld [vmem:[%s965 + $0x10] sm:$0xff]
        %v972 = vunpack.c.l.b16 %v966
        %v973 = vunpack.c.h.b16 %v966
        %v974 = vunpack.c.l.b16 %v967
        %v975 = vunpack.c.h.b16 %v967
        %v976 = vunpack.c.l.b16 %v968
        %v977 = vunpack.c.h.b16 %v968
        %v978 = vpack.c.b16 %v974, %v972
        %v979 = vpack.c.b16 %v975, %v973
        %v980 = vpack.c.b16 %v976, %v976
        %v981 = vpack.c.b16 %v977, %v977
        %v985 = vsel %vm770, %v963, 0
        %v988 = vsel %vm770, %v964, 0
        %v991 = vsel %vm777, %v980, 0
        %v994 = vsel %vm777, %v981, 0
        %996 = vmatpush.bf16.msra.mxu0 0
        %997 = vmatpush.bf16.msra.mxu0 0
        %998 = vmatpush.bf16.msra.mxu0 0
        %999 = vmatpush.bf16.msra.mxu0 0
        %1000 = vmatpush.bf16.msra.mxu0 0
        %1001 = vmatpush.bf16.msra.mxu0 0
        %1002 = vmatpush.bf16.msra.mxu0 %v991
        %1003 = vmatpush.bf16.msra.mxu0 %v978
        %1004 = vmatmul.bf16.gmra.mxu0 %v985
        %v1005 = vpop.f32.mrf.mxu0
        %v1006 = vadd.f32 0.0, %v1005
        %v1007 = vpop.f32.mrf.mxu0
        %v1008 = vadd.f32 0.0, %v1007
        %1009 = vmatmul.bf16.gmra.mxu0 %v988
        %v1010 = vpop.f32.mrf.mxu0
        %v1011 = vadd.f32 0.0, %v1010
        %v1012 = vpop.f32.mrf.mxu0
        %1013 = vdwg.mxu0
        %1014 = vmatpush.bf16.msra.mxu0 0
        %1015 = vmatpush.bf16.msra.mxu0 0
        %1016 = vmatpush.bf16.msra.mxu0 0
        %1017 = vmatpush.bf16.msra.mxu0 0
        %1018 = vmatpush.bf16.msra.mxu0 0
        %1019 = vmatpush.bf16.msra.mxu0 0
        %1020 = vmatpush.bf16.msra.mxu0 %v994
        %1021 = vmatpush.bf16.msra.mxu0 %v979
        %1022 = vmatmul.bf16.gmra.mxu0 %v985
        %v1023 = vpop.f32.mrf.mxu0
        %v1024 = vadd.f32 0.0, %v1023
        %v1025 = vpop.f32.mrf.mxu0
        %v1026 = vadd.f32 0.0, %v1025
        %1027 = vmatmul.bf16.gmra.mxu0 %v988
        %v1028 = vpop.f32.mrf.mxu0
        %v1029 = vadd.f32 0.0, %v1028
        %v1030 = vpop.f32.mrf.mxu0
        %1031 = vdwg.mxu0
        %v1032 = vadd.f32 %v954, %v1006
        %v1033 = vadd.f32 %v955, %v1024
        %v1034 = vadd.f32 %v956, %v1008
        %v1035 = vadd.f32 %v957, %v1026
        %v1036 = vadd.f32 %v958, %v1011
        %v1037 = vadd.f32 %v959, %v1029
        %s1038 = scalar_lea.vmem %s1, 96
        %v1039 = vld [vmem:[%s1038] sm:$0xff]
        %v1040 = vld [vmem:[%s1038 + $0x8] sm:$0xff]
        %v1041 = vld [vmem:[%s1038 + $0x10] sm:$0xff]
        %1044 = vrot.lane.b32.xlu0 %v963, 127
        %v1045 = vpop.permute.xlu0 %1044
        %1046 = vrot.lane.b32.xlu0 %v964, 127
        %v1047 = vpop.permute.xlu0 %1046
        %v1051 = vunpack.c.l.b16 %v1039
        %v1052 = vunpack.c.h.b16 %v1039
        %v1053 = vunpack.c.l.b16 %v1040
        %v1054 = vunpack.c.h.b16 %v1040
        %v1055 = vunpack.c.l.b16 %v1041
        %v1056 = vunpack.c.h.b16 %v1041
        %v1057 = vpack.c.b16 %v1053, %v1051
        %v1058 = vpack.c.b16 %v1054, %v1052
        %v1059 = vpack.c.b16 %v1055, %v1055
        %v1060 = vpack.c.b16 %v1056, %v1056
        %v1064 = vsel %vm770, %v1045, 0
        %v1067 = vsel %vm770, %v1047, 0
        %v1070 = vsel %vm777, %v1059, 0
        %v1073 = vsel %vm777, %v1060, 0
        %1075 = vmatpush.bf16.msra.mxu0 0
        %1076 = vmatpush.bf16.msra.mxu0 0
        %1077 = vmatpush.bf16.msra.mxu0 0
        %1078 = vmatpush.bf16.msra.mxu0 0
        %1079 = vmatpush.bf16.msra.mxu0 0
        %1080 = vmatpush.bf16.msra.mxu0 0
        %1081 = vmatpush.bf16.msra.mxu0 %v1070
        %1082 = vmatpush.bf16.msra.mxu0 %v1057
        %1083 = vmatmul.bf16.gmra.mxu0 %v1064
        %v1084 = vpop.f32.mrf.mxu0
        %v1085 = vadd.f32 0.0, %v1084
        %v1086 = vpop.f32.mrf.mxu0
        %v1087 = vadd.f32 0.0, %v1086
        %1088 = vmatmul.bf16.gmra.mxu0 %v1067
        %v1089 = vpop.f32.mrf.mxu0
        %v1090 = vadd.f32 0.0, %v1089
        %v1091 = vpop.f32.mrf.mxu0
        %1092 = vdwg.mxu0
        %1093 = vmatpush.bf16.msra.mxu0 0
        %1094 = vmatpush.bf16.msra.mxu0 0
        %1095 = vmatpush.bf16.msra.mxu0 0
        %1096 = vmatpush.bf16.msra.mxu0 0
        %1097 = vmatpush.bf16.msra.mxu0 0
        %1098 = vmatpush.bf16.msra.mxu0 0
        %1099 = vmatpush.bf16.msra.mxu0 %v1073
        %1100 = vmatpush.bf16.msra.mxu0 %v1058
        %1101 = vmatmul.bf16.gmra.mxu0 %v1064
        %v1102 = vpop.f32.mrf.mxu0
        %v1103 = vadd.f32 0.0, %v1102
        %v1104 = vpop.f32.mrf.mxu0
        %v1105 = vadd.f32 0.0, %v1104
        %1106 = vmatmul.bf16.gmra.mxu0 %v1067
        %v1107 = vpop.f32.mrf.mxu0
        %v1108 = vadd.f32 0.0, %v1107
        %v1109 = vpop.f32.mrf.mxu0
        %1110 = vdwg.mxu0
        %v1111 = vadd.f32 %v1032, %v1085
        %v1112 = vadd.f32 %v1033, %v1103
        %v1113 = vadd.f32 %v1034, %v1087
        %v1114 = vadd.f32 %v1035, %v1105
        %v1115 = vadd.f32 %v1036, %v1090
        %v1116 = vadd.f32 %v1037, %v1108
        %s1117 = scalar_lea.vmem %s1, 120
        %v1118 = vld [vmem:[%s1117] sm:$0xff]
        %v1119 = vld [vmem:[%s1117 + $0x8] sm:$0xff]
        %v1120 = vld [vmem:[%s1117 + $0x10] sm:$0xff]
        %1121 = vrot.lane.b32.xlu0 %v963, 126
        %v1122 = vpop.permute.xlu0 %1121
        %1123 = vrot.lane.b32.xlu0 %v964, 126
        %v1124 = vpop.permute.xlu0 %1123
        %v1128 = vunpack.c.l.b16 %v1118
        %v1129 = vunpack.c.h.b16 %v1118
        %v1130 = vunpack.c.l.b16 %v1119
        %v1131 = vunpack.c.h.b16 %v1119
        %v1132 = vunpack.c.l.b16 %v1120
        %v1133 = vunpack.c.h.b16 %v1120
        %v1134 = vpack.c.b16 %v1130, %v1128
        %v1135 = vpack.c.b16 %v1131, %v1129
        %v1136 = vpack.c.b16 %v1132, %v1132
        %v1137 = vpack.c.b16 %v1133, %v1133
        %v1141 = vsel %vm770, %v1122, 0
        %v1144 = vsel %vm770, %v1124, 0
        %v1147 = vsel %vm777, %v1136, 0
        %v1150 = vsel %vm777, %v1137, 0
        %1152 = vmatpush.bf16.msra.mxu0 0
        %1153 = vmatpush.bf16.msra.mxu0 0
        %1154 = vmatpush.bf16.msra.mxu0 0
        %1155 = vmatpush.bf16.msra.mxu0 0
        %1156 = vmatpush.bf16.msra.mxu0 0
        %1157 = vmatpush.bf16.msra.mxu0 0
        %1158 = vmatpush.bf16.msra.mxu0 %v1147
        %1159 = vmatpush.bf16.msra.mxu0 %v1134
        %1160 = vmatmul.bf16.gmra.mxu0 %v1141
        %v1161 = vpop.f32.mrf.mxu0
        %v1162 = vadd.f32 0.0, %v1161
        %v1163 = vpop.f32.mrf.mxu0
        %v1164 = vadd.f32 0.0, %v1163
        %1165 = vmatmul.bf16.gmra.mxu0 %v1144
        %v1166 = vpop.f32.mrf.mxu0
        %v1167 = vadd.f32 0.0, %v1166
        %v1168 = vpop.f32.mrf.mxu0
        %1169 = vdwg.mxu0
        %1170 = vmatpush.bf16.msra.mxu0 0
        %1171 = vmatpush.bf16.msra.mxu0 0
        %1172 = vmatpush.bf16.msra.mxu0 0
        %1173 = vmatpush.bf16.msra.mxu0 0
        %1174 = vmatpush.bf16.msra.mxu0 0
        %1175 = vmatpush.bf16.msra.mxu0 0
        %1176 = vmatpush.bf16.msra.mxu0 %v1150
        %1177 = vmatpush.bf16.msra.mxu0 %v1135
        %1178 = vmatmul.bf16.gmra.mxu0 %v1141
        %v1179 = vpop.f32.mrf.mxu0
        %v1180 = vadd.f32 0.0, %v1179
        %v1181 = vpop.f32.mrf.mxu0
        %v1182 = vadd.f32 0.0, %v1181
        %1183 = vmatmul.bf16.gmra.mxu0 %v1144
        %v1184 = vpop.f32.mrf.mxu0
        %v1185 = vadd.f32 0.0, %v1184
        %v1186 = vpop.f32.mrf.mxu0
        %1187 = vdwg.mxu0
        %v1188 = vadd.f32 %v1111, %v1162
        %v1189 = vadd.f32 %v1112, %v1180
        %v1190 = vadd.f32 %v1113, %v1164
        %v1191 = vadd.f32 %v1114, %v1182
        %v1192 = vadd.f32 %v1115, %v1167
        %v1193 = vadd.f32 %v1116, %v1185
        %v1194 = vld [vmem:[%s730 + $0x2] sm:$0xff]
        %v1195 = vld [vmem:[%s730 + $0xa] sm:$0xff]
        %v1196 = vld [vmem:[%s730 + $0x12] sm:$0xff]
        %v1197 = vpack.c.bf16 %v1195, %v1194
        %v1198 = vpack.c.bf16 %v1196, %v1196
        %s1199 = scalar_lea.vmem %s1, 144
        %v1200 = vld [vmem:[%s1199] sm:$0xff]
        %v1201 = vld [vmem:[%s1199 + $0x8] sm:$0xff]
        %v1202 = vld [vmem:[%s1199 + $0x10] sm:$0xff]
        %v1206 = vunpack.c.l.b16 %v1200
        %v1207 = vunpack.c.h.b16 %v1200
        %v1208 = vunpack.c.l.b16 %v1201
        %v1209 = vunpack.c.h.b16 %v1201
        %v1210 = vunpack.c.l.b16 %v1202
        %v1211 = vunpack.c.h.b16 %v1202
        %v1212 = vpack.c.b16 %v1208, %v1206
        %v1213 = vpack.c.b16 %v1209, %v1207
        %v1214 = vpack.c.b16 %v1210, %v1210
        %v1215 = vpack.c.b16 %v1211, %v1211
        %v1219 = vsel %vm770, %v1197, 0
        %v1222 = vsel %vm770, %v1198, 0
        %v1225 = vsel %vm777, %v1214, 0
        %v1228 = vsel %vm777, %v1215, 0
        %1230 = vmatpush.bf16.msra.mxu0 0
        %1231 = vmatpush.bf16.msra.mxu0 0
        %1232 = vmatpush.bf16.msra.mxu0 0
        %1233 = vmatpush.bf16.msra.mxu0 0
        %1234 = vmatpush.bf16.msra.mxu0 0
        %1235 = vmatpush.bf16.msra.mxu0 0
        %1236 = vmatpush.bf16.msra.mxu0 %v1225
        %1237 = vmatpush.bf16.msra.mxu0 %v1212
        %1238 = vmatmul.bf16.gmra.mxu0 %v1219
        %v1239 = vpop.f32.mrf.mxu0
        %v1240 = vadd.f32 0.0, %v1239
        %v1241 = vpop.f32.mrf.mxu0
        %v1242 = vadd.f32 0.0, %v1241
        %1243 = vmatmul.bf16.gmra.mxu0 %v1222
        %v1244 = vpop.f32.mrf.mxu0
        %v1245 = vadd.f32 0.0, %v1244
        %v1246 = vpop.f32.mrf.mxu0
        %1247 = vdwg.mxu0
        %1248 = vmatpush.bf16.msra.mxu0 0
        %1249 = vmatpush.bf16.msra.mxu0 0
        %1250 = vmatpush.bf16.msra.mxu0 0
        %1251 = vmatpush.bf16.msra.mxu0 0
        %1252 = vmatpush.bf16.msra.mxu0 0
        %1253 = vmatpush.bf16.msra.mxu0 0
        %1254 = vmatpush.bf16.msra.mxu0 %v1228
        %1255 = vmatpush.bf16.msra.mxu0 %v1213
        %1256 = vmatmul.bf16.gmra.mxu0 %v1219
        %v1257 = vpop.f32.mrf.mxu0
        %v1258 = vadd.f32 0.0, %v1257
        %v1259 = vpop.f32.mrf.mxu0
        %v1260 = vadd.f32 0.0, %v1259
        %1261 = vmatmul.bf16.gmra.mxu0 %v1222
        %v1262 = vpop.f32.mrf.mxu0
        %v1263 = vadd.f32 0.0, %v1262
        %v1264 = vpop.f32.mrf.mxu0
        %1265 = vdwg.mxu0
        %v1266 = vadd.f32 %v1188, %v1240
        %v1267 = vadd.f32 %v1189, %v1258
        %v1268 = vadd.f32 %v1190, %v1242
        %v1269 = vadd.f32 %v1191, %v1260
        %v1270 = vadd.f32 %v1192, %v1245
        %v1271 = vadd.f32 %v1193, %v1263
        %s1272 = scalar_lea.vmem %s1, 168
        %v1273 = vld [vmem:[%s1272] sm:$0xff]
        %v1274 = vld [vmem:[%s1272 + $0x8] sm:$0xff]
        %v1275 = vld [vmem:[%s1272 + $0x10] sm:$0xff]
        %1278 = vrot.lane.b32.xlu0 %v1197, 127
        %v1279 = vpop.permute.xlu0 %1278
        %1280 = vrot.lane.b32.xlu0 %v1198, 127
        %v1281 = vpop.permute.xlu0 %1280
        %v1285 = vunpack.c.l.b16 %v1273
        %v1286 = vunpack.c.h.b16 %v1273
        %v1287 = vunpack.c.l.b16 %v1274
        %v1288 = vunpack.c.h.b16 %v1274
        %v1289 = vunpack.c.l.b16 %v1275
        %v1290 = vunpack.c.h.b16 %v1275
        %v1291 = vpack.c.b16 %v1287, %v1285
        %v1292 = vpack.c.b16 %v1288, %v1286
        %v1293 = vpack.c.b16 %v1289, %v1289
        %v1294 = vpack.c.b16 %v1290, %v1290
        %v1298 = vsel %vm770, %v1279, 0
        %v1301 = vsel %vm770, %v1281, 0
        %v1304 = vsel %vm777, %v1293, 0
        %v1307 = vsel %vm777, %v1294, 0
        %1309 = vmatpush.bf16.msra.mxu0 0
        %1310 = vmatpush.bf16.msra.mxu0 0
        %1311 = vmatpush.bf16.msra.mxu0 0
        %1312 = vmatpush.bf16.msra.mxu0 0
        %1313 = vmatpush.bf16.msra.mxu0 0
        %1314 = vmatpush.bf16.msra.mxu0 0
        %1315 = vmatpush.bf16.msra.mxu0 %v1304
        %1316 = vmatpush.bf16.msra.mxu0 %v1291
        %1317 = vmatmul.bf16.gmra.mxu0 %v1298
        %v1318 = vpop.f32.mrf.mxu0
        %v1319 = vadd.f32 0.0, %v1318
        %v1320 = vpop.f32.mrf.mxu0
        %v1321 = vadd.f32 0.0, %v1320
        %1322 = vmatmul.bf16.gmra.mxu0 %v1301
        %v1323 = vpop.f32.mrf.mxu0
        %v1324 = vadd.f32 0.0, %v1323
        %v1325 = vpop.f32.mrf.mxu0
        %1326 = vdwg.mxu0
        %1327 = vmatpush.bf16.msra.mxu0 0
        %1328 = vmatpush.bf16.msra.mxu0 0
        %1329 = vmatpush.bf16.msra.mxu0 0
        %1330 = vmatpush.bf16.msra.mxu0 0
        %1331 = vmatpush.bf16.msra.mxu0 0
        %1332 = vmatpush.bf16.msra.mxu0 0
        %1333 = vmatpush.bf16.msra.mxu0 %v1307
        %1334 = vmatpush.bf16.msra.mxu0 %v1292
        %1335 = vmatmul.bf16.gmra.mxu0 %v1298
        %v1336 = vpop.f32.mrf.mxu0
        %v1337 = vadd.f32 0.0, %v1336
        %v1338 = vpop.f32.mrf.mxu0
        %v1339 = vadd.f32 0.0, %v1338
        %1340 = vmatmul.bf16.gmra.mxu0 %v1301
        %v1341 = vpop.f32.mrf.mxu0
        %v1342 = vadd.f32 0.0, %v1341
        %v1343 = vpop.f32.mrf.mxu0
        %1344 = vdwg.mxu0
        %v1345 = vadd.f32 %v1266, %v1319
        %v1346 = vadd.f32 %v1267, %v1337
        %v1347 = vadd.f32 %v1268, %v1321
        %v1348 = vadd.f32 %v1269, %v1339
        %v1349 = vadd.f32 %v1270, %v1324
        %v1350 = vadd.f32 %v1271, %v1342
        %s1351 = scalar_lea.vmem %s1, 192
        %v1352 = vld [vmem:[%s1351] sm:$0xff]
        %v1353 = vld [vmem:[%s1351 + $0x8] sm:$0xff]
        %v1354 = vld [vmem:[%s1351 + $0x10] sm:$0xff]
        %1355 = vrot.lane.b32.xlu0 %v1197, 126
        %v1356 = vpop.permute.xlu0 %1355
        %1357 = vrot.lane.b32.xlu0 %v1198, 126
        %v1358 = vpop.permute.xlu0 %1357
        %v1362 = vunpack.c.l.b16 %v1352
        %v1363 = vunpack.c.h.b16 %v1352
        %v1364 = vunpack.c.l.b16 %v1353
        %v1365 = vunpack.c.h.b16 %v1353
        %v1366 = vunpack.c.l.b16 %v1354
        %v1367 = vunpack.c.h.b16 %v1354
        %v1368 = vpack.c.b16 %v1364, %v1362
        %v1369 = vpack.c.b16 %v1365, %v1363
        %v1370 = vpack.c.b16 %v1366, %v1366
        %v1371 = vpack.c.b16 %v1367, %v1367
        %v1375 = vsel %vm770, %v1356, 0
        %v1378 = vsel %vm770, %v1358, 0
        %v1381 = vsel %vm777, %v1370, 0
        %v1384 = vsel %vm777, %v1371, 0
        %1386 = vmatpush.bf16.msra.mxu0 0
        %1387 = vmatpush.bf16.msra.mxu0 0
        %1388 = vmatpush.bf16.msra.mxu0 0
        %1389 = vmatpush.bf16.msra.mxu0 0
        %1390 = vmatpush.bf16.msra.mxu0 0
        %1391 = vmatpush.bf16.msra.mxu0 0
        %1392 = vmatpush.bf16.msra.mxu0 %v1381
        %1393 = vmatpush.bf16.msra.mxu0 %v1368
        %1394 = vmatmul.bf16.gmra.mxu0 %v1375
        %v1395 = vpop.f32.mrf.mxu0
        %v1396 = vadd.f32 0.0, %v1395
        %v1397 = vpop.f32.mrf.mxu0
        %v1398 = vadd.f32 0.0, %v1397
        %1399 = vmatmul.bf16.gmra.mxu0 %v1378
        %v1400 = vpop.f32.mrf.mxu0
        %v1401 = vadd.f32 0.0, %v1400
        %v1402 = vpop.f32.mrf.mxu0
        %1403 = vdwg.mxu0
        %1404 = vmatpush.bf16.msra.mxu0 0
        %1405 = vmatpush.bf16.msra.mxu0 0
        %1406 = vmatpush.bf16.msra.mxu0 0
        %1407 = vmatpush.bf16.msra.mxu0 0
        %1408 = vmatpush.bf16.msra.mxu0 0
        %1409 = vmatpush.bf16.msra.mxu0 0
        %1410 = vmatpush.bf16.msra.mxu0 %v1384
        %1411 = vmatpush.bf16.msra.mxu0 %v1369
        %1412 = vmatmul.bf16.gmra.mxu0 %v1375
        %v1413 = vpop.f32.mrf.mxu0
        %v1414 = vadd.f32 0.0, %v1413
        %v1415 = vpop.f32.mrf.mxu0
        %v1416 = vadd.f32 0.0, %v1415
        %1417 = vmatmul.bf16.gmra.mxu0 %v1378
        %v1418 = vpop.f32.mrf.mxu0
        %v1419 = vadd.f32 0.0, %v1418
        %v1420 = vpop.f32.mrf.mxu0
        %1421 = vdwg.mxu0
        %v1422 = vadd.f32 %v1345, %v1396
        %v1423 = vadd.f32 %v1346, %v1414
        %v1424 = vadd.f32 %v1347, %v1398
        %v1425 = vadd.f32 %v1348, %v1416
        %v1426 = vadd.f32 %v1349, %v1401
        %v1427 = vadd.f32 %v1350, %v1419
        %v1428 = vld [vmem:[%s2] sm:$0x3]
        %v1430 = vperm.slane %v1428, 0
        %v1431 = vperm.slane %v1428, 1
        %v1434 = vadd.f32 %v1422, %v1430
        %v1435 = vadd.f32 %v1423, %v1431
        %v1436 = vadd.f32 %v1424, %v1430
        %v1437 = vadd.f32 %v1425, %v1431
        %v1438 = vadd.f32 %v1426, %v1430
        %v1439 = vadd.f32 %v1427, %v1431
        %v1440 = vmax.f32 %v1434, 0.0
        %v1441 = vmax.f32 %v1435, 0.0
        %v1442 = vmax.f32 %v1436, 0.0
        %v1443 = vmax.f32 %v1437, 0.0
        %v1444 = vmax.f32 %v1438, 0.0
        %v1445 = vmax.f32 %v1439, 0.0
        %1446 = vst [vmem:[#allocation2] sm:$0xff] %v1440
        %vm1447 = vcmask 523264
        %1448 = vst.msk [vmem:[#allocation2 + $0x8] sm:$0xff] %vm1447, %v1441
        %1449 = vst [vmem:[#allocation2 + $0x10] sm:$0xff] %v1442
        %1450 = vst.msk [vmem:[#allocation2 + $0x18] sm:$0xff] %vm1447, %v1443
        %1451 = vst [vmem:[#allocation2 + $0x20] sm:$0xff] %v1444
        %1452 = vst.msk [vmem:[#allocation2 + $0x28] sm:$0xff] %vm1447, %v1445
        %v1453 = vld [vmem:[#allocation2] ss:$8 sm:$0x3]
        %s1454 = scalar_lea.vmem [#allocation2], 1
        %v1455 = vld [vmem:[%s1454] ss:$8 sm:$0x3]
        %v1456 = vmax.f32 %v1453, %v1455
        %v1457 = vlaneseq
        %vm1458 = vcmp.ge.s32.totalorder %v1457, 0
        %vm1459 = vcmp.lt.s32.totalorder %v1457, 192
        %vm1460 = vmand %vm1458, %vm1459
        %1461 = vst.msk [vmem:[#allocation3] ss:$8 sm:$0x3] %vm1460, %v1456
        %1462 = vst.msk [vmem:[#allocation3] ss:$8 sm:$0x0] %vm1460, %v1456
        %s1463 = scalar_lea.vmem [#allocation2], 2
        %v1464 = vld [vmem:[%s1463] ss:$8 sm:$0x3]
        %s1465 = scalar_lea.vmem [#allocation2], 3
        %v1466 = vld [vmem:[%s1465] ss:$8 sm:$0x3]
        %v1467 = vmax.f32 %v1464, %v1466
        %s1468 = scalar_lea.vmem [#allocation3], 1
        %1469 = vst.msk [vmem:[%s1468] ss:$8 sm:$0x3] %vm1460, %v1467
        %1470 = vst.msk [vmem:[%s1468] ss:$8 sm:$0x0] %vm1460, %v1467
        %s1471 = scalar_lea.vmem [#allocation2], 4
        %v1472 = vld [vmem:[%s1471] ss:$8 sm:$0x3]
        %s1473 = scalar_lea.vmem [#allocation2], 5
        %v1474 = vld [vmem:[%s1473] ss:$8 sm:$0x3]
        %v1475 = vmax.f32 %v1472, %v1474
        %s1476 = scalar_lea.vmem [#allocation3], 2
        %1477 = vst.msk [vmem:[%s1476] ss:$8 sm:$0x3] %vm1460, %v1475
        %1478 = vst.msk [vmem:[%s1476] ss:$8 sm:$0x0] %vm1460, %v1475
        %s1479 = scalar_lea.vmem [#allocation2], 6
        %v1480 = vld [vmem:[%s1479] ss:$8 sm:$0x3]
        %s1481 = scalar_lea.vmem [#allocation2], 7
        %v1482 = vld [vmem:[%s1481] ss:$8 sm:$0x3]
        %v1483 = vmax.f32 %v1480, %v1482
        %s1484 = scalar_lea.vmem [#allocation3], 3
        %1485 = vst.msk [vmem:[%s1484] ss:$8 sm:$0x3] %vm1460, %v1483
        %1486 = vst.msk [vmem:[%s1484] ss:$8 sm:$0x0] %vm1460, %v1483
        %s1487 = scalar_lea.vmem [#allocation2], 16
        %v1488 = vld [vmem:[%s1487] ss:$8 sm:$0x3]
        %s1489 = scalar_lea.vmem [#allocation2], 17
        %v1490 = vld [vmem:[%s1489] ss:$8 sm:$0x3]
        %v1491 = vmax.f32 %v1488, %v1490
        %s1492 = scalar_lea.vmem [#allocation3], 4
        %1493 = vst.msk [vmem:[%s1492] ss:$8 sm:$0x3] %vm1460, %v1491
        %1494 = vst.msk [vmem:[%s1492] ss:$8 sm:$0x0] %vm1460, %v1491
        %s1495 = scalar_lea.vmem [#allocation2], 18
        %v1496 = vld [vmem:[%s1495] ss:$8 sm:$0x3]
        %s1497 = scalar_lea.vmem [#allocation2], 19
        %v1498 = vld [vmem:[%s1497] ss:$8 sm:$0x3]
        %v1499 = vmax.f32 %v1496, %v1498
        %s1500 = scalar_lea.vmem [#allocation3], 5
        %1501 = vst.msk [vmem:[%s1500] ss:$8 sm:$0x3] %vm1460, %v1499
        %1502 = vst.msk [vmem:[%s1500] ss:$8 sm:$0x0] %vm1460, %v1499
        %s1503 = scalar_lea.vmem [#allocation2], 20
        %v1504 = vld [vmem:[%s1503] ss:$8 sm:$0x3]
        %s1505 = scalar_lea.vmem [#allocation2], 21
        %v1506 = vld [vmem:[%s1505] ss:$8 sm:$0x3]
        %v1507 = vmax.f32 %v1504, %v1506
        %s1508 = scalar_lea.vmem [#allocation3], 6
        %1509 = vst.msk [vmem:[%s1508] ss:$8 sm:$0x3] %vm1460, %v1507
        %1510 = vst.msk [vmem:[%s1508] ss:$8 sm:$0x0] %vm1460, %v1507
        %s1511 = scalar_lea.vmem [#allocation2], 22
        %v1512 = vld [vmem:[%s1511] ss:$8 sm:$0x3]
        %s1513 = scalar_lea.vmem [#allocation2], 23
        %v1514 = vld [vmem:[%s1513] ss:$8 sm:$0x3]
        %v1515 = vmax.f32 %v1512, %v1514
        %s1516 = scalar_lea.vmem [#allocation3], 7
        %1517 = vst.msk [vmem:[%s1516] ss:$8 sm:$0x3] %vm1460, %v1515
        %1518 = vst.msk [vmem:[%s1516] ss:$8 sm:$0x0] %vm1460, %v1515
        %s1519 = scalar_lea.vmem [#allocation2], 32
        %v1520 = vld [vmem:[%s1519] ss:$8 sm:$0x3]
        %s1521 = scalar_lea.vmem [#allocation2], 33
        %v1522 = vld [vmem:[%s1521] ss:$8 sm:$0x3]
        %v1523 = vmax.f32 %v1520, %v1522
        %s1524 = scalar_lea.vmem [#allocation3], 16
        %1525 = vst.msk [vmem:[%s1524] ss:$8 sm:$0x3] %vm1460, %v1523
        %1526 = vst.msk [vmem:[%s1524] ss:$8 sm:$0x0] %vm1460, %v1523
        %s1527 = scalar_lea.vmem [#allocation2], 34
        %v1528 = vld [vmem:[%s1527] ss:$8 sm:$0x3]
        %s1529 = scalar_lea.vmem [#allocation2], 35
        %v1530 = vld [vmem:[%s1529] ss:$8 sm:$0x3]
        %v1531 = vmax.f32 %v1528, %v1530
        %s1532 = scalar_lea.vmem [#allocation3], 17
        %1533 = vst.msk [vmem:[%s1532] ss:$8 sm:$0x3] %vm1460, %v1531
        %1534 = vst.msk [vmem:[%s1532] ss:$8 sm:$0x0] %vm1460, %v1531
        %s1535 = scalar_lea.vmem [#allocation2], 36
        %v1536 = vld [vmem:[%s1535] ss:$8 sm:$0x3]
        %s1537 = scalar_lea.vmem [#allocation2], 37
        %v1538 = vld [vmem:[%s1537] ss:$8 sm:$0x3]
        %v1539 = vmax.f32 %v1536, %v1538
        %s1540 = scalar_lea.vmem [#allocation3], 18
        %1541 = vst.msk [vmem:[%s1540] ss:$8 sm:$0x3] %vm1460, %v1539
        %1542 = vst.msk [vmem:[%s1540] ss:$8 sm:$0x0] %vm1460, %v1539
        %s1543 = scalar_lea.vmem [#allocation2], 38
        %v1544 = vld [vmem:[%s1543] ss:$8 sm:$0x3]
        %s1545 = scalar_lea.vmem [#allocation2], 39
        %v1546 = vld [vmem:[%s1545] ss:$8 sm:$0x3]
        %v1547 = vmax.f32 %v1544, %v1546
        %s1548 = scalar_lea.vmem [#allocation3], 19
        %1549 = vst.msk [vmem:[%s1548] ss:$8 sm:$0x3] %vm1460, %v1547
        %1550 = vst.msk [vmem:[%s1548] ss:$8 sm:$0x0] %vm1460, %v1547
        %v1551 = vld [vmem:[#allocation3] sm:$0xff]
        %v1552 = vld [vmem:[#allocation3 + $0x10] sm:$0xf]
        %1555 = vrot.lane.b32.xlu0 %v1551, 120
        %v1556 = vpop.permute.xlu0 %1555
        %1557 = vrot.lane.b32.xlu0 %v1552, 120
        %v1558 = vpop.permute.xlu0 %1557
        %v1561 = vmax.f32 %v1551, %v1556
        %v1562 = vmax.f32 %v1552, %v1558
        %vm1563 = vcmask 64512
        %1564 = vst.msk [vmem:[#allocation4] sm:$0xff] %vm1563, %v1561
        %vm1565 = vcmask 60416
        %1566 = vst.msk [vmem:[#allocation4 + $0x8] sm:$0xf] %vm1565, %v1562
        %v1567 = vld [vmem:[#allocation3] sm:$0xff]
        %v1568 = vld [vmem:[#allocation3 + $0x10] sm:$0xf]
        %1571 = vrot.lane.b32.xlu0 %v1567, 120
        %v1572 = vpop.permute.xlu0 %1571
        %1573 = vrot.lane.b32.xlu0 %v1568, 120
        %v1574 = vpop.permute.xlu0 %1573
        %v1577 = vmax.f32 %v1567, %v1572
        %v1578 = vmax.f32 %v1568, %v1574
        %1581 = vrot.lane.b32.xlu0 %v1577, 120
        %v1582 = vpop.permute.xlu0 %1581
        %1583 = vrot.lane.b32.xlu0 %v1578, 120
        %v1584 = vpop.permute.xlu0 %1583
        %vm1587 = vcmask 130112
        %1588 = vst.msk [vmem:[#allocation4] sm:$0xff] %vm1587, %v1582
        %vm1589 = vcmask 126016
        %1590 = vst.msk [vmem:[#allocation4 + $0x8] sm:$0xf] %vm1589, %v1584
        %v1591 = vld [vmem:[#allocation3] sm:$0xff]
        %v1592 = vld [vmem:[#allocation3 + $0x10] sm:$0xf]
        %1595 = vrot.lane.b32.xlu0 %v1591, 120
        %v1596 = vpop.permute.xlu0 %1595
        %1597 = vrot.lane.b32.xlu0 %v1592, 120
        %v1598 = vpop.permute.xlu0 %1597
        %v1601 = vmax.f32 %v1591, %v1596
        %v1602 = vmax.f32 %v1592, %v1598
        %1605 = vrot.lane.b32.xlu0 %v1601, 112
        %v1606 = vpop.permute.xlu0 %1605
        %1607 = vrot.lane.b32.xlu0 %v1602, 112
        %v1608 = vpop.permute.xlu0 %1607
        %vm1611 = vcmask 195712
        %1612 = vst.msk [vmem:[#allocation4] sm:$0xff] %vm1611, %v1606
        %vm1613 = vcmask 191616
        %1614 = vst.msk [vmem:[#allocation4 + $0x8] sm:$0xf] %vm1613, %v1608
        %v1615 = vld [vmem:[#allocation3] sm:$0xff]
        %v1616 = vld [vmem:[#allocation3 + $0x10] sm:$0xf]
        %1619 = vrot.lane.b32.xlu0 %v1615, 120
        %v1620 = vpop.permute.xlu0 %1619
        %1621 = vrot.lane.b32.xlu0 %v1616, 120
        %v1622 = vpop.permute.xlu0 %1621
        %v1625 = vmax.f32 %v1615, %v1620
        %v1626 = vmax.f32 %v1616, %v1622
        %1629 = vrot.lane.b32.xlu0 %v1625, 104
        %v1630 = vpop.permute.xlu0 %1629
        %1631 = vrot.lane.b32.xlu0 %v1626, 104
        %v1632 = vpop.permute.xlu0 %1631
        %vm1635 = vcmask 261312
        %1636 = vst.msk [vmem:[#allocation4] sm:$0xff] %vm1635, %v1630
        %vm1637 = vcmask 257216
        %1638 = vst.msk [vmem:[#allocation4 + $0x8] sm:$0xf] %vm1637, %v1632
        %v1639 = vld [vmem:[#allocation3] sm:$0xff]
        %v1640 = vld [vmem:[#allocation3 + $0x10] sm:$0xf]
        %1643 = vrot.lane.b32.xlu0 %v1639, 120
        %v1644 = vpop.permute.xlu0 %1643
        %1645 = vrot.lane.b32.xlu0 %v1640, 120
        %v1646 = vpop.permute.xlu0 %1645
        %v1649 = vmax.f32 %v1639, %v1644
        %v1650 = vmax.f32 %v1640, %v1646
        %1653 = vrot.lane.b32.xlu0 %v1649, 96
        %v1654 = vpop.permute.xlu0 %1653
        %1655 = vrot.lane.b32.xlu0 %v1650, 96
        %v1656 = vpop.permute.xlu0 %1655
        %vm1659 = vcmask 326912
        %1660 = vst.msk [vmem:[#allocation4] sm:$0xff] %vm1659, %v1654
        %vm1661 = vcmask 322816
        %1662 = vst.msk [vmem:[#allocation4 + $0x8] sm:$0xf] %vm1661, %v1656
        %v1663 = vld [vmem:[#allocation3] sm:$0xff]
        %v1664 = vld [vmem:[#allocation3 + $0x10] sm:$0xf]
        %1667 = vrot.lane.b32.xlu0 %v1663, 120
        %v1668 = vpop.permute.xlu0 %1667
        %1669 = vrot.lane.b32.xlu0 %v1664, 120
        %v1670 = vpop.permute.xlu0 %1669
        %v1673 = vmax.f32 %v1663, %v1668
        %v1674 = vmax.f32 %v1664, %v1670
        %1677 = vrot.lane.b32.xlu0 %v1673, 88
        %v1678 = vpop.permute.xlu0 %1677
        %1679 = vrot.lane.b32.xlu0 %v1674, 88
        %v1680 = vpop.permute.xlu0 %1679
        %vm1683 = vcmask 392512
        %1684 = vst.msk [vmem:[#allocation4] sm:$0xff] %vm1683, %v1678
        %vm1685 = vcmask 388416
        %1686 = vst.msk [vmem:[#allocation4 + $0x8] sm:$0xf] %vm1685, %v1680
        %v1687 = vld [vmem:[#allocation3] sm:$0xff]
        %v1688 = vld [vmem:[#allocation3 + $0x10] sm:$0xf]
        %1691 = vrot.lane.b32.xlu0 %v1687, 120
        %v1692 = vpop.permute.xlu0 %1691
        %1693 = vrot.lane.b32.xlu0 %v1688, 120
        %v1694 = vpop.permute.xlu0 %1693
        %v1697 = vmax.f32 %v1687, %v1692
        %v1698 = vmax.f32 %v1688, %v1694
        %1701 = vrot.lane.b32.xlu0 %v1697, 80
        %v1702 = vpop.permute.xlu0 %1701
        %1703 = vrot.lane.b32.xlu0 %v1698, 80
        %v1704 = vpop.permute.xlu0 %1703
        %vm1707 = vcmask 458112
        %1708 = vst.msk [vmem:[#allocation4] sm:$0xff] %vm1707, %v1702
        %vm1709 = vcmask 454016
        %1710 = vst.msk [vmem:[#allocation4 + $0x8] sm:$0xf] %vm1709, %v1704
        %v1711 = vld [vmem:[#allocation3] sm:$0xff]
        %v1712 = vld [vmem:[#allocation3 + $0x10] sm:$0xf]
        %1715 = vrot.lane.b32.xlu0 %v1711, 120
        %v1716 = vpop.permute.xlu0 %1715
        %1717 = vrot.lane.b32.xlu0 %v1712, 120
        %v1718 = vpop.permute.xlu0 %1717
        %v1721 = vmax.f32 %v1711, %v1716
        %v1722 = vmax.f32 %v1712, %v1718
        %1725 = vrot.lane.b32.xlu0 %v1721, 72
        %v1726 = vpop.permute.xlu0 %1725
        %1727 = vrot.lane.b32.xlu0 %v1722, 72
        %v1728 = vpop.permute.xlu0 %1727
        %vm1731 = vcmask 523712
        %1732 = vst.msk [vmem:[#allocation4] sm:$0xff] %vm1731, %v1726
        %vm1733 = vcmask 519616
        %1734 = vst.msk [vmem:[#allocation4 + $0x8] sm:$0xf] %vm1733, %v1728
        %v1735 = vld [vmem:[#allocation3 + $0x8] sm:$0xff]
        %v1736 = vld [vmem:[#allocation3 + $0x18] sm:$0xf]
        %1739 = vrot.lane.b32.xlu0 %v1735, 120
        %v1740 = vpop.permute.xlu0 %1739
        %1741 = vrot.lane.b32.xlu0 %v1736, 120
        %v1742 = vpop.permute.xlu0 %1741
        %v1745 = vmax.f32 %v1735, %v1740
        %v1746 = vmax.f32 %v1736, %v1742
        %1749 = vrot.lane.b32.xlu0 %v1745, 64
        %v1750 = vpop.permute.xlu0 %1749
        %1751 = vrot.lane.b32.xlu0 %v1746, 64
        %v1752 = vpop.permute.xlu0 %1751
        %vm1755 = vcmask 589312
        %1756 = vst.msk [vmem:[#allocation4] sm:$0xff] %vm1755, %v1750
        %vm1757 = vcmask 585216
        %1758 = vst.msk [vmem:[#allocation4 + $0x8] sm:$0xf] %vm1757, %v1752
        %v1759 = vld [vmem:[#allocation3 + $0x8] sm:$0xff]
        %v1760 = vld [vmem:[#allocation3 + $0x18] sm:$0xf]
        %1763 = vrot.lane.b32.xlu0 %v1759, 120
        %v1764 = vpop.permute.xlu0 %1763
        %1765 = vrot.lane.b32.xlu0 %v1760, 120
        %v1766 = vpop.permute.xlu0 %1765
        %v1769 = vmax.f32 %v1759, %v1764
        %v1770 = vmax.f32 %v1760, %v1766
        %1773 = vrot.lane.b32.xlu0 %v1769, 56
        %v1774 = vpop.permute.xlu0 %1773
        %1775 = vrot.lane.b32.xlu0 %v1770, 56
        %v1776 = vpop.permute.xlu0 %1775
        %vm1779 = vcmask 654912
        %1780 = vst.msk [vmem:[#allocation4] sm:$0xff] %vm1779, %v1774
        %vm1781 = vcmask 650816
        %1782 = vst.msk [vmem:[#allocation4 + $0x8] sm:$0xf] %vm1781, %v1776
        %v1783 = vld [vmem:[#allocation3 + $0x8] sm:$0xff]
        %v1784 = vld [vmem:[#allocation3 + $0x18] sm:$0xf]
        %1787 = vrot.lane.b32.xlu0 %v1783, 120
        %v1788 = vpop.permute.xlu0 %1787
        %1789 = vrot.lane.b32.xlu0 %v1784, 120
        %v1790 = vpop.permute.xlu0 %1789
        %v1793 = vmax.f32 %v1783, %v1788
        %v1794 = vmax.f32 %v1784, %v1790
        %1797 = vrot.lane.b32.xlu0 %v1793, 48
        %v1798 = vpop.permute.xlu0 %1797
        %1799 = vrot.lane.b32.xlu0 %v1794, 48
        %v1800 = vpop.permute.xlu0 %1799
        %vm1803 = vcmask 720512
        %1804 = vst.msk [vmem:[#allocation4] sm:$0xff] %vm1803, %v1798
        %vm1805 = vcmask 716416
        %1806 = vst.msk [vmem:[#allocation4 + $0x8] sm:$0xf] %vm1805, %v1800
        %v1807 = vld [vmem:[#allocation3 + $0x8] sm:$0xff]
        %v1808 = vld [vmem:[#allocation3 + $0x18] sm:$0xf]
        %1811 = vrot.lane.b32.xlu0 %v1807, 120
        %v1812 = vpop.permute.xlu0 %1811
        %1813 = vrot.lane.b32.xlu0 %v1808, 120
        %v1814 = vpop.permute.xlu0 %1813
        %v1817 = vmax.f32 %v1807, %v1812
        %v1818 = vmax.f32 %v1808, %v1814
        %1821 = vrot.lane.b32.xlu0 %v1817, 40
        %v1822 = vpop.permute.xlu0 %1821
        %1823 = vrot.lane.b32.xlu0 %v1818, 40
        %v1824 = vpop.permute.xlu0 %1823
        %vm1827 = vcmask 786112
        %1828 = vst.msk [vmem:[#allocation4] sm:$0xff] %vm1827, %v1822
        %vm1829 = vcmask 782016
        %1830 = vst.msk [vmem:[#allocation4 + $0x8] sm:$0xf] %vm1829, %v1824
        %v1831 = vld [vmem:[#allocation4] sm:$0xff]
        %v1832 = vld [vmem:[#allocation4 + $0x8] sm:$0x3]
        %v1833 = vpack.c.bf16 %v1832, %v1831
        %v1834 = vld [vmem:[#allocation10] sm:$0xff]
        %v1835 = vld [vmem:[#allocation10 + $0x8] sm:$0xff]
        %v1836 = vld [vmem:[#allocation10 + $0x10] sm:$0xff]
        %v1837 = vld [vmem:[#allocation10 + $0x18] sm:$0xff]
        %v1838 = vld [vmem:[#allocation10 + $0x20] sm:$0xff]
        %v1839 = vld [vmem:[#allocation10 + $0x28] sm:$0xff]
        %v1840 = vld [vmem:[#allocation10 + $0x30] sm:$0xff]
        %v1841 = vld [vmem:[#allocation10 + $0x38] sm:$0xff]
        %v1842 = vld [vmem:[#allocation10 + $0x40] sm:$0xff]
        %v1843 = vld [vmem:[#allocation10 + $0x48] sm:$0xff]
        %s1844 = scalar_lea.vmem [#allocation10], 80
        %v1845 = vld [vmem:[%s1844] sm:$0xff]
        %v1846 = vld [vmem:[%s1844 + $0x8] sm:$0xff]
        %v1847 = vld [vmem:[%s1844 + $0x10] sm:$0xff]
        %v1848 = vld [vmem:[%s1844 + $0x18] sm:$0xff]
        %v1849 = vld [vmem:[%s1844 + $0x20] sm:$0xff]
        %v1850 = vld [vmem:[%s1844 + $0x28] sm:$0xff]
        %v1851 = vld [vmem:[%s1844 + $0x30] sm:$0xff]
        %v1852 = vld [vmem:[%s1844 + $0x38] sm:$0xff]
        %v1853 = vld [vmem:[%s1844 + $0x40] sm:$0xff]
        %v1854 = vld [vmem:[%s1844 + $0x48] sm:$0xff]
        %1856 = vrot.lane.b32.xlu0 %v1833, 120
        %v1857 = vpop.permute.xlu0 %1856
        %v1868 = vunpack.c.l.b16 %v1845
        %v1869 = vunpack.c.h.b16 %v1845
        %v1870 = vunpack.c.l.b16 %v1846
        %v1871 = vunpack.c.h.b16 %v1846
        %v1872 = vunpack.c.l.b16 %v1847
        %v1873 = vunpack.c.h.b16 %v1847
        %v1874 = vunpack.c.l.b16 %v1848
        %v1875 = vunpack.c.h.b16 %v1848
        %v1876 = vunpack.c.l.b16 %v1849
        %v1877 = vunpack.c.h.b16 %v1849
        %v1878 = vunpack.c.l.b16 %v1850
        %v1879 = vunpack.c.h.b16 %v1850
        %v1880 = vunpack.c.l.b16 %v1851
        %v1881 = vunpack.c.h.b16 %v1851
        %v1882 = vunpack.c.l.b16 %v1852
        %v1883 = vunpack.c.h.b16 %v1852
        %v1884 = vunpack.c.l.b16 %v1853
        %v1885 = vunpack.c.h.b16 %v1853
        %v1886 = vunpack.c.l.b16 %v1854
        %v1887 = vunpack.c.h.b16 %v1854
        %v1888 = vpack.c.b16 %v1870, %v1868
        %v1889 = vpack.c.b16 %v1871, %v1869
        %v1890 = vpack.c.b16 %v1874, %v1872
        %v1891 = vpack.c.b16 %v1875, %v1873
        %v1892 = vpack.c.b16 %v1878, %v1876
        %v1893 = vpack.c.b16 %v1879, %v1877
        %v1894 = vpack.c.b16 %v1882, %v1880
        %v1895 = vpack.c.b16 %v1883, %v1881
        %v1896 = vpack.c.b16 %v1886, %v1884
        %v1897 = vpack.c.b16 %v1887, %v1885
        %vm1908 = vcmask 654336
        %v1910 = vsel %vm1908, %v1857, 0
        %1912 = vmatpush.bf16.msra.mxu0 0
        %1913 = vmatpush.bf16.msra.mxu0 0
        %1914 = vmatpush.bf16.msra.mxu0 0
        %1915 = vmatpush.bf16.msra.mxu0 %v1896
        %1916 = vmatpush.bf16.msra.mxu0 %v1894
        %1917 = vmatpush.bf16.msra.mxu0 %v1892
        %1918 = vmatpush.bf16.msra.mxu0 %v1890
        %1919 = vmatpush.bf16.msra.mxu0 %v1888
        %1920 = vmatmul.bf16.gmra.mxu0 %v1910
        %v1921 = vpop.f32.mrf.mxu0
        %v1922 = vadd.f32 0.0, %v1921
        %v1923 = vpop.f32.mrf.mxu0
        %v1924 = vadd.f32 0.0, %v1923
        %1925 = vdwg.mxu0
        %1926 = vmatpush.bf16.msra.mxu0 0
        %1927 = vmatpush.bf16.msra.mxu0 0
        %1928 = vmatpush.bf16.msra.mxu0 0
        %1929 = vmatpush.bf16.msra.mxu0 %v1897
        %1930 = vmatpush.bf16.msra.mxu0 %v1895
        %1931 = vmatpush.bf16.msra.mxu0 %v1893
        %1932 = vmatpush.bf16.msra.mxu0 %v1891
        %1933 = vmatpush.bf16.msra.mxu0 %v1889
        %1934 = vmatmul.bf16.gmra.mxu0 %v1910
        %v1935 = vpop.f32.mrf.mxu0
        %v1936 = vadd.f32 0.0, %v1935
        %v1937 = vpop.f32.mrf.mxu0
        %v1938 = vadd.f32 0.0, %v1937
        %1939 = vdwg.mxu0
        %v1950 = vunpack.c.l.b16 %v1834
        %v1951 = vunpack.c.h.b16 %v1834
        %v1952 = vunpack.c.l.b16 %v1835
        %v1953 = vunpack.c.h.b16 %v1835
        %v1954 = vunpack.c.l.b16 %v1836
        %v1955 = vunpack.c.h.b16 %v1836
        %v1956 = vunpack.c.l.b16 %v1837
        %v1957 = vunpack.c.h.b16 %v1837
        %v1958 = vunpack.c.l.b16 %v1838
        %v1959 = vunpack.c.h.b16 %v1838
        %v1960 = vunpack.c.l.b16 %v1839
        %v1961 = vunpack.c.h.b16 %v1839
        %v1962 = vunpack.c.l.b16 %v1840
        %v1963 = vunpack.c.h.b16 %v1840
        %v1964 = vunpack.c.l.b16 %v1841
        %v1965 = vunpack.c.h.b16 %v1841
        %v1966 = vunpack.c.l.b16 %v1842
        %v1967 = vunpack.c.h.b16 %v1842
        %v1968 = vunpack.c.l.b16 %v1843
        %v1969 = vunpack.c.h.b16 %v1843
        %v1970 = vpack.c.b16 %v1952, %v1950
        %v1971 = vpack.c.b16 %v1953, %v1951
        %v1972 = vpack.c.b16 %v1956, %v1954
        %v1973 = vpack.c.b16 %v1957, %v1955
        %v1974 = vpack.c.b16 %v1960, %v1958
        %v1975 = vpack.c.b16 %v1961, %v1959
        %v1976 = vpack.c.b16 %v1964, %v1962
        %v1977 = vpack.c.b16 %v1965, %v1963
        %v1978 = vpack.c.b16 %v1968, %v1966
        %v1979 = vpack.c.b16 %v1969, %v1967
        %v1991 = vsel %vm1908, %v1833, 0
        %1993 = vmatpush.bf16.msra.mxu0 0
        %1994 = vmatpush.bf16.msra.mxu0 0
        %1995 = vmatpush.bf16.msra.mxu0 0
        %1996 = vmatpush.bf16.msra.mxu0 %v1978
        %1997 = vmatpush.bf16.msra.mxu0 %v1976
        %1998 = vmatpush.bf16.msra.mxu0 %v1974
        %1999 = vmatpush.bf16.msra.mxu0 %v1972
        %2000 = vmatpush.bf16.msra.mxu0 %v1970
        %2001 = vmatmul.bf16.gmra.mxu0 %v1991
        %v2002 = vpop.f32.mrf.mxu0
        %v2003 = vadd.f32 %v1922, %v2002
        %v2004 = vpop.f32.mrf.mxu0
        %v2005 = vadd.f32 %v1924, %v2004
        %2006 = vdwg.mxu0
        %2007 = vmatpush.bf16.msra.mxu0 0
        %2008 = vmatpush.bf16.msra.mxu0 0
        %2009 = vmatpush.bf16.msra.mxu0 0
        %2010 = vmatpush.bf16.msra.mxu0 %v1979
        %2011 = vmatpush.bf16.msra.mxu0 %v1977
        %2012 = vmatpush.bf16.msra.mxu0 %v1975
        %2013 = vmatpush.bf16.msra.mxu0 %v1973
        %2014 = vmatpush.bf16.msra.mxu0 %v1971
        %2015 = vmatmul.bf16.gmra.mxu0 %v1991
        %v2016 = vpop.f32.mrf.mxu0
        %v2017 = vadd.f32 %v1936, %v2016
        %v2018 = vpop.f32.mrf.mxu0
        %v2019 = vadd.f32 %v1938, %v2018
        %2020 = vdwg.mxu0
        %s2021 = scalar_lea.vmem [#allocation10], 160
        %v2022 = vld [vmem:[%s2021] sm:$0xff]
        %v2023 = vld [vmem:[%s2021 + $0x8] sm:$0xff]
        %v2024 = vld [vmem:[%s2021 + $0x10] sm:$0xff]
        %v2025 = vld [vmem:[%s2021 + $0x18] sm:$0xff]
        %v2026 = vld [vmem:[%s2021 + $0x20] sm:$0xff]
        %v2027 = vld [vmem:[%s2021 + $0x28] sm:$0xff]
        %v2028 = vld [vmem:[%s2021 + $0x30] sm:$0xff]
        %v2029 = vld [vmem:[%s2021 + $0x38] sm:$0xff]
        %v2030 = vld [vmem:[%s2021 + $0x40] sm:$0xff]
        %v2031 = vld [vmem:[%s2021 + $0x48] sm:$0xff]
        %2032 = vrot.lane.b32.xlu0 %v1833, 112
        %v2033 = vpop.permute.xlu0 %2032
        %v2044 = vunpack.c.l.b16 %v2022
        %v2045 = vunpack.c.h.b16 %v2022
        %v2046 = vunpack.c.l.b16 %v2023
        %v2047 = vunpack.c.h.b16 %v2023
        %v2048 = vunpack.c.l.b16 %v2024
        %v2049 = vunpack.c.h.b16 %v2024
        %v2050 = vunpack.c.l.b16 %v2025
        %v2051 = vunpack.c.h.b16 %v2025
        %v2052 = vunpack.c.l.b16 %v2026
        %v2053 = vunpack.c.h.b16 %v2026
        %v2054 = vunpack.c.l.b16 %v2027
        %v2055 = vunpack.c.h.b16 %v2027
        %v2056 = vunpack.c.l.b16 %v2028
        %v2057 = vunpack.c.h.b16 %v2028
        %v2058 = vunpack.c.l.b16 %v2029
        %v2059 = vunpack.c.h.b16 %v2029
        %v2060 = vunpack.c.l.b16 %v2030
        %v2061 = vunpack.c.h.b16 %v2030
        %v2062 = vunpack.c.l.b16 %v2031
        %v2063 = vunpack.c.h.b16 %v2031
        %v2064 = vpack.c.b16 %v2046, %v2044
        %v2065 = vpack.c.b16 %v2047, %v2045
        %v2066 = vpack.c.b16 %v2050, %v2048
        %v2067 = vpack.c.b16 %v2051, %v2049
        %v2068 = vpack.c.b16 %v2054, %v2052
        %v2069 = vpack.c.b16 %v2055, %v2053
        %v2070 = vpack.c.b16 %v2058, %v2056
        %v2071 = vpack.c.b16 %v2059, %v2057
        %v2072 = vpack.c.b16 %v2062, %v2060
        %v2073 = vpack.c.b16 %v2063, %v2061
        %v2085 = vsel %vm1908, %v2033, 0
        %2087 = vmatpush.bf16.msra.mxu0 0
        %2088 = vmatpush.bf16.msra.mxu0 0
        %2089 = vmatpush.bf16.msra.mxu0 0
        %2090 = vmatpush.bf16.msra.mxu0 %v2072
        %2091 = vmatpush.bf16.msra.mxu0 %v2070
        %2092 = vmatpush.bf16.msra.mxu0 %v2068
        %2093 = vmatpush.bf16.msra.mxu0 %v2066
        %2094 = vmatpush.bf16.msra.mxu0 %v2064
        %2095 = vmatmul.bf16.gmra.mxu0 %v2085
        %v2096 = vpop.f32.mrf.mxu0
        %v2097 = vadd.f32 0.0, %v2096
        %v2098 = vpop.f32.mrf.mxu0
        %v2099 = vadd.f32 0.0, %v2098
        %2100 = vdwg.mxu0
        %2101 = vmatpush.bf16.msra.mxu0 0
        %2102 = vmatpush.bf16.msra.mxu0 0
        %2103 = vmatpush.bf16.msra.mxu0 0
        %2104 = vmatpush.bf16.msra.mxu0 %v2073
        %2105 = vmatpush.bf16.msra.mxu0 %v2071
        %2106 = vmatpush.bf16.msra.mxu0 %v2069
        %2107 = vmatpush.bf16.msra.mxu0 %v2067
        %2108 = vmatpush.bf16.msra.mxu0 %v2065
        %2109 = vmatmul.bf16.gmra.mxu0 %v2085
        %v2110 = vpop.f32.mrf.mxu0
        %v2111 = vadd.f32 0.0, %v2110
        %v2112 = vpop.f32.mrf.mxu0
        %v2113 = vadd.f32 0.0, %v2112
        %2114 = vdwg.mxu0
        %v2115 = vadd.f32 %v2003, %v2097
        %v2116 = vadd.f32 %v2017, %v2111
        %v2117 = vadd.f32 %v2005, %v2099
        %v2118 = vadd.f32 %v2019, %v2113
        %v2119 = vld [vmem:[#allocation4 + $0x1] sm:$0xff]
        %v2120 = vld [vmem:[#allocation4 + $0x9] sm:$0x3]
        %v2121 = vpack.c.bf16 %v2120, %v2119
        %s2122 = scalar_lea.vmem [#allocation10], 240
        %v2123 = vld [vmem:[%s2122] sm:$0xff]
        %v2124 = vld [vmem:[%s2122 + $0x8] sm:$0xff]
        %v2125 = vld [vmem:[%s2122 + $0x10] sm:$0xff]
        %v2126 = vld [vmem:[%s2122 + $0x18] sm:$0xff]
        %v2127 = vld [vmem:[%s2122 + $0x20] sm:$0xff]
        %v2128 = vld [vmem:[%s2122 + $0x28] sm:$0xff]
        %v2129 = vld [vmem:[%s2122 + $0x30] sm:$0xff]
        %v2130 = vld [vmem:[%s2122 + $0x38] sm:$0xff]
        %v2131 = vld [vmem:[%s2122 + $0x40] sm:$0xff]
        %v2132 = vld [vmem:[%s2122 + $0x48] sm:$0xff]
        %v2143 = vunpack.c.l.b16 %v2123
        %v2144 = vunpack.c.h.b16 %v2123
        %v2145 = vunpack.c.l.b16 %v2124
        %v2146 = vunpack.c.h.b16 %v2124
        %v2147 = vunpack.c.l.b16 %v2125
        %v2148 = vunpack.c.h.b16 %v2125
        %v2149 = vunpack.c.l.b16 %v2126
        %v2150 = vunpack.c.h.b16 %v2126
        %v2151 = vunpack.c.l.b16 %v2127
        %v2152 = vunpack.c.h.b16 %v2127
        %v2153 = vunpack.c.l.b16 %v2128
        %v2154 = vunpack.c.h.b16 %v2128
        %v2155 = vunpack.c.l.b16 %v2129
        %v2156 = vunpack.c.h.b16 %v2129
        %v2157 = vunpack.c.l.b16 %v2130
        %v2158 = vunpack.c.h.b16 %v2130
        %v2159 = vunpack.c.l.b16 %v2131
        %v2160 = vunpack.c.h.b16 %v2131
        %v2161 = vunpack.c.l.b16 %v2132
        %v2162 = vunpack.c.h.b16 %v2132
        %v2163 = vpack.c.b16 %v2145, %v2143
        %v2164 = vpack.c.b16 %v2146, %v2144
        %v2165 = vpack.c.b16 %v2149, %v2147
        %v2166 = vpack.c.b16 %v2150, %v2148
        %v2167 = vpack.c.b16 %v2153, %v2151
        %v2168 = vpack.c.b16 %v2154, %v2152
        %v2169 = vpack.c.b16 %v2157, %v2155
        %v2170 = vpack.c.b16 %v2158, %v2156
        %v2171 = vpack.c.b16 %v2161, %v2159
        %v2172 = vpack.c.b16 %v2162, %v2160
        %v2184 = vsel %vm1908, %v2121, 0
        %2186 = vmatpush.bf16.msra.mxu0 0
        %2187 = vmatpush.bf16.msra.mxu0 0
        %2188 = vmatpush.bf16.msra.mxu0 0
        %2189 = vmatpush.bf16.msra.mxu0 %v2171
        %2190 = vmatpush.bf16.msra.mxu0 %v2169
        %2191 = vmatpush.bf16.msra.mxu0 %v2167
        %2192 = vmatpush.bf16.msra.mxu0 %v2165
        %2193 = vmatpush.bf16.msra.mxu0 %v2163
        %2194 = vmatmul.bf16.gmra.mxu0 %v2184
        %v2195 = vpop.f32.mrf.mxu0
        %v2196 = vadd.f32 0.0, %v2195
        %v2197 = vpop.f32.mrf.mxu0
        %v2198 = vadd.f32 0.0, %v2197
        %2199 = vdwg.mxu0
        %2200 = vmatpush.bf16.msra.mxu0 0
        %2201 = vmatpush.bf16.msra.mxu0 0
        %2202 = vmatpush.bf16.msra.mxu0 0
        %2203 = vmatpush.bf16.msra.mxu0 %v2172
        %2204 = vmatpush.bf16.msra.mxu0 %v2170
        %2205 = vmatpush.bf16.msra.mxu0 %v2168
        %2206 = vmatpush.bf16.msra.mxu0 %v2166
        %2207 = vmatpush.bf16.msra.mxu0 %v2164
        %2208 = vmatmul.bf16.gmra.mxu0 %v2184
        %v2209 = vpop.f32.mrf.mxu0
        %v2210 = vadd.f32 0.0, %v2209
        %v2211 = vpop.f32.mrf.mxu0
        %v2212 = vadd.f32 0.0, %v2211
        %2213 = vdwg.mxu0
        %v2214 = vadd.f32 %v2115, %v2196
        %v2215 = vadd.f32 %v2116, %v2210
        %v2216 = vadd.f32 %v2117, %v2198
        %v2217 = vadd.f32 %v2118, %v2212
        %s2218 = scalar_lea.vmem [#allocation10], 320
        %v2219 = vld [vmem:[%s2218] sm:$0xff]
        %v2220 = vld [vmem:[%s2218 + $0x8] sm:$0xff]
        %v2221 = vld [vmem:[%s2218 + $0x10] sm:$0xff]
        %v2222 = vld [vmem:[%s2218 + $0x18] sm:$0xff]
        %v2223 = vld [vmem:[%s2218 + $0x20] sm:$0xff]
        %v2224 = vld [vmem:[%s2218 + $0x28] sm:$0xff]
        %v2225 = vld [vmem:[%s2218 + $0x30] sm:$0xff]
        %v2226 = vld [vmem:[%s2218 + $0x38] sm:$0xff]
        %v2227 = vld [vmem:[%s2218 + $0x40] sm:$0xff]
        %v2228 = vld [vmem:[%s2218 + $0x48] sm:$0xff]
        %2230 = vrot.lane.b32.xlu0 %v2121, 120
        %v2231 = vpop.permute.xlu0 %2230
        %v2242 = vunpack.c.l.b16 %v2219
        %v2243 = vunpack.c.h.b16 %v2219
        %v2244 = vunpack.c.l.b16 %v2220
        %v2245 = vunpack.c.h.b16 %v2220
        %v2246 = vunpack.c.l.b16 %v2221
        %v2247 = vunpack.c.h.b16 %v2221
        %v2248 = vunpack.c.l.b16 %v2222
        %v2249 = vunpack.c.h.b16 %v2222
        %v2250 = vunpack.c.l.b16 %v2223
        %v2251 = vunpack.c.h.b16 %v2223
        %v2252 = vunpack.c.l.b16 %v2224
        %v2253 = vunpack.c.h.b16 %v2224
        %v2254 = vunpack.c.l.b16 %v2225
        %v2255 = vunpack.c.h.b16 %v2225
        %v2256 = vunpack.c.l.b16 %v2226
        %v2257 = vunpack.c.h.b16 %v2226
        %v2258 = vunpack.c.l.b16 %v2227
        %v2259 = vunpack.c.h.b16 %v2227
        %v2260 = vunpack.c.l.b16 %v2228
        %v2261 = vunpack.c.h.b16 %v2228
        %v2262 = vpack.c.b16 %v2244, %v2242
        %v2263 = vpack.c.b16 %v2245, %v2243
        %v2264 = vpack.c.b16 %v2248, %v2246
        %v2265 = vpack.c.b16 %v2249, %v2247
        %v2266 = vpack.c.b16 %v2252, %v2250
        %v2267 = vpack.c.b16 %v2253, %v2251
        %v2268 = vpack.c.b16 %v2256, %v2254
        %v2269 = vpack.c.b16 %v2257, %v2255
        %v2270 = vpack.c.b16 %v2260, %v2258
        %v2271 = vpack.c.b16 %v2261, %v2259
        %v2283 = vsel %vm1908, %v2231, 0
        %2285 = vmatpush.bf16.msra.mxu0 0
        %2286 = vmatpush.bf16.msra.mxu0 0
        %2287 = vmatpush.bf16.msra.mxu0 0
        %2288 = vmatpush.bf16.msra.mxu0 %v2270
        %2289 = vmatpush.bf16.msra.mxu0 %v2268
        %2290 = vmatpush.bf16.msra.mxu0 %v2266
        %2291 = vmatpush.bf16.msra.mxu0 %v2264
        %2292 = vmatpush.bf16.msra.mxu0 %v2262
        %2293 = vmatmul.bf16.gmra.mxu0 %v2283
        %v2294 = vpop.f32.mrf.mxu0
        %v2295 = vadd.f32 0.0, %v2294
        %v2296 = vpop.f32.mrf.mxu0
        %v2297 = vadd.f32 0.0, %v2296
        %2298 = vdwg.mxu0
        %2299 = vmatpush.bf16.msra.mxu0 0
        %2300 = vmatpush.bf16.msra.mxu0 0
        %2301 = vmatpush.bf16.msra.mxu0 0
        %2302 = vmatpush.bf16.msra.mxu0 %v2271
        %2303 = vmatpush.bf16.msra.mxu0 %v2269
        %2304 = vmatpush.bf16.msra.mxu0 %v2267
        %2305 = vmatpush.bf16.msra.mxu0 %v2265
        %2306 = vmatpush.bf16.msra.mxu0 %v2263
        %2307 = vmatmul.bf16.gmra.mxu0 %v2283
        %v2308 = vpop.f32.mrf.mxu0
        %v2309 = vadd.f32 0.0, %v2308
        %v2310 = vpop.f32.mrf.mxu0
        %v2311 = vadd.f32 0.0, %v2310
        %2312 = vdwg.mxu0
        %v2313 = vadd.f32 %v2214, %v2295
        %v2314 = vadd.f32 %v2215, %v2309
        %v2315 = vadd.f32 %v2216, %v2297
        %v2316 = vadd.f32 %v2217, %v2311
        %s2317 = scalar_lea.vmem [#allocation10], 400
        %v2318 = vld [vmem:[%s2317] sm:$0xff]
        %v2319 = vld [vmem:[%s2317 + $0x8] sm:$0xff]
        %v2320 = vld [vmem:[%s2317 + $0x10] sm:$0xff]
        %v2321 = vld [vmem:[%s2317 + $0x18] sm:$0xff]
        %v2322 = vld [vmem:[%s2317 + $0x20] sm:$0xff]
        %v2323 = vld [vmem:[%s2317 + $0x28] sm:$0xff]
        %v2324 = vld [vmem:[%s2317 + $0x30] sm:$0xff]
        %v2325 = vld [vmem:[%s2317 + $0x38] sm:$0xff]
        %v2326 = vld [vmem:[%s2317 + $0x40] sm:$0xff]
        %v2327 = vld [vmem:[%s2317 + $0x48] sm:$0xff]
        %2328 = vrot.lane.b32.xlu0 %v2121, 112
        %v2329 = vpop.permute.xlu0 %2328
        %v2340 = vunpack.c.l.b16 %v2318
        %v2341 = vunpack.c.h.b16 %v2318
        %v2342 = vunpack.c.l.b16 %v2319
        %v2343 = vunpack.c.h.b16 %v2319
        %v2344 = vunpack.c.l.b16 %v2320
        %v2345 = vunpack.c.h.b16 %v2320
        %v2346 = vunpack.c.l.b16 %v2321
        %v2347 = vunpack.c.h.b16 %v2321
        %v2348 = vunpack.c.l.b16 %v2322
        %v2349 = vunpack.c.h.b16 %v2322
        %v2350 = vunpack.c.l.b16 %v2323
        %v2351 = vunpack.c.h.b16 %v2323
        %v2352 = vunpack.c.l.b16 %v2324
        %v2353 = vunpack.c.h.b16 %v2324
        %v2354 = vunpack.c.l.b16 %v2325
        %v2355 = vunpack.c.h.b16 %v2325
        %v2356 = vunpack.c.l.b16 %v2326
        %v2357 = vunpack.c.h.b16 %v2326
        %v2358 = vunpack.c.l.b16 %v2327
        %v2359 = vunpack.c.h.b16 %v2327
        %v2360 = vpack.c.b16 %v2342, %v2340
        %v2361 = vpack.c.b16 %v2343, %v2341
        %v2362 = vpack.c.b16 %v2346, %v2344
        %v2363 = vpack.c.b16 %v2347, %v2345
        %v2364 = vpack.c.b16 %v2350, %v2348
        %v2365 = vpack.c.b16 %v2351, %v2349
        %v2366 = vpack.c.b16 %v2354, %v2352
        %v2367 = vpack.c.b16 %v2355, %v2353
        %v2368 = vpack.c.b16 %v2358, %v2356
        %v2369 = vpack.c.b16 %v2359, %v2357
        %v2381 = vsel %vm1908, %v2329, 0
        %2383 = vmatpush.bf16.msra.mxu0 0
        %2384 = vmatpush.bf16.msra.mxu0 0
        %2385 = vmatpush.bf16.msra.mxu0 0
        %2386 = vmatpush.bf16.msra.mxu0 %v2368
        %2387 = vmatpush.bf16.msra.mxu0 %v2366
        %2388 = vmatpush.bf16.msra.mxu0 %v2364
        %2389 = vmatpush.bf16.msra.mxu0 %v2362
        %2390 = vmatpush.bf16.msra.mxu0 %v2360
        %2391 = vmatmul.bf16.gmra.mxu0 %v2381
        %v2392 = vpop.f32.mrf.mxu0
        %v2393 = vadd.f32 0.0, %v2392
        %v2394 = vpop.f32.mrf.mxu0
        %v2395 = vadd.f32 0.0, %v2394
        %2396 = vdwg.mxu0
        %2397 = vmatpush.bf16.msra.mxu0 0
        %2398 = vmatpush.bf16.msra.mxu0 0
        %2399 = vmatpush.bf16.msra.mxu0 0
        %2400 = vmatpush.bf16.msra.mxu0 %v2369
        %2401 = vmatpush.bf16.msra.mxu0 %v2367
        %2402 = vmatpush.bf16.msra.mxu0 %v2365
        %2403 = vmatpush.bf16.msra.mxu0 %v2363
        %2404 = vmatpush.bf16.msra.mxu0 %v2361
        %2405 = vmatmul.bf16.gmra.mxu0 %v2381
        %v2406 = vpop.f32.mrf.mxu0
        %v2407 = vadd.f32 0.0, %v2406
        %v2408 = vpop.f32.mrf.mxu0
        %v2409 = vadd.f32 0.0, %v2408
        %2410 = vdwg.mxu0
        %v2411 = vadd.f32 %v2313, %v2393
        %v2412 = vadd.f32 %v2314, %v2407
        %v2413 = vadd.f32 %v2315, %v2395
        %v2414 = vadd.f32 %v2316, %v2409
        %v2415 = vld [vmem:[#allocation4 + $0x2] sm:$0xff]
        %v2416 = vld [vmem:[#allocation4 + $0xa] sm:$0x3]
        %v2417 = vpack.c.bf16 %v2416, %v2415
        %s2418 = scalar_lea.vmem [#allocation10], 480
        %v2419 = vld [vmem:[%s2418] sm:$0xff]
        %v2420 = vld [vmem:[%s2418 + $0x8] sm:$0xff]
        %v2421 = vld [vmem:[%s2418 + $0x10] sm:$0xff]
        %v2422 = vld [vmem:[%s2418 + $0x18] sm:$0xff]
        %v2423 = vld [vmem:[%s2418 + $0x20] sm:$0xff]
        %v2424 = vld [vmem:[%s2418 + $0x28] sm:$0xff]
        %v2425 = vld [vmem:[%s2418 + $0x30] sm:$0xff]
        %v2426 = vld [vmem:[%s2418 + $0x38] sm:$0xff]
        %v2427 = vld [vmem:[%s2418 + $0x40] sm:$0xff]
        %v2428 = vld [vmem:[%s2418 + $0x48] sm:$0xff]
        %v2439 = vunpack.c.l.b16 %v2419
        %v2440 = vunpack.c.h.b16 %v2419
        %v2441 = vunpack.c.l.b16 %v2420
        %v2442 = vunpack.c.h.b16 %v2420
        %v2443 = vunpack.c.l.b16 %v2421
        %v2444 = vunpack.c.h.b16 %v2421
        %v2445 = vunpack.c.l.b16 %v2422
        %v2446 = vunpack.c.h.b16 %v2422
        %v2447 = vunpack.c.l.b16 %v2423
        %v2448 = vunpack.c.h.b16 %v2423
        %v2449 = vunpack.c.l.b16 %v2424
        %v2450 = vunpack.c.h.b16 %v2424
        %v2451 = vunpack.c.l.b16 %v2425
        %v2452 = vunpack.c.h.b16 %v2425
        %v2453 = vunpack.c.l.b16 %v2426
        %v2454 = vunpack.c.h.b16 %v2426
        %v2455 = vunpack.c.l.b16 %v2427
        %v2456 = vunpack.c.h.b16 %v2427
        %v2457 = vunpack.c.l.b16 %v2428
        %v2458 = vunpack.c.h.b16 %v2428
        %v2459 = vpack.c.b16 %v2441, %v2439
        %v2460 = vpack.c.b16 %v2442, %v2440
        %v2461 = vpack.c.b16 %v2445, %v2443
        %v2462 = vpack.c.b16 %v2446, %v2444
        %v2463 = vpack.c.b16 %v2449, %v2447
        %v2464 = vpack.c.b16 %v2450, %v2448
        %v2465 = vpack.c.b16 %v2453, %v2451
        %v2466 = vpack.c.b16 %v2454, %v2452
        %v2467 = vpack.c.b16 %v2457, %v2455
        %v2468 = vpack.c.b16 %v2458, %v2456
        %v2480 = vsel %vm1908, %v2417, 0
        %2482 = vmatpush.bf16.msra.mxu0 0
        %2483 = vmatpush.bf16.msra.mxu0 0
        %2484 = vmatpush.bf16.msra.mxu0 0
        %2485 = vmatpush.bf16.msra.mxu0 %v2467
        %2486 = vmatpush.bf16.msra.mxu0 %v2465
        %2487 = vmatpush.bf16.msra.mxu0 %v2463
        %2488 = vmatpush.bf16.msra.mxu0 %v2461
        %2489 = vmatpush.bf16.msra.mxu0 %v2459
        %2490 = vmatmul.bf16.gmra.mxu0 %v2480
        %v2491 = vpop.f32.mrf.mxu0
        %v2492 = vadd.f32 0.0, %v2491
        %v2493 = vpop.f32.mrf.mxu0
        %v2494 = vadd.f32 0.0, %v2493
        %2495 = vdwg.mxu0
        %2496 = vmatpush.bf16.msra.mxu0 0
        %2497 = vmatpush.bf16.msra.mxu0 0
        %2498 = vmatpush.bf16.msra.mxu0 0
        %2499 = vmatpush.bf16.msra.mxu0 %v2468
        %2500 = vmatpush.bf16.msra.mxu0 %v2466
        %2501 = vmatpush.bf16.msra.mxu0 %v2464
        %2502 = vmatpush.bf16.msra.mxu0 %v2462
        %2503 = vmatpush.bf16.msra.mxu0 %v2460
        %2504 = vmatmul.bf16.gmra.mxu0 %v2480
        %v2505 = vpop.f32.mrf.mxu0
        %v2506 = vadd.f32 0.0, %v2505
        %v2507 = vpop.f32.mrf.mxu0
        %v2508 = vadd.f32 0.0, %v2507
        %2509 = vdwg.mxu0
        %v2510 = vadd.f32 %v2411, %v2492
        %v2511 = vadd.f32 %v2412, %v2506
        %v2512 = vadd.f32 %v2413, %v2494
        %v2513 = vadd.f32 %v2414, %v2508
        %s2514 = scalar_lea.vmem [#allocation10], 560
        %v2515 = vld [vmem:[%s2514] sm:$0xff]
        %v2516 = vld [vmem:[%s2514 + $0x8] sm:$0xff]
        %v2517 = vld [vmem:[%s2514 + $0x10] sm:$0xff]
        %v2518 = vld [vmem:[%s2514 + $0x18] sm:$0xff]
        %v2519 = vld [vmem:[%s2514 + $0x20] sm:$0xff]
        %v2520 = vld [vmem:[%s2514 + $0x28] sm:$0xff]
        %v2521 = vld [vmem:[%s2514 + $0x30] sm:$0xff]
        %v2522 = vld [vmem:[%s2514 + $0x38] sm:$0xff]
        %v2523 = vld [vmem:[%s2514 + $0x40] sm:$0xff]
        %v2524 = vld [vmem:[%s2514 + $0x48] sm:$0xff]
        %2526 = vrot.lane.b32.xlu0 %v2417, 120
        %v2527 = vpop.permute.xlu0 %2526
        %v2538 = vunpack.c.l.b16 %v2515
        %v2539 = vunpack.c.h.b16 %v2515
        %v2540 = vunpack.c.l.b16 %v2516
        %v2541 = vunpack.c.h.b16 %v2516
        %v2542 = vunpack.c.l.b16 %v2517
        %v2543 = vunpack.c.h.b16 %v2517
        %v2544 = vunpack.c.l.b16 %v2518
        %v2545 = vunpack.c.h.b16 %v2518
        %v2546 = vunpack.c.l.b16 %v2519
        %v2547 = vunpack.c.h.b16 %v2519
        %v2548 = vunpack.c.l.b16 %v2520
        %v2549 = vunpack.c.h.b16 %v2520
        %v2550 = vunpack.c.l.b16 %v2521
        %v2551 = vunpack.c.h.b16 %v2521
        %v2552 = vunpack.c.l.b16 %v2522
        %v2553 = vunpack.c.h.b16 %v2522
        %v2554 = vunpack.c.l.b16 %v2523
        %v2555 = vunpack.c.h.b16 %v2523
        %v2556 = vunpack.c.l.b16 %v2524
        %v2557 = vunpack.c.h.b16 %v2524
        %v2558 = vpack.c.b16 %v2540, %v2538
        %v2559 = vpack.c.b16 %v2541, %v2539
        %v2560 = vpack.c.b16 %v2544, %v2542
        %v2561 = vpack.c.b16 %v2545, %v2543
        %v2562 = vpack.c.b16 %v2548, %v2546
        %v2563 = vpack.c.b16 %v2549, %v2547
        %v2564 = vpack.c.b16 %v2552, %v2550
        %v2565 = vpack.c.b16 %v2553, %v2551
        %v2566 = vpack.c.b16 %v2556, %v2554
        %v2567 = vpack.c.b16 %v2557, %v2555
        %v2579 = vsel %vm1908, %v2527, 0
        %2581 = vmatpush.bf16.msra.mxu0 0
        %2582 = vmatpush.bf16.msra.mxu0 0
        %2583 = vmatpush.bf16.msra.mxu0 0
        %2584 = vmatpush.bf16.msra.mxu0 %v2566
        %2585 = vmatpush.bf16.msra.mxu0 %v2564
        %2586 = vmatpush.bf16.msra.mxu0 %v2562
        %2587 = vmatpush.bf16.msra.mxu0 %v2560
        %2588 = vmatpush.bf16.msra.mxu0 %v2558
        %2589 = vmatmul.bf16.gmra.mxu0 %v2579
        %v2590 = vpop.f32.mrf.mxu0
        %v2591 = vadd.f32 0.0, %v2590
        %v2592 = vpop.f32.mrf.mxu0
        %v2593 = vadd.f32 0.0, %v2592
        %2594 = vdwg.mxu0
        %2595 = vmatpush.bf16.msra.mxu0 0
        %2596 = vmatpush.bf16.msra.mxu0 0
        %2597 = vmatpush.bf16.msra.mxu0 0
        %2598 = vmatpush.bf16.msra.mxu0 %v2567
        %2599 = vmatpush.bf16.msra.mxu0 %v2565
        %2600 = vmatpush.bf16.msra.mxu0 %v2563
        %2601 = vmatpush.bf16.msra.mxu0 %v2561
        %2602 = vmatpush.bf16.msra.mxu0 %v2559
        %2603 = vmatmul.bf16.gmra.mxu0 %v2579
        %v2604 = vpop.f32.mrf.mxu0
        %v2605 = vadd.f32 0.0, %v2604
        %v2606 = vpop.f32.mrf.mxu0
        %v2607 = vadd.f32 0.0, %v2606
        %2608 = vdwg.mxu0
        %v2609 = vadd.f32 %v2510, %v2591
        %v2610 = vadd.f32 %v2511, %v2605
        %v2611 = vadd.f32 %v2512, %v2593
        %v2612 = vadd.f32 %v2513, %v2607
        %s2613 = scalar_lea.vmem [#allocation10], 640
        %v2614 = vld [vmem:[%s2613] sm:$0xff]
        %v2615 = vld [vmem:[%s2613 + $0x8] sm:$0xff]
        %v2616 = vld [vmem:[%s2613 + $0x10] sm:$0xff]
        %v2617 = vld [vmem:[%s2613 + $0x18] sm:$0xff]
        %v2618 = vld [vmem:[%s2613 + $0x20] sm:$0xff]
        %v2619 = vld [vmem:[%s2613 + $0x28] sm:$0xff]
        %v2620 = vld [vmem:[%s2613 + $0x30] sm:$0xff]
        %v2621 = vld [vmem:[%s2613 + $0x38] sm:$0xff]
        %v2622 = vld [vmem:[%s2613 + $0x40] sm:$0xff]
        %v2623 = vld [vmem:[%s2613 + $0x48] sm:$0xff]
        %2624 = vrot.lane.b32.xlu0 %v2417, 112
        %v2625 = vpop.permute.xlu0 %2624
        %v2636 = vunpack.c.l.b16 %v2614
        %v2637 = vunpack.c.h.b16 %v2614
        %v2638 = vunpack.c.l.b16 %v2615
        %v2639 = vunpack.c.h.b16 %v2615
        %v2640 = vunpack.c.l.b16 %v2616
        %v2641 = vunpack.c.h.b16 %v2616
        %v2642 = vunpack.c.l.b16 %v2617
        %v2643 = vunpack.c.h.b16 %v2617
        %v2644 = vunpack.c.l.b16 %v2618
        %v2645 = vunpack.c.h.b16 %v2618
        %v2646 = vunpack.c.l.b16 %v2619
        %v2647 = vunpack.c.h.b16 %v2619
        %v2648 = vunpack.c.l.b16 %v2620
        %v2649 = vunpack.c.h.b16 %v2620
        %v2650 = vunpack.c.l.b16 %v2621
        %v2651 = vunpack.c.h.b16 %v2621
        %v2652 = vunpack.c.l.b16 %v2622
        %v2653 = vunpack.c.h.b16 %v2622
        %v2654 = vunpack.c.l.b16 %v2623
        %v2655 = vunpack.c.h.b16 %v2623
        %v2656 = vpack.c.b16 %v2638, %v2636
        %v2657 = vpack.c.b16 %v2639, %v2637
        %v2658 = vpack.c.b16 %v2642, %v2640
        %v2659 = vpack.c.b16 %v2643, %v2641
        %v2660 = vpack.c.b16 %v2646, %v2644
        %v2661 = vpack.c.b16 %v2647, %v2645
        %v2662 = vpack.c.b16 %v2650, %v2648
        %v2663 = vpack.c.b16 %v2651, %v2649
        %v2664 = vpack.c.b16 %v2654, %v2652
        %v2665 = vpack.c.b16 %v2655, %v2653
        %v2677 = vsel %vm1908, %v2625, 0
        %2679 = vmatpush.bf16.msra.mxu0 0
        %2680 = vmatpush.bf16.msra.mxu0 0
        %2681 = vmatpush.bf16.msra.mxu0 0
        %2682 = vmatpush.bf16.msra.mxu0 %v2664
        %2683 = vmatpush.bf16.msra.mxu0 %v2662
        %2684 = vmatpush.bf16.msra.mxu0 %v2660
        %2685 = vmatpush.bf16.msra.mxu0 %v2658
        %2686 = vmatpush.bf16.msra.mxu0 %v2656
        %2687 = vmatmul.bf16.gmra.mxu0 %v2677
        %v2688 = vpop.f32.mrf.mxu0
        %v2689 = vadd.f32 0.0, %v2688
        %v2690 = vpop.f32.mrf.mxu0
        %v2691 = vadd.f32 0.0, %v2690
        %2692 = vdwg.mxu0
        %2693 = vmatpush.bf16.msra.mxu0 0
        %2694 = vmatpush.bf16.msra.mxu0 0
        %2695 = vmatpush.bf16.msra.mxu0 0
        %2696 = vmatpush.bf16.msra.mxu0 %v2665
        %2697 = vmatpush.bf16.msra.mxu0 %v2663
        %2698 = vmatpush.bf16.msra.mxu0 %v2661
        %2699 = vmatpush.bf16.msra.mxu0 %v2659
        %2700 = vmatpush.bf16.msra.mxu0 %v2657
        %2701 = vmatmul.bf16.gmra.mxu0 %v2677
        %v2702 = vpop.f32.mrf.mxu0
        %v2703 = vadd.f32 0.0, %v2702
        %v2704 = vpop.f32.mrf.mxu0
        %v2705 = vadd.f32 0.0, %v2704
        %2706 = vdwg.mxu0
        %v2707 = vadd.f32 %v2609, %v2689
        %v2708 = vadd.f32 %v2610, %v2703
        %v2709 = vadd.f32 %v2611, %v2691
        %v2710 = vadd.f32 %v2612, %v2705
        %v2711 = vld [vmem:[%s4] sm:$0x3]
        %v2713 = vperm.slane %v2711, 0
        %v2714 = vperm.slane %v2711, 1
        %v2717 = vadd.f32 %v2707, %v2713
        %v2718 = vadd.f32 %v2708, %v2714
        %v2719 = vadd.f32 %v2709, %v2713
        %v2720 = vadd.f32 %v2710, %v2714
        %v2721 = vmax.f32 %v2717, 0.0
        %v2722 = vmax.f32 %v2718, 0.0
        %v2723 = vmax.f32 %v2719, 0.0
        %v2724 = vmax.f32 %v2720, 0.0
        %2725 = vst [vmem:[#allocation5] sm:$0xff] %v2721
        %vm2726 = vcmask 261120
        %2727 = vst.msk [vmem:[#allocation5 + $0x8] sm:$0xff] %vm2726, %v2722
        %2728 = vst [vmem:[#allocation5 + $0x10] sm:$0x3] %v2723
        %vm2729 = vcmask 254976
        %2730 = vst.msk [vmem:[#allocation5 + $0x18] sm:$0x3] %vm2729, %v2724
        %v2731 = vld [vmem:[#allocation5] ss:$8 sm:$0x3]
        %s2732 = scalar_lea.vmem [#allocation5], 1
        %v2733 = vld [vmem:[%s2732] ss:$8 sm:$0x3]
        %v2734 = vmax.f32 %v2731, %v2733
        %vm2735 = vcmp.lt.s32.totalorder %v1457, 160
        %vm2736 = vmand %vm1458, %vm2735
        %2737 = vst.msk [vmem:[#allocation6] ss:$8 sm:$0x3] %vm2736, %v2734
        %2738 = vst.msk [vmem:[#allocation6] ss:$8 sm:$0x0] %vm2736, %v2734
        %s2739 = scalar_lea.vmem [#allocation5], 2
        %v2740 = vld [vmem:[%s2739] ss:$8 sm:$0x3]
        %s2741 = scalar_lea.vmem [#allocation5], 3
        %v2742 = vld [vmem:[%s2741] ss:$8 sm:$0x3]
        %v2743 = vmax.f32 %v2740, %v2742
        %s2744 = scalar_lea.vmem [#allocation6], 1
        %2745 = vst.msk [vmem:[%s2744] ss:$8 sm:$0x3] %vm2736, %v2743
        %2746 = vst.msk [vmem:[%s2744] ss:$8 sm:$0x0] %vm2736, %v2743
        %s2747 = scalar_lea.vmem [#allocation5], 4
        %v2748 = vld [vmem:[%s2747] ss:$8 sm:$0x3]
        %s2749 = scalar_lea.vmem [#allocation5], 5
        %v2750 = vld [vmem:[%s2749] ss:$8 sm:$0x3]
        %v2751 = vmax.f32 %v2748, %v2750
        %s2752 = scalar_lea.vmem [#allocation6], 2
        %2753 = vst.msk [vmem:[%s2752] ss:$8 sm:$0x3] %vm2736, %v2751
        %2754 = vst.msk [vmem:[%s2752] ss:$8 sm:$0x0] %vm2736, %v2751
        %s2755 = scalar_lea.vmem [#allocation5], 6
        %v2756 = vld [vmem:[%s2755] ss:$8 sm:$0x3]
        %s2757 = scalar_lea.vmem [#allocation5], 7
        %v2758 = vld [vmem:[%s2757] ss:$8 sm:$0x3]
        %v2759 = vmax.f32 %v2756, %v2758
        %s2760 = scalar_lea.vmem [#allocation6], 3
        %2761 = vst.msk [vmem:[%s2760] ss:$8 sm:$0x3] %vm2736, %v2759
        %2762 = vst.msk [vmem:[%s2760] ss:$8 sm:$0x0] %vm2736, %v2759
        %s2763 = scalar_lea.vmem [#allocation5], 16
        %v2764 = vld [vmem:[%s2763] ss:$8 sm:$0x3]
        %s2765 = scalar_lea.vmem [#allocation5], 17
        %v2766 = vld [vmem:[%s2765] ss:$8 sm:$0x3]
        %v2767 = vmax.f32 %v2764, %v2766
        %s2768 = scalar_lea.vmem [#allocation6], 4
        %2769 = vst.msk [vmem:[%s2768] ss:$8 sm:$0x3] %vm2736, %v2767
        %2770 = vst.msk [vmem:[%s2768] ss:$8 sm:$0x0] %vm2736, %v2767
        %v2771 = vld [vmem:[#allocation6] sm:$0x1f]
        %2773 = vrot.lane.b32.xlu0 %v2771, 112
        %v2774 = vpop.permute.xlu0 %2773
        %v2776 = vmax.f32 %v2771, %v2774
        %vm2777 = vcmask 126976
        %2778 = vst.msk [vmem:[#allocation7] sm:$0x1f] %vm2777, %v2776
        %v2779 = vld [vmem:[#allocation6] sm:$0x1f]
        %2781 = vrot.lane.b32.xlu0 %v2779, 112
        %v2782 = vpop.permute.xlu0 %2781
        %v2784 = vmax.f32 %v2779, %v2782
        %2786 = vrot.lane.b32.xlu0 %v2784, 112
        %v2787 = vpop.permute.xlu0 %2786
        %vm2789 = vcmask 258176
        %2790 = vst.msk [vmem:[#allocation7] sm:$0x1f] %vm2789, %v2787
        %v2791 = vld [vmem:[#allocation6] sm:$0x1f]
        %2793 = vrot.lane.b32.xlu0 %v2791, 112
        %v2794 = vpop.permute.xlu0 %2793
        %v2796 = vmax.f32 %v2791, %v2794
        %2798 = vrot.lane.b32.xlu0 %v2796, 96
        %v2799 = vpop.permute.xlu0 %2798
        %vm2801 = vcmask 389376
        %2802 = vst.msk [vmem:[#allocation7] sm:$0x1f] %vm2801, %v2799
        %v2803 = vld [vmem:[#allocation6] sm:$0x1f]
        %2805 = vrot.lane.b32.xlu0 %v2803, 112
        %v2806 = vpop.permute.xlu0 %2805
        %v2808 = vmax.f32 %v2803, %v2806
        %2810 = vrot.lane.b32.xlu0 %v2808, 80
        %v2811 = vpop.permute.xlu0 %2810
        %vm2813 = vcmask 520576
        %2814 = vst.msk [vmem:[#allocation7] sm:$0x1f] %vm2813, %v2811
        %v2815 = vld [vmem:[#allocation6 + $0x8] sm:$0x1f]
        %2817 = vrot.lane.b32.xlu0 %v2815, 112
        %v2818 = vpop.permute.xlu0 %2817
        %v2820 = vmax.f32 %v2815, %v2818
        %2822 = vrot.lane.b32.xlu0 %v2820, 64
        %v2823 = vpop.permute.xlu0 %2822
        %vm2825 = vcmask 651776
        %2826 = vst.msk [vmem:[#allocation7] sm:$0x1f] %vm2825, %v2823
        %v2827 = vld [vmem:[#allocation7] sm:$0x7]
        %v2828 = vpack.c.bf16 %v2827, %v2827
        %v2829 = vld [vmem:[#allocation12] sm:$0xf]
        %v2830 = vld [vmem:[#allocation12 + $0x4] sm:$0xf]
        %v2831 = vld [vmem:[#allocation12 + $0x8] sm:$0xf]
        %v2832 = vld [vmem:[#allocation12 + $0xc] sm:$0xf]
        %v2833 = vld [vmem:[#allocation12 + $0x10] sm:$0xf]
        %v2834 = vld [vmem:[#allocation12 + $0x14] sm:$0xf]
        %s2835 = scalar_lea.vmem [#allocation12], 24
        %v2836 = vld [vmem:[%s2835] sm:$0xf]
        %v2837 = vld [vmem:[%s2835 + $0x4] sm:$0xf]
        %v2838 = vld [vmem:[%s2835 + $0x8] sm:$0xf]
        %v2839 = vld [vmem:[%s2835 + $0xc] sm:$0xf]
        %v2840 = vld [vmem:[%s2835 + $0x10] sm:$0xf]
        %v2841 = vld [vmem:[%s2835 + $0x14] sm:$0xf]
        %2843 = vrot.lane.b32.xlu0 %v2828, 112
        %v2844 = vpop.permute.xlu0 %2843
        %v2851 = vunpack.c.l.b16 %v2836
        %v2852 = vunpack.c.l.b16 %v2837
        %v2853 = vunpack.c.l.b16 %v2838
        %v2854 = vunpack.c.l.b16 %v2839
        %v2855 = vunpack.c.l.b16 %v2840
        %v2856 = vunpack.c.l.b16 %v2841
        %v2857 = vpack.c.b16 %v2852, %v2851
        %v2858 = vpack.c.b16 %v2854, %v2853
        %v2859 = vpack.c.b16 %v2856, %v2855
        %vm2863 = vcmask 392192
        %v2865 = vsel %vm2863, %v2844, 0
        %2867 = vmatpush.bf16.msra.mxu0 0
        %2868 = vmatpush.bf16.msra.mxu0 0
        %2869 = vmatpush.bf16.msra.mxu0 0
        %2870 = vmatpush.bf16.msra.mxu0 0
        %2871 = vmatpush.bf16.msra.mxu0 0
        %2872 = vmatpush.bf16.msra.mxu0 %v2859
        %2873 = vmatpush.bf16.msra.mxu0 %v2858
        %2874 = vmatpush.bf16.msra.mxu0 %v2857
        %2875 = vmatmul.bf16.gmra.mxu0 %v2865
        %v2876 = vpop.f32.mrf.mxu0
        %v2877 = vadd.f32 0.0, %v2876
        %v2878 = vpop.f32.mrf.mxu0
        %2879 = vdwg.mxu0
        %v2886 = vunpack.c.l.b16 %v2829
        %v2887 = vunpack.c.l.b16 %v2830
        %v2888 = vunpack.c.l.b16 %v2831
        %v2889 = vunpack.c.l.b16 %v2832
        %v2890 = vunpack.c.l.b16 %v2833
        %v2891 = vunpack.c.l.b16 %v2834
        %v2892 = vpack.c.b16 %v2887, %v2886
        %v2893 = vpack.c.b16 %v2889, %v2888
        %v2894 = vpack.c.b16 %v2891, %v2890
        %v2899 = vsel %vm2863, %v2828, 0
        %2901 = vmatpush.bf16.msra.mxu0 0
        %2902 = vmatpush.bf16.msra.mxu0 0
        %2903 = vmatpush.bf16.msra.mxu0 0
        %2904 = vmatpush.bf16.msra.mxu0 0
        %2905 = vmatpush.bf16.msra.mxu0 0
        %2906 = vmatpush.bf16.msra.mxu0 %v2894
        %2907 = vmatpush.bf16.msra.mxu0 %v2893
        %2908 = vmatpush.bf16.msra.mxu0 %v2892
        %2909 = vmatmul.bf16.gmra.mxu0 %v2899
        %v2910 = vpop.f32.mrf.mxu0
        %v2911 = vadd.f32 %v2877, %v2910
        %v2912 = vpop.f32.mrf.mxu0
        %2913 = vdwg.mxu0
        %s2914 = scalar_lea.vmem [#allocation12], 48
        %v2915 = vld [vmem:[%s2914] sm:$0xf]
        %v2916 = vld [vmem:[%s2914 + $0x4] sm:$0xf]
        %v2917 = vld [vmem:[%s2914 + $0x8] sm:$0xf]
        %v2918 = vld [vmem:[%s2914 + $0xc] sm:$0xf]
        %v2919 = vld [vmem:[%s2914 + $0x10] sm:$0xf]
        %v2920 = vld [vmem:[%s2914 + $0x14] sm:$0xf]
        %2921 = vrot.lane.b32.xlu0 %v2828, 96
        %v2922 = vpop.permute.xlu0 %2921
        %v2929 = vunpack.c.l.b16 %v2915
        %v2930 = vunpack.c.l.b16 %v2916
        %v2931 = vunpack.c.l.b16 %v2917
        %v2932 = vunpack.c.l.b16 %v2918
        %v2933 = vunpack.c.l.b16 %v2919
        %v2934 = vunpack.c.l.b16 %v2920
        %v2935 = vpack.c.b16 %v2930, %v2929
        %v2936 = vpack.c.b16 %v2932, %v2931
        %v2937 = vpack.c.b16 %v2934, %v2933
        %v2942 = vsel %vm2863, %v2922, 0
        %2944 = vmatpush.bf16.msra.mxu0 0
        %2945 = vmatpush.bf16.msra.mxu0 0
        %2946 = vmatpush.bf16.msra.mxu0 0
        %2947 = vmatpush.bf16.msra.mxu0 0
        %2948 = vmatpush.bf16.msra.mxu0 0
        %2949 = vmatpush.bf16.msra.mxu0 %v2937
        %2950 = vmatpush.bf16.msra.mxu0 %v2936
        %2951 = vmatpush.bf16.msra.mxu0 %v2935
        %2952 = vmatmul.bf16.gmra.mxu0 %v2942
        %v2953 = vpop.f32.mrf.mxu0
        %v2954 = vadd.f32 0.0, %v2953
        %v2955 = vpop.f32.mrf.mxu0
        %2956 = vdwg.mxu0
        %v2957 = vadd.f32 %v2911, %v2954
        %v2958 = vld [vmem:[#allocation7 + $0x1] sm:$0x7]
        %v2959 = vpack.c.bf16 %v2958, %v2958
        %s2960 = scalar_lea.vmem [#allocation12], 72
        %v2961 = vld [vmem:[%s2960] sm:$0xf]
        %v2962 = vld [vmem:[%s2960 + $0x4] sm:$0xf]
        %v2963 = vld [vmem:[%s2960 + $0x8] sm:$0xf]
        %v2964 = vld [vmem:[%s2960 + $0xc] sm:$0xf]
        %v2965 = vld [vmem:[%s2960 + $0x10] sm:$0xf]
        %v2966 = vld [vmem:[%s2960 + $0x14] sm:$0xf]
        %v2973 = vunpack.c.l.b16 %v2961
        %v2974 = vunpack.c.l.b16 %v2962
        %v2975 = vunpack.c.l.b16 %v2963
        %v2976 = vunpack.c.l.b16 %v2964
        %v2977 = vunpack.c.l.b16 %v2965
        %v2978 = vunpack.c.l.b16 %v2966
        %v2979 = vpack.c.b16 %v2974, %v2973
        %v2980 = vpack.c.b16 %v2976, %v2975
        %v2981 = vpack.c.b16 %v2978, %v2977
        %v2986 = vsel %vm2863, %v2959, 0
        %2988 = vmatpush.bf16.msra.mxu0 0
        %2989 = vmatpush.bf16.msra.mxu0 0
        %2990 = vmatpush.bf16.msra.mxu0 0
        %2991 = vmatpush.bf16.msra.mxu0 0
        %2992 = vmatpush.bf16.msra.mxu0 0
        %2993 = vmatpush.bf16.msra.mxu0 %v2981
        %2994 = vmatpush.bf16.msra.mxu0 %v2980
        %2995 = vmatpush.bf16.msra.mxu0 %v2979
        %2996 = vmatmul.bf16.gmra.mxu0 %v2986
        %v2997 = vpop.f32.mrf.mxu0
        %v2998 = vadd.f32 0.0, %v2997
        %v2999 = vpop.f32.mrf.mxu0
        %3000 = vdwg.mxu0
        %v3001 = vadd.f32 %v2957, %v2998
        %s3002 = scalar_lea.vmem [#allocation12], 96
        %v3003 = vld [vmem:[%s3002] sm:$0xf]
        %v3004 = vld [vmem:[%s3002 + $0x4] sm:$0xf]
        %v3005 = vld [vmem:[%s3002 + $0x8] sm:$0xf]
        %v3006 = vld [vmem:[%s3002 + $0xc] sm:$0xf]
        %v3007 = vld [vmem:[%s3002 + $0x10] sm:$0xf]
        %v3008 = vld [vmem:[%s3002 + $0x14] sm:$0xf]
        %3010 = vrot.lane.b32.xlu0 %v2959, 112
        %v3011 = vpop.permute.xlu0 %3010
        %v3018 = vunpack.c.l.b16 %v3003
        %v3019 = vunpack.c.l.b16 %v3004
        %v3020 = vunpack.c.l.b16 %v3005
        %v3021 = vunpack.c.l.b16 %v3006
        %v3022 = vunpack.c.l.b16 %v3007
        %v3023 = vunpack.c.l.b16 %v3008
        %v3024 = vpack.c.b16 %v3019, %v3018
        %v3025 = vpack.c.b16 %v3021, %v3020
        %v3026 = vpack.c.b16 %v3023, %v3022
        %v3031 = vsel %vm2863, %v3011, 0
        %3033 = vmatpush.bf16.msra.mxu0 0
        %3034 = vmatpush.bf16.msra.mxu0 0
        %3035 = vmatpush.bf16.msra.mxu0 0
        %3036 = vmatpush.bf16.msra.mxu0 0
        %3037 = vmatpush.bf16.msra.mxu0 0
        %3038 = vmatpush.bf16.msra.mxu0 %v3026
        %3039 = vmatpush.bf16.msra.mxu0 %v3025
        %3040 = vmatpush.bf16.msra.mxu0 %v3024
        %3041 = vmatmul.bf16.gmra.mxu0 %v3031
        %v3042 = vpop.f32.mrf.mxu0
        %v3043 = vadd.f32 0.0, %v3042
        %v3044 = vpop.f32.mrf.mxu0
        %3045 = vdwg.mxu0
        %v3046 = vadd.f32 %v3001, %v3043
        %s3047 = scalar_lea.vmem [#allocation12], 120
        %v3048 = vld [vmem:[%s3047] sm:$0xf]
        %v3049 = vld [vmem:[%s3047 + $0x4] sm:$0xf]
        %v3050 = vld [vmem:[%s3047 + $0x8] sm:$0xf]
        %v3051 = vld [vmem:[%s3047 + $0xc] sm:$0xf]
        %v3052 = vld [vmem:[%s3047 + $0x10] sm:$0xf]
        %v3053 = vld [vmem:[%s3047 + $0x14] sm:$0xf]
        %3054 = vrot.lane.b32.xlu0 %v2959, 96
        %v3055 = vpop.permute.xlu0 %3054
        %v3062 = vunpack.c.l.b16 %v3048
        %v3063 = vunpack.c.l.b16 %v3049
        %v3064 = vunpack.c.l.b16 %v3050
        %v3065 = vunpack.c.l.b16 %v3051
        %v3066 = vunpack.c.l.b16 %v3052
        %v3067 = vunpack.c.l.b16 %v3053
        %v3068 = vpack.c.b16 %v3063, %v3062
        %v3069 = vpack.c.b16 %v3065, %v3064
        %v3070 = vpack.c.b16 %v3067, %v3066
        %v3075 = vsel %vm2863, %v3055, 0
        %3077 = vmatpush.bf16.msra.mxu0 0
        %3078 = vmatpush.bf16.msra.mxu0 0
        %3079 = vmatpush.bf16.msra.mxu0 0
        %3080 = vmatpush.bf16.msra.mxu0 0
        %3081 = vmatpush.bf16.msra.mxu0 0
        %3082 = vmatpush.bf16.msra.mxu0 %v3070
        %3083 = vmatpush.bf16.msra.mxu0 %v3069
        %3084 = vmatpush.bf16.msra.mxu0 %v3068
        %3085 = vmatmul.bf16.gmra.mxu0 %v3075
        %v3086 = vpop.f32.mrf.mxu0
        %v3087 = vadd.f32 0.0, %v3086
        %v3088 = vpop.f32.mrf.mxu0
        %3089 = vdwg.mxu0
        %v3090 = vadd.f32 %v3046, %v3087
        %v3091 = vld [vmem:[#allocation7 + $0x2] sm:$0x7]
        %v3092 = vpack.c.bf16 %v3091, %v3091
        %s3093 = scalar_lea.vmem [#allocation12], 144
        %v3094 = vld [vmem:[%s3093] sm:$0xf]
        %v3095 = vld [vmem:[%s3093 + $0x4] sm:$0xf]
        %v3096 = vld [vmem:[%s3093 + $0x8] sm:$0xf]
        %v3097 = vld [vmem:[%s3093 + $0xc] sm:$0xf]
        %v3098 = vld [vmem:[%s3093 + $0x10] sm:$0xf]
        %v3099 = vld [vmem:[%s3093 + $0x14] sm:$0xf]
        %v3106 = vunpack.c.l.b16 %v3094
        %v3107 = vunpack.c.l.b16 %v3095
        %v3108 = vunpack.c.l.b16 %v3096
        %v3109 = vunpack.c.l.b16 %v3097
        %v3110 = vunpack.c.l.b16 %v3098
        %v3111 = vunpack.c.l.b16 %v3099
        %v3112 = vpack.c.b16 %v3107, %v3106
        %v3113 = vpack.c.b16 %v3109, %v3108
        %v3114 = vpack.c.b16 %v3111, %v3110
        %v3119 = vsel %vm2863, %v3092, 0
        %3121 = vmatpush.bf16.msra.mxu0 0
        %3122 = vmatpush.bf16.msra.mxu0 0
        %3123 = vmatpush.bf16.msra.mxu0 0
        %3124 = vmatpush.bf16.msra.mxu0 0
        %3125 = vmatpush.bf16.msra.mxu0 0
        %3126 = vmatpush.bf16.msra.mxu0 %v3114
        %3127 = vmatpush.bf16.msra.mxu0 %v3113
        %3128 = vmatpush.bf16.msra.mxu0 %v3112
        %3129 = vmatmul.bf16.gmra.mxu0 %v3119
        %v3130 = vpop.f32.mrf.mxu0
        %v3131 = vadd.f32 0.0, %v3130
        %v3132 = vpop.f32.mrf.mxu0
        %3133 = vdwg.mxu0
        %v3134 = vadd.f32 %v3090, %v3131
        %s3135 = scalar_lea.vmem [#allocation12], 168
        %v3136 = vld [vmem:[%s3135] sm:$0xf]
        %v3137 = vld [vmem:[%s3135 + $0x4] sm:$0xf]
        %v3138 = vld [vmem:[%s3135 + $0x8] sm:$0xf]
        %v3139 = vld [vmem:[%s3135 + $0xc] sm:$0xf]
        %v3140 = vld [vmem:[%s3135 + $0x10] sm:$0xf]
        %v3141 = vld [vmem:[%s3135 + $0x14] sm:$0xf]
        %3143 = vrot.lane.b32.xlu0 %v3092, 112
        %v3144 = vpop.permute.xlu0 %3143
        %v3151 = vunpack.c.l.b16 %v3136
        %v3152 = vunpack.c.l.b16 %v3137
        %v3153 = vunpack.c.l.b16 %v3138
        %v3154 = vunpack.c.l.b16 %v3139
        %v3155 = vunpack.c.l.b16 %v3140
        %v3156 = vunpack.c.l.b16 %v3141
        %v3157 = vpack.c.b16 %v3152, %v3151
        %v3158 = vpack.c.b16 %v3154, %v3153
        %v3159 = vpack.c.b16 %v3156, %v3155
        %v3164 = vsel %vm2863, %v3144, 0
        %3166 = vmatpush.bf16.msra.mxu0 0
        %3167 = vmatpush.bf16.msra.mxu0 0
        %3168 = vmatpush.bf16.msra.mxu0 0
        %3169 = vmatpush.bf16.msra.mxu0 0
        %3170 = vmatpush.bf16.msra.mxu0 0
        %3171 = vmatpush.bf16.msra.mxu0 %v3159
        %3172 = vmatpush.bf16.msra.mxu0 %v3158
        %3173 = vmatpush.bf16.msra.mxu0 %v3157
        %3174 = vmatmul.bf16.gmra.mxu0 %v3164
        %v3175 = vpop.f32.mrf.mxu0
        %v3176 = vadd.f32 0.0, %v3175
        %v3177 = vpop.f32.mrf.mxu0
        %3178 = vdwg.mxu0
        %v3179 = vadd.f32 %v3134, %v3176
        %s3180 = scalar_lea.vmem [#allocation12], 192
        %v3181 = vld [vmem:[%s3180] sm:$0xf]
        %v3182 = vld [vmem:[%s3180 + $0x4] sm:$0xf]
        %v3183 = vld [vmem:[%s3180 + $0x8] sm:$0xf]
        %v3184 = vld [vmem:[%s3180 + $0xc] sm:$0xf]
        %v3185 = vld [vmem:[%s3180 + $0x10] sm:$0xf]
        %v3186 = vld [vmem:[%s3180 + $0x14] sm:$0xf]
        %3187 = vrot.lane.b32.xlu0 %v3092, 96
        %v3188 = vpop.permute.xlu0 %3187
        %v3195 = vunpack.c.l.b16 %v3181
        %v3196 = vunpack.c.l.b16 %v3182
        %v3197 = vunpack.c.l.b16 %v3183
        %v3198 = vunpack.c.l.b16 %v3184
        %v3199 = vunpack.c.l.b16 %v3185
        %v3200 = vunpack.c.l.b16 %v3186
        %v3201 = vpack.c.b16 %v3196, %v3195
        %v3202 = vpack.c.b16 %v3198, %v3197
        %v3203 = vpack.c.b16 %v3200, %v3199
        %v3208 = vsel %vm2863, %v3188, 0
        %3210 = vmatpush.bf16.msra.mxu0 0
        %3211 = vmatpush.bf16.msra.mxu0 0
        %3212 = vmatpush.bf16.msra.mxu0 0
        %3213 = vmatpush.bf16.msra.mxu0 0
        %3214 = vmatpush.bf16.msra.mxu0 0
        %3215 = vmatpush.bf16.msra.mxu0 %v3203
        %3216 = vmatpush.bf16.msra.mxu0 %v3202
        %3217 = vmatpush.bf16.msra.mxu0 %v3201
        %3218 = vmatmul.bf16.gmra.mxu0 %v3208
        %v3219 = vpop.f32.mrf.mxu0
        %v3220 = vadd.f32 0.0, %v3219
        %v3221 = vpop.f32.mrf.mxu0
        %3222 = vdwg.mxu0
        %v3223 = vadd.f32 %v3179, %v3220
        %v3224 = vld [vmem:[%s6] sm:$0x1]
        %v3226 = vperm.slane %v3224, 0
        %v3228 = vadd.f32 %v3223, %v3226
        %v3229 = vmax.f32 %v3228, 0.0
        %v3230 = vpack.c.bf16 %v3229, %v3229
        %v3231 = vld [vmem:[#allocation14] sm:$0xf]
        %v3232 = vld [vmem:[#allocation14 + $0x4] sm:$0xf]
        %v3233 = vld [vmem:[#allocation14 + $0x8] sm:$0xf]
        %v3234 = vld [vmem:[#allocation14 + $0xc] sm:$0xf]
        %v3235 = vld [vmem:[#allocation14 + $0x10] sm:$0xf]
        %v3236 = vld [vmem:[#allocation14 + $0x14] sm:$0xf]
        %v3237 = vld [vmem:[#allocation14 + $0x18] sm:$0xf]
        %v3238 = vld [vmem:[#allocation14 + $0x1c] sm:$0xf]
        %v3239 = vld [vmem:[#allocation14 + $0x20] sm:$0xf]
        %v3240 = vld [vmem:[#allocation14 + $0x24] sm:$0xf]
        %v3241 = vld [vmem:[#allocation14 + $0x28] sm:$0xf]
        %v3242 = vld [vmem:[#allocation14 + $0x2c] sm:$0xf]
        %v3243 = vld [vmem:[%s8] sm:$0x1]
        %v3245 = vperm.slane %v3243, 0
        %v3259 = vunpack.c.l.b16 %v3231
        %v3260 = vunpack.c.l.b16 %v3232
        %v3261 = vunpack.c.l.b16 %v3233
        %v3262 = vunpack.c.l.b16 %v3234
        %v3263 = vunpack.c.l.b16 %v3235
        %v3264 = vunpack.c.l.b16 %v3236
        %v3265 = vunpack.c.l.b16 %v3237
        %v3266 = vunpack.c.l.b16 %v3238
        %v3267 = vunpack.c.l.b16 %v3239
        %v3268 = vunpack.c.l.b16 %v3240
        %v3269 = vunpack.c.l.b16 %v3241
        %v3270 = vunpack.c.l.b16 %v3242
        %v3271 = vpack.c.b16 %v3260, %v3259
        %v3272 = vpack.c.b16 %v3262, %v3261
        %v3273 = vpack.c.b16 %v3264, %v3263
        %v3274 = vpack.c.b16 %v3266, %v3265
        %v3275 = vpack.c.b16 %v3268, %v3267
        %v3276 = vpack.c.b16 %v3270, %v3269
        %vm3283 = vcmask 785408
        %v3285 = vsel %vm3283, %v3230, 0
        %3287 = vmatpush.bf16.msra.mxu0 0
        %3288 = vmatpush.bf16.msra.mxu0 0
        %3289 = vmatpush.bf16.msra.mxu0 %v3276
        %3290 = vmatpush.bf16.msra.mxu0 %v3275
        %3291 = vmatpush.bf16.msra.mxu0 %v3274
        %3292 = vmatpush.bf16.msra.mxu0 %v3273
        %3293 = vmatpush.bf16.msra.mxu0 %v3272
        %3294 = vmatpush.bf16.msra.mxu0 %v3271
        %3295 = vmatmul.bf16.gmra.mxu0 %v3285
        %v3296 = vpop.f32.mrf.mxu0
        %v3297 = vadd.f32 %v3245, %v3296
        %v3298 = vpop.f32.mrf.mxu0
        %3299 = vdwg.mxu0
        %vm3300 = vcmask 778240
        %3301 = vst.msk [vmem:[#allocation8] sm:$0x1] %vm3300, %v3297
        %vm3302 = vcmask 779265
        %3303 = vst.msk [vmem:[#allocation8 + $0x1] sm:$0x2] %vm3302, %v3297
        %vm3304 = vcmask 780290
        %3305 = vst.msk [vmem:[#allocation8 + $0x2] sm:$0x4] %vm3304, %v3297
        %s3306 = scalar_lea.vmem [#allocation14], 48
        %v3307 = vld [vmem:[%s3306] sm:$0xf]
        %v3308 = vld [vmem:[%s3306 + $0x4] sm:$0xf]
        %v3309 = vld [vmem:[%s3306 + $0x8] sm:$0xf]
        %v3310 = vld [vmem:[%s3306 + $0xc] sm:$0xf]
        %v3311 = vld [vmem:[%s3306 + $0x10] sm:$0xf]
        %v3312 = vld [vmem:[%s3306 + $0x14] sm:$0xf]
        %v3313 = vld [vmem:[%s3306 + $0x18] sm:$0xf]
        %v3314 = vld [vmem:[%s3306 + $0x1c] sm:$0xf]
        %v3315 = vld [vmem:[%s3306 + $0x20] sm:$0xf]
        %v3316 = vld [vmem:[%s3306 + $0x24] sm:$0xf]
        %v3317 = vld [vmem:[%s3306 + $0x28] sm:$0xf]
        %v3318 = vld [vmem:[%s3306 + $0x2c] sm:$0xf]
        %v3319 = vld [vmem:[%s8] sm:$0x1]
        %v3321 = vperm.slane %v3319, 0
        %v3335 = vunpack.c.l.b16 %v3307
        %v3336 = vunpack.c.l.b16 %v3308
        %v3337 = vunpack.c.l.b16 %v3309
        %v3338 = vunpack.c.l.b16 %v3310
        %v3339 = vunpack.c.l.b16 %v3311
        %v3340 = vunpack.c.l.b16 %v3312
        %v3341 = vunpack.c.l.b16 %v3313
        %v3342 = vunpack.c.l.b16 %v3314
        %v3343 = vunpack.c.l.b16 %v3315
        %v3344 = vunpack.c.l.b16 %v3316
        %v3345 = vunpack.c.l.b16 %v3317
        %v3346 = vunpack.c.l.b16 %v3318
        %v3347 = vpack.c.b16 %v3336, %v3335
        %v3348 = vpack.c.b16 %v3338, %v3337
        %v3349 = vpack.c.b16 %v3340, %v3339
        %v3350 = vpack.c.b16 %v3342, %v3341
        %v3351 = vpack.c.b16 %v3344, %v3343
        %v3352 = vpack.c.b16 %v3346, %v3345
        %3359 = vmatpush.bf16.msra.mxu0 0
        %3360 = vmatpush.bf16.msra.mxu0 0
        %3361 = vmatpush.bf16.msra.mxu0 %v3352
        %3362 = vmatpush.bf16.msra.mxu0 %v3351
        %3363 = vmatpush.bf16.msra.mxu0 %v3350
        %3364 = vmatpush.bf16.msra.mxu0 %v3349
        %3365 = vmatpush.bf16.msra.mxu0 %v3348
        %3366 = vmatpush.bf16.msra.mxu0 %v3347
        %3367 = vmatmul.bf16.gmra.mxu0 %v3285
        %v3368 = vpop.f32.mrf.mxu0
        %v3369 = vadd.f32 %v3321, %v3368
        %v3370 = vpop.f32.mrf.mxu0
        %3371 = vdwg.mxu0
        %3372 = vst.msk [vmem:[#allocation8 + $0x1] sm:$0x1] %vm3300, %v3369
        %3373 = vst.msk [vmem:[#allocation8 + $0x2] sm:$0x2] %vm3302, %v3369
        %3374 = vst.msk [vmem:[#allocation8 + $0x3] sm:$0x4] %vm3304, %v3369
        %v3375 = vld [vmem:[#allocation8] sm:$0xf]
        %v3376 = vpack.c.bf16 %v3375, %v3375
        %v3377 = vld [vmem:[#allocation15] sm:$0xf]
        %v3378 = vld [vmem:[#allocation15 + $0x4] sm:$0xf]
        %v3379 = vld [vmem:[#allocation15 + $0x8] sm:$0xf]
        %v3380 = vld [vmem:[#allocation15 + $0xc] sm:$0xf]
        %v3381 = vld [vmem:[#allocation15 + $0x10] sm:$0xf]
        %v3382 = vld [vmem:[#allocation15 + $0x14] sm:$0xf]
        %v3383 = vld [vmem:[#allocation15 + $0x18] sm:$0xf]
        %v3384 = vld [vmem:[#allocation15 + $0x1c] sm:$0xf]
        %v3385 = vld [vmem:[#allocation5] sm:$0x3c]
        %v3386 = vpack.c.bf16 %v3385, %v3385
        %v3387 = vld [vmem:[#allocation17] sm:$0xf]
        %v3388 = vld [vmem:[#allocation17 + $0x4] sm:$0xf]
        %v3389 = vld [vmem:[#allocation17 + $0x8] sm:$0xf]
        %v3390 = vld [vmem:[#allocation17 + $0xc] sm:$0xf]
        %v3391 = vld [vmem:[#allocation17 + $0x10] sm:$0xf]
        %v3392 = vld [vmem:[#allocation17 + $0x14] sm:$0xf]
        %v3393 = vld [vmem:[#allocation17 + $0x18] sm:$0xf]
        %v3394 = vld [vmem:[#allocation17 + $0x1c] sm:$0xf]
        %v3396 = vrot.slane %v3386, 1
        %3397 = vrot.lane.b32.xlu0 %v3396, 96
        %v3398 = vpop.permute.xlu0 %3397
        %v3407 = vunpack.c.l.b16 %v3387
        %v3408 = vunpack.c.l.b16 %v3388
        %v3409 = vunpack.c.l.b16 %v3389
        %v3410 = vunpack.c.l.b16 %v3390
        %v3411 = vunpack.c.l.b16 %v3391
        %v3412 = vunpack.c.l.b16 %v3392
        %v3413 = vunpack.c.l.b16 %v3393
        %v3414 = vunpack.c.l.b16 %v3394
        %v3415 = vpack.c.b16 %v3408, %v3407
        %v3416 = vpack.c.b16 %v3410, %v3409
        %v3417 = vpack.c.b16 %v3412, %v3411
        %v3418 = vpack.c.b16 %v3414, %v3413
        %v3424 = vsel %vm1447, %v3398, 0
        %3426 = vmatpush.bf16.msra.mxu0 0
        %3427 = vmatpush.bf16.msra.mxu0 0
        %3428 = vmatpush.bf16.msra.mxu0 0
        %3429 = vmatpush.bf16.msra.mxu0 0
        %3430 = vmatpush.bf16.msra.mxu0 %v3418
        %3431 = vmatpush.bf16.msra.mxu0 %v3417
        %3432 = vmatpush.bf16.msra.mxu0 %v3416
        %3433 = vmatpush.bf16.msra.mxu0 %v3415
        %3434 = vmatmul.bf16.gmra.mxu0 %v3424
        %v3435 = vpop.f32.mrf.mxu0
        %v3436 = vadd.f32 0.0, %v3435
        %v3437 = vpop.f32.mrf.mxu0
        %3438 = vdwg.mxu0
        %v3447 = vunpack.c.l.b16 %v3377
        %v3448 = vunpack.c.l.b16 %v3378
        %v3449 = vunpack.c.l.b16 %v3379
        %v3450 = vunpack.c.l.b16 %v3380
        %v3451 = vunpack.c.l.b16 %v3381
        %v3452 = vunpack.c.l.b16 %v3382
        %v3453 = vunpack.c.l.b16 %v3383
        %v3454 = vunpack.c.l.b16 %v3384
        %v3455 = vpack.c.b16 %v3448, %v3447
        %v3456 = vpack.c.b16 %v3450, %v3449
        %v3457 = vpack.c.b16 %v3452, %v3451
        %v3458 = vpack.c.b16 %v3454, %v3453
        %v3464 = vsel %vm1447, %v3376, 0
        %3466 = vmatpush.bf16.msra.mxu0 0
        %3467 = vmatpush.bf16.msra.mxu0 0
        %3468 = vmatpush.bf16.msra.mxu0 0
        %3469 = vmatpush.bf16.msra.mxu0 0
        %3470 = vmatpush.bf16.msra.mxu0 %v3458
        %3471 = vmatpush.bf16.msra.mxu0 %v3457
        %3472 = vmatpush.bf16.msra.mxu0 %v3456
        %3473 = vmatpush.bf16.msra.mxu0 %v3455
        %3474 = vmatmul.bf16.gmra.mxu0 %v3464
        %v3475 = vpop.f32.mrf.mxu0
        %v3476 = vadd.f32 %v3436, %v3475
        %v3477 = vpop.f32.mrf.mxu0
        %3478 = vdwg.mxu0
        %s3479 = scalar_lea.vmem [#allocation15], 32
        %v3480 = vld [vmem:[%s3479] sm:$0xf]
        %v3481 = vld [vmem:[%s3479 + $0x4] sm:$0xf]
        %v3482 = vld [vmem:[%s3479 + $0x8] sm:$0xf]
        %v3483 = vld [vmem:[%s3479 + $0xc] sm:$0xf]
        %v3484 = vld [vmem:[%s3479 + $0x10] sm:$0xf]
        %v3485 = vld [vmem:[%s3479 + $0x14] sm:$0xf]
        %v3486 = vld [vmem:[%s3479 + $0x18] sm:$0xf]
        %v3487 = vld [vmem:[%s3479 + $0x1c] sm:$0xf]
        %3489 = vrot.lane.b32.xlu0 %v3376, 112
        %v3490 = vpop.permute.xlu0 %3489
        %v3499 = vunpack.c.l.b16 %v3480
        %v3500 = vunpack.c.l.b16 %v3481
        %v3501 = vunpack.c.l.b16 %v3482
        %v3502 = vunpack.c.l.b16 %v3483
        %v3503 = vunpack.c.l.b16 %v3484
        %v3504 = vunpack.c.l.b16 %v3485
        %v3505 = vunpack.c.l.b16 %v3486
        %v3506 = vunpack.c.l.b16 %v3487
        %v3507 = vpack.c.b16 %v3500, %v3499
        %v3508 = vpack.c.b16 %v3502, %v3501
        %v3509 = vpack.c.b16 %v3504, %v3503
        %v3510 = vpack.c.b16 %v3506, %v3505
        %v3516 = vsel %vm1447, %v3490, 0
        %3518 = vmatpush.bf16.msra.mxu0 0
        %3519 = vmatpush.bf16.msra.mxu0 0
        %3520 = vmatpush.bf16.msra.mxu0 0
        %3521 = vmatpush.bf16.msra.mxu0 0
        %3522 = vmatpush.bf16.msra.mxu0 %v3510
        %3523 = vmatpush.bf16.msra.mxu0 %v3509
        %3524 = vmatpush.bf16.msra.mxu0 %v3508
        %3525 = vmatpush.bf16.msra.mxu0 %v3507
        %3526 = vmatmul.bf16.gmra.mxu0 %v3516
        %v3527 = vpop.f32.mrf.mxu0
        %v3528 = vadd.f32 0.0, %v3527
        %v3529 = vpop.f32.mrf.mxu0
        %3530 = vdwg.mxu0
        %v3531 = vadd.f32 %v3476, %v3528
        %s3532 = scalar_lea.vmem [#allocation17], 32
        %v3533 = vld [vmem:[%s3532] sm:$0xf]
        %v3534 = vld [vmem:[%s3532 + $0x4] sm:$0xf]
        %v3535 = vld [vmem:[%s3532 + $0x8] sm:$0xf]
        %v3536 = vld [vmem:[%s3532 + $0xc] sm:$0xf]
        %v3537 = vld [vmem:[%s3532 + $0x10] sm:$0xf]
        %v3538 = vld [vmem:[%s3532 + $0x14] sm:$0xf]
        %v3539 = vld [vmem:[%s3532 + $0x18] sm:$0xf]
        %v3540 = vld [vmem:[%s3532 + $0x1c] sm:$0xf]
        %3541 = vrot.lane.b32.xlu0 %v3396, 80
        %v3542 = vpop.permute.xlu0 %3541
        %v3551 = vunpack.c.l.b16 %v3533
        %v3552 = vunpack.c.l.b16 %v3534
        %v3553 = vunpack.c.l.b16 %v3535
        %v3554 = vunpack.c.l.b16 %v3536
        %v3555 = vunpack.c.l.b16 %v3537
        %v3556 = vunpack.c.l.b16 %v3538
        %v3557 = vunpack.c.l.b16 %v3539
        %v3558 = vunpack.c.l.b16 %v3540
        %v3559 = vpack.c.b16 %v3552, %v3551
        %v3560 = vpack.c.b16 %v3554, %v3553
        %v3561 = vpack.c.b16 %v3556, %v3555
        %v3562 = vpack.c.b16 %v3558, %v3557
        %v3568 = vsel %vm1447, %v3542, 0
        %3570 = vmatpush.bf16.msra.mxu0 0
        %3571 = vmatpush.bf16.msra.mxu0 0
        %3572 = vmatpush.bf16.msra.mxu0 0
        %3573 = vmatpush.bf16.msra.mxu0 0
        %3574 = vmatpush.bf16.msra.mxu0 %v3562
        %3575 = vmatpush.bf16.msra.mxu0 %v3561
        %3576 = vmatpush.bf16.msra.mxu0 %v3560
        %3577 = vmatpush.bf16.msra.mxu0 %v3559
        %3578 = vmatmul.bf16.gmra.mxu0 %v3568
        %v3579 = vpop.f32.mrf.mxu0
        %v3580 = vadd.f32 0.0, %v3579
        %v3581 = vpop.f32.mrf.mxu0
        %3582 = vdwg.mxu0
        %v3583 = vadd.f32 %v3531, %v3580
        %s3584 = scalar_lea.vmem [#allocation15], 64
        %v3585 = vld [vmem:[%s3584] sm:$0xf]
        %v3586 = vld [vmem:[%s3584 + $0x4] sm:$0xf]
        %v3587 = vld [vmem:[%s3584 + $0x8] sm:$0xf]
        %v3588 = vld [vmem:[%s3584 + $0xc] sm:$0xf]
        %v3589 = vld [vmem:[%s3584 + $0x10] sm:$0xf]
        %v3590 = vld [vmem:[%s3584 + $0x14] sm:$0xf]
        %v3591 = vld [vmem:[%s3584 + $0x18] sm:$0xf]
        %v3592 = vld [vmem:[%s3584 + $0x1c] sm:$0xf]
        %3593 = vrot.lane.b32.xlu0 %v3376, 96
        %v3594 = vpop.permute.xlu0 %3593
        %v3603 = vunpack.c.l.b16 %v3585
        %v3604 = vunpack.c.l.b16 %v3586
        %v3605 = vunpack.c.l.b16 %v3587
        %v3606 = vunpack.c.l.b16 %v3588
        %v3607 = vunpack.c.l.b16 %v3589
        %v3608 = vunpack.c.l.b16 %v3590
        %v3609 = vunpack.c.l.b16 %v3591
        %v3610 = vunpack.c.l.b16 %v3592
        %v3611 = vpack.c.b16 %v3604, %v3603
        %v3612 = vpack.c.b16 %v3606, %v3605
        %v3613 = vpack.c.b16 %v3608, %v3607
        %v3614 = vpack.c.b16 %v3610, %v3609
        %v3620 = vsel %vm1447, %v3594, 0
        %3622 = vmatpush.bf16.msra.mxu0 0
        %3623 = vmatpush.bf16.msra.mxu0 0
        %3624 = vmatpush.bf16.msra.mxu0 0
        %3625 = vmatpush.bf16.msra.mxu0 0
        %3626 = vmatpush.bf16.msra.mxu0 %v3614
        %3627 = vmatpush.bf16.msra.mxu0 %v3613
        %3628 = vmatpush.bf16.msra.mxu0 %v3612
        %3629 = vmatpush.bf16.msra.mxu0 %v3611
        %3630 = vmatmul.bf16.gmra.mxu0 %v3620
        %v3631 = vpop.f32.mrf.mxu0
        %v3632 = vadd.f32 0.0, %v3631
        %v3633 = vpop.f32.mrf.mxu0
        %3634 = vdwg.mxu0
        %v3635 = vadd.f32 %v3583, %v3632
        %s3636 = scalar_lea.vmem [#allocation17], 64
        %v3637 = vld [vmem:[%s3636] sm:$0xf]
        %v3638 = vld [vmem:[%s3636 + $0x4] sm:$0xf]
        %v3639 = vld [vmem:[%s3636 + $0x8] sm:$0xf]
        %v3640 = vld [vmem:[%s3636 + $0xc] sm:$0xf]
        %v3641 = vld [vmem:[%s3636 + $0x10] sm:$0xf]
        %v3642 = vld [vmem:[%s3636 + $0x14] sm:$0xf]
        %v3643 = vld [vmem:[%s3636 + $0x18] sm:$0xf]
        %v3644 = vld [vmem:[%s3636 + $0x1c] sm:$0xf]
        %3645 = vrot.lane.b32.xlu0 %v3396, 64
        %v3646 = vpop.permute.xlu0 %3645
        %v3655 = vunpack.c.l.b16 %v3637
        %v3656 = vunpack.c.l.b16 %v3638
        %v3657 = vunpack.c.l.b16 %v3639
        %v3658 = vunpack.c.l.b16 %v3640
        %v3659 = vunpack.c.l.b16 %v3641
        %v3660 = vunpack.c.l.b16 %v3642
        %v3661 = vunpack.c.l.b16 %v3643
        %v3662 = vunpack.c.l.b16 %v3644
        %v3663 = vpack.c.b16 %v3656, %v3655
        %v3664 = vpack.c.b16 %v3658, %v3657
        %v3665 = vpack.c.b16 %v3660, %v3659
        %v3666 = vpack.c.b16 %v3662, %v3661
        %v3672 = vsel %vm1447, %v3646, 0
        %3674 = vmatpush.bf16.msra.mxu0 0
        %3675 = vmatpush.bf16.msra.mxu0 0
        %3676 = vmatpush.bf16.msra.mxu0 0
        %3677 = vmatpush.bf16.msra.mxu0 0
        %3678 = vmatpush.bf16.msra.mxu0 %v3666
        %3679 = vmatpush.bf16.msra.mxu0 %v3665
        %3680 = vmatpush.bf16.msra.mxu0 %v3664
        %3681 = vmatpush.bf16.msra.mxu0 %v3663
        %3682 = vmatmul.bf16.gmra.mxu0 %v3672
        %v3683 = vpop.f32.mrf.mxu0
        %v3684 = vadd.f32 0.0, %v3683
        %v3685 = vpop.f32.mrf.mxu0
        %3686 = vdwg.mxu0
        %v3687 = vadd.f32 %v3635, %v3684
        %v3688 = vld [vmem:[#allocation8 + $0x1] sm:$0xf]
        %v3689 = vpack.c.bf16 %v3688, %v3688
        %s3690 = scalar_lea.vmem [#allocation15], 96
        %v3691 = vld [vmem:[%s3690] sm:$0xf]
        %v3692 = vld [vmem:[%s3690 + $0x4] sm:$0xf]
        %v3693 = vld [vmem:[%s3690 + $0x8] sm:$0xf]
        %v3694 = vld [vmem:[%s3690 + $0xc] sm:$0xf]
        %v3695 = vld [vmem:[%s3690 + $0x10] sm:$0xf]
        %v3696 = vld [vmem:[%s3690 + $0x14] sm:$0xf]
        %v3697 = vld [vmem:[%s3690 + $0x18] sm:$0xf]
        %v3698 = vld [vmem:[%s3690 + $0x1c] sm:$0xf]
        %v3707 = vunpack.c.l.b16 %v3691
        %v3708 = vunpack.c.l.b16 %v3692
        %v3709 = vunpack.c.l.b16 %v3693
        %v3710 = vunpack.c.l.b16 %v3694
        %v3711 = vunpack.c.l.b16 %v3695
        %v3712 = vunpack.c.l.b16 %v3696
        %v3713 = vunpack.c.l.b16 %v3697
        %v3714 = vunpack.c.l.b16 %v3698
        %v3715 = vpack.c.b16 %v3708, %v3707
        %v3716 = vpack.c.b16 %v3710, %v3709
        %v3717 = vpack.c.b16 %v3712, %v3711
        %v3718 = vpack.c.b16 %v3714, %v3713
        %v3724 = vsel %vm1447, %v3689, 0
        %3726 = vmatpush.bf16.msra.mxu0 0
        %3727 = vmatpush.bf16.msra.mxu0 0
        %3728 = vmatpush.bf16.msra.mxu0 0
        %3729 = vmatpush.bf16.msra.mxu0 0
        %3730 = vmatpush.bf16.msra.mxu0 %v3718
        %3731 = vmatpush.bf16.msra.mxu0 %v3717
        %3732 = vmatpush.bf16.msra.mxu0 %v3716
        %3733 = vmatpush.bf16.msra.mxu0 %v3715
        %3734 = vmatmul.bf16.gmra.mxu0 %v3724
        %v3735 = vpop.f32.mrf.mxu0
        %v3736 = vadd.f32 0.0, %v3735
        %v3737 = vpop.f32.mrf.mxu0
        %3738 = vdwg.mxu0
        %v3739 = vadd.f32 %v3687, %v3736
        %v3740 = vld [vmem:[#allocation5] sm:$0x78]
        %v3741 = vpack.c.bf16 %v3740, %v3740
        %s3742 = scalar_lea.vmem [#allocation17], 96
        %v3743 = vld [vmem:[%s3742] sm:$0xf]
        %v3744 = vld [vmem:[%s3742 + $0x4] sm:$0xf]
        %v3745 = vld [vmem:[%s3742 + $0x8] sm:$0xf]
        %v3746 = vld [vmem:[%s3742 + $0xc] sm:$0xf]
        %v3747 = vld [vmem:[%s3742 + $0x10] sm:$0xf]
        %v3748 = vld [vmem:[%s3742 + $0x14] sm:$0xf]
        %v3749 = vld [vmem:[%s3742 + $0x18] sm:$0xf]
        %v3750 = vld [vmem:[%s3742 + $0x1c] sm:$0xf]
        %v3752 = vshrl.u32 %v3741, 16
        %v3754 = vrot.slane %v3752, 1
        %v3755 = vshll.u32 %v3741, 16
        %v3757 = vrot.slane %v3755, 2
        %v3758 = vor.u32 %v3754, %v3757
        %3759 = vrot.lane.b32.xlu0 %v3758, 96
        %v3760 = vpop.permute.xlu0 %3759
        %v3769 = vunpack.c.l.b16 %v3743
        %v3770 = vunpack.c.l.b16 %v3744
        %v3771 = vunpack.c.l.b16 %v3745
        %v3772 = vunpack.c.l.b16 %v3746
        %v3773 = vunpack.c.l.b16 %v3747
        %v3774 = vunpack.c.l.b16 %v3748
        %v3775 = vunpack.c.l.b16 %v3749
        %v3776 = vunpack.c.l.b16 %v3750
        %v3777 = vpack.c.b16 %v3770, %v3769
        %v3778 = vpack.c.b16 %v3772, %v3771
        %v3779 = vpack.c.b16 %v3774, %v3773
        %v3780 = vpack.c.b16 %v3776, %v3775
        %v3786 = vsel %vm1447, %v3760, 0
        %3788 = vmatpush.bf16.msra.mxu0 0
        %3789 = vmatpush.bf16.msra.mxu0 0
        %3790 = vmatpush.bf16.msra.mxu0 0
        %3791 = vmatpush.bf16.msra.mxu0 0
        %3792 = vmatpush.bf16.msra.mxu0 %v3780
        %3793 = vmatpush.bf16.msra.mxu0 %v3779
        %3794 = vmatpush.bf16.msra.mxu0 %v3778
        %3795 = vmatpush.bf16.msra.mxu0 %v3777
        %3796 = vmatmul.bf16.gmra.mxu0 %v3786
        %v3797 = vpop.f32.mrf.mxu0
        %v3798 = vadd.f32 0.0, %v3797
        %v3799 = vpop.f32.mrf.mxu0
        %3800 = vdwg.mxu0
        %v3801 = vadd.f32 %v3739, %v3798
        %s3802 = scalar_lea.vmem [#allocation15], 128
        %v3803 = vld [vmem:[%s3802] sm:$0xf]
        %v3804 = vld [vmem:[%s3802 + $0x4] sm:$0xf]
        %v3805 = vld [vmem:[%s3802 + $0x8] sm:$0xf]
        %v3806 = vld [vmem:[%s3802 + $0xc] sm:$0xf]
        %v3807 = vld [vmem:[%s3802 + $0x10] sm:$0xf]
        %v3808 = vld [vmem:[%s3802 + $0x14] sm:$0xf]
        %v3809 = vld [vmem:[%s3802 + $0x18] sm:$0xf]
        %v3810 = vld [vmem:[%s3802 + $0x1c] sm:$0xf]
        %3812 = vrot.lane.b32.xlu0 %v3689, 112
        %v3813 = vpop.permute.xlu0 %3812
        %v3822 = vunpack.c.l.b16 %v3803
        %v3823 = vunpack.c.l.b16 %v3804
        %v3824 = vunpack.c.l.b16 %v3805
        %v3825 = vunpack.c.l.b16 %v3806
        %v3826 = vunpack.c.l.b16 %v3807
        %v3827 = vunpack.c.l.b16 %v3808
        %v3828 = vunpack.c.l.b16 %v3809
        %v3829 = vunpack.c.l.b16 %v3810
        %v3830 = vpack.c.b16 %v3823, %v3822
        %v3831 = vpack.c.b16 %v3825, %v3824
        %v3832 = vpack.c.b16 %v3827, %v3826
        %v3833 = vpack.c.b16 %v3829, %v3828
        %v3839 = vsel %vm1447, %v3813, 0
        %3841 = vmatpush.bf16.msra.mxu0 0
        %3842 = vmatpush.bf16.msra.mxu0 0
        %3843 = vmatpush.bf16.msra.mxu0 0
        %3844 = vmatpush.bf16.msra.mxu0 0
        %3845 = vmatpush.bf16.msra.mxu0 %v3833
        %3846 = vmatpush.bf16.msra.mxu0 %v3832
        %3847 = vmatpush.bf16.msra.mxu0 %v3831
        %3848 = vmatpush.bf16.msra.mxu0 %v3830
        %3849 = vmatmul.bf16.gmra.mxu0 %v3839
        %v3850 = vpop.f32.mrf.mxu0
        %v3851 = vadd.f32 0.0, %v3850
        %v3852 = vpop.f32.mrf.mxu0
        %3853 = vdwg.mxu0
        %v3854 = vadd.f32 %v3801, %v3851
        %s3855 = scalar_lea.vmem [#allocation17], 128
        %v3856 = vld [vmem:[%s3855] sm:$0xf]
        %v3857 = vld [vmem:[%s3855 + $0x4] sm:$0xf]
        %v3858 = vld [vmem:[%s3855 + $0x8] sm:$0xf]
        %v3859 = vld [vmem:[%s3855 + $0xc] sm:$0xf]
        %v3860 = vld [vmem:[%s3855 + $0x10] sm:$0xf]
        %v3861 = vld [vmem:[%s3855 + $0x14] sm:$0xf]
        %v3862 = vld [vmem:[%s3855 + $0x18] sm:$0xf]
        %v3863 = vld [vmem:[%s3855 + $0x1c] sm:$0xf]
        %3864 = vrot.lane.b32.xlu0 %v3758, 80
        %v3865 = vpop.permute.xlu0 %3864
        %v3874 = vunpack.c.l.b16 %v3856
        %v3875 = vunpack.c.l.b16 %v3857
        %v3876 = vunpack.c.l.b16 %v3858
        %v3877 = vunpack.c.l.b16 %v3859
        %v3878 = vunpack.c.l.b16 %v3860
        %v3879 = vunpack.c.l.b16 %v3861
        %v3880 = vunpack.c.l.b16 %v3862
        %v3881 = vunpack.c.l.b16 %v3863
        %v3882 = vpack.c.b16 %v3875, %v3874
        %v3883 = vpack.c.b16 %v3877, %v3876
        %v3884 = vpack.c.b16 %v3879, %v3878
        %v3885 = vpack.c.b16 %v3881, %v3880
        %v3891 = vsel %vm1447, %v3865, 0
        %3893 = vmatpush.bf16.msra.mxu0 0
        %3894 = vmatpush.bf16.msra.mxu0 0
        %3895 = vmatpush.bf16.msra.mxu0 0
        %3896 = vmatpush.bf16.msra.mxu0 0
        %3897 = vmatpush.bf16.msra.mxu0 %v3885
        %3898 = vmatpush.bf16.msra.mxu0 %v3884
        %3899 = vmatpush.bf16.msra.mxu0 %v3883
        %3900 = vmatpush.bf16.msra.mxu0 %v3882
        %3901 = vmatmul.bf16.gmra.mxu0 %v3891
        %v3902 = vpop.f32.mrf.mxu0
        %v3903 = vadd.f32 0.0, %v3902
        %v3904 = vpop.f32.mrf.mxu0
        %3905 = vdwg.mxu0
        %v3906 = vadd.f32 %v3854, %v3903
        %s3907 = scalar_lea.vmem [#allocation15], 160
        %v3908 = vld [vmem:[%s3907] sm:$0xf]
        %v3909 = vld [vmem:[%s3907 + $0x4] sm:$0xf]
        %v3910 = vld [vmem:[%s3907 + $0x8] sm:$0xf]
        %v3911 = vld [vmem:[%s3907 + $0xc] sm:$0xf]
        %v3912 = vld [vmem:[%s3907 + $0x10] sm:$0xf]
        %v3913 = vld [vmem:[%s3907 + $0x14] sm:$0xf]
        %v3914 = vld [vmem:[%s3907 + $0x18] sm:$0xf]
        %v3915 = vld [vmem:[%s3907 + $0x1c] sm:$0xf]
        %3916 = vrot.lane.b32.xlu0 %v3689, 96
        %v3917 = vpop.permute.xlu0 %3916
        %v3926 = vunpack.c.l.b16 %v3908
        %v3927 = vunpack.c.l.b16 %v3909
        %v3928 = vunpack.c.l.b16 %v3910
        %v3929 = vunpack.c.l.b16 %v3911
        %v3930 = vunpack.c.l.b16 %v3912
        %v3931 = vunpack.c.l.b16 %v3913
        %v3932 = vunpack.c.l.b16 %v3914
        %v3933 = vunpack.c.l.b16 %v3915
        %v3934 = vpack.c.b16 %v3927, %v3926
        %v3935 = vpack.c.b16 %v3929, %v3928
        %v3936 = vpack.c.b16 %v3931, %v3930
        %v3937 = vpack.c.b16 %v3933, %v3932
        %v3943 = vsel %vm1447, %v3917, 0
        %3945 = vmatpush.bf16.msra.mxu0 0
        %3946 = vmatpush.bf16.msra.mxu0 0
        %3947 = vmatpush.bf16.msra.mxu0 0
        %3948 = vmatpush.bf16.msra.mxu0 0
        %3949 = vmatpush.bf16.msra.mxu0 %v3937
        %3950 = vmatpush.bf16.msra.mxu0 %v3936
        %3951 = vmatpush.bf16.msra.mxu0 %v3935
        %3952 = vmatpush.bf16.msra.mxu0 %v3934
        %3953 = vmatmul.bf16.gmra.mxu0 %v3943
        %v3954 = vpop.f32.mrf.mxu0
        %v3955 = vadd.f32 0.0, %v3954
        %v3956 = vpop.f32.mrf.mxu0
        %3957 = vdwg.mxu0
        %v3958 = vadd.f32 %v3906, %v3955
        %s3959 = scalar_lea.vmem [#allocation17], 160
        %v3960 = vld [vmem:[%s3959] sm:$0xf]
        %v3961 = vld [vmem:[%s3959 + $0x4] sm:$0xf]
        %v3962 = vld [vmem:[%s3959 + $0x8] sm:$0xf]
        %v3963 = vld [vmem:[%s3959 + $0xc] sm:$0xf]
        %v3964 = vld [vmem:[%s3959 + $0x10] sm:$0xf]
        %v3965 = vld [vmem:[%s3959 + $0x14] sm:$0xf]
        %v3966 = vld [vmem:[%s3959 + $0x18] sm:$0xf]
        %v3967 = vld [vmem:[%s3959 + $0x1c] sm:$0xf]
        %3968 = vrot.lane.b32.xlu0 %v3758, 64
        %v3969 = vpop.permute.xlu0 %3968
        %v3978 = vunpack.c.l.b16 %v3960
        %v3979 = vunpack.c.l.b16 %v3961
        %v3980 = vunpack.c.l.b16 %v3962
        %v3981 = vunpack.c.l.b16 %v3963
        %v3982 = vunpack.c.l.b16 %v3964
        %v3983 = vunpack.c.l.b16 %v3965
        %v3984 = vunpack.c.l.b16 %v3966
        %v3985 = vunpack.c.l.b16 %v3967
        %v3986 = vpack.c.b16 %v3979, %v3978
        %v3987 = vpack.c.b16 %v3981, %v3980
        %v3988 = vpack.c.b16 %v3983, %v3982
        %v3989 = vpack.c.b16 %v3985, %v3984
        %v3995 = vsel %vm1447, %v3969, 0
        %3997 = vmatpush.bf16.msra.mxu0 0
        %3998 = vmatpush.bf16.msra.mxu0 0
        %3999 = vmatpush.bf16.msra.mxu0 0
        %4000 = vmatpush.bf16.msra.mxu0 0
        %4001 = vmatpush.bf16.msra.mxu0 %v3989
        %4002 = vmatpush.bf16.msra.mxu0 %v3988
        %4003 = vmatpush.bf16.msra.mxu0 %v3987
        %4004 = vmatpush.bf16.msra.mxu0 %v3986
        %4005 = vmatmul.bf16.gmra.mxu0 %v3995
        %v4006 = vpop.f32.mrf.mxu0
        %v4007 = vadd.f32 0.0, %v4006
        %v4008 = vpop.f32.mrf.mxu0
        %4009 = vdwg.mxu0
        %v4010 = vadd.f32 %v3958, %v4007
        %v4011 = vld [vmem:[#allocation8 + $0x2] sm:$0xf]
        %v4012 = vpack.c.bf16 %v4011, %v4011
        %s4013 = scalar_lea.vmem [#allocation15], 192
        %v4014 = vld [vmem:[%s4013] sm:$0xf]
        %v4015 = vld [vmem:[%s4013 + $0x4] sm:$0xf]
        %v4016 = vld [vmem:[%s4013 + $0x8] sm:$0xf]
        %v4017 = vld [vmem:[%s4013 + $0xc] sm:$0xf]
        %v4018 = vld [vmem:[%s4013 + $0x10] sm:$0xf]
        %v4019 = vld [vmem:[%s4013 + $0x14] sm:$0xf]
        %v4020 = vld [vmem:[%s4013 + $0x18] sm:$0xf]
        %v4021 = vld [vmem:[%s4013 + $0x1c] sm:$0xf]
        %v4030 = vunpack.c.l.b16 %v4014
        %v4031 = vunpack.c.l.b16 %v4015
        %v4032 = vunpack.c.l.b16 %v4016
        %v4033 = vunpack.c.l.b16 %v4017
        %v4034 = vunpack.c.l.b16 %v4018
        %v4035 = vunpack.c.l.b16 %v4019
        %v4036 = vunpack.c.l.b16 %v4020
        %v4037 = vunpack.c.l.b16 %v4021
        %v4038 = vpack.c.b16 %v4031, %v4030
        %v4039 = vpack.c.b16 %v4033, %v4032
        %v4040 = vpack.c.b16 %v4035, %v4034
        %v4041 = vpack.c.b16 %v4037, %v4036
        %v4047 = vsel %vm1447, %v4012, 0
        %4049 = vmatpush.bf16.msra.mxu0 0
        %4050 = vmatpush.bf16.msra.mxu0 0
        %4051 = vmatpush.bf16.msra.mxu0 0
        %4052 = vmatpush.bf16.msra.mxu0 0
        %4053 = vmatpush.bf16.msra.mxu0 %v4041
        %4054 = vmatpush.bf16.msra.mxu0 %v4040
        %4055 = vmatpush.bf16.msra.mxu0 %v4039
        %4056 = vmatpush.bf16.msra.mxu0 %v4038
        %4057 = vmatmul.bf16.gmra.mxu0 %v4047
        %v4058 = vpop.f32.mrf.mxu0
        %v4059 = vadd.f32 0.0, %v4058
        %v4060 = vpop.f32.mrf.mxu0
        %4061 = vdwg.mxu0
        %v4062 = vadd.f32 %v4010, %v4059
        %v4063 = vld [vmem:[#allocation5] sm:$0xf0]
        %v4064 = vpack.c.bf16 %v4063, %v4063
        %s4065 = scalar_lea.vmem [#allocation17], 192
        %v4066 = vld [vmem:[%s4065] sm:$0xf]
        %v4067 = vld [vmem:[%s4065 + $0x4] sm:$0xf]
        %v4068 = vld [vmem:[%s4065 + $0x8] sm:$0xf]
        %v4069 = vld [vmem:[%s4065 + $0xc] sm:$0xf]
        %v4070 = vld [vmem:[%s4065 + $0x10] sm:$0xf]
        %v4071 = vld [vmem:[%s4065 + $0x14] sm:$0xf]
        %v4072 = vld [vmem:[%s4065 + $0x18] sm:$0xf]
        %v4073 = vld [vmem:[%s4065 + $0x1c] sm:$0xf]
        %v4075 = vrot.slane %v4064, 2
        %4076 = vrot.lane.b32.xlu0 %v4075, 96
        %v4077 = vpop.permute.xlu0 %4076
        %v4086 = vunpack.c.l.b16 %v4066
        %v4087 = vunpack.c.l.b16 %v4067
        %v4088 = vunpack.c.l.b16 %v4068
        %v4089 = vunpack.c.l.b16 %v4069
        %v4090 = vunpack.c.l.b16 %v4070
        %v4091 = vunpack.c.l.b16 %v4071
        %v4092 = vunpack.c.l.b16 %v4072
        %v4093 = vunpack.c.l.b16 %v4073
        %v4094 = vpack.c.b16 %v4087, %v4086
        %v4095 = vpack.c.b16 %v4089, %v4088
        %v4096 = vpack.c.b16 %v4091, %v4090
        %v4097 = vpack.c.b16 %v4093, %v4092
        %v4103 = vsel %vm1447, %v4077, 0
        %4105 = vmatpush.bf16.msra.mxu0 0
        %4106 = vmatpush.bf16.msra.mxu0 0
        %4107 = vmatpush.bf16.msra.mxu0 0
        %4108 = vmatpush.bf16.msra.mxu0 0
        %4109 = vmatpush.bf16.msra.mxu0 %v4097
        %4110 = vmatpush.bf16.msra.mxu0 %v4096
        %4111 = vmatpush.bf16.msra.mxu0 %v4095
        %4112 = vmatpush.bf16.msra.mxu0 %v4094
        %4113 = vmatmul.bf16.gmra.mxu0 %v4103
        %v4114 = vpop.f32.mrf.mxu0
        %v4115 = vadd.f32 0.0, %v4114
        %v4116 = vpop.f32.mrf.mxu0
        %4117 = vdwg.mxu0
        %v4118 = vadd.f32 %v4062, %v4115
        %s4119 = scalar_lea.vmem [#allocation15], 224
        %v4120 = vld [vmem:[%s4119] sm:$0xf]
        %v4121 = vld [vmem:[%s4119 + $0x4] sm:$0xf]
        %v4122 = vld [vmem:[%s4119 + $0x8] sm:$0xf]
        %v4123 = vld [vmem:[%s4119 + $0xc] sm:$0xf]
        %v4124 = vld [vmem:[%s4119 + $0x10] sm:$0xf]
        %v4125 = vld [vmem:[%s4119 + $0x14] sm:$0xf]
        %v4126 = vld [vmem:[%s4119 + $0x18] sm:$0xf]
        %v4127 = vld [vmem:[%s4119 + $0x1c] sm:$0xf]
        %4129 = vrot.lane.b32.xlu0 %v4012, 112
        %v4130 = vpop.permute.xlu0 %4129
        %v4139 = vunpack.c.l.b16 %v4120
        %v4140 = vunpack.c.l.b16 %v4121
        %v4141 = vunpack.c.l.b16 %v4122
        %v4142 = vunpack.c.l.b16 %v4123
        %v4143 = vunpack.c.l.b16 %v4124
        %v4144 = vunpack.c.l.b16 %v4125
        %v4145 = vunpack.c.l.b16 %v4126
        %v4146 = vunpack.c.l.b16 %v4127
        %v4147 = vpack.c.b16 %v4140, %v4139
        %v4148 = vpack.c.b16 %v4142, %v4141
        %v4149 = vpack.c.b16 %v4144, %v4143
        %v4150 = vpack.c.b16 %v4146, %v4145
        %v4156 = vsel %vm1447, %v4130, 0
        %4158 = vmatpush.bf16.msra.mxu0 0
        %4159 = vmatpush.bf16.msra.mxu0 0
        %4160 = vmatpush.bf16.msra.mxu0 0
        %4161 = vmatpush.bf16.msra.mxu0 0
        %4162 = vmatpush.bf16.msra.mxu0 %v4150
        %4163 = vmatpush.bf16.msra.mxu0 %v4149
        %4164 = vmatpush.bf16.msra.mxu0 %v4148
        %4165 = vmatpush.bf16.msra.mxu0 %v4147
        %4166 = vmatmul.bf16.gmra.mxu0 %v4156
        %v4167 = vpop.f32.mrf.mxu0
        %v4168 = vadd.f32 0.0, %v4167
        %v4169 = vpop.f32.mrf.mxu0
        %4170 = vdwg.mxu0
        %v4171 = vadd.f32 %v4118, %v4168
        %s4172 = scalar_lea.vmem [#allocation17], 224
        %v4173 = vld [vmem:[%s4172] sm:$0xf]
        %v4174 = vld [vmem:[%s4172 + $0x4] sm:$0xf]
        %v4175 = vld [vmem:[%s4172 + $0x8] sm:$0xf]
        %v4176 = vld [vmem:[%s4172 + $0xc] sm:$0xf]
        %v4177 = vld [vmem:[%s4172 + $0x10] sm:$0xf]
        %v4178 = vld [vmem:[%s4172 + $0x14] sm:$0xf]
        %v4179 = vld [vmem:[%s4172 + $0x18] sm:$0xf]
        %v4180 = vld [vmem:[%s4172 + $0x1c] sm:$0xf]
        %4181 = vrot.lane.b32.xlu0 %v4075, 80
        %v4182 = vpop.permute.xlu0 %4181
        %v4191 = vunpack.c.l.b16 %v4173
        %v4192 = vunpack.c.l.b16 %v4174
        %v4193 = vunpack.c.l.b16 %v4175
        %v4194 = vunpack.c.l.b16 %v4176
        %v4195 = vunpack.c.l.b16 %v4177
        %v4196 = vunpack.c.l.b16 %v4178
        %v4197 = vunpack.c.l.b16 %v4179
        %v4198 = vunpack.c.l.b16 %v4180
        %v4199 = vpack.c.b16 %v4192, %v4191
        %v4200 = vpack.c.b16 %v4194, %v4193
        %v4201 = vpack.c.b16 %v4196, %v4195
        %v4202 = vpack.c.b16 %v4198, %v4197
        %v4208 = vsel %vm1447, %v4182, 0
        %4210 = vmatpush.bf16.msra.mxu0 0
        %4211 = vmatpush.bf16.msra.mxu0 0
        %4212 = vmatpush.bf16.msra.mxu0 0
        %4213 = vmatpush.bf16.msra.mxu0 0
        %4214 = vmatpush.bf16.msra.mxu0 %v4202
        %4215 = vmatpush.bf16.msra.mxu0 %v4201
        %4216 = vmatpush.bf16.msra.mxu0 %v4200
        %4217 = vmatpush.bf16.msra.mxu0 %v4199
        %4218 = vmatmul.bf16.gmra.mxu0 %v4208
        %v4219 = vpop.f32.mrf.mxu0
        %v4220 = vadd.f32 0.0, %v4219
        %v4221 = vpop.f32.mrf.mxu0
        %4222 = vdwg.mxu0
        %v4223 = vadd.f32 %v4171, %v4220
        %s4224 = scalar_lea.vmem [#allocation15], 256
        %v4225 = vld [vmem:[%s4224] sm:$0xf]
        %v4226 = vld [vmem:[%s4224 + $0x4] sm:$0xf]
        %v4227 = vld [vmem:[%s4224 + $0x8] sm:$0xf]
        %v4228 = vld [vmem:[%s4224 + $0xc] sm:$0xf]
        %v4229 = vld [vmem:[%s4224 + $0x10] sm:$0xf]
        %v4230 = vld [vmem:[%s4224 + $0x14] sm:$0xf]
        %v4231 = vld [vmem:[%s4224 + $0x18] sm:$0xf]
        %v4232 = vld [vmem:[%s4224 + $0x1c] sm:$0xf]
        %4233 = vrot.lane.b32.xlu0 %v4012, 96
        %v4234 = vpop.permute.xlu0 %4233
        %v4243 = vunpack.c.l.b16 %v4225
        %v4244 = vunpack.c.l.b16 %v4226
        %v4245 = vunpack.c.l.b16 %v4227
        %v4246 = vunpack.c.l.b16 %v4228
        %v4247 = vunpack.c.l.b16 %v4229
        %v4248 = vunpack.c.l.b16 %v4230
        %v4249 = vunpack.c.l.b16 %v4231
        %v4250 = vunpack.c.l.b16 %v4232
        %v4251 = vpack.c.b16 %v4244, %v4243
        %v4252 = vpack.c.b16 %v4246, %v4245
        %v4253 = vpack.c.b16 %v4248, %v4247
        %v4254 = vpack.c.b16 %v4250, %v4249
        %v4260 = vsel %vm1447, %v4234, 0
        %4262 = vmatpush.bf16.msra.mxu0 0
        %4263 = vmatpush.bf16.msra.mxu0 0
        %4264 = vmatpush.bf16.msra.mxu0 0
        %4265 = vmatpush.bf16.msra.mxu0 0
        %4266 = vmatpush.bf16.msra.mxu0 %v4254
        %4267 = vmatpush.bf16.msra.mxu0 %v4253
        %4268 = vmatpush.bf16.msra.mxu0 %v4252
        %4269 = vmatpush.bf16.msra.mxu0 %v4251
        %4270 = vmatmul.bf16.gmra.mxu0 %v4260
        %v4271 = vpop.f32.mrf.mxu0
        %v4272 = vadd.f32 0.0, %v4271
        %v4273 = vpop.f32.mrf.mxu0
        %4274 = vdwg.mxu0
        %v4275 = vadd.f32 %v4223, %v4272
        %s4276 = scalar_lea.vmem [#allocation17], 256
        %v4277 = vld [vmem:[%s4276] sm:$0xf]
        %v4278 = vld [vmem:[%s4276 + $0x4] sm:$0xf]
        %v4279 = vld [vmem:[%s4276 + $0x8] sm:$0xf]
        %v4280 = vld [vmem:[%s4276 + $0xc] sm:$0xf]
        %v4281 = vld [vmem:[%s4276 + $0x10] sm:$0xf]
        %v4282 = vld [vmem:[%s4276 + $0x14] sm:$0xf]
        %v4283 = vld [vmem:[%s4276 + $0x18] sm:$0xf]
        %v4284 = vld [vmem:[%s4276 + $0x1c] sm:$0xf]
        %4285 = vrot.lane.b32.xlu0 %v4075, 64
        %v4286 = vpop.permute.xlu0 %4285
        %v4295 = vunpack.c.l.b16 %v4277
        %v4296 = vunpack.c.l.b16 %v4278
        %v4297 = vunpack.c.l.b16 %v4279
        %v4298 = vunpack.c.l.b16 %v4280
        %v4299 = vunpack.c.l.b16 %v4281
        %v4300 = vunpack.c.l.b16 %v4282
        %v4301 = vunpack.c.l.b16 %v4283
        %v4302 = vunpack.c.l.b16 %v4284
        %v4303 = vpack.c.b16 %v4296, %v4295
        %v4304 = vpack.c.b16 %v4298, %v4297
        %v4305 = vpack.c.b16 %v4300, %v4299
        %v4306 = vpack.c.b16 %v4302, %v4301
        %v4312 = vsel %vm1447, %v4286, 0
        %4314 = vmatpush.bf16.msra.mxu0 0
        %4315 = vmatpush.bf16.msra.mxu0 0
        %4316 = vmatpush.bf16.msra.mxu0 0
        %4317 = vmatpush.bf16.msra.mxu0 0
        %4318 = vmatpush.bf16.msra.mxu0 %v4306
        %4319 = vmatpush.bf16.msra.mxu0 %v4305
        %4320 = vmatpush.bf16.msra.mxu0 %v4304
        %4321 = vmatpush.bf16.msra.mxu0 %v4303
        %4322 = vmatmul.bf16.gmra.mxu0 %v4312
        %v4323 = vpop.f32.mrf.mxu0
        %v4324 = vadd.f32 0.0, %v4323
        %v4325 = vpop.f32.mrf.mxu0
        %4326 = vdwg.mxu0
        %v4327 = vadd.f32 %v4275, %v4324
        %v4328 = vld [vmem:[%s11] sm:$0x1]
        %v4330 = vperm.slane %v4328, 0
        %v4332 = vadd.f32 %v4327, %v4330
        %v4333 = vmax.f32 %v4332, 0.0
        %v4334 = vpack.c.bf16 %v4333, %v4333
        %v4335 = vld [vmem:[#allocation18] sm:$0xf]
        %v4336 = vld [vmem:[#allocation18 + $0x4] sm:$0xf]
        %v4337 = vld [vmem:[#allocation18 + $0x8] sm:$0xf]
        %v4338 = vld [vmem:[#allocation18 + $0xc] sm:$0xf]
        %v4339 = vld [vmem:[#allocation18 + $0x10] sm:$0xf]
        %v4340 = vld [vmem:[#allocation18 + $0x14] sm:$0xf]
        %v4341 = vld [vmem:[#allocation18 + $0x18] sm:$0xf]
        %v4342 = vld [vmem:[#allocation18 + $0x1c] sm:$0xf]
        %v4343 = vld [vmem:[%s13] sm:$0x1]
        %v4345 = vperm.slane %v4343, 0
        %v4355 = vunpack.c.l.b16 %v4335
        %v4356 = vunpack.c.l.b16 %v4336
        %v4357 = vunpack.c.l.b16 %v4337
        %v4358 = vunpack.c.l.b16 %v4338
        %v4359 = vunpack.c.l.b16 %v4339
        %v4360 = vunpack.c.l.b16 %v4340
        %v4361 = vunpack.c.l.b16 %v4341
        %v4362 = vunpack.c.l.b16 %v4342
        %v4363 = vpack.c.b16 %v4356, %v4355
        %v4364 = vpack.c.b16 %v4358, %v4357
        %v4365 = vpack.c.b16 %v4360, %v4359
        %v4366 = vpack.c.b16 %v4362, %v4361
        %v4372 = vsel %vm1447, %v4334, 0
        %4374 = vmatpush.bf16.msra.mxu0 0
        %4375 = vmatpush.bf16.msra.mxu0 0
        %4376 = vmatpush.bf16.msra.mxu0 0
        %4377 = vmatpush.bf16.msra.mxu0 0
        %4378 = vmatpush.bf16.msra.mxu0 %v4366
        %4379 = vmatpush.bf16.msra.mxu0 %v4365
        %4380 = vmatpush.bf16.msra.mxu0 %v4364
        %4381 = vmatpush.bf16.msra.mxu0 %v4363
        %4382 = vmatmul.bf16.gmra.mxu0 %v4372
        %v4383 = vpop.f32.mrf.mxu0
        %v4384 = vadd.f32 %v4345, %v4383
        %v4385 = vpop.f32.mrf.mxu0
        %4386 = vdwg.mxu0
        %vm4387 = vcmask 516096
        %4388 = vst.msk [vmem:[#allocation9] sm:$0x1] %vm4387, %v4384
        %vm4389 = vcmask 517121
        %4390 = vst.msk [vmem:[#allocation9 + $0x1] sm:$0x2] %vm4389, %v4384
        %vm4391 = vcmask 518146
        %4392 = vst.msk [vmem:[#allocation9 + $0x2] sm:$0x4] %vm4391, %v4384
        %vm4393 = vcmask 519171
        %4394 = vst.msk [vmem:[#allocation9 + $0x3] sm:$0x8] %vm4393, %v4384
        %s4395 = scalar_lea.vmem [#allocation18], 32
        %v4396 = vld [vmem:[%s4395] sm:$0xf]
        %v4397 = vld [vmem:[%s4395 + $0x4] sm:$0xf]
        %v4398 = vld [vmem:[%s4395 + $0x8] sm:$0xf]
        %v4399 = vld [vmem:[%s4395 + $0xc] sm:$0xf]
        %v4400 = vld [vmem:[%s4395 + $0x10] sm:$0xf]
        %v4401 = vld [vmem:[%s4395 + $0x14] sm:$0xf]
        %v4402 = vld [vmem:[%s4395 + $0x18] sm:$0xf]
        %v4403 = vld [vmem:[%s4395 + $0x1c] sm:$0xf]
        %v4404 = vld [vmem:[%s13] sm:$0x1]
        %v4406 = vperm.slane %v4404, 0
        %v4416 = vunpack.c.l.b16 %v4396
        %v4417 = vunpack.c.l.b16 %v4397
        %v4418 = vunpack.c.l.b16 %v4398
        %v4419 = vunpack.c.l.b16 %v4399
        %v4420 = vunpack.c.l.b16 %v4400
        %v4421 = vunpack.c.l.b16 %v4401
        %v4422 = vunpack.c.l.b16 %v4402
        %v4423 = vunpack.c.l.b16 %v4403
        %v4424 = vpack.c.b16 %v4417, %v4416
        %v4425 = vpack.c.b16 %v4419, %v4418
        %v4426 = vpack.c.b16 %v4421, %v4420
        %v4427 = vpack.c.b16 %v4423, %v4422
        %4432 = vmatpush.bf16.msra.mxu0 0
        %4433 = vmatpush.bf16.msra.mxu0 0
        %4434 = vmatpush.bf16.msra.mxu0 0
        %4435 = vmatpush.bf16.msra.mxu0 0
        %4436 = vmatpush.bf16.msra.mxu0 %v4427
        %4437 = vmatpush.bf16.msra.mxu0 %v4426
        %4438 = vmatpush.bf16.msra.mxu0 %v4425
        %4439 = vmatpush.bf16.msra.mxu0 %v4424
        %4440 = vmatmul.bf16.gmra.mxu0 %v4372
        %v4441 = vpop.f32.mrf.mxu0
        %v4442 = vadd.f32 %v4406, %v4441
        %v4443 = vpop.f32.mrf.mxu0
        %4444 = vdwg.mxu0
        %4445 = vst.msk [vmem:[#allocation9 + $0x1] sm:$0x1] %vm4387, %v4442
        %4446 = vst.msk [vmem:[#allocation9 + $0x2] sm:$0x2] %vm4389, %v4442
        %4447 = vst.msk [vmem:[#allocation9 + $0x3] sm:$0x4] %vm4391, %v4442
        %4448 = vst.msk [vmem:[#allocation9 + $0x4] sm:$0x8] %vm4393, %v4442
        %v4449 = vld [vmem:[#allocation9] sm:$0x3f]
        %v4450 = vpack.c.bf16 %v4449, %v4449
        %v4451 = vld [vmem:[#allocation20] sm:$0xf]
        %v4452 = vld [vmem:[#allocation20 + $0x4] sm:$0xf]
        %v4453 = vld [vmem:[#allocation20 + $0x8] sm:$0xf]
        %v4454 = vld [vmem:[#allocation20 + $0xc] sm:$0xf]
        %v4455 = vld [vmem:[#allocation20 + $0x10] sm:$0xf]
        %v4456 = vld [vmem:[#allocation20 + $0x14] sm:$0xf]
        %v4457 = vld [vmem:[#allocation2 + $0x10] sm:$0x3f]
        %v4458 = vpack.c.bf16 %v4457, %v4457
        %v4459 = vld [vmem:[#allocation21] sm:$0xf]
        %v4460 = vld [vmem:[#allocation21 + $0x4] sm:$0xf]
        %v4461 = vld [vmem:[#allocation21 + $0x8] sm:$0xf]
        %v4462 = vld [vmem:[#allocation21 + $0xc] sm:$0xf]
        %v4463 = vld [vmem:[#allocation21 + $0x10] sm:$0xf]
        %v4464 = vld [vmem:[#allocation21 + $0x14] sm:$0xf]
        %4466 = vrot.lane.b32.xlu0 %v4458, 64
        %v4467 = vpop.permute.xlu0 %4466
        %v4474 = vunpack.c.l.b16 %v4459
        %v4475 = vunpack.c.l.b16 %v4460
        %v4476 = vunpack.c.l.b16 %v4461
        %v4477 = vunpack.c.l.b16 %v4462
        %v4478 = vunpack.c.l.b16 %v4463
        %v4479 = vunpack.c.l.b16 %v4464
        %v4480 = vpack.c.b16 %v4475, %v4474
        %v4481 = vpack.c.b16 %v4477, %v4476
        %v4482 = vpack.c.b16 %v4479, %v4478
        %v4487 = vsel %vm2863, %v4467, 0
        %4489 = vmatpush.bf16.msra.mxu0 0
        %4490 = vmatpush.bf16.msra.mxu0 0
        %4491 = vmatpush.bf16.msra.mxu0 0
        %4492 = vmatpush.bf16.msra.mxu0 0
        %4493 = vmatpush.bf16.msra.mxu0 0
        %4494 = vmatpush.bf16.msra.mxu0 %v4482
        %4495 = vmatpush.bf16.msra.mxu0 %v4481
        %4496 = vmatpush.bf16.msra.mxu0 %v4480
        %4497 = vmatmul.bf16.gmra.mxu0 %v4487
        %v4498 = vpop.f32.mrf.mxu0
        %v4499 = vadd.f32 0.0, %v4498
        %v4500 = vpop.f32.mrf.mxu0
        %4501 = vdwg.mxu0
        %v4508 = vunpack.c.l.b16 %v4451
        %v4509 = vunpack.c.l.b16 %v4452
        %v4510 = vunpack.c.l.b16 %v4453
        %v4511 = vunpack.c.l.b16 %v4454
        %v4512 = vunpack.c.l.b16 %v4455
        %v4513 = vunpack.c.l.b16 %v4456
        %v4514 = vpack.c.b16 %v4509, %v4508
        %v4515 = vpack.c.b16 %v4511, %v4510
        %v4516 = vpack.c.b16 %v4513, %v4512
        %v4521 = vsel %vm2863, %v4450, 0
        %4523 = vmatpush.bf16.msra.mxu0 0
        %4524 = vmatpush.bf16.msra.mxu0 0
        %4525 = vmatpush.bf16.msra.mxu0 0
        %4526 = vmatpush.bf16.msra.mxu0 0
        %4527 = vmatpush.bf16.msra.mxu0 0
        %4528 = vmatpush.bf16.msra.mxu0 %v4516
        %4529 = vmatpush.bf16.msra.mxu0 %v4515
        %4530 = vmatpush.bf16.msra.mxu0 %v4514
        %4531 = vmatmul.bf16.gmra.mxu0 %v4521
        %v4532 = vpop.f32.mrf.mxu0
        %v4533 = vadd.f32 %v4499, %v4532
        %v4534 = vpop.f32.mrf.mxu0
        %4535 = vdwg.mxu0
        %s4536 = scalar_lea.vmem [#allocation20], 24
        %v4537 = vld [vmem:[%s4536] sm:$0xf]
        %v4538 = vld [vmem:[%s4536 + $0x4] sm:$0xf]
        %v4539 = vld [vmem:[%s4536 + $0x8] sm:$0xf]
        %v4540 = vld [vmem:[%s4536 + $0xc] sm:$0xf]
        %v4541 = vld [vmem:[%s4536 + $0x10] sm:$0xf]
        %v4542 = vld [vmem:[%s4536 + $0x14] sm:$0xf]
        %4544 = vrot.lane.b32.xlu0 %v4450, 120
        %v4545 = vpop.permute.xlu0 %4544
        %v4552 = vunpack.c.l.b16 %v4537
        %v4553 = vunpack.c.l.b16 %v4538
        %v4554 = vunpack.c.l.b16 %v4539
        %v4555 = vunpack.c.l.b16 %v4540
        %v4556 = vunpack.c.l.b16 %v4541
        %v4557 = vunpack.c.l.b16 %v4542
        %v4558 = vpack.c.b16 %v4553, %v4552
        %v4559 = vpack.c.b16 %v4555, %v4554
        %v4560 = vpack.c.b16 %v4557, %v4556
        %v4565 = vsel %vm2863, %v4545, 0
        %4567 = vmatpush.bf16.msra.mxu0 0
        %4568 = vmatpush.bf16.msra.mxu0 0
        %4569 = vmatpush.bf16.msra.mxu0 0
        %4570 = vmatpush.bf16.msra.mxu0 0
        %4571 = vmatpush.bf16.msra.mxu0 0
        %4572 = vmatpush.bf16.msra.mxu0 %v4560
        %4573 = vmatpush.bf16.msra.mxu0 %v4559
        %4574 = vmatpush.bf16.msra.mxu0 %v4558
        %4575 = vmatmul.bf16.gmra.mxu0 %v4565
        %v4576 = vpop.f32.mrf.mxu0
        %v4577 = vadd.f32 0.0, %v4576
        %v4578 = vpop.f32.mrf.mxu0
        %4579 = vdwg.mxu0
        %v4580 = vadd.f32 %v4533, %v4577
        %s4581 = scalar_lea.vmem [#allocation21], 24
        %v4582 = vld [vmem:[%s4581] sm:$0xf]
        %v4583 = vld [vmem:[%s4581 + $0x4] sm:$0xf]
        %v4584 = vld [vmem:[%s4581 + $0x8] sm:$0xf]
        %v4585 = vld [vmem:[%s4581 + $0xc] sm:$0xf]
        %v4586 = vld [vmem:[%s4581 + $0x10] sm:$0xf]
        %v4587 = vld [vmem:[%s4581 + $0x14] sm:$0xf]
        %4588 = vrot.lane.b32.xlu0 %v4458, 56
        %v4589 = vpop.permute.xlu0 %4588
        %v4596 = vunpack.c.l.b16 %v4582
        %v4597 = vunpack.c.l.b16 %v4583
        %v4598 = vunpack.c.l.b16 %v4584
        %v4599 = vunpack.c.l.b16 %v4585
        %v4600 = vunpack.c.l.b16 %v4586
        %v4601 = vunpack.c.l.b16 %v4587
        %v4602 = vpack.c.b16 %v4597, %v4596
        %v4603 = vpack.c.b16 %v4599, %v4598
        %v4604 = vpack.c.b16 %v4601, %v4600
        %v4609 = vsel %vm2863, %v4589, 0
        %4611 = vmatpush.bf16.msra.mxu0 0
        %4612 = vmatpush.bf16.msra.mxu0 0
        %4613 = vmatpush.bf16.msra.mxu0 0
        %4614 = vmatpush.bf16.msra.mxu0 0
        %4615 = vmatpush.bf16.msra.mxu0 0
        %4616 = vmatpush.bf16.msra.mxu0 %v4604
        %4617 = vmatpush.bf16.msra.mxu0 %v4603
        %4618 = vmatpush.bf16.msra.mxu0 %v4602
        %4619 = vmatmul.bf16.gmra.mxu0 %v4609
        %v4620 = vpop.f32.mrf.mxu0
        %v4621 = vadd.f32 0.0, %v4620
        %v4622 = vpop.f32.mrf.mxu0
        %4623 = vdwg.mxu0
        %v4624 = vadd.f32 %v4580, %v4621
        %s4625 = scalar_lea.vmem [#allocation20], 48
        %v4626 = vld [vmem:[%s4625] sm:$0xf]
        %v4627 = vld [vmem:[%s4625 + $0x4] sm:$0xf]
        %v4628 = vld [vmem:[%s4625 + $0x8] sm:$0xf]
        %v4629 = vld [vmem:[%s4625 + $0xc] sm:$0xf]
        %v4630 = vld [vmem:[%s4625 + $0x10] sm:$0xf]
        %v4631 = vld [vmem:[%s4625 + $0x14] sm:$0xf]
        %4632 = vrot.lane.b32.xlu0 %v4450, 112
        %v4633 = vpop.permute.xlu0 %4632
        %v4640 = vunpack.c.l.b16 %v4626
        %v4641 = vunpack.c.l.b16 %v4627
        %v4642 = vunpack.c.l.b16 %v4628
        %v4643 = vunpack.c.l.b16 %v4629
        %v4644 = vunpack.c.l.b16 %v4630
        %v4645 = vunpack.c.l.b16 %v4631
        %v4646 = vpack.c.b16 %v4641, %v4640
        %v4647 = vpack.c.b16 %v4643, %v4642
        %v4648 = vpack.c.b16 %v4645, %v4644
        %v4653 = vsel %vm2863, %v4633, 0
        %4655 = vmatpush.bf16.msra.mxu0 0
        %4656 = vmatpush.bf16.msra.mxu0 0
        %4657 = vmatpush.bf16.msra.mxu0 0
        %4658 = vmatpush.bf16.msra.mxu0 0
        %4659 = vmatpush.bf16.msra.mxu0 0
        %4660 = vmatpush.bf16.msra.mxu0 %v4648
        %4661 = vmatpush.bf16.msra.mxu0 %v4647
        %4662 = vmatpush.bf16.msra.mxu0 %v4646
        %4663 = vmatmul.bf16.gmra.mxu0 %v4653
        %v4664 = vpop.f32.mrf.mxu0
        %v4665 = vadd.f32 0.0, %v4664
        %v4666 = vpop.f32.mrf.mxu0
        %4667 = vdwg.mxu0
        %v4668 = vadd.f32 %v4624, %v4665
        %s4669 = scalar_lea.vmem [#allocation21], 48
        %v4670 = vld [vmem:[%s4669] sm:$0xf]
        %v4671 = vld [vmem:[%s4669 + $0x4] sm:$0xf]
        %v4672 = vld [vmem:[%s4669 + $0x8] sm:$0xf]
        %v4673 = vld [vmem:[%s4669 + $0xc] sm:$0xf]
        %v4674 = vld [vmem:[%s4669 + $0x10] sm:$0xf]
        %v4675 = vld [vmem:[%s4669 + $0x14] sm:$0xf]
        %4676 = vrot.lane.b32.xlu0 %v4458, 48
        %v4677 = vpop.permute.xlu0 %4676
        %v4684 = vunpack.c.l.b16 %v4670
        %v4685 = vunpack.c.l.b16 %v4671
        %v4686 = vunpack.c.l.b16 %v4672
        %v4687 = vunpack.c.l.b16 %v4673
        %v4688 = vunpack.c.l.b16 %v4674
        %v4689 = vunpack.c.l.b16 %v4675
        %v4690 = vpack.c.b16 %v4685, %v4684
        %v4691 = vpack.c.b16 %v4687, %v4686
        %v4692 = vpack.c.b16 %v4689, %v4688
        %v4697 = vsel %vm2863, %v4677, 0
        %4699 = vmatpush.bf16.msra.mxu0 0
        %4700 = vmatpush.bf16.msra.mxu0 0
        %4701 = vmatpush.bf16.msra.mxu0 0
        %4702 = vmatpush.bf16.msra.mxu0 0
        %4703 = vmatpush.bf16.msra.mxu0 0
        %4704 = vmatpush.bf16.msra.mxu0 %v4692
        %4705 = vmatpush.bf16.msra.mxu0 %v4691
        %4706 = vmatpush.bf16.msra.mxu0 %v4690
        %4707 = vmatmul.bf16.gmra.mxu0 %v4697
        %v4708 = vpop.f32.mrf.mxu0
        %v4709 = vadd.f32 0.0, %v4708
        %v4710 = vpop.f32.mrf.mxu0
        %4711 = vdwg.mxu0
        %v4712 = vadd.f32 %v4668, %v4709
        %v4713 = vld [vmem:[#allocation9 + $0x1] sm:$0x3f]
        %v4714 = vpack.c.bf16 %v4713, %v4713
        %s4715 = scalar_lea.vmem [#allocation20], 72
        %v4716 = vld [vmem:[%s4715] sm:$0xf]
        %v4717 = vld [vmem:[%s4715 + $0x4] sm:$0xf]
        %v4718 = vld [vmem:[%s4715 + $0x8] sm:$0xf]
        %v4719 = vld [vmem:[%s4715 + $0xc] sm:$0xf]
        %v4720 = vld [vmem:[%s4715 + $0x10] sm:$0xf]
        %v4721 = vld [vmem:[%s4715 + $0x14] sm:$0xf]
        %v4728 = vunpack.c.l.b16 %v4716
        %v4729 = vunpack.c.l.b16 %v4717
        %v4730 = vunpack.c.l.b16 %v4718
        %v4731 = vunpack.c.l.b16 %v4719
        %v4732 = vunpack.c.l.b16 %v4720
        %v4733 = vunpack.c.l.b16 %v4721
        %v4734 = vpack.c.b16 %v4729, %v4728
        %v4735 = vpack.c.b16 %v4731, %v4730
        %v4736 = vpack.c.b16 %v4733, %v4732
        %v4741 = vsel %vm2863, %v4714, 0
        %4743 = vmatpush.bf16.msra.mxu0 0
        %4744 = vmatpush.bf16.msra.mxu0 0
        %4745 = vmatpush.bf16.msra.mxu0 0
        %4746 = vmatpush.bf16.msra.mxu0 0
        %4747 = vmatpush.bf16.msra.mxu0 0
        %4748 = vmatpush.bf16.msra.mxu0 %v4736
        %4749 = vmatpush.bf16.msra.mxu0 %v4735
        %4750 = vmatpush.bf16.msra.mxu0 %v4734
        %4751 = vmatmul.bf16.gmra.mxu0 %v4741
        %v4752 = vpop.f32.mrf.mxu0
        %v4753 = vadd.f32 0.0, %v4752
        %v4754 = vpop.f32.mrf.mxu0
        %4755 = vdwg.mxu0
        %v4756 = vadd.f32 %v4712, %v4753
        %v4757 = vld [vmem:[#allocation2 + $0x10] sm:$0x7e]
        %v4758 = vpack.c.bf16 %v4757, %v4757
        %s4759 = scalar_lea.vmem [#allocation21], 72
        %v4760 = vld [vmem:[%s4759] sm:$0xf]
        %v4761 = vld [vmem:[%s4759 + $0x4] sm:$0xf]
        %v4762 = vld [vmem:[%s4759 + $0x8] sm:$0xf]
        %v4763 = vld [vmem:[%s4759 + $0xc] sm:$0xf]
        %v4764 = vld [vmem:[%s4759 + $0x10] sm:$0xf]
        %v4765 = vld [vmem:[%s4759 + $0x14] sm:$0xf]
        %v4767 = vshrl.u32 %v4758, 16
        %v4769 = vshll.u32 %v4758, 16
        %v4771 = vrot.slane %v4769, 1
        %v4772 = vor.u32 %v4767, %v4771
        %4773 = vrot.lane.b32.xlu0 %v4772, 64
        %v4774 = vpop.permute.xlu0 %4773
        %v4781 = vunpack.c.l.b16 %v4760
        %v4782 = vunpack.c.l.b16 %v4761
        %v4783 = vunpack.c.l.b16 %v4762
        %v4784 = vunpack.c.l.b16 %v4763
        %v4785 = vunpack.c.l.b16 %v4764
        %v4786 = vunpack.c.l.b16 %v4765
        %v4787 = vpack.c.b16 %v4782, %v4781
        %v4788 = vpack.c.b16 %v4784, %v4783
        %v4789 = vpack.c.b16 %v4786, %v4785
        %v4794 = vsel %vm2863, %v4774, 0
        %4796 = vmatpush.bf16.msra.mxu0 0
        %4797 = vmatpush.bf16.msra.mxu0 0
        %4798 = vmatpush.bf16.msra.mxu0 0
        %4799 = vmatpush.bf16.msra.mxu0 0
        %4800 = vmatpush.bf16.msra.mxu0 0
        %4801 = vmatpush.bf16.msra.mxu0 %v4789
        %4802 = vmatpush.bf16.msra.mxu0 %v4788
        %4803 = vmatpush.bf16.msra.mxu0 %v4787
        %4804 = vmatmul.bf16.gmra.mxu0 %v4794
        %v4805 = vpop.f32.mrf.mxu0
        %v4806 = vadd.f32 0.0, %v4805
        %v4807 = vpop.f32.mrf.mxu0
        %4808 = vdwg.mxu0
        %v4809 = vadd.f32 %v4756, %v4806
        %s4810 = scalar_lea.vmem [#allocation20], 96
        %v4811 = vld [vmem:[%s4810] sm:$0xf]
        %v4812 = vld [vmem:[%s4810 + $0x4] sm:$0xf]
        %v4813 = vld [vmem:[%s4810 + $0x8] sm:$0xf]
        %v4814 = vld [vmem:[%s4810 + $0xc] sm:$0xf]
        %v4815 = vld [vmem:[%s4810 + $0x10] sm:$0xf]
        %v4816 = vld [vmem:[%s4810 + $0x14] sm:$0xf]
        %4818 = vrot.lane.b32.xlu0 %v4714, 120
        %v4819 = vpop.permute.xlu0 %4818
        %v4826 = vunpack.c.l.b16 %v4811
        %v4827 = vunpack.c.l.b16 %v4812
        %v4828 = vunpack.c.l.b16 %v4813
        %v4829 = vunpack.c.l.b16 %v4814
        %v4830 = vunpack.c.l.b16 %v4815
        %v4831 = vunpack.c.l.b16 %v4816
        %v4832 = vpack.c.b16 %v4827, %v4826
        %v4833 = vpack.c.b16 %v4829, %v4828
        %v4834 = vpack.c.b16 %v4831, %v4830
        %v4839 = vsel %vm2863, %v4819, 0
        %4841 = vmatpush.bf16.msra.mxu0 0
        %4842 = vmatpush.bf16.msra.mxu0 0
        %4843 = vmatpush.bf16.msra.mxu0 0
        %4844 = vmatpush.bf16.msra.mxu0 0
        %4845 = vmatpush.bf16.msra.mxu0 0
        %4846 = vmatpush.bf16.msra.mxu0 %v4834
        %4847 = vmatpush.bf16.msra.mxu0 %v4833
        %4848 = vmatpush.bf16.msra.mxu0 %v4832
        %4849 = vmatmul.bf16.gmra.mxu0 %v4839
        %v4850 = vpop.f32.mrf.mxu0
        %v4851 = vadd.f32 0.0, %v4850
        %v4852 = vpop.f32.mrf.mxu0
        %4853 = vdwg.mxu0
        %v4854 = vadd.f32 %v4809, %v4851
        %s4855 = scalar_lea.vmem [#allocation21], 96
        %v4856 = vld [vmem:[%s4855] sm:$0xf]
        %v4857 = vld [vmem:[%s4855 + $0x4] sm:$0xf]
        %v4858 = vld [vmem:[%s4855 + $0x8] sm:$0xf]
        %v4859 = vld [vmem:[%s4855 + $0xc] sm:$0xf]
        %v4860 = vld [vmem:[%s4855 + $0x10] sm:$0xf]
        %v4861 = vld [vmem:[%s4855 + $0x14] sm:$0xf]
        %4862 = vrot.lane.b32.xlu0 %v4772, 56
        %v4863 = vpop.permute.xlu0 %4862
        %v4870 = vunpack.c.l.b16 %v4856
        %v4871 = vunpack.c.l.b16 %v4857
        %v4872 = vunpack.c.l.b16 %v4858
        %v4873 = vunpack.c.l.b16 %v4859
        %v4874 = vunpack.c.l.b16 %v4860
        %v4875 = vunpack.c.l.b16 %v4861
        %v4876 = vpack.c.b16 %v4871, %v4870
        %v4877 = vpack.c.b16 %v4873, %v4872
        %v4878 = vpack.c.b16 %v4875, %v4874
        %v4883 = vsel %vm2863, %v4863, 0
        %4885 = vmatpush.bf16.msra.mxu0 0
        %4886 = vmatpush.bf16.msra.mxu0 0
        %4887 = vmatpush.bf16.msra.mxu0 0
        %4888 = vmatpush.bf16.msra.mxu0 0
        %4889 = vmatpush.bf16.msra.mxu0 0
        %4890 = vmatpush.bf16.msra.mxu0 %v4878
        %4891 = vmatpush.bf16.msra.mxu0 %v4877
        %4892 = vmatpush.bf16.msra.mxu0 %v4876
        %4893 = vmatmul.bf16.gmra.mxu0 %v4883
        %v4894 = vpop.f32.mrf.mxu0
        %v4895 = vadd.f32 0.0, %v4894
        %v4896 = vpop.f32.mrf.mxu0
        %4897 = vdwg.mxu0
        %v4898 = vadd.f32 %v4854, %v4895
        %s4899 = scalar_lea.vmem [#allocation20], 120
        %v4900 = vld [vmem:[%s4899] sm:$0xf]
        %v4901 = vld [vmem:[%s4899 + $0x4] sm:$0xf]
        %v4902 = vld [vmem:[%s4899 + $0x8] sm:$0xf]
        %v4903 = vld [vmem:[%s4899 + $0xc] sm:$0xf]
        %v4904 = vld [vmem:[%s4899 + $0x10] sm:$0xf]
        %v4905 = vld [vmem:[%s4899 + $0x14] sm:$0xf]
        %4906 = vrot.lane.b32.xlu0 %v4714, 112
        %v4907 = vpop.permute.xlu0 %4906
        %v4914 = vunpack.c.l.b16 %v4900
        %v4915 = vunpack.c.l.b16 %v4901
        %v4916 = vunpack.c.l.b16 %v4902
        %v4917 = vunpack.c.l.b16 %v4903
        %v4918 = vunpack.c.l.b16 %v4904
        %v4919 = vunpack.c.l.b16 %v4905
        %v4920 = vpack.c.b16 %v4915, %v4914
        %v4921 = vpack.c.b16 %v4917, %v4916
        %v4922 = vpack.c.b16 %v4919, %v4918
        %v4927 = vsel %vm2863, %v4907, 0
        %4929 = vmatpush.bf16.msra.mxu0 0
        %4930 = vmatpush.bf16.msra.mxu0 0
        %4931 = vmatpush.bf16.msra.mxu0 0
        %4932 = vmatpush.bf16.msra.mxu0 0
        %4933 = vmatpush.bf16.msra.mxu0 0
        %4934 = vmatpush.bf16.msra.mxu0 %v4922
        %4935 = vmatpush.bf16.msra.mxu0 %v4921
        %4936 = vmatpush.bf16.msra.mxu0 %v4920
        %4937 = vmatmul.bf16.gmra.mxu0 %v4927
        %v4938 = vpop.f32.mrf.mxu0
        %v4939 = vadd.f32 0.0, %v4938
        %v4940 = vpop.f32.mrf.mxu0
        %4941 = vdwg.mxu0
        %v4942 = vadd.f32 %v4898, %v4939
        %s4943 = scalar_lea.vmem [#allocation21], 120
        %v4944 = vld [vmem:[%s4943] sm:$0xf]
        %v4945 = vld [vmem:[%s4943 + $0x4] sm:$0xf]
        %v4946 = vld [vmem:[%s4943 + $0x8] sm:$0xf]
        %v4947 = vld [vmem:[%s4943 + $0xc] sm:$0xf]
        %v4948 = vld [vmem:[%s4943 + $0x10] sm:$0xf]
        %v4949 = vld [vmem:[%s4943 + $0x14] sm:$0xf]
        %4950 = vrot.lane.b32.xlu0 %v4772, 48
        %v4951 = vpop.permute.xlu0 %4950
        %v4958 = vunpack.c.l.b16 %v4944
        %v4959 = vunpack.c.l.b16 %v4945
        %v4960 = vunpack.c.l.b16 %v4946
        %v4961 = vunpack.c.l.b16 %v4947
        %v4962 = vunpack.c.l.b16 %v4948
        %v4963 = vunpack.c.l.b16 %v4949
        %v4964 = vpack.c.b16 %v4959, %v4958
        %v4965 = vpack.c.b16 %v4961, %v4960
        %v4966 = vpack.c.b16 %v4963, %v4962
        %v4971 = vsel %vm2863, %v4951, 0
        %4973 = vmatpush.bf16.msra.mxu0 0
        %4974 = vmatpush.bf16.msra.mxu0 0
        %4975 = vmatpush.bf16.msra.mxu0 0
        %4976 = vmatpush.bf16.msra.mxu0 0
        %4977 = vmatpush.bf16.msra.mxu0 0
        %4978 = vmatpush.bf16.msra.mxu0 %v4966
        %4979 = vmatpush.bf16.msra.mxu0 %v4965
        %4980 = vmatpush.bf16.msra.mxu0 %v4964
        %4981 = vmatmul.bf16.gmra.mxu0 %v4971
        %v4982 = vpop.f32.mrf.mxu0
        %v4983 = vadd.f32 0.0, %v4982
        %v4984 = vpop.f32.mrf.mxu0
        %4985 = vdwg.mxu0
        %v4986 = vadd.f32 %v4942, %v4983
        %v4987 = vld [vmem:[#allocation9 + $0x2] sm:$0x3f]
        %v4988 = vpack.c.bf16 %v4987, %v4987
        %s4989 = scalar_lea.vmem [#allocation20], 144
        %v4990 = vld [vmem:[%s4989] sm:$0xf]
        %v4991 = vld [vmem:[%s4989 + $0x4] sm:$0xf]
        %v4992 = vld [vmem:[%s4989 + $0x8] sm:$0xf]
        %v4993 = vld [vmem:[%s4989 + $0xc] sm:$0xf]
        %v4994 = vld [vmem:[%s4989 + $0x10] sm:$0xf]
        %v4995 = vld [vmem:[%s4989 + $0x14] sm:$0xf]
        %v5002 = vunpack.c.l.b16 %v4990
        %v5003 = vunpack.c.l.b16 %v4991
        %v5004 = vunpack.c.l.b16 %v4992
        %v5005 = vunpack.c.l.b16 %v4993
        %v5006 = vunpack.c.l.b16 %v4994
        %v5007 = vunpack.c.l.b16 %v4995
        %v5008 = vpack.c.b16 %v5003, %v5002
        %v5009 = vpack.c.b16 %v5005, %v5004
        %v5010 = vpack.c.b16 %v5007, %v5006
        %v5015 = vsel %vm2863, %v4988, 0
        %5017 = vmatpush.bf16.msra.mxu0 0
        %5018 = vmatpush.bf16.msra.mxu0 0
        %5019 = vmatpush.bf16.msra.mxu0 0
        %5020 = vmatpush.bf16.msra.mxu0 0
        %5021 = vmatpush.bf16.msra.mxu0 0
        %5022 = vmatpush.bf16.msra.mxu0 %v5010
        %5023 = vmatpush.bf16.msra.mxu0 %v5009
        %5024 = vmatpush.bf16.msra.mxu0 %v5008
        %5025 = vmatmul.bf16.gmra.mxu0 %v5015
        %v5026 = vpop.f32.mrf.mxu0
        %v5027 = vadd.f32 0.0, %v5026
        %v5028 = vpop.f32.mrf.mxu0
        %5029 = vdwg.mxu0
        %v5030 = vadd.f32 %v4986, %v5027
        %v5031 = vld [vmem:[#allocation2 + $0x10] sm:$0xfc]
        %v5032 = vpack.c.bf16 %v5031, %v5031
        %s5033 = scalar_lea.vmem [#allocation21], 144
        %v5034 = vld [vmem:[%s5033] sm:$0xf]
        %v5035 = vld [vmem:[%s5033 + $0x4] sm:$0xf]
        %v5036 = vld [vmem:[%s5033 + $0x8] sm:$0xf]
        %v5037 = vld [vmem:[%s5033 + $0xc] sm:$0xf]
        %v5038 = vld [vmem:[%s5033 + $0x10] sm:$0xf]
        %v5039 = vld [vmem:[%s5033 + $0x14] sm:$0xf]
        %v5041 = vrot.slane %v5032, 1
        %5042 = vrot.lane.b32.xlu0 %v5041, 64
        %v5043 = vpop.permute.xlu0 %5042
        %v5050 = vunpack.c.l.b16 %v5034
        %v5051 = vunpack.c.l.b16 %v5035
        %v5052 = vunpack.c.l.b16 %v5036
        %v5053 = vunpack.c.l.b16 %v5037
        %v5054 = vunpack.c.l.b16 %v5038
        %v5055 = vunpack.c.l.b16 %v5039
        %v5056 = vpack.c.b16 %v5051, %v5050
        %v5057 = vpack.c.b16 %v5053, %v5052
        %v5058 = vpack.c.b16 %v5055, %v5054
        %v5063 = vsel %vm2863, %v5043, 0
        %5065 = vmatpush.bf16.msra.mxu0 0
        %5066 = vmatpush.bf16.msra.mxu0 0
        %5067 = vmatpush.bf16.msra.mxu0 0
        %5068 = vmatpush.bf16.msra.mxu0 0
        %5069 = vmatpush.bf16.msra.mxu0 0
        %5070 = vmatpush.bf16.msra.mxu0 %v5058
        %5071 = vmatpush.bf16.msra.mxu0 %v5057
        %5072 = vmatpush.bf16.msra.mxu0 %v5056
        %5073 = vmatmul.bf16.gmra.mxu0 %v5063
        %v5074 = vpop.f32.mrf.mxu0
        %v5075 = vadd.f32 0.0, %v5074
        %v5076 = vpop.f32.mrf.mxu0
        %5077 = vdwg.mxu0
        %v5078 = vadd.f32 %v5030, %v5075
        %s5079 = scalar_lea.vmem [#allocation20], 168
        %v5080 = vld [vmem:[%s5079] sm:$0xf]
        %v5081 = vld [vmem:[%s5079 + $0x4] sm:$0xf]
        %v5082 = vld [vmem:[%s5079 + $0x8] sm:$0xf]
        %v5083 = vld [vmem:[%s5079 + $0xc] sm:$0xf]
        %v5084 = vld [vmem:[%s5079 + $0x10] sm:$0xf]
        %v5085 = vld [vmem:[%s5079 + $0x14] sm:$0xf]
        %5087 = vrot.lane.b32.xlu0 %v4988, 120
        %v5088 = vpop.permute.xlu0 %5087
        %v5095 = vunpack.c.l.b16 %v5080
        %v5096 = vunpack.c.l.b16 %v5081
        %v5097 = vunpack.c.l.b16 %v5082
        %v5098 = vunpack.c.l.b16 %v5083
        %v5099 = vunpack.c.l.b16 %v5084
        %v5100 = vunpack.c.l.b16 %v5085
        %v5101 = vpack.c.b16 %v5096, %v5095
        %v5102 = vpack.c.b16 %v5098, %v5097
        %v5103 = vpack.c.b16 %v5100, %v5099
        %v5108 = vsel %vm2863, %v5088, 0
        %5110 = vmatpush.bf16.msra.mxu0 0
        %5111 = vmatpush.bf16.msra.mxu0 0
        %5112 = vmatpush.bf16.msra.mxu0 0
        %5113 = vmatpush.bf16.msra.mxu0 0
        %5114 = vmatpush.bf16.msra.mxu0 0
        %5115 = vmatpush.bf16.msra.mxu0 %v5103
        %5116 = vmatpush.bf16.msra.mxu0 %v5102
        %5117 = vmatpush.bf16.msra.mxu0 %v5101
        %5118 = vmatmul.bf16.gmra.mxu0 %v5108
        %v5119 = vpop.f32.mrf.mxu0
        %v5120 = vadd.f32 0.0, %v5119
        %v5121 = vpop.f32.mrf.mxu0
        %5122 = vdwg.mxu0
        %v5123 = vadd.f32 %v5078, %v5120
        %s5124 = scalar_lea.vmem [#allocation21], 168
        %v5125 = vld [vmem:[%s5124] sm:$0xf]
        %v5126 = vld [vmem:[%s5124 + $0x4] sm:$0xf]
        %v5127 = vld [vmem:[%s5124 + $0x8] sm:$0xf]
        %v5128 = vld [vmem:[%s5124 + $0xc] sm:$0xf]
        %v5129 = vld [vmem:[%s5124 + $0x10] sm:$0xf]
        %v5130 = vld [vmem:[%s5124 + $0x14] sm:$0xf]
        %5131 = vrot.lane.b32.xlu0 %v5041, 56
        %v5132 = vpop.permute.xlu0 %5131
        %v5139 = vunpack.c.l.b16 %v5125
        %v5140 = vunpack.c.l.b16 %v5126
        %v5141 = vunpack.c.l.b16 %v5127
        %v5142 = vunpack.c.l.b16 %v5128
        %v5143 = vunpack.c.l.b16 %v5129
        %v5144 = vunpack.c.l.b16 %v5130
        %v5145 = vpack.c.b16 %v5140, %v5139
        %v5146 = vpack.c.b16 %v5142, %v5141
        %v5147 = vpack.c.b16 %v5144, %v5143
        %v5152 = vsel %vm2863, %v5132, 0
        %5154 = vmatpush.bf16.msra.mxu0 0
        %5155 = vmatpush.bf16.msra.mxu0 0
        %5156 = vmatpush.bf16.msra.mxu0 0
        %5157 = vmatpush.bf16.msra.mxu0 0
        %5158 = vmatpush.bf16.msra.mxu0 0
        %5159 = vmatpush.bf16.msra.mxu0 %v5147
        %5160 = vmatpush.bf16.msra.mxu0 %v5146
        %5161 = vmatpush.bf16.msra.mxu0 %v5145
        %5162 = vmatmul.bf16.gmra.mxu0 %v5152
        %v5163 = vpop.f32.mrf.mxu0
        %v5164 = vadd.f32 0.0, %v5163
        %v5165 = vpop.f32.mrf.mxu0
        %5166 = vdwg.mxu0
        %v5167 = vadd.f32 %v5123, %v5164
        %s5168 = scalar_lea.vmem [#allocation20], 192
        %v5169 = vld [vmem:[%s5168] sm:$0xf]
        %v5170 = vld [vmem:[%s5168 + $0x4] sm:$0xf]
        %v5171 = vld [vmem:[%s5168 + $0x8] sm:$0xf]
        %v5172 = vld [vmem:[%s5168 + $0xc] sm:$0xf]
        %v5173 = vld [vmem:[%s5168 + $0x10] sm:$0xf]
        %v5174 = vld [vmem:[%s5168 + $0x14] sm:$0xf]
        %5175 = vrot.lane.b32.xlu0 %v4988, 112
        %v5176 = vpop.permute.xlu0 %5175
        %v5183 = vunpack.c.l.b16 %v5169
        %v5184 = vunpack.c.l.b16 %v5170
        %v5185 = vunpack.c.l.b16 %v5171
        %v5186 = vunpack.c.l.b16 %v5172
        %v5187 = vunpack.c.l.b16 %v5173
        %v5188 = vunpack.c.l.b16 %v5174
        %v5189 = vpack.c.b16 %v5184, %v5183
        %v5190 = vpack.c.b16 %v5186, %v5185
        %v5191 = vpack.c.b16 %v5188, %v5187
        %v5196 = vsel %vm2863, %v5176, 0
        %5198 = vmatpush.bf16.msra.mxu0 0
        %5199 = vmatpush.bf16.msra.mxu0 0
        %5200 = vmatpush.bf16.msra.mxu0 0
        %5201 = vmatpush.bf16.msra.mxu0 0
        %5202 = vmatpush.bf16.msra.mxu0 0
        %5203 = vmatpush.bf16.msra.mxu0 %v5191
        %5204 = vmatpush.bf16.msra.mxu0 %v5190
        %5205 = vmatpush.bf16.msra.mxu0 %v5189
        %5206 = vmatmul.bf16.gmra.mxu0 %v5196
        %v5207 = vpop.f32.mrf.mxu0
        %v5208 = vadd.f32 0.0, %v5207
        %v5209 = vpop.f32.mrf.mxu0
        %5210 = vdwg.mxu0
        %v5211 = vadd.f32 %v5167, %v5208
        %s5212 = scalar_lea.vmem [#allocation21], 192
        %v5213 = vld [vmem:[%s5212] sm:$0xf]
        %v5214 = vld [vmem:[%s5212 + $0x4] sm:$0xf]
        %v5215 = vld [vmem:[%s5212 + $0x8] sm:$0xf]
        %v5216 = vld [vmem:[%s5212 + $0xc] sm:$0xf]
        %v5217 = vld [vmem:[%s5212 + $0x10] sm:$0xf]
        %v5218 = vld [vmem:[%s5212 + $0x14] sm:$0xf]
        %5219 = vrot.lane.b32.xlu0 %v5041, 48
        %v5220 = vpop.permute.xlu0 %5219
        %v5227 = vunpack.c.l.b16 %v5213
        %v5228 = vunpack.c.l.b16 %v5214
        %v5229 = vunpack.c.l.b16 %v5215
        %v5230 = vunpack.c.l.b16 %v5216
        %v5231 = vunpack.c.l.b16 %v5217
        %v5232 = vunpack.c.l.b16 %v5218
        %v5233 = vpack.c.b16 %v5228, %v5227
        %v5234 = vpack.c.b16 %v5230, %v5229
        %v5235 = vpack.c.b16 %v5232, %v5231
        %v5240 = vsel %vm2863, %v5220, 0
        %5242 = vmatpush.bf16.msra.mxu0 0
        %5243 = vmatpush.bf16.msra.mxu0 0
        %5244 = vmatpush.bf16.msra.mxu0 0
        %5245 = vmatpush.bf16.msra.mxu0 0
        %5246 = vmatpush.bf16.msra.mxu0 0
        %5247 = vmatpush.bf16.msra.mxu0 %v5235
        %5248 = vmatpush.bf16.msra.mxu0 %v5234
        %5249 = vmatpush.bf16.msra.mxu0 %v5233
        %5250 = vmatmul.bf16.gmra.mxu0 %v5240
        %v5251 = vpop.f32.mrf.mxu0
        %v5252 = vadd.f32 0.0, %v5251
        %v5253 = vpop.f32.mrf.mxu0
        %5254 = vdwg.mxu0
        %v5255 = vadd.f32 %v5211, %v5252
        %v5256 = vld [vmem:[%s16] sm:$0x1]
        %v5258 = vperm.slane %v5256, 0
        %v5260 = vadd.f32 %v5255, %v5258
        %v5261 = vmax.f32 %v5260, 0.0
        %v5262 = vpack.c.bf16 %v5261, %v5261
        %v5263 = vld [vmem:[%s17] sm:$0xf]
        %v5264 = vld [vmem:[%s17 + $0x4] sm:$0xf]
        %v5265 = vld [vmem:[%s17 + $0x8] sm:$0xf]
        %v5266 = vld [vmem:[%s17 + $0xc] sm:$0xf]
        %v5267 = vld [vmem:[%s17 + $0x10] sm:$0xf]
        %v5268 = vld [vmem:[%s17 + $0x14] sm:$0xf]
        %v5269 = vld [vmem:[%s18] sm:$0x1]
        %v5271 = vperm.slane %v5269, 0
        %v5279 = vunpack.c.l.b16 %v5263
        %v5280 = vunpack.c.l.b16 %v5264
        %v5281 = vunpack.c.l.b16 %v5265
        %v5282 = vunpack.c.l.b16 %v5266
        %v5283 = vunpack.c.l.b16 %v5267
        %v5284 = vunpack.c.l.b16 %v5268
        %v5285 = vpack.c.b16 %v5280, %v5279
        %v5286 = vpack.c.b16 %v5282, %v5281
        %v5287 = vpack.c.b16 %v5284, %v5283
        %v5292 = vsel %vm2863, %v5262, 0
        %5294 = vmatpush.bf16.msra.mxu0 0
        %5295 = vmatpush.bf16.msra.mxu0 0
        %5296 = vmatpush.bf16.msra.mxu0 0
        %5297 = vmatpush.bf16.msra.mxu0 0
        %5298 = vmatpush.bf16.msra.mxu0 0
        %5299 = vmatpush.bf16.msra.mxu0 %v5287
        %5300 = vmatpush.bf16.msra.mxu0 %v5286
        %5301 = vmatpush.bf16.msra.mxu0 %v5285
        %5302 = vmatmul.bf16.gmra.mxu0 %v5292
        %v5303 = vpop.f32.mrf.mxu0
        %v5304 = vadd.f32 %v5271, %v5303
        %v5305 = vpop.f32.mrf.mxu0
        %5306 = vdwg.mxu0
        %v5307 = vmul.f32 %v5304, 0.1
        %vm5308 = vcmask 46080
        %5309 = vst.msk [vmem:[%s735] sm:$0x3f] %vm5308, %v5307
        %s5310 = scalar_lea.vmem %s17, 24
        %v5311 = vld [vmem:[%s5310] sm:$0xf]
        %v5312 = vld [vmem:[%s5310 + $0x4] sm:$0xf]
        %v5313 = vld [vmem:[%s5310 + $0x8] sm:$0xf]
        %v5314 = vld [vmem:[%s5310 + $0xc] sm:$0xf]
        %v5315 = vld [vmem:[%s5310 + $0x10] sm:$0xf]
        %v5316 = vld [vmem:[%s5310 + $0x14] sm:$0xf]
        %s5317 = scalar_lea.vmem %s18, 1
        %v5318 = vld [vmem:[%s5317] sm:$0x1]
        %v5320 = vperm.slane %v5318, 0
        %v5328 = vunpack.c.l.b16 %v5311
        %v5329 = vunpack.c.l.b16 %v5312
        %v5330 = vunpack.c.l.b16 %v5313
        %v5331 = vunpack.c.l.b16 %v5314
        %v5332 = vunpack.c.l.b16 %v5315
        %v5333 = vunpack.c.l.b16 %v5316
        %v5334 = vpack.c.b16 %v5329, %v5328
        %v5335 = vpack.c.b16 %v5331, %v5330
        %v5336 = vpack.c.b16 %v5333, %v5332
        %5340 = vmatpush.bf16.msra.mxu0 0
        %5341 = vmatpush.bf16.msra.mxu0 0
        %5342 = vmatpush.bf16.msra.mxu0 0
        %5343 = vmatpush.bf16.msra.mxu0 0
        %5344 = vmatpush.bf16.msra.mxu0 0
        %5345 = vmatpush.bf16.msra.mxu0 %v5336
        %5346 = vmatpush.bf16.msra.mxu0 %v5335
        %5347 = vmatpush.bf16.msra.mxu0 %v5334
        %5348 = vmatmul.bf16.gmra.mxu0 %v5292
        %v5349 = vpop.f32.mrf.mxu0
        %v5350 = vadd.f32 %v5320, %v5349
        %v5351 = vpop.f32.mrf.mxu0
        %5352 = vdwg.mxu0
        %v5353 = vmul.f32 %v5350, 0.1
        %s5354 = scalar_lea.vmem %s735, 8
        %5355 = vst.msk [vmem:[%s5354] sm:$0x3f] %vm5308, %v5353
        %p5356 = scmp.lt.s32.totalorder %s35, 1
        %s5357 = scalar_select %p5356, %s35, 1
        %s5358 = smul.addr %s5357, 2
        %s5359 = smul.addr %s5358, 8
        %s5360 = scalar_lea.vmem %s19, %s5359
        // Predicated region
        $region129: #{unet_apply.1} parent=95 // pred_check
          %p5361 = pneg %p457
        $region130: #{unet_apply.1} parent=95 // pred_check_branch
          %5363 = sbr.rel (%p5361) target = $region132
        $region131: #{unet_apply.1} parent=95 // pred_region
          _
        $region132: #{unet_apply.1} parent=95 // pred_fallthru
          _
      $region96: #{unet_apply.1} parent=5 // pred_fallthru
        _
      %p5364 = scmp.le.s32.totalorder 2, %s30
      // Predicated region
      $region133: #{unet_apply.1} parent=5 // pred_check
        %p5365 = pneg %p5364
      $region134: #{unet_apply.1} parent=5 // pred_check_branch
        %5367 = sbr.rel (%p5365) target = $region136
      $region135: #{unet_apply.1} parent=5 // pred_region
        %s5368 = ssub.s32 %s30, 2
        // Predicated region
        $region137: #{unet_apply.1} parent=135 // pred_check
          %p5369 = pneg %p463
        $region138: #{unet_apply.1} parent=135 // pred_check_branch
          %5371 = sbr.rel (%p5369) target = $region140
        $region139: #{unet_apply.1} parent=135 // pred_region
          %p5372 = scmp.lt.s32.totalorder %s36, 1
          %s5373 = scalar_select %p5372, %s36, 1
          %s5374 = smul.addr %s5373, 2
          %s5375 = smul.addr %s5374, 8
          %s5376 = scalar_lea.vmem %s19, %s5375
        $region140: #{unet_apply.1} parent=135 // pred_fallthru
          _
      $region136: #{unet_apply.1} parent=5 // pred_fallthru
        _
    $region6: #{unet_apply.1} parent=1 // loop_footer
      %s34 = sadd.s32 1, %s30
    $region7: #{unet_apply.1} parent=1 // loop_footer_branch
      %29 = sbr.rel target = $region3
    $region8: #{unet_apply.1} parent=1 // loop_exit
      _
    %5377 = vsyncpa [#allocation11], 1
    %s5378 = scalar_lea.sflag [#allocation11], 1
    %5379 = vsyncpa %s5378, 1
    %5380 = vsyncpa [#allocation13], 1
    %5381 = vsyncpa [#allocation16], 1
    %5382 = vsyncpa [#allocation19], 1
    %5383 = vsyncpa [#allocation22], 1

</llo_original>
